<compile_context>
chip_gen: v7x
topology: tpu7x:2x2x1
jax: 0.10.0
libtpu: 0.0.40
codegen_flags: <defaults>
</compile_context>

<pallas_src>
import math

import jax
import jax.numpy as jnp
from jax.experimental import pallas as pl
from jax.experimental.pallas import tpu as pltpu

# ---------------- small, module-consistent configuration ----------------
B = 2                                    # batch
IN_CH = 3                                # image channels
IMG = 16                                 # image height/width
PATCH = 4                                # patch size -> 4x4 grid of patches
N_PATCHES = (IMG // PATCH) ** 2          # 16
SEQ = N_PATCHES + 1                      # 17 tokens (cls + patches)
SEQ_PAD = 32                             # padded sequence (sublane-aligned, power of two)
HIDDEN = 32                              # config.hidden_size
NUM_HEADS = 4                            # config.transformer['num_heads']
HEAD_DIM = HIDDEN // NUM_HEADS           # 8
MLP_DIM = 64                             # config.transformer['mlp_dim']
NUM_LAYERS = 2                           # config.transformer['num_layers']
EPS = 1e-6                               # LayerNorm eps
PATCH_DIM = IN_CH * PATCH * PATCH        # 48
N_TOK = B * SEQ_PAD                      # 64 padded token rows
SCALE = 1.0 / math.sqrt(HEAD_DIM)
INV_SQRT2 = 1.0 / math.sqrt(2.0)
NEG_INF = -1e30
N_IN = 17                                # number of kernel inputs


# ---------------- in-kernel helper ----------------
def _layernorm(v, gamma_row, beta_row):
    mu = jnp.mean(v, axis=-1, keepdims=True)
    var = jnp.mean((v - mu) ** 2, axis=-1, keepdims=True)
    return (v - mu) * jax.lax.rsqrt(var + EPS) * gamma_row + beta_row


# ---------------- fused ViT-Transformer kernel (single invocation, all in VMEM) ----------------
def vit_kernel(patches_ref, wp_ref, bp_ref, clspos_ref, pospatch_ref, kbias_ref,
               ln_attn_ref, wqkv_ref, bqkv_ref, wo_ref, bo_ref,
               ln_ffn_ref, w1_ref, b1_ref, w2_ref, b2_ref, enc_ln_ref,
               out_ref, x_scr, ctx_scr):
    # ---- Embeddings: one MXU matmul for all patches of all batches ----
    emb = jnp.dot(patches_ref[...], wp_ref[...],
                  preferred_element_type=jnp.float32) + bp_ref[...]          # (B*NP, H)

    # Build padded token tensor with direct row stores (no concatenate).
    # Pad rows must be zero (finite) so masked attention never sees NaN/Inf.
    x_scr[...] = jnp.zeros_like(x_scr)
    for b in range(B):
        base = b * SEQ_PAD
        x_scr[pl.ds(base, 1), :] = clspos_ref[...]                           # cls_token + pos[0]
        x_scr[pl.ds(base + 1, N_PATCHES), :] = (
            emb[b * N_PATCHES:(b + 1) * N_PATCHES, :] + pospatch_ref[...])   # patches + pos[1:]
    x = x_scr[...]                                                           # (N_TOK, H); dropout=identity

    # additive key-pad mask (hoisted out of the layer/head loops)
    kbias = kbias_ref[...].reshape(1, 1, SEQ_PAD)                            # 0 for real keys, -1e30 for pad

    # ---- encoder Blocks (weights stacked along a leading layer axis) ----
    for l in range(NUM_LAYERS):
        # attention_norm
        lna = ln_attn_ref[l]                                                 # (2, H)
        xn = _layernorm(x, lna[0:1, :], lna[1:2, :])

        # fused QKV projection: single (H, 3H) matmul
        qkv = jnp.dot(xn, wqkv_ref[l], preferred_element_type=jnp.float32) + bqkv_ref[l]

        # head split: lane slices + free leading-dim reshapes (no transposes / concats)
        q3 = qkv[:, 0:HIDDEN].reshape(B, SEQ_PAD, HIDDEN)
        k3 = qkv[:, HIDDEN:2 * HIDDEN].reshape(B, SEQ_PAD, HIDDEN)
        v3 = qkv[:, 2 * HIDDEN:3 * HIDDEN].reshape(B, SEQ_PAD, HIDDEN)

        for h in range(NUM_HEADS):
            c0 = h * HEAD_DIM
            qh = q3[:, :, c0:c0 + HEAD_DIM]                                  # (B, S_PAD, D)
            kh = k3[:, :, c0:c0 + HEAD_DIM]
            vh = v3[:, :, c0:c0 + HEAD_DIM]
            s = jnp.einsum('bqd,bkd->bqk', qh, kh,
                           preferred_element_type=jnp.float32) * SCALE + kbias
            s = s - jnp.max(s, axis=-1, keepdims=True)
            e = jnp.exp(s)
            p = e / jnp.sum(e, axis=-1, keepdims=True)                       # softmax; attn_dropout=identity
            ctxh = jnp.einsum('bqk,bkd->bqd', p, vh,
                              preferred_element_type=jnp.float32)            # (B, S_PAD, D)
            # merge heads by writing each head directly into its lanes (no concatenate)
            ctx_scr[:, c0:c0 + HEAD_DIM] = ctxh.reshape(N_TOK, HEAD_DIM)

        attn = jnp.dot(ctx_scr[...], wo_ref[l],
                       preferred_element_type=jnp.float32) + bo_ref[l]
        x = attn + x                                                         # proj_dropout=identity, residual

        # ffn_norm + MLP (fc1 -> exact GELU -> fc2), dropouts = identity
        lnf = ln_ffn_ref[l]
        yn = _layernorm(x, lnf[0:1, :], lnf[1:2, :])
        z = jnp.dot(yn, w1_ref[l], preferred_element_type=jnp.float32) + b1_ref[l]
        z = 0.5 * z * (1.0 + jax.lax.erf(z * INV_SQRT2))                     # exact GELU (torch default)
        z = jnp.dot(z, w2_ref[l], preferred_element_type=jnp.float32) + b2_ref[l]
        x = z + x

    # ---- fused Encoder.encoder_norm ----
    encw = enc_ln_ref[...]
    out_ref[...] = _layernorm(x, encw[0:1, :], encw[1:2, :])


# ---------------- wrapper ----------------
def _vit_call(patches, packed):
    return pl.pallas_call(
        vit_kernel,
        out_shape=jax.ShapeDtypeStruct((N_TOK, HIDDEN), jnp.float32),
        in_specs=[pl.BlockSpec(memory_space=pltpu.MemorySpace.VMEM)] * N_IN,
        out_specs=pl.BlockSpec(memory_space=pltpu.MemorySpace.VMEM),
        scratch_shapes=[pltpu.VMEM((N_TOK, HIDDEN), jnp.float32),   # padded token buffer
                        pltpu.VMEM((N_TOK, HIDDEN), jnp.float32)],  # head-merge buffer
    )(patches, *packed)


@jax.jit
def vit_transformer_pallas(x_img, packed):
    # Patch extraction is pure layout work (done by XLA outside the kernel).
    gh = gw = IMG // PATCH
    xp = x_img.reshape(B, IN_CH, gh, PATCH, gw, PATCH)
    xp = xp.transpose(0, 2, 4, 1, 3, 5)                        # (B, gh, gw, C, ph, pw)
    patches = xp.reshape(B * N_PATCHES, PATCH_DIM)             # flattened in (C, ph, pw) order
    out = _vit_call(patches, packed)                           # (B*SEQ_PAD, H)
    return out.reshape(B, SEQ_PAD, HIDDEN)[:, :SEQ, :]         # drop pad rows


def pack_params(params):
    """One-time weight packing (outside the jitted forward)."""
    pos = params['pos'].reshape(SEQ, HIDDEN)
    blocks = params['blocks']
    packed = (
        params['conv_w'].reshape(HIDDEN, PATCH_DIM).T,                               # wp  (PATCH_DIM, H)
        params['conv_b'].reshape(1, HIDDEN),                                         # bp
        params['cls'].reshape(1, HIDDEN) + pos[0:1],                                 # cls_token + pos[0]
        pos[1:],                                                                     # pos for patch rows (NP, H)
        jnp.where(jnp.arange(SEQ_PAD) < SEQ, 0.0, NEG_INF)
           .astype(jnp.float32).reshape(1, SEQ_PAD),                                 # additive key-pad mask
        jnp.stack([jnp.stack([b['ln1_g'], b['ln1_b']]) for b in blocks]),            # (L, 2, H)
        jnp.stack([jnp.concatenate([b['wq'], b['wk'], b['wv']], axis=1)
                   for b in blocks]),                                                # (L, H, 3H)
        jnp.stack([jnp.concatenate([b['bq'], b['bk'], b['bv']]).reshape(1, 3 * HIDDEN)
                   for b in blocks]),                                                # (L, 1, 3H)
        jnp.stack([b['wo'] for b in blocks]),                                        # (L, H, H)
        jnp.stack([b['bo'].reshape(1, HIDDEN) for b in blocks]),                     # (L, 1, H)
        jnp.stack([jnp.stack([b['ln2_g'], b['ln2_b']]) for b in blocks]),            # (L, 2, H)
        jnp.stack([b['w1'] for b in blocks]),                                        # (L, H, M)
        jnp.stack([b['b1'].reshape(1, MLP_DIM) for b in blocks]),                    # (L, 1, M)
        jnp.stack([b['w2'] for b in blocks]),                                        # (L, M, H)
        jnp.stack([b['b2'].reshape(1, HIDDEN) for b in blocks]),                     # (L, 1, H)
        jnp.stack([params['enc_g'], params['enc_b']]),                               # (2, H)
    )
    return tuple(jax.device_put(a) for a in packed)


# ---------------- pure-JAX reference mirroring the PyTorch Transformer forward (eval mode) ----
def _ln_ref(v, g, b):
    mu = jnp.mean(v, axis=-1, keepdims=True)
    var = jnp.mean((v - mu) ** 2, axis=-1, keepdims=True)
    return (v - mu) / jnp.sqrt(var + EPS) * g + b


def vit_transformer_ref(x_img, params):
    hp = jax.lax.Precision.HIGHEST
    y = jax.lax.conv_general_dilated(
        x_img, params['conv_w'], window_strides=(PATCH, PATCH), padding='VALID',
        dimension_numbers=('NCHW', 'OIHW', 'NCHW'), precision=hp)
    y = y + params['conv_b'].reshape(1, HIDDEN, 1, 1)
    y = y.reshape(B, HIDDEN, N_PATCHES).transpose(0, 2, 1)     # flatten(2).transpose(-1,-2)
    cls = jnp.broadcast_to(params['cls'], (B, 1, HIDDEN))
    y = jnp.concatenate([cls, y], axis=1) + params['pos']

    for blk in params['blocks']:
        h = y
        xn = _ln_ref(y, blk['ln1_g'], blk['ln1_b'])
        q = jnp.einsum('bsh,hk->bsk', xn, blk['wq'], precision=hp) + blk['bq']
        k = jnp.einsum('bsh,hk->bsk', xn, blk['wk'], precision=hp) + blk['bk']
        v = jnp.einsum('bsh,hk->bsk', xn, blk['wv'], precision=hp) + blk['bv']

        def split(t):
            return t.reshape(B, SEQ, NUM_HEADS, HEAD_DIM).transpose(0, 2, 1, 3)

        qh, kh, vh = split(q), split(k), split(v)
        scores = jnp.einsum('bhqd,bhkd->bhqk', qh, kh, precision=hp) / math.sqrt(HEAD_DIM)
        probs = jax.nn.softmax(scores, axis=-1)
        ctx = jnp.einsum('bhqk,bhkd->bhqd', probs, vh, precision=hp)
        ctx = ctx.transpose(0, 2, 1, 3).reshape(B, SEQ, HIDDEN)
        attn_out = jnp.einsum('bsh,hk->bsk', ctx, blk['wo'], precision=hp) + blk['bo']
        x1 = attn_out + h

        yn = _ln_ref(x1, blk['ln2_g'], blk['ln2_b'])
        z = jnp.einsum('bsh,hk->bsk', yn, blk['w1'], precision=hp) + blk['b1']
        z = 0.5 * z * (1.0 + jax.lax.erf(z * INV_SQRT2))
        z = jnp.einsum('bsk,kh->bsh', z, blk['w2'], precision=hp) + blk['b2']
        y = z + x1

    return _ln_ref(y, params['enc_g'], params['enc_b'])


# ---------------- deterministic parameter construction ----------------
def make_params(key):
    ks = iter(jax.random.split(key, 64))

    def nrm(shape, std=0.02):
        return std * jax.random.normal(next(ks), shape, jnp.float32)

    def xavier(shape):
        fan_in, fan_out = shape[-2], shape[-1]
        lim = math.sqrt(6.0 / (fan_in + fan_out))
        return jax.random.uniform(next(ks), shape, jnp.float32, -lim, lim)

    params = {
        'conv_w': nrm((HIDDEN, IN_CH, PATCH, PATCH), 0.1),
        'conv_b': nrm((HIDDEN,), 0.02),
        # PyTorch initializes cls/pos to zeros; small random values keep the numerical test meaningful.
        'cls': nrm((1, 1, HIDDEN), 0.02),
        'pos': nrm((1, SEQ, HIDDEN), 0.02),
        'enc_g': 1.0 + nrm((HIDDEN,), 0.01),
        'enc_b': nrm((HIDDEN,), 0.01),
        'blocks': [],
    }
    for _ in range(NUM_LAYERS):
        params['blocks'].append({
            'ln1_g': 1.0 + nrm((HIDDEN,), 0.01), 'ln1_b': nrm((HIDDEN,), 0.01),
            'ln2_g': 1.0 + nrm((HIDDEN,), 0.01), 'ln2_b': nrm((HIDDEN,), 0.01),
            'wq': xavier((HIDDEN, HIDDEN)), 'bq': nrm((HIDDEN,), 0.01),
            'wk': xavier((HIDDEN, HIDDEN)), 'bk': nrm((HIDDEN,), 0.01),
            'wv': xavier((HIDDEN, HIDDEN)), 'bv': nrm((HIDDEN,), 0.01),
            'wo': xavier((HIDDEN, HIDDEN)), 'bo': nrm((HIDDEN,), 0.01),
            'w1': xavier((HIDDEN, MLP_DIM)),
            'b1': 1e-6 * jax.random.normal(next(ks), (MLP_DIM,), jnp.float32),
            'w2': xavier((MLP_DIM, HIDDEN)),
            'b2': 1e-6 * jax.random.normal(next(ks), (HIDDEN,), jnp.float32),
        })
    return params


if __name__ == "__main__":
    key = jax.random.PRNGKey(0)
    kx, kp = jax.random.split(key)
    x_img = jax.random.normal(kx, (B, IN_CH, IMG, IMG), jnp.float32)
    params = make_params(kp)

    packed = pack_params(params)                       # one-time packing, outside the jitted forward
    encoded = vit_transformer_pallas(x_img, packed)
    encoded = jax.block_until_ready(encoded)

    ref = vit_transformer_ref(x_img, params)
    assert encoded.shape == (B, SEQ, HIDDEN)
    max_diff = float(jnp.max(jnp.abs(encoded - ref)))
    assert jnp.allclose(encoded, ref, atol=3e-3, rtol=3e-3), f"max abs diff {max_diff}"

    # Transformer.forward returns (encoded, attn_weights); vis=False -> no weights collected.
    result = (encoded, [])
    print("KERNEL_OK")
</pallas_src>

<mosaic_0001>
module attributes {stable_mosaic.version = 11 : i64} {
  func.func @vit_kernel(%arg0: memref<32x48xf32, #tpu.memory_space<vmem>>, %arg1: memref<48x32xf32, #tpu.memory_space<vmem>>, %arg2: memref<1x32xf32, #tpu.memory_space<vmem>>, %arg3: memref<1x32xf32, #tpu.memory_space<vmem>>, %arg4: memref<16x32xf32, #tpu.memory_space<vmem>>, %arg5: memref<1x32xf32, #tpu.memory_space<vmem>>, %arg6: memref<2x2x32xf32, #tpu.memory_space<vmem>>, %arg7: memref<2x32x96xf32, #tpu.memory_space<vmem>>, %arg8: memref<2x1x96xf32, #tpu.memory_space<vmem>>, %arg9: memref<2x32x32xf32, #tpu.memory_space<vmem>>, %arg10: memref<2x1x32xf32, #tpu.memory_space<vmem>>, %arg11: memref<2x2x32xf32, #tpu.memory_space<vmem>>, %arg12: memref<2x32x64xf32, #tpu.memory_space<vmem>>, %arg13: memref<2x1x64xf32, #tpu.memory_space<vmem>>, %arg14: memref<2x64x32xf32, #tpu.memory_space<vmem>>, %arg15: memref<2x1x32xf32, #tpu.memory_space<vmem>>, %arg16: memref<2x32xf32, #tpu.memory_space<vmem>>, %arg17: memref<64x32xf32, #tpu.memory_space<vmem>>, %arg18: memref<64x32xf32, #tpu.memory_space<vmem>>, %arg19: memref<64x32xf32, #tpu.memory_space<vmem>>) attributes {dimension_semantics = [], scalar_prefetch = 0 : i64, scratch_operands = 2 : i64, tpu.core_type = #tpu.core_type<tc>} {
    %c0 = arith.constant 0 : index
    %c0_0 = arith.constant 0 : index
    %0 = vector.load %arg0[%c0, %c0_0] : memref<32x48xf32, #tpu.memory_space<vmem>>, vector<32x48xf32>
    %c0_1 = arith.constant 0 : index
    %c0_2 = arith.constant 0 : index
    %1 = vector.load %arg1[%c0_1, %c0_2] : memref<48x32xf32, #tpu.memory_space<vmem>>, vector<48x32xf32>
    %cst = arith.constant dense<0.000000e+00> : vector<32x32xf32>
    %2 = tpu.matmul %0, %1, %cst {dimension_numbers = #tpu.dot_dimension_numbers<[1], [0], [0], [1], [0, 0, 1, 1], [], []>} : vector<32x48xf32>, vector<48x32xf32>, vector<32x32xf32> -> vector<32x32xf32>
    %c0_3 = arith.constant 0 : index
    %c0_4 = arith.constant 0 : index
    %3 = vector.load %arg2[%c0_3, %c0_4] : memref<1x32xf32, #tpu.memory_space<vmem>>, vector<1x32xf32>
    %4 = vector.broadcast %3 : vector<1x32xf32> to vector<32x32xf32>
    %5 = arith.addf %2, %4 : vector<32x32xf32>
    %cst_5 = arith.constant 0.000000e+00 : f32
    %6 = vector.broadcast %cst_5 : f32 to vector<64x32xf32>
    %c0_6 = arith.constant 0 : index
    %c0_7 = arith.constant 0 : index
    %7 = vector.load %arg18[%c0_6, %c0_7] : memref<64x32xf32, #tpu.memory_space<vmem>>, vector<64x32xf32>
    tpu.vector_store %arg18[%c0_6, %c0_7], %6 {strides = array<i32>} : memref<64x32xf32, #tpu.memory_space<vmem>>, vector<64x32xf32>,
    %c0_8 = arith.constant 0 : index
    %c0_9 = arith.constant 0 : index
    %8 = vector.load %arg3[%c0_8, %c0_9] : memref<1x32xf32, #tpu.memory_space<vmem>>, vector<1x32xf32>
    %c0_10 = arith.constant 0 : index
    %c0_11 = arith.constant 0 : index
    %9 = vector.load %arg18[%c0_10, %c0_11] : memref<64x32xf32, #tpu.memory_space<vmem>>, vector<1x32xf32>
    tpu.vector_store %arg18[%c0_10, %c0_11], %8 {strides = array<i32>} : memref<64x32xf32, #tpu.memory_space<vmem>>, vector<1x32xf32>,
    %10 = vector.extract_strided_slice %5 {offsets = [0, 0], sizes = [16, 32], strides = [1, 1]} : vector<32x32xf32> to vector<16x32xf32>
    %c0_12 = arith.constant 0 : index
    %c0_13 = arith.constant 0 : index
    %11 = vector.load %arg4[%c0_12, %c0_13] : memref<16x32xf32, #tpu.memory_space<vmem>>, vector<16x32xf32>
    %12 = arith.addf %10, %11 : vector<16x32xf32>
    %c1 = arith.constant 1 : index
    %c0_14 = arith.constant 0 : index
    %13 = vector.load %arg18[%c1, %c0_14] : memref<64x32xf32, #tpu.memory_space<vmem>>, vector<16x32xf32>
    tpu.vector_store %arg18[%c1, %c0_14], %12 {strides = array<i32>} : memref<64x32xf32, #tpu.memory_space<vmem>>, vector<16x32xf32>,
    %c0_15 = arith.constant 0 : index
    %c0_16 = arith.constant 0 : index
    %14 = vector.load %arg3[%c0_15, %c0_16] : memref<1x32xf32, #tpu.memory_space<vmem>>, vector<1x32xf32>
    %c32 = arith.constant 32 : index
    %c0_17 = arith.constant 0 : index
    %15 = vector.load %arg18[%c32, %c0_17] : memref<64x32xf32, #tpu.memory_space<vmem>>, vector<1x32xf32>
    tpu.vector_store %arg18[%c32, %c0_17], %14 {strides = array<i32>} : memref<64x32xf32, #tpu.memory_space<vmem>>, vector<1x32xf32>,
    %16 = vector.extract_strided_slice %5 {offsets = [16, 0], sizes = [16, 32], strides = [1, 1]} : vector<32x32xf32> to vector<16x32xf32>
    %c0_18 = arith.constant 0 : index
    %c0_19 = arith.constant 0 : index
    %17 = vector.load %arg4[%c0_18, %c0_19] : memref<16x32xf32, #tpu.memory_space<vmem>>, vector<16x32xf32>
    %18 = arith.addf %16, %17 : vector<16x32xf32>
    %c33 = arith.constant 33 : index
    %c0_20 = arith.constant 0 : index
    %19 = vector.load %arg18[%c33, %c0_20] : memref<64x32xf32, #tpu.memory_space<vmem>>, vector<16x32xf32>
    tpu.vector_store %arg18[%c33, %c0_20], %18 {strides = array<i32>} : memref<64x32xf32, #tpu.memory_space<vmem>>, vector<16x32xf32>,
    %c0_21 = arith.constant 0 : index
    %c0_22 = arith.constant 0 : index
    %20 = vector.load %arg18[%c0_21, %c0_22] : memref<64x32xf32, #tpu.memory_space<vmem>>, vector<64x32xf32>
    %c0_23 = arith.constant 0 : index
    %c0_24 = arith.constant 0 : index
    %21 = vector.load %arg5[%c0_23, %c0_24] : memref<1x32xf32, #tpu.memory_space<vmem>>, vector<1x32xf32>
    %22 = vector.shape_cast %21 : vector<1x32xf32> to vector<1x1x32xf32>
    %c0_25 = arith.constant 0 : index
    %c0_26 = arith.constant 0 : index
    %c0_27 = arith.constant 0 : index
    %23 = vector.load %arg6[%c0_25, %c0_26, %c0_27] : memref<2x2x32xf32, #tpu.memory_space<vmem>>, vector<1x2x32xf32>
    %24 = vector.shape_cast %23 : vector<1x2x32xf32> to vector<2x32xf32>
    %25 = vector.extract_strided_slice %24 {offsets = [0, 0], sizes = [1, 32], strides = [1, 1]} : vector<2x32xf32> to vector<1x32xf32>
    %26 = vector.extract_strided_slice %24 {offsets = [1, 0], sizes = [1, 32], strides = [1, 1]} : vector<2x32xf32> to vector<1x32xf32>
    %cst_28 = arith.constant dense<0.000000e+00> : vector<64xf32>
    %27 = vector.multi_reduction <add>, %20, %cst_28 [1] : vector<64x32xf32> to vector<64xf32>
    %28 = vector.shape_cast %27 : vector<64xf32> to vector<64x1xf32>
    %cst_29 = arith.constant 3.200000e+01 : f32
    %29 = vector.broadcast %cst_29 : f32 to vector<64x1xf32>
    %30 = arith.divf %28, %29 : vector<64x1xf32>
    %31 = vector.broadcast %30 : vector<64x1xf32> to vector<64x32xf32>
    %32 = arith.subf %20, %31 : vector<64x32xf32>
    %33 = arith.mulf %32, %32 : vector<64x32xf32>
    %cst_30 = arith.constant dense<0.000000e+00> : vector<64xf32>
    %34 = vector.multi_reduction <add>, %33, %cst_30 [1] : vector<64x32xf32> to vector<64xf32>
    %35 = vector.shape_cast %34 : vector<64xf32> to vector<64x1xf32>
    %cst_31 = arith.constant 3.200000e+01 : f32
    %36 = vector.broadcast %cst_31 : f32 to vector<64x1xf32>
    %37 = arith.divf %35, %36 : vector<64x1xf32>
    %38 = vector.broadcast %30 : vector<64x1xf32> to vector<64x32xf32>
    %39 = arith.subf %20, %38 : vector<64x32xf32>
    %cst_32 = arith.constant 9.99999997E-7 : f32
    %40 = vector.broadcast %cst_32 : f32 to vector<64x1xf32>
    %41 = arith.addf %37, %40 : vector<64x1xf32>
    %42 = math.rsqrt %41 : vector<64x1xf32>
    %43 = vector.broadcast %42 : vector<64x1xf32> to vector<64x32xf32>
    %44 = arith.mulf %39, %43 : vector<64x32xf32>
    %45 = vector.broadcast %25 : vector<1x32xf32> to vector<64x32xf32>
    %46 = arith.mulf %44, %45 : vector<64x32xf32>
    %47 = vector.broadcast %26 : vector<1x32xf32> to vector<64x32xf32>
    %48 = arith.addf %46, %47 : vector<64x32xf32>
    %c0_33 = arith.constant 0 : index
    %c0_34 = arith.constant 0 : index
    %c0_35 = arith.constant 0 : index
    %49 = vector.load %arg7[%c0_33, %c0_34, %c0_35] : memref<2x32x96xf32, #tpu.memory_space<vmem>>, vector<1x32x96xf32>
    %50 = vector.shape_cast %49 : vector<1x32x96xf32> to vector<32x96xf32>
    %cst_36 = arith.constant dense<0.000000e+00> : vector<64x96xf32>
    %51 = tpu.matmul %48, %50, %cst_36 {dimension_numbers = #tpu.dot_dimension_numbers<[1], [0], [0], [1], [0, 0, 1, 1], [], []>} : vector<64x32xf32>, vector<32x96xf32>, vector<64x96xf32> -> vector<64x96xf32>
    %c0_37 = arith.constant 0 : index
    %c0_38 = arith.constant 0 : index
    %c0_39 = arith.constant 0 : index
    %52 = vector.load %arg8[%c0_37, %c0_38, %c0_39] : memref<2x1x96xf32, #tpu.memory_space<vmem>>, vector<1x1x96xf32>
    %53 = vector.shape_cast %52 : vector<1x1x96xf32> to vector<1x96xf32>
    %54 = vector.broadcast %53 : vector<1x96xf32> to vector<64x96xf32>
    %55 = arith.addf %51, %54 : vector<64x96xf32>
    %56 = vector.extract_strided_slice %55 {offsets = [0, 0], sizes = [64, 32], strides = [1, 1]} : vector<64x96xf32> to vector<64x32xf32>
    %57 = vector.shape_cast %56 : vector<64x32xf32> to vector<2x32x32xf32>
    %58 = vector.extract_strided_slice %55 {offsets = [0, 32], sizes = [64, 32], strides = [1, 1]} : vector<64x96xf32> to vector<64x32xf32>
    %59 = vector.shape_cast %58 : vector<64x32xf32> to vector<2x32x32xf32>
    %60 = vector.extract_strided_slice %55 {offsets = [0, 64], sizes = [64, 32], strides = [1, 1]} : vector<64x96xf32> to vector<64x32xf32>
    %61 = vector.shape_cast %60 : vector<64x32xf32> to vector<2x32x32xf32>
    %62 = vector.extract_strided_slice %57 {offsets = [0, 0, 0], sizes = [2, 32, 8], strides = [1, 1, 1]} : vector<2x32x32xf32> to vector<2x32x8xf32>
    %63 = vector.extract_strided_slice %59 {offsets = [0, 0, 0], sizes = [2, 32, 8], strides = [1, 1, 1]} : vector<2x32x32xf32> to vector<2x32x8xf32>
    %64 = vector.extract_strided_slice %61 {offsets = [0, 0, 0], sizes = [2, 32, 8], strides = [1, 1, 1]} : vector<2x32x32xf32> to vector<2x32x8xf32>
    "tpu.trace_start"() <{level = 10 : i32, message = "bqd,bkd->bqk"}> : () -> ()
    %cst_40 = arith.constant dense<0.000000e+00> : vector<2x32x32xf32>
    %65 = tpu.matmul %62, %63, %cst_40 {dimension_numbers = #tpu.dot_dimension_numbers<[2], [2], [1], [1], [0, 0, 0, 1, 1, 1], [0], [0]>} : vector<2x32x8xf32>, vector<2x32x8xf32>, vector<2x32x32xf32> -> vector<2x32x32xf32>
    "tpu.trace_stop"() : () -> ()
    %cst_41 = arith.constant 0.353553385 : f32
    %66 = vector.broadcast %cst_41 : f32 to vector<2x32x32xf32>
    %67 = arith.mulf %65, %66 : vector<2x32x32xf32>
    %68 = vector.broadcast %22 : vector<1x1x32xf32> to vector<2x32x32xf32>
    %69 = arith.addf %67, %68 : vector<2x32x32xf32>
    %cst_42 = arith.constant dense<0xFF800000> : vector<2x32xf32>
    %70 = vector.multi_reduction <maximumf>, %69, %cst_42 [2] : vector<2x32x32xf32> to vector<2x32xf32>
    %71 = vector.shape_cast %70 : vector<2x32xf32> to vector<2x32x1xf32>
    %72 = vector.broadcast %71 : vector<2x32x1xf32> to vector<2x32x32xf32>
    %73 = arith.subf %69, %72 : vector<2x32x32xf32>
    %74 = math.exp %73 : vector<2x32x32xf32>
    %cst_43 = arith.constant dense<0.000000e+00> : vector<2x32xf32>
    %75 = vector.multi_reduction <add>, %74, %cst_43 [2] : vector<2x32x32xf32> to vector<2x32xf32>
    %76 = vector.shape_cast %75 : vector<2x32xf32> to vector<2x32x1xf32>
    %77 = vector.broadcast %76 : vector<2x32x1xf32> to vector<2x32x32xf32>
    %78 = arith.divf %74, %77 : vector<2x32x32xf32>
    "tpu.trace_start"() <{level = 10 : i32, message = "bqk,bkd->bqd"}> : () -> ()
    %cst_44 = arith.constant dense<0.000000e+00> : vector<2x32x8xf32>
    %79 = tpu.matmul %78, %64, %cst_44 {dimension_numbers = #tpu.dot_dimension_numbers<[2], [1], [1], [2], [0, 0, 0, 1, 1, 2], [0], [0]>} : vector<2x32x32xf32>, vector<2x32x8xf32>, vector<2x32x8xf32> -> vector<2x32x8xf32>
    "tpu.trace_stop"() : () -> ()
    %80 = vector.shape_cast %79 : vector<2x32x8xf32> to vector<64x8xf32>
    %c0_45 = arith.constant 0 : index
    %c0_46 = arith.constant 0 : index
    %81 = vector.load %arg19[%c0_45, %c0_46] : memref<64x32xf32, #tpu.memory_space<vmem>>, vector<64x8xf32>
    tpu.vector_store %arg19[%c0_45, %c0_46], %80 {strides = array<i32>} : memref<64x32xf32, #tpu.memory_space<vmem>>, vector<64x8xf32>,
    %82 = vector.extract_strided_slice %57 {offsets = [0, 0, 8], sizes = [2, 32, 8], strides = [1, 1, 1]} : vector<2x32x32xf32> to vector<2x32x8xf32>
    %83 = vector.extract_strided_slice %59 {offsets = [0, 0, 8], sizes = [2, 32, 8], strides = [1, 1, 1]} : vector<2x32x32xf32> to vector<2x32x8xf32>
    %84 = vector.extract_strided_slice %61 {offsets = [0, 0, 8], sizes = [2, 32, 8], strides = [1, 1, 1]} : vector<2x32x32xf32> to vector<2x32x8xf32>
    "tpu.trace_start"() <{level = 10 : i32, message = "bqd,bkd->bqk"}> : () -> ()
    %cst_47 = arith.constant dense<0.000000e+00> : vector<2x32x32xf32>
    %85 = tpu.matmul %82, %83, %cst_47 {dimension_numbers = #tpu.dot_dimension_numbers<[2], [2], [1], [1], [0, 0, 0, 1, 1, 1], [0], [0]>} : vector<2x32x8xf32>, vector<2x32x8xf32>, vector<2x32x32xf32> -> vector<2x32x32xf32>
    "tpu.trace_stop"() : () -> ()
    %cst_48 = arith.constant 0.353553385 : f32
    %86 = vector.broadcast %cst_48 : f32 to vector<2x32x32xf32>
    %87 = arith.mulf %85, %86 : vector<2x32x32xf32>
    %88 = vector.broadcast %22 : vector<1x1x32xf32> to vector<2x32x32xf32>
    %89 = arith.addf %87, %88 : vector<2x32x32xf32>
    %cst_49 = arith.constant dense<0xFF800000> : vector<2x32xf32>
    %90 = vector.multi_reduction <maximumf>, %89, %cst_49 [2] : vector<2x32x32xf32> to vector<2x32xf32>
    %91 = vector.shape_cast %90 : vector<2x32xf32> to vector<2x32x1xf32>
    %92 = vector.broadcast %91 : vector<2x32x1xf32> to vector<2x32x32xf32>
    %93 = arith.subf %89, %92 : vector<2x32x32xf32>
    %94 = math.exp %93 : vector<2x32x32xf32>
    %cst_50 = arith.constant dense<0.000000e+00> : vector<2x32xf32>
    %95 = vector.multi_reduction <add>, %94, %cst_50 [2] : vector<2x32x32xf32> to vector<2x32xf32>
    %96 = vector.shape_cast %95 : vector<2x32xf32> to vector<2x32x1xf32>
    %97 = vector.broadcast %96 : vector<2x32x1xf32> to vector<2x32x32xf32>
    %98 = arith.divf %94, %97 : vector<2x32x32xf32>
    "tpu.trace_start"() <{level = 10 : i32, message = "bqk,bkd->bqd"}> : () -> ()
    %cst_51 = arith.constant dense<0.000000e+00> : vector<2x32x8xf32>
    %99 = tpu.matmul %98, %84, %cst_51 {dimension_numbers = #tpu.dot_dimension_numbers<[2], [1], [1], [2], [0, 0, 0, 1, 1, 2], [0], [0]>} : vector<2x32x32xf32>, vector<2x32x8xf32>, vector<2x32x8xf32> -> vector<2x32x8xf32>
    "tpu.trace_stop"() : () -> ()
    %100 = vector.shape_cast %99 : vector<2x32x8xf32> to vector<64x8xf32>
    %c0_52 = arith.constant 0 : index
    %c8 = arith.constant 8 : index
    %101 = vector.load %arg19[%c0_52, %c8] : memref<64x32xf32, #tpu.memory_space<vmem>>, vector<64x8xf32>
    tpu.vector_store %arg19[%c0_52, %c8], %100 {strides = array<i32>} : memref<64x32xf32, #tpu.memory_space<vmem>>, vector<64x8xf32>,
    %102 = vector.extract_strided_slice %57 {offsets = [0, 0, 16], sizes = [2, 32, 8], strides = [1, 1, 1]} : vector<2x32x32xf32> to vector<2x32x8xf32>
    %103 = vector.extract_strided_slice %59 {offsets = [0, 0, 16], sizes = [2, 32, 8], strides = [1, 1, 1]} : vector<2x32x32xf32> to vector<2x32x8xf32>
    %104 = vector.extract_strided_slice %61 {offsets = [0, 0, 16], sizes = [2, 32, 8], strides = [1, 1, 1]} : vector<2x32x32xf32> to vector<2x32x8xf32>
    "tpu.trace_start"() <{level = 10 : i32, message = "bqd,bkd->bqk"}> : () -> ()
    %cst_53 = arith.constant dense<0.000000e+00> : vector<2x32x32xf32>
    %105 = tpu.matmul %102, %103, %cst_53 {dimension_numbers = #tpu.dot_dimension_numbers<[2], [2], [1], [1], [0, 0, 0, 1, 1, 1], [0], [0]>} : vector<2x32x8xf32>, vector<2x32x8xf32>, vector<2x32x32xf32> -> vector<2x32x32xf32>
    "tpu.trace_stop"() : () -> ()
    %cst_54 = arith.constant 0.353553385 : f32
    %106 = vector.broadcast %cst_54 : f32 to vector<2x32x32xf32>
    %107 = arith.mulf %105, %106 : vector<2x32x32xf32>
    %108 = vector.broadcast %22 : vector<1x1x32xf32> to vector<2x32x32xf32>
    %109 = arith.addf %107, %108 : vector<2x32x32xf32>
    %cst_55 = arith.constant dense<0xFF800000> : vector<2x32xf32>
    %110 = vector.multi_reduction <maximumf>, %109, %cst_55 [2] : vector<2x32x32xf32> to vector<2x32xf32>
    %111 = vector.shape_cast %110 : vector<2x32xf32> to vector<2x32x1xf32>
    %112 = vector.broadcast %111 : vector<2x32x1xf32> to vector<2x32x32xf32>
    %113 = arith.subf %109, %112 : vector<2x32x32xf32>
    %114 = math.exp %113 : vector<2x32x32xf32>
    %cst_56 = arith.constant dense<0.000000e+00> : vector<2x32xf32>
    %115 = vector.multi_reduction <add>, %114, %cst_56 [2] : vector<2x32x32xf32> to vector<2x32xf32>
    %116 = vector.shape_cast %115 : vector<2x32xf32> to vector<2x32x1xf32>
    %117 = vector.broadcast %116 : vector<2x32x1xf32> to vector<2x32x32xf32>
    %118 = arith.divf %114, %117 : vector<2x32x32xf32>
    "tpu.trace_start"() <{level = 10 : i32, message = "bqk,bkd->bqd"}> : () -> ()
    %cst_57 = arith.constant dense<0.000000e+00> : vector<2x32x8xf32>
    %119 = tpu.matmul %118, %104, %cst_57 {dimension_numbers = #tpu.dot_dimension_numbers<[2], [1], [1], [2], [0, 0, 0, 1, 1, 2], [0], [0]>} : vector<2x32x32xf32>, vector<2x32x8xf32>, vector<2x32x8xf32> -> vector<2x32x8xf32>
    "tpu.trace_stop"() : () -> ()
    %120 = vector.shape_cast %119 : vector<2x32x8xf32> to vector<64x8xf32>
    %c0_58 = arith.constant 0 : index
    %c16 = arith.constant 16 : index
    %121 = vector.load %arg19[%c0_58, %c16] : memref<64x32xf32, #tpu.memory_space<vmem>>, vector<64x8xf32>
    tpu.vector_store %arg19[%c0_58, %c16], %120 {strides = array<i32>} : memref<64x32xf32, #tpu.memory_space<vmem>>, vector<64x8xf32>,
    %122 = vector.extract_strided_slice %57 {offsets = [0, 0, 24], sizes = [2, 32, 8], strides = [1, 1, 1]} : vector<2x32x32xf32> to vector<2x32x8xf32>
    %123 = vector.extract_strided_slice %59 {offsets = [0, 0, 24], sizes = [2, 32, 8], strides = [1, 1, 1]} : vector<2x32x32xf32> to vector<2x32x8xf32>
    %124 = vector.extract_strided_slice %61 {offsets = [0, 0, 24], sizes = [2, 32, 8], strides = [1, 1, 1]} : vector<2x32x32xf32> to vector<2x32x8xf32>
    "tpu.trace_start"() <{level = 10 : i32, message = "bqd,bkd->bqk"}> : () -> ()
    %cst_59 = arith.constant dense<0.000000e+00> : vector<2x32x32xf32>
    %125 = tpu.matmul %122, %123, %cst_59 {dimension_numbers = #tpu.dot_dimension_numbers<[2], [2], [1], [1], [0, 0, 0, 1, 1, 1], [0], [0]>} : vector<2x32x8xf32>, vector<2x32x8xf32>, vector<2x32x32xf32> -> vector<2x32x32xf32>
    "tpu.trace_stop"() : () -> ()
    %cst_60 = arith.constant 0.353553385 : f32
    %126 = vector.broadcast %cst_60 : f32 to vector<2x32x32xf32>
    %127 = arith.mulf %125, %126 : vector<2x32x32xf32>
    %128 = vector.broadcast %22 : vector<1x1x32xf32> to vector<2x32x32xf32>
    %129 = arith.addf %127, %128 : vector<2x32x32xf32>
    %cst_61 = arith.constant dense<0xFF800000> : vector<2x32xf32>
    %130 = vector.multi_reduction <maximumf>, %129, %cst_61 [2] : vector<2x32x32xf32> to vector<2x32xf32>
    %131 = vector.shape_cast %130 : vector<2x32xf32> to vector<2x32x1xf32>
    %132 = vector.broadcast %131 : vector<2x32x1xf32> to vector<2x32x32xf32>
    %133 = arith.subf %129, %132 : vector<2x32x32xf32>
    %134 = math.exp %133 : vector<2x32x32xf32>
    %cst_62 = arith.constant dense<0.000000e+00> : vector<2x32xf32>
    %135 = vector.multi_reduction <add>, %134, %cst_62 [2] : vector<2x32x32xf32> to vector<2x32xf32>
    %136 = vector.shape_cast %135 : vector<2x32xf32> to vector<2x32x1xf32>
    %137 = vector.broadcast %136 : vector<2x32x1xf32> to vector<2x32x32xf32>
    %138 = arith.divf %134, %137 : vector<2x32x32xf32>
    "tpu.trace_start"() <{level = 10 : i32, message = "bqk,bkd->bqd"}> : () -> ()
    %cst_63 = arith.constant dense<0.000000e+00> : vector<2x32x8xf32>
    %139 = tpu.matmul %138, %124, %cst_63 {dimension_numbers = #tpu.dot_dimension_numbers<[2], [1], [1], [2], [0, 0, 0, 1, 1, 2], [0], [0]>} : vector<2x32x32xf32>, vector<2x32x8xf32>, vector<2x32x8xf32> -> vector<2x32x8xf32>
    "tpu.trace_stop"() : () -> ()
    %140 = vector.shape_cast %139 : vector<2x32x8xf32> to vector<64x8xf32>
    %c0_64 = arith.constant 0 : index
    %c24 = arith.constant 24 : index
    %141 = vector.load %arg19[%c0_64, %c24] : memref<64x32xf32, #tpu.memory_space<vmem>>, vector<64x8xf32>
    tpu.vector_store %arg19[%c0_64, %c24], %140 {strides = array<i32>} : memref<64x32xf32, #tpu.memory_space<vmem>>, vector<64x8xf32>,
    %c0_65 = arith.constant 0 : index
    %c0_66 = arith.constant 0 : index
    %142 = vector.load %arg19[%c0_65, %c0_66] : memref<64x32xf32, #tpu.memory_space<vmem>>, vector<64x32xf32>
    %c0_67 = arith.constant 0 : index
    %c0_68 = arith.constant 0 : index
    %c0_69 = arith.constant 0 : index
    %143 = vector.load %arg9[%c0_67, %c0_68, %c0_69] : memref<2x32x32xf32, #tpu.memory_space<vmem>>, vector<1x32x32xf32>
    %144 = vector.shape_cast %143 : vector<1x32x32xf32> to vector<32x32xf32>
    %cst_70 = arith.constant dense<0.000000e+00> : vector<64x32xf32>
    %145 = tpu.matmul %142, %144, %cst_70 {dimension_numbers = #tpu.dot_dimension_numbers<[1], [0], [0], [1], [0, 0, 1, 1], [], []>} : vector<64x32xf32>, vector<32x32xf32>, vector<64x32xf32> -> vector<64x32xf32>
    %c0_71 = arith.constant 0 : index
    %c0_72 = arith.constant 0 : index
    %c0_73 = arith.constant 0 : index
    %146 = vector.load %arg10[%c0_71, %c0_72, %c0_73] : memref<2x1x32xf32, #tpu.memory_space<vmem>>, vector<1x1x32xf32>
    %147 = vector.shape_cast %146 : vector<1x1x32xf32> to vector<1x32xf32>
    %148 = vector.broadcast %147 : vector<1x32xf32> to vector<64x32xf32>
    %149 = arith.addf %145, %148 : vector<64x32xf32>
    %150 = arith.addf %149, %20 : vector<64x32xf32>
    %c0_74 = arith.constant 0 : index
    %c0_75 = arith.constant 0 : index
    %c0_76 = arith.constant 0 : index
    %151 = vector.load %arg11[%c0_74, %c0_75, %c0_76] : memref<2x2x32xf32, #tpu.memory_space<vmem>>, vector<1x2x32xf32>
    %152 = vector.shape_cast %151 : vector<1x2x32xf32> to vector<2x32xf32>
    %153 = vector.extract_strided_slice %152 {offsets = [0, 0], sizes = [1, 32], strides = [1, 1]} : vector<2x32xf32> to vector<1x32xf32>
    %154 = vector.extract_strided_slice %152 {offsets = [1, 0], sizes = [1, 32], strides = [1, 1]} : vector<2x32xf32> to vector<1x32xf32>
    %cst_77 = arith.constant dense<0.000000e+00> : vector<64xf32>
    %155 = vector.multi_reduction <add>, %150, %cst_77 [1] : vector<64x32xf32> to vector<64xf32>
    %156 = vector.shape_cast %155 : vector<64xf32> to vector<64x1xf32>
    %cst_78 = arith.constant 3.200000e+01 : f32
    %157 = vector.broadcast %cst_78 : f32 to vector<64x1xf32>
    %158 = arith.divf %156, %157 : vector<64x1xf32>
    %159 = vector.broadcast %158 : vector<64x1xf32> to vector<64x32xf32>
    %160 = arith.subf %150, %159 : vector<64x32xf32>
    %161 = arith.mulf %160, %160 : vector<64x32xf32>
    %cst_79 = arith.constant dense<0.000000e+00> : vector<64xf32>
    %162 = vector.multi_reduction <add>, %161, %cst_79 [1] : vector<64x32xf32> to vector<64xf32>
    %163 = vector.shape_cast %162 : vector<64xf32> to vector<64x1xf32>
    %cst_80 = arith.constant 3.200000e+01 : f32
    %164 = vector.broadcast %cst_80 : f32 to vector<64x1xf32>
    %165 = arith.divf %163, %164 : vector<64x1xf32>
    %166 = vector.broadcast %158 : vector<64x1xf32> to vector<64x32xf32>
    %167 = arith.subf %150, %166 : vector<64x32xf32>
    %cst_81 = arith.constant 9.99999997E-7 : f32
    %168 = vector.broadcast %cst_81 : f32 to vector<64x1xf32>
    %169 = arith.addf %165, %168 : vector<64x1xf32>
    %170 = math.rsqrt %169 : vector<64x1xf32>
    %171 = vector.broadcast %170 : vector<64x1xf32> to vector<64x32xf32>
    %172 = arith.mulf %167, %171 : vector<64x32xf32>
    %173 = vector.broadcast %153 : vector<1x32xf32> to vector<64x32xf32>
    %174 = arith.mulf %172, %173 : vector<64x32xf32>
    %175 = vector.broadcast %154 : vector<1x32xf32> to vector<64x32xf32>
    %176 = arith.addf %174, %175 : vector<64x32xf32>
    %c0_82 = arith.constant 0 : index
    %c0_83 = arith.constant 0 : index
    %c0_84 = arith.constant 0 : index
    %177 = vector.load %arg12[%c0_82, %c0_83, %c0_84] : memref<2x32x64xf32, #tpu.memory_space<vmem>>, vector<1x32x64xf32>
    %178 = vector.shape_cast %177 : vector<1x32x64xf32> to vector<32x64xf32>
    %cst_85 = arith.constant dense<0.000000e+00> : vector<64x64xf32>
    %179 = tpu.matmul %176, %178, %cst_85 {dimension_numbers = #tpu.dot_dimension_numbers<[1], [0], [0], [1], [0, 0, 1, 1], [], []>} : vector<64x32xf32>, vector<32x64xf32>, vector<64x64xf32> -> vector<64x64xf32>
    %c0_86 = arith.constant 0 : index
    %c0_87 = arith.constant 0 : index
    %c0_88 = arith.constant 0 : index
    %180 = vector.load %arg13[%c0_86, %c0_87, %c0_88] : memref<2x1x64xf32, #tpu.memory_space<vmem>>, vector<1x1x64xf32>
    %181 = vector.shape_cast %180 : vector<1x1x64xf32> to vector<1x64xf32>
    %182 = vector.broadcast %181 : vector<1x64xf32> to vector<64x64xf32>
    %183 = arith.addf %179, %182 : vector<64x64xf32>
    %cst_89 = arith.constant 5.000000e-01 : f32
    %184 = vector.broadcast %cst_89 : f32 to vector<64x64xf32>
    %185 = arith.mulf %184, %183 : vector<64x64xf32>
    %cst_90 = arith.constant 0.707106769 : f32
    %186 = vector.broadcast %cst_90 : f32 to vector<64x64xf32>
    %187 = arith.mulf %183, %186 : vector<64x64xf32>
    %188 = math.erf %187 : vector<64x64xf32>
    %cst_91 = arith.constant 1.000000e+00 : f32
    %189 = vector.broadcast %cst_91 : f32 to vector<64x64xf32>
    %190 = arith.addf %189, %188 : vector<64x64xf32>
    %191 = arith.mulf %185, %190 : vector<64x64xf32>
    %c0_92 = arith.constant 0 : index
    %c0_93 = arith.constant 0 : index
    %c0_94 = arith.constant 0 : index
    %192 = vector.load %arg14[%c0_92, %c0_93, %c0_94] : memref<2x64x32xf32, #tpu.memory_space<vmem>>, vector<1x64x32xf32>
    %193 = vector.shape_cast %192 : vector<1x64x32xf32> to vector<64x32xf32>
    %cst_95 = arith.constant dense<0.000000e+00> : vector<64x32xf32>
    %194 = tpu.matmul %191, %193, %cst_95 {dimension_numbers = #tpu.dot_dimension_numbers<[1], [0], [0], [1], [0, 0, 1, 1], [], []>} : vector<64x64xf32>, vector<64x32xf32>, vector<64x32xf32> -> vector<64x32xf32>
    %c0_96 = arith.constant 0 : index
    %c0_97 = arith.constant 0 : index
    %c0_98 = arith.constant 0 : index
    %195 = vector.load %arg15[%c0_96, %c0_97, %c0_98] : memref<2x1x32xf32, #tpu.memory_space<vmem>>, vector<1x1x32xf32>
    %196 = vector.shape_cast %195 : vector<1x1x32xf32> to vector<1x32xf32>
    %197 = vector.broadcast %196 : vector<1x32xf32> to vector<64x32xf32>
    %198 = arith.addf %194, %197 : vector<64x32xf32>
    %199 = arith.addf %198, %150 : vector<64x32xf32>
    %c1_99 = arith.constant 1 : index
    %c0_100 = arith.constant 0 : index
    %c0_101 = arith.constant 0 : index
    %200 = vector.load %arg6[%c1_99, %c0_100, %c0_101] : memref<2x2x32xf32, #tpu.memory_space<vmem>>, vector<1x2x32xf32>
    %201 = vector.shape_cast %200 : vector<1x2x32xf32> to vector<2x32xf32>
    %202 = vector.extract_strided_slice %201 {offsets = [0, 0], sizes = [1, 32], strides = [1, 1]} : vector<2x32xf32> to vector<1x32xf32>
    %203 = vector.extract_strided_slice %201 {offsets = [1, 0], sizes = [1, 32], strides = [1, 1]} : vector<2x32xf32> to vector<1x32xf32>
    %cst_102 = arith.constant dense<0.000000e+00> : vector<64xf32>
    %204 = vector.multi_reduction <add>, %199, %cst_102 [1] : vector<64x32xf32> to vector<64xf32>
    %205 = vector.shape_cast %204 : vector<64xf32> to vector<64x1xf32>
    %cst_103 = arith.constant 3.200000e+01 : f32
    %206 = vector.broadcast %cst_103 : f32 to vector<64x1xf32>
    %207 = arith.divf %205, %206 : vector<64x1xf32>
    %208 = vector.broadcast %207 : vector<64x1xf32> to vector<64x32xf32>
    %209 = arith.subf %199, %208 : vector<64x32xf32>
    %210 = arith.mulf %209, %209 : vector<64x32xf32>
    %cst_104 = arith.constant dense<0.000000e+00> : vector<64xf32>
    %211 = vector.multi_reduction <add>, %210, %cst_104 [1] : vector<64x32xf32> to vector<64xf32>
    %212 = vector.shape_cast %211 : vector<64xf32> to vector<64x1xf32>
    %cst_105 = arith.constant 3.200000e+01 : f32
    %213 = vector.broadcast %cst_105 : f32 to vector<64x1xf32>
    %214 = arith.divf %212, %213 : vector<64x1xf32>
    %215 = vector.broadcast %207 : vector<64x1xf32> to vector<64x32xf32>
    %216 = arith.subf %199, %215 : vector<64x32xf32>
    %cst_106 = arith.constant 9.99999997E-7 : f32
    %217 = vector.broadcast %cst_106 : f32 to vector<64x1xf32>
    %218 = arith.addf %214, %217 : vector<64x1xf32>
    %219 = math.rsqrt %218 : vector<64x1xf32>
    %220 = vector.broadcast %219 : vector<64x1xf32> to vector<64x32xf32>
    %221 = arith.mulf %216, %220 : vector<64x32xf32>
    %222 = vector.broadcast %202 : vector<1x32xf32> to vector<64x32xf32>
    %223 = arith.mulf %221, %222 : vector<64x32xf32>
    %224 = vector.broadcast %203 : vector<1x32xf32> to vector<64x32xf32>
    %225 = arith.addf %223, %224 : vector<64x32xf32>
    %c1_107 = arith.constant 1 : index
    %c0_108 = arith.constant 0 : index
    %c0_109 = arith.constant 0 : index
    %226 = vector.load %arg7[%c1_107, %c0_108, %c0_109] : memref<2x32x96xf32, #tpu.memory_space<vmem>>, vector<1x32x96xf32>
    %227 = vector.shape_cast %226 : vector<1x32x96xf32> to vector<32x96xf32>
    %cst_110 = arith.constant dense<0.000000e+00> : vector<64x96xf32>
    %228 = tpu.matmul %225, %227, %cst_110 {dimension_numbers = #tpu.dot_dimension_numbers<[1], [0], [0], [1], [0, 0, 1, 1], [], []>} : vector<64x32xf32>, vector<32x96xf32>, vector<64x96xf32> -> vector<64x96xf32>
    %c1_111 = arith.constant 1 : index
    %c0_112 = arith.constant 0 : index
    %c0_113 = arith.constant 0 : index
    %229 = vector.load %arg8[%c1_111, %c0_112, %c0_113] : memref<2x1x96xf32, #tpu.memory_space<vmem>>, vector<1x1x96xf32>
    %230 = vector.shape_cast %229 : vector<1x1x96xf32> to vector<1x96xf32>
    %231 = vector.broadcast %230 : vector<1x96xf32> to vector<64x96xf32>
    %232 = arith.addf %228, %231 : vector<64x96xf32>
    %233 = vector.extract_strided_slice %232 {offsets = [0, 0], sizes = [64, 32], strides = [1, 1]} : vector<64x96xf32> to vector<64x32xf32>
    %234 = vector.shape_cast %233 : vector<64x32xf32> to vector<2x32x32xf32>
    %235 = vector.extract_strided_slice %232 {offsets = [0, 32], sizes = [64, 32], strides = [1, 1]} : vector<64x96xf32> to vector<64x32xf32>
    %236 = vector.shape_cast %235 : vector<64x32xf32> to vector<2x32x32xf32>
    %237 = vector.extract_strided_slice %232 {offsets = [0, 64], sizes = [64, 32], strides = [1, 1]} : vector<64x96xf32> to vector<64x32xf32>
    %238 = vector.shape_cast %237 : vector<64x32xf32> to vector<2x32x32xf32>
    %239 = vector.extract_strided_slice %234 {offsets = [0, 0, 0], sizes = [2, 32, 8], strides = [1, 1, 1]} : vector<2x32x32xf32> to vector<2x32x8xf32>
    %240 = vector.extract_strided_slice %236 {offsets = [0, 0, 0], sizes = [2, 32, 8], strides = [1, 1, 1]} : vector<2x32x32xf32> to vector<2x32x8xf32>
    %241 = vector.extract_strided_slice %238 {offsets = [0, 0, 0], sizes = [2, 32, 8], strides = [1, 1, 1]} : vector<2x32x32xf32> to vector<2x32x8xf32>
    "tpu.trace_start"() <{level = 10 : i32, message = "bqd,bkd->bqk"}> : () -> ()
    %cst_114 = arith.constant dense<0.000000e+00> : vector<2x32x32xf32>
    %242 = tpu.matmul %239, %240, %cst_114 {dimension_numbers = #tpu.dot_dimension_numbers<[2], [2], [1], [1], [0, 0, 0, 1, 1, 1], [0], [0]>} : vector<2x32x8xf32>, vector<2x32x8xf32>, vector<2x32x32xf32> -> vector<2x32x32xf32>
    "tpu.trace_stop"() : () -> ()
    %cst_115 = arith.constant 0.353553385 : f32
    %243 = vector.broadcast %cst_115 : f32 to vector<2x32x32xf32>
    %244 = arith.mulf %242, %243 : vector<2x32x32xf32>
    %245 = vector.broadcast %22 : vector<1x1x32xf32> to vector<2x32x32xf32>
    %246 = arith.addf %244, %245 : vector<2x32x32xf32>
    %cst_116 = arith.constant dense<0xFF800000> : vector<2x32xf32>
    %247 = vector.multi_reduction <maximumf>, %246, %cst_116 [2] : vector<2x32x32xf32> to vector<2x32xf32>
    %248 = vector.shape_cast %247 : vector<2x32xf32> to vector<2x32x1xf32>
    %249 = vector.broadcast %248 : vector<2x32x1xf32> to vector<2x32x32xf32>
    %250 = arith.subf %246, %249 : vector<2x32x32xf32>
    %251 = math.exp %250 : vector<2x32x32xf32>
    %cst_117 = arith.constant dense<0.000000e+00> : vector<2x32xf32>
    %252 = vector.multi_reduction <add>, %251, %cst_117 [2] : vector<2x32x32xf32> to vector<2x32xf32>
    %253 = vector.shape_cast %252 : vector<2x32xf32> to vector<2x32x1xf32>
    %254 = vector.broadcast %253 : vector<2x32x1xf32> to vector<2x32x32xf32>
    %255 = arith.divf %251, %254 : vector<2x32x32xf32>
    "tpu.trace_start"() <{level = 10 : i32, message = "bqk,bkd->bqd"}> : () -> ()
    %cst_118 = arith.constant dense<0.000000e+00> : vector<2x32x8xf32>
    %256 = tpu.matmul %255, %241, %cst_118 {dimension_numbers = #tpu.dot_dimension_numbers<[2], [1], [1], [2], [0, 0, 0, 1, 1, 2], [0], [0]>} : vector<2x32x32xf32>, vector<2x32x8xf32>, vector<2x32x8xf32> -> vector<2x32x8xf32>
    "tpu.trace_stop"() : () -> ()
    %257 = vector.shape_cast %256 : vector<2x32x8xf32> to vector<64x8xf32>
    %c0_119 = arith.constant 0 : index
    %c0_120 = arith.constant 0 : index
    %258 = vector.load %arg19[%c0_119, %c0_120] : memref<64x32xf32, #tpu.memory_space<vmem>>, vector<64x8xf32>
    tpu.vector_store %arg19[%c0_119, %c0_120], %257 {strides = array<i32>} : memref<64x32xf32, #tpu.memory_space<vmem>>, vector<64x8xf32>,
    %259 = vector.extract_strided_slice %234 {offsets = [0, 0, 8], sizes = [2, 32, 8], strides = [1, 1, 1]} : vector<2x32x32xf32> to vector<2x32x8xf32>
    %260 = vector.extract_strided_slice %236 {offsets = [0, 0, 8], sizes = [2, 32, 8], strides = [1, 1, 1]} : vector<2x32x32xf32> to vector<2x32x8xf32>
    %261 = vector.extract_strided_slice %238 {offsets = [0, 0, 8], sizes = [2, 32, 8], strides = [1, 1, 1]} : vector<2x32x32xf32> to vector<2x32x8xf32>
    "tpu.trace_start"() <{level = 10 : i32, message = "bqd,bkd->bqk"}> : () -> ()
    %cst_121 = arith.constant dense<0.000000e+00> : vector<2x32x32xf32>
    %262 = tpu.matmul %259, %260, %cst_121 {dimension_numbers = #tpu.dot_dimension_numbers<[2], [2], [1], [1], [0, 0, 0, 1, 1, 1], [0], [0]>} : vector<2x32x8xf32>, vector<2x32x8xf32>, vector<2x32x32xf32> -> vector<2x32x32xf32>
    "tpu.trace_stop"() : () -> ()
    %cst_122 = arith.constant 0.353553385 : f32
    %263 = vector.broadcast %cst_122 : f32 to vector<2x32x32xf32>
    %264 = arith.mulf %262, %263 : vector<2x32x32xf32>
    %265 = vector.broadcast %22 : vector<1x1x32xf32> to vector<2x32x32xf32>
    %266 = arith.addf %264, %265 : vector<2x32x32xf32>
    %cst_123 = arith.constant dense<0xFF800000> : vector<2x32xf32>
    %267 = vector.multi_reduction <maximumf>, %266, %cst_123 [2] : vector<2x32x32xf32> to vector<2x32xf32>
    %268 = vector.shape_cast %267 : vector<2x32xf32> to vector<2x32x1xf32>
    %269 = vector.broadcast %268 : vector<2x32x1xf32> to vector<2x32x32xf32>
    %270 = arith.subf %266, %269 : vector<2x32x32xf32>
    %271 = math.exp %270 : vector<2x32x32xf32>
    %cst_124 = arith.constant dense<0.000000e+00> : vector<2x32xf32>
    %272 = vector.multi_reduction <add>, %271, %cst_124 [2] : vector<2x32x32xf32> to vector<2x32xf32>
    %273 = vector.shape_cast %272 : vector<2x32xf32> to vector<2x32x1xf32>
    %274 = vector.broadcast %273 : vector<2x32x1xf32> to vector<2x32x32xf32>
    %275 = arith.divf %271, %274 : vector<2x32x32xf32>
    "tpu.trace_start"() <{level = 10 : i32, message = "bqk,bkd->bqd"}> : () -> ()
    %cst_125 = arith.constant dense<0.000000e+00> : vector<2x32x8xf32>
    %276 = tpu.matmul %275, %261, %cst_125 {dimension_numbers = #tpu.dot_dimension_numbers<[2], [1], [1], [2], [0, 0, 0, 1, 1, 2], [0], [0]>} : vector<2x32x32xf32>, vector<2x32x8xf32>, vector<2x32x8xf32> -> vector<2x32x8xf32>
    "tpu.trace_stop"() : () -> ()
    %277 = vector.shape_cast %276 : vector<2x32x8xf32> to vector<64x8xf32>
    %c0_126 = arith.constant 0 : index
    %c8_127 = arith.constant 8 : index
    %278 = vector.load %arg19[%c0_126, %c8_127] : memref<64x32xf32, #tpu.memory_space<vmem>>, vector<64x8xf32>
    tpu.vector_store %arg19[%c0_126, %c8_127], %277 {strides = array<i32>} : memref<64x32xf32, #tpu.memory_space<vmem>>, vector<64x8xf32>,
    %279 = vector.extract_strided_slice %234 {offsets = [0, 0, 16], sizes = [2, 32, 8], strides = [1, 1, 1]} : vector<2x32x32xf32> to vector<2x32x8xf32>
    %280 = vector.extract_strided_slice %236 {offsets = [0, 0, 16], sizes = [2, 32, 8], strides = [1, 1, 1]} : vector<2x32x32xf32> to vector<2x32x8xf32>
    %281 = vector.extract_strided_slice %238 {offsets = [0, 0, 16], sizes = [2, 32, 8], strides = [1, 1, 1]} : vector<2x32x32xf32> to vector<2x32x8xf32>
    "tpu.trace_start"() <{level = 10 : i32, message = "bqd,bkd->bqk"}> : () -> ()
    %cst_128 = arith.constant dense<0.000000e+00> : vector<2x32x32xf32>
    %282 = tpu.matmul %279, %280, %cst_128 {dimension_numbers = #tpu.dot_dimension_numbers<[2], [2], [1], [1], [0, 0, 0, 1, 1, 1], [0], [0]>} : vector<2x32x8xf32>, vector<2x32x8xf32>, vector<2x32x32xf32> -> vector<2x32x32xf32>
    "tpu.trace_stop"() : () -> ()
    %cst_129 = arith.constant 0.353553385 : f32
    %283 = vector.broadcast %cst_129 : f32 to vector<2x32x32xf32>
    %284 = arith.mulf %282, %283 : vector<2x32x32xf32>
    %285 = vector.broadcast %22 : vector<1x1x32xf32> to vector<2x32x32xf32>
    %286 = arith.addf %284, %285 : vector<2x32x32xf32>
    %cst_130 = arith.constant dense<0xFF800000> : vector<2x32xf32>
    %287 = vector.multi_reduction <maximumf>, %286, %cst_130 [2] : vector<2x32x32xf32> to vector<2x32xf32>
    %288 = vector.shape_cast %287 : vector<2x32xf32> to vector<2x32x1xf32>
    %289 = vector.broadcast %288 : vector<2x32x1xf32> to vector<2x32x32xf32>
    %290 = arith.subf %286, %289 : vector<2x32x32xf32>
    %291 = math.exp %290 : vector<2x32x32xf32>
    %cst_131 = arith.constant dense<0.000000e+00> : vector<2x32xf32>
    %292 = vector.multi_reduction <add>, %291, %cst_131 [2] : vector<2x32x32xf32> to vector<2x32xf32>
    %293 = vector.shape_cast %292 : vector<2x32xf32> to vector<2x32x1xf32>
    %294 = vector.broadcast %293 : vector<2x32x1xf32> to vector<2x32x32xf32>
    %295 = arith.divf %291, %294 : vector<2x32x32xf32>
    "tpu.trace_start"() <{level = 10 : i32, message = "bqk,bkd->bqd"}> : () -> ()
    %cst_132 = arith.constant dense<0.000000e+00> : vector<2x32x8xf32>
    %296 = tpu.matmul %295, %281, %cst_132 {dimension_numbers = #tpu.dot_dimension_numbers<[2], [1], [1], [2], [0, 0, 0, 1, 1, 2], [0], [0]>} : vector<2x32x32xf32>, vector<2x32x8xf32>, vector<2x32x8xf32> -> vector<2x32x8xf32>
    "tpu.trace_stop"() : () -> ()
    %297 = vector.shape_cast %296 : vector<2x32x8xf32> to vector<64x8xf32>
    %c0_133 = arith.constant 0 : index
    %c16_134 = arith.constant 16 : index
    %298 = vector.load %arg19[%c0_133, %c16_134] : memref<64x32xf32, #tpu.memory_space<vmem>>, vector<64x8xf32>
    tpu.vector_store %arg19[%c0_133, %c16_134], %297 {strides = array<i32>} : memref<64x32xf32, #tpu.memory_space<vmem>>, vector<64x8xf32>,
    %299 = vector.extract_strided_slice %234 {offsets = [0, 0, 24], sizes = [2, 32, 8], strides = [1, 1, 1]} : vector<2x32x32xf32> to vector<2x32x8xf32>
    %300 = vector.extract_strided_slice %236 {offsets = [0, 0, 24], sizes = [2, 32, 8], strides = [1, 1, 1]} : vector<2x32x32xf32> to vector<2x32x8xf32>
    %301 = vector.extract_strided_slice %238 {offsets = [0, 0, 24], sizes = [2, 32, 8], strides = [1, 1, 1]} : vector<2x32x32xf32> to vector<2x32x8xf32>
    "tpu.trace_start"() <{level = 10 : i32, message = "bqd,bkd->bqk"}> : () -> ()
    %cst_135 = arith.constant dense<0.000000e+00> : vector<2x32x32xf32>
    %302 = tpu.matmul %299, %300, %cst_135 {dimension_numbers = #tpu.dot_dimension_numbers<[2], [2], [1], [1], [0, 0, 0, 1, 1, 1], [0], [0]>} : vector<2x32x8xf32>, vector<2x32x8xf32>, vector<2x32x32xf32> -> vector<2x32x32xf32>
    "tpu.trace_stop"() : () -> ()
    %cst_136 = arith.constant 0.353553385 : f32
    %303 = vector.broadcast %cst_136 : f32 to vector<2x32x32xf32>
    %304 = arith.mulf %302, %303 : vector<2x32x32xf32>
    %305 = vector.broadcast %22 : vector<1x1x32xf32> to vector<2x32x32xf32>
    %306 = arith.addf %304, %305 : vector<2x32x32xf32>
    %cst_137 = arith.constant dense<0xFF800000> : vector<2x32xf32>
    %307 = vector.multi_reduction <maximumf>, %306, %cst_137 [2] : vector<2x32x32xf32> to vector<2x32xf32>
    %308 = vector.shape_cast %307 : vector<2x32xf32> to vector<2x32x1xf32>
    %309 = vector.broadcast %308 : vector<2x32x1xf32> to vector<2x32x32xf32>
    %310 = arith.subf %306, %309 : vector<2x32x32xf32>
    %311 = math.exp %310 : vector<2x32x32xf32>
    %cst_138 = arith.constant dense<0.000000e+00> : vector<2x32xf32>
    %312 = vector.multi_reduction <add>, %311, %cst_138 [2] : vector<2x32x32xf32> to vector<2x32xf32>
    %313 = vector.shape_cast %312 : vector<2x32xf32> to vector<2x32x1xf32>
    %314 = vector.broadcast %313 : vector<2x32x1xf32> to vector<2x32x32xf32>
    %315 = arith.divf %311, %314 : vector<2x32x32xf32>
    "tpu.trace_start"() <{level = 10 : i32, message = "bqk,bkd->bqd"}> : () -> ()
    %cst_139 = arith.constant dense<0.000000e+00> : vector<2x32x8xf32>
    %316 = tpu.matmul %315, %301, %cst_139 {dimension_numbers = #tpu.dot_dimension_numbers<[2], [1], [1], [2], [0, 0, 0, 1, 1, 2], [0], [0]>} : vector<2x32x32xf32>, vector<2x32x8xf32>, vector<2x32x8xf32> -> vector<2x32x8xf32>
    "tpu.trace_stop"() : () -> ()
    %317 = vector.shape_cast %316 : vector<2x32x8xf32> to vector<64x8xf32>
    %c0_140 = arith.constant 0 : index
    %c24_141 = arith.constant 24 : index
    %318 = vector.load %arg19[%c0_140, %c24_141] : memref<64x32xf32, #tpu.memory_space<vmem>>, vector<64x8xf32>
    tpu.vector_store %arg19[%c0_140, %c24_141], %317 {strides = array<i32>} : memref<64x32xf32, #tpu.memory_space<vmem>>, vector<64x8xf32>,
    %c0_142 = arith.constant 0 : index
    %c0_143 = arith.constant 0 : index
    %319 = vector.load %arg19[%c0_142, %c0_143] : memref<64x32xf32, #tpu.memory_space<vmem>>, vector<64x32xf32>
    %c1_144 = arith.constant 1 : index
    %c0_145 = arith.constant 0 : index
    %c0_146 = arith.constant 0 : index
    %320 = vector.load %arg9[%c1_144, %c0_145, %c0_146] : memref<2x32x32xf32, #tpu.memory_space<vmem>>, vector<1x32x32xf32>
    %321 = vector.shape_cast %320 : vector<1x32x32xf32> to vector<32x32xf32>
    %cst_147 = arith.constant dense<0.000000e+00> : vector<64x32xf32>
    %322 = tpu.matmul %319, %321, %cst_147 {dimension_numbers = #tpu.dot_dimension_numbers<[1], [0], [0], [1], [0, 0, 1, 1], [], []>} : vector<64x32xf32>, vector<32x32xf32>, vector<64x32xf32> -> vector<64x32xf32>
    %c1_148 = arith.constant 1 : index
    %c0_149 = arith.constant 0 : index
    %c0_150 = arith.constant 0 : index
    %323 = vector.load %arg10[%c1_148, %c0_149, %c0_150] : memref<2x1x32xf32, #tpu.memory_space<vmem>>, vector<1x1x32xf32>
    %324 = vector.shape_cast %323 : vector<1x1x32xf32> to vector<1x32xf32>
    %325 = vector.broadcast %324 : vector<1x32xf32> to vector<64x32xf32>
    %326 = arith.addf %322, %325 : vector<64x32xf32>
    %327 = arith.addf %326, %199 : vector<64x32xf32>
    %c1_151 = arith.constant 1 : index
    %c0_152 = arith.constant 0 : index
    %c0_153 = arith.constant 0 : index
    %328 = vector.load %arg11[%c1_151, %c0_152, %c0_153] : memref<2x2x32xf32, #tpu.memory_space<vmem>>, vector<1x2x32xf32>
    %329 = vector.shape_cast %328 : vector<1x2x32xf32> to vector<2x32xf32>
    %330 = vector.extract_strided_slice %329 {offsets = [0, 0], sizes = [1, 32], strides = [1, 1]} : vector<2x32xf32> to vector<1x32xf32>
    %331 = vector.extract_strided_slice %329 {offsets = [1, 0], sizes = [1, 32], strides = [1, 1]} : vector<2x32xf32> to vector<1x32xf32>
    %cst_154 = arith.constant dense<0.000000e+00> : vector<64xf32>
    %332 = vector.multi_reduction <add>, %327, %cst_154 [1] : vector<64x32xf32> to vector<64xf32>
    %333 = vector.shape_cast %332 : vector<64xf32> to vector<64x1xf32>
    %cst_155 = arith.constant 3.200000e+01 : f32
    %334 = vector.broadcast %cst_155 : f32 to vector<64x1xf32>
    %335 = arith.divf %333, %334 : vector<64x1xf32>
    %336 = vector.broadcast %335 : vector<64x1xf32> to vector<64x32xf32>
    %337 = arith.subf %327, %336 : vector<64x32xf32>
    %338 = arith.mulf %337, %337 : vector<64x32xf32>
    %cst_156 = arith.constant dense<0.000000e+00> : vector<64xf32>
    %339 = vector.multi_reduction <add>, %338, %cst_156 [1] : vector<64x32xf32> to vector<64xf32>
    %340 = vector.shape_cast %339 : vector<64xf32> to vector<64x1xf32>
    %cst_157 = arith.constant 3.200000e+01 : f32
    %341 = vector.broadcast %cst_157 : f32 to vector<64x1xf32>
    %342 = arith.divf %340, %341 : vector<64x1xf32>
    %343 = vector.broadcast %335 : vector<64x1xf32> to vector<64x32xf32>
    %344 = arith.subf %327, %343 : vector<64x32xf32>
    %cst_158 = arith.constant 9.99999997E-7 : f32
    %345 = vector.broadcast %cst_158 : f32 to vector<64x1xf32>
    %346 = arith.addf %342, %345 : vector<64x1xf32>
    %347 = math.rsqrt %346 : vector<64x1xf32>
    %348 = vector.broadcast %347 : vector<64x1xf32> to vector<64x32xf32>
    %349 = arith.mulf %344, %348 : vector<64x32xf32>
    %350 = vector.broadcast %330 : vector<1x32xf32> to vector<64x32xf32>
    %351 = arith.mulf %349, %350 : vector<64x32xf32>
    %352 = vector.broadcast %331 : vector<1x32xf32> to vector<64x32xf32>
    %353 = arith.addf %351, %352 : vector<64x32xf32>
    %c1_159 = arith.constant 1 : index
    %c0_160 = arith.constant 0 : index
    %c0_161 = arith.constant 0 : index
    %354 = vector.load %arg12[%c1_159, %c0_160, %c0_161] : memref<2x32x64xf32, #tpu.memory_space<vmem>>, vector<1x32x64xf32>
    %355 = vector.shape_cast %354 : vector<1x32x64xf32> to vector<32x64xf32>
    %cst_162 = arith.constant dense<0.000000e+00> : vector<64x64xf32>
    %356 = tpu.matmul %353, %355, %cst_162 {dimension_numbers = #tpu.dot_dimension_numbers<[1], [0], [0], [1], [0, 0, 1, 1], [], []>} : vector<64x32xf32>, vector<32x64xf32>, vector<64x64xf32> -> vector<64x64xf32>
    %c1_163 = arith.constant 1 : index
    %c0_164 = arith.constant 0 : index
    %c0_165 = arith.constant 0 : index
    %357 = vector.load %arg13[%c1_163, %c0_164, %c0_165] : memref<2x1x64xf32, #tpu.memory_space<vmem>>, vector<1x1x64xf32>
    %358 = vector.shape_cast %357 : vector<1x1x64xf32> to vector<1x64xf32>
    %359 = vector.broadcast %358 : vector<1x64xf32> to vector<64x64xf32>
    %360 = arith.addf %356, %359 : vector<64x64xf32>
    %cst_166 = arith.constant 5.000000e-01 : f32
    %361 = vector.broadcast %cst_166 : f32 to vector<64x64xf32>
    %362 = arith.mulf %361, %360 : vector<64x64xf32>
    %cst_167 = arith.constant 0.707106769 : f32
    %363 = vector.broadcast %cst_167 : f32 to vector<64x64xf32>
    %364 = arith.mulf %360, %363 : vector<64x64xf32>
    %365 = math.erf %364 : vector<64x64xf32>
    %cst_168 = arith.constant 1.000000e+00 : f32
    %366 = vector.broadcast %cst_168 : f32 to vector<64x64xf32>
    %367 = arith.addf %366, %365 : vector<64x64xf32>
    %368 = arith.mulf %362, %367 : vector<64x64xf32>
    %c1_169 = arith.constant 1 : index
    %c0_170 = arith.constant 0 : index
    %c0_171 = arith.constant 0 : index
    %369 = vector.load %arg14[%c1_169, %c0_170, %c0_171] : memref<2x64x32xf32, #tpu.memory_space<vmem>>, vector<1x64x32xf32>
    %370 = vector.shape_cast %369 : vector<1x64x32xf32> to vector<64x32xf32>
    %cst_172 = arith.constant dense<0.000000e+00> : vector<64x32xf32>
    %371 = tpu.matmul %368, %370, %cst_172 {dimension_numbers = #tpu.dot_dimension_numbers<[1], [0], [0], [1], [0, 0, 1, 1], [], []>} : vector<64x64xf32>, vector<64x32xf32>, vector<64x32xf32> -> vector<64x32xf32>
    %c1_173 = arith.constant 1 : index
    %c0_174 = arith.constant 0 : index
    %c0_175 = arith.constant 0 : index
    %372 = vector.load %arg15[%c1_173, %c0_174, %c0_175] : memref<2x1x32xf32, #tpu.memory_space<vmem>>, vector<1x1x32xf32>
    %373 = vector.shape_cast %372 : vector<1x1x32xf32> to vector<1x32xf32>
    %374 = vector.broadcast %373 : vector<1x32xf32> to vector<64x32xf32>
    %375 = arith.addf %371, %374 : vector<64x32xf32>
    %376 = arith.addf %375, %327 : vector<64x32xf32>
    %c0_176 = arith.constant 0 : index
    %c0_177 = arith.constant 0 : index
    %377 = vector.load %arg16[%c0_176, %c0_177] : memref<2x32xf32, #tpu.memory_space<vmem>>, vector<2x32xf32>
    %378 = vector.extract_strided_slice %377 {offsets = [0, 0], sizes = [1, 32], strides = [1, 1]} : vector<2x32xf32> to vector<1x32xf32>
    %379 = vector.extract_strided_slice %377 {offsets = [1, 0], sizes = [1, 32], strides = [1, 1]} : vector<2x32xf32> to vector<1x32xf32>
    %cst_178 = arith.constant dense<0.000000e+00> : vector<64xf32>
    %380 = vector.multi_reduction <add>, %376, %cst_178 [1] : vector<64x32xf32> to vector<64xf32>
    %381 = vector.shape_cast %380 : vector<64xf32> to vector<64x1xf32>
    %cst_179 = arith.constant 3.200000e+01 : f32
    %382 = vector.broadcast %cst_179 : f32 to vector<64x1xf32>
    %383 = arith.divf %381, %382 : vector<64x1xf32>
    %384 = vector.broadcast %383 : vector<64x1xf32> to vector<64x32xf32>
    %385 = arith.subf %376, %384 : vector<64x32xf32>
    %386 = arith.mulf %385, %385 : vector<64x32xf32>
    %cst_180 = arith.constant dense<0.000000e+00> : vector<64xf32>
    %387 = vector.multi_reduction <add>, %386, %cst_180 [1] : vector<64x32xf32> to vector<64xf32>
    %388 = vector.shape_cast %387 : vector<64xf32> to vector<64x1xf32>
    %cst_181 = arith.constant 3.200000e+01 : f32
    %389 = vector.broadcast %cst_181 : f32 to vector<64x1xf32>
    %390 = arith.divf %388, %389 : vector<64x1xf32>
    %391 = vector.broadcast %383 : vector<64x1xf32> to vector<64x32xf32>
    %392 = arith.subf %376, %391 : vector<64x32xf32>
    %cst_182 = arith.constant 9.99999997E-7 : f32
    %393 = vector.broadcast %cst_182 : f32 to vector<64x1xf32>
    %394 = arith.addf %390, %393 : vector<64x1xf32>
    %395 = math.rsqrt %394 : vector<64x1xf32>
    %396 = vector.broadcast %395 : vector<64x1xf32> to vector<64x32xf32>
    %397 = arith.mulf %392, %396 : vector<64x32xf32>
    %398 = vector.broadcast %378 : vector<1x32xf32> to vector<64x32xf32>
    %399 = arith.mulf %397, %398 : vector<64x32xf32>
    %400 = vector.broadcast %379 : vector<1x32xf32> to vector<64x32xf32>
    %401 = arith.addf %399, %400 : vector<64x32xf32>
    %c0_183 = arith.constant 0 : index
    %c0_184 = arith.constant 0 : index
    %402 = vector.load %arg17[%c0_183, %c0_184] : memref<64x32xf32, #tpu.memory_space<vmem>>, vector<64x32xf32>
    tpu.vector_store %arg17[%c0_183, %c0_184], %401 {strides = array<i32>} : memref<64x32xf32, #tpu.memory_space<vmem>>, vector<64x32xf32>,
    return
  }
}

</mosaic_0001>

<llo_original>
// kernel: vit_transformer_pallas.1
$region0: #{vit_transformer_pallas.1}
  #allocation0 [shape = 'u32[]', space=smem, size = 0x4, offset = 0x4, fixed_abs, tag = 'smem constant byte address 0x4 - core index']
  #allocation1 [shape = 'u32[144,128]{1,0:T(1,128)}', space=vmem, size = 0x12000, scoped, tag = 'internal scratch']
  #allocation2 [shape = 'f32[64,32]{1,0:T(8,128)}', space=vmem, size = 0x8000, scoped, tag = 'scratch operand']
  #allocation3 [shape = 'f32[64,32]{1,0:T(8,128)}', space=vmem, size = 0x8000, scoped, tag = 'scratch operand']
  %s0 = inlined_call_operand.vmem [shape: f32[32,48], index: 0, kind: input, shape index: {}]
  %s1 = inlined_call_operand.vmem [shape: f32[48,32], index: 1, kind: input, shape index: {}]
  %s2 = inlined_call_operand.vmem [shape: f32[1,32], index: 2, kind: input, shape index: {}]
  %s3 = inlined_call_operand.vmem [shape: f32[1,32], index: 3, kind: input, shape index: {}]
  %s4 = inlined_call_operand.vmem [shape: f32[16,32], index: 4, kind: input, shape index: {}]
  %s5 = inlined_call_operand.vmem [shape: f32[1,32], index: 5, kind: input, shape index: {}]
  %s6 = inlined_call_operand.vmem [shape: f32[2,2,32], index: 6, kind: input, shape index: {}]
  %s7 = inlined_call_operand.vmem [shape: f32[2,32,96], index: 7, kind: input, shape index: {}]
  %s8 = inlined_call_operand.vmem [shape: f32[2,1,96], index: 8, kind: input, shape index: {}]
  %s9 = inlined_call_operand.vmem [shape: f32[2,32,32], index: 9, kind: input, shape index: {}]
  %s10 = inlined_call_operand.vmem [shape: f32[2,1,32], index: 10, kind: input, shape index: {}]
  %s11 = inlined_call_operand.vmem [shape: f32[2,2,32], index: 11, kind: input, shape index: {}]
  %s12 = inlined_call_operand.vmem [shape: f32[2,32,64], index: 12, kind: input, shape index: {}]
  %s13 = inlined_call_operand.vmem [shape: f32[2,1,64], index: 13, kind: input, shape index: {}]
  %s14 = inlined_call_operand.vmem [shape: f32[2,64,32], index: 14, kind: input, shape index: {}]
  %s15 = inlined_call_operand.vmem [shape: f32[2,1,32], index: 15, kind: input, shape index: {}]
  %s16 = inlined_call_operand.vmem [shape: f32[2,32], index: 16, kind: input, shape index: {}]
  %s17 = inlined_call_operand.vmem [shape: f32[64,32], index: 17, kind: output, shape index: {}]
  %s18 = sld [smem:[#allocation0]]
  $region78: #{vit_transformer_pallas.1} parent=0
    _
  %s20 = ssub.s32 1, %s18
  %s21 = scalar_select 0, %s20, %s18
  // Predicated region
  $region2: #{vit_transformer_pallas.1} parent=0 // pred_check
    _
  $region3: #{vit_transformer_pallas.1} parent=0 // pred_check_branch
    %23 = sbr.rel (0) target = $region5
  $region4: #{vit_transformer_pallas.1} parent=0 // pred_region
    _
  $region5: #{vit_transformer_pallas.1} parent=0 // pred_fallthru
    _
  // Predicated region
  $region6: #{vit_transformer_pallas.1} parent=0 // pred_check
    _
  $region7: #{vit_transformer_pallas.1} parent=0 // pred_check_branch
    %25 = sbr.rel (0) target = $region9
  $region8: #{vit_transformer_pallas.1} parent=0 // pred_region
    _
  $region9: #{vit_transformer_pallas.1} parent=0 // pred_fallthru
    _
  // Predicated region
  $region10: #{vit_transformer_pallas.1} parent=0 // pred_check
    _
  $region11: #{vit_transformer_pallas.1} parent=0 // pred_check_branch
    %27 = sbr.rel (0) target = $region13
  $region12: #{vit_transformer_pallas.1} parent=0 // pred_region
    _
  $region13: #{vit_transformer_pallas.1} parent=0 // pred_fallthru
    _
  // Predicated region
  $region14: #{vit_transformer_pallas.1} parent=0 // pred_check
    _
  $region15: #{vit_transformer_pallas.1} parent=0 // pred_check_branch
    %29 = sbr.rel (0) target = $region17
  $region16: #{vit_transformer_pallas.1} parent=0 // pred_region
    _
  $region17: #{vit_transformer_pallas.1} parent=0 // pred_fallthru
    _
  // Predicated region
  $region18: #{vit_transformer_pallas.1} parent=0 // pred_check
    _
  $region19: #{vit_transformer_pallas.1} parent=0 // pred_check_branch
    %31 = sbr.rel (0) target = $region21
  $region20: #{vit_transformer_pallas.1} parent=0 // pred_region
    _
  $region21: #{vit_transformer_pallas.1} parent=0 // pred_fallthru
    _
  // Predicated region
  $region22: #{vit_transformer_pallas.1} parent=0 // pred_check
    _
  $region23: #{vit_transformer_pallas.1} parent=0 // pred_check_branch
    %33 = sbr.rel (0) target = $region25
  $region24: #{vit_transformer_pallas.1} parent=0 // pred_region
    _
  $region25: #{vit_transformer_pallas.1} parent=0 // pred_fallthru
    _
  // Predicated region
  $region26: #{vit_transformer_pallas.1} parent=0 // pred_check
    _
  $region27: #{vit_transformer_pallas.1} parent=0 // pred_check_branch
    %35 = sbr.rel (0) target = $region29
  $region28: #{vit_transformer_pallas.1} parent=0 // pred_region
    _
  $region29: #{vit_transformer_pallas.1} parent=0 // pred_fallthru
    _
  // Predicated region
  $region30: #{vit_transformer_pallas.1} parent=0 // pred_check
    _
  $region31: #{vit_transformer_pallas.1} parent=0 // pred_check_branch
    %37 = sbr.rel (0) target = $region33
  $region32: #{vit_transformer_pallas.1} parent=0 // pred_region
    _
  $region33: #{vit_transformer_pallas.1} parent=0 // pred_fallthru
    _
  // Predicated region
  $region34: #{vit_transformer_pallas.1} parent=0 // pred_check
    _
  $region35: #{vit_transformer_pallas.1} parent=0 // pred_check_branch
    %39 = sbr.rel (0) target = $region37
  $region36: #{vit_transformer_pallas.1} parent=0 // pred_region
    _
  $region37: #{vit_transformer_pallas.1} parent=0 // pred_fallthru
    _
  // Predicated region
  $region38: #{vit_transformer_pallas.1} parent=0 // pred_check
    _
  $region39: #{vit_transformer_pallas.1} parent=0 // pred_check_branch
    %41 = sbr.rel (0) target = $region41
  $region40: #{vit_transformer_pallas.1} parent=0 // pred_region
    _
  $region41: #{vit_transformer_pallas.1} parent=0 // pred_fallthru
    _
  // Predicated region
  $region42: #{vit_transformer_pallas.1} parent=0 // pred_check
    _
  $region43: #{vit_transformer_pallas.1} parent=0 // pred_check_branch
    %43 = sbr.rel (0) target = $region45
  $region44: #{vit_transformer_pallas.1} parent=0 // pred_region
    _
  $region45: #{vit_transformer_pallas.1} parent=0 // pred_fallthru
    _
  // Predicated region
  $region46: #{vit_transformer_pallas.1} parent=0 // pred_check
    _
  $region47: #{vit_transformer_pallas.1} parent=0 // pred_check_branch
    %45 = sbr.rel (0) target = $region49
  $region48: #{vit_transformer_pallas.1} parent=0 // pred_region
    _
  $region49: #{vit_transformer_pallas.1} parent=0 // pred_fallthru
    _
  // Predicated region
  $region50: #{vit_transformer_pallas.1} parent=0 // pred_check
    _
  $region51: #{vit_transformer_pallas.1} parent=0 // pred_check_branch
    %47 = sbr.rel (0) target = $region53
  $region52: #{vit_transformer_pallas.1} parent=0 // pred_region
    _
  $region53: #{vit_transformer_pallas.1} parent=0 // pred_fallthru
    _
  // Predicated region
  $region54: #{vit_transformer_pallas.1} parent=0 // pred_check
    _
  $region55: #{vit_transformer_pallas.1} parent=0 // pred_check_branch
    %49 = sbr.rel (0) target = $region57
  $region56: #{vit_transformer_pallas.1} parent=0 // pred_region
    _
  $region57: #{vit_transformer_pallas.1} parent=0 // pred_fallthru
    _
  // Predicated region
  $region58: #{vit_transformer_pallas.1} parent=0 // pred_check
    _
  $region59: #{vit_transformer_pallas.1} parent=0 // pred_check_branch
    %51 = sbr.rel (0) target = $region61
  $region60: #{vit_transformer_pallas.1} parent=0 // pred_region
    _
  $region61: #{vit_transformer_pallas.1} parent=0 // pred_fallthru
    _
  // Predicated region
  $region62: #{vit_transformer_pallas.1} parent=0 // pred_check
    _
  $region63: #{vit_transformer_pallas.1} parent=0 // pred_check_branch
    %53 = sbr.rel (0) target = $region65
  $region64: #{vit_transformer_pallas.1} parent=0 // pred_region
    _
  $region65: #{vit_transformer_pallas.1} parent=0 // pred_fallthru
    _
  // Predicated region
  $region66: #{vit_transformer_pallas.1} parent=0 // pred_check
    _
  $region67: #{vit_transformer_pallas.1} parent=0 // pred_check_branch
    %55 = sbr.rel (0) target = $region69
  $region68: #{vit_transformer_pallas.1} parent=0 // pred_region
    _
  $region69: #{vit_transformer_pallas.1} parent=0 // pred_fallthru
    _
  %v56 = vld [vmem:[%s0] sm:$0xff]
  %v57 = vld [vmem:[%s0 + $0x8] sm:$0xff]
  %v58 = vld [vmem:[%s0 + $0x10] sm:$0xff]
  %v59 = vld [vmem:[%s0 + $0x18] sm:$0xff]
  %v60 = vld [vmem:[%s1] sm:$0xff]
  %v61 = vld [vmem:[%s1 + $0x8] sm:$0xff]
  %v62 = vld [vmem:[%s1 + $0x10] sm:$0xff]
  %v63 = vld [vmem:[%s1 + $0x18] sm:$0xff]
  %v64 = vld [vmem:[%s1 + $0x20] sm:$0xff]
  %v65 = vld [vmem:[%s1 + $0x28] sm:$0xff]
  %v66 = vld [vmem:[%s2] sm:$0x1]
  %v68 = vlaneseq
  %v69 = vshrl.u32 %v68, 7
  %v70 = vsub.s32 0, %v69
  %v71 = vrot.slane %v66, %v70
  %vm73 = vcmask 392192
  %v75 = vsel %vm73, %v56, 0
  %v78 = vsel %vm73, %v57, 0
  %v81 = vsel %vm73, %v58, 0
  %v84 = vsel %vm73, %v59, 0
  %86 = vmatprep.subr.mxu0 0.0
  %87 = vmatpush1.msra.mxu0 %v60
  %88 = vmatprep.subr.mxu0 0.0
  %89 = vmatpush1.msra.mxu0 %v61
  %90 = vmatprep.subr.mxu0 0.0
  %91 = vmatpush1.msra.mxu0 %v62
  %92 = vmatprep.subr.mxu0 0.0
  %93 = vmatpush1.msra.mxu0 %v63
  %94 = vmatprep.subr.mxu0 0.0
  %95 = vmatpush1.msra.mxu0 %v64
  %96 = vmatprep.subr.mxu0 0.0
  %97 = vmatpush1.msra.mxu0 %v65
  %98 = vmatprep.subr.mxu0 0.0
  %99 = vmatpush1.msra.mxu0 0.0
  %100 = vmatprep.subr.mxu0 0.0
  %101 = vmatpush1.msra.mxu0 0.0
  %102 = vmatprep.subr.mxu0 0.0
  %103 = vmatpush1.msra.mxu0 0.0
  %104 = vmatprep.subr.mxu0 0.0
  %105 = vmatpush1.msra.mxu0 0.0
  %106 = vmatprep.subr.mxu0 0.0
  %107 = vmatpush1.msra.mxu0 0.0
  %108 = vmatprep.subr.mxu0 0.0
  %109 = vmatpush1.msra.mxu0 0.0
  %110 = vmatprep.subr.mxu0 0.0
  %111 = vmatpush1.msra.mxu0 0.0
  %112 = vmatprep.subr.mxu0 0.0
  %113 = vmatpush1.msra.mxu0 0.0
  %114 = vmatprep.subr.mxu0 0.0
  %115 = vmatpush1.msra.mxu0 0.0
  %116 = vmatprep.subr.mxu0 0.0
  %117 = vmatpush1.msra.mxu0 0.0
  %118 = vmatprep.subr.mxu0 0.0
  %119 = vmatpush1.msra.mxu0 0.0
  %120 = vmatprep.subr.mxu0 0.0
  %121 = vmatpush1.msra.mxu0 0.0
  %122 = vmatprep.subr.mxu0 0.0
  %123 = vmatpush1.msra.mxu0 0.0
  %124 = vmatprep.subr.mxu0 0.0
  %125 = vmatpush1.msra.mxu0 0.0
  %126 = vmatprep.subr.mxu0 0.0
  %127 = vmatpush1.msra.mxu0 0.0
  %128 = vmatprep.subr.mxu0 0.0
  %129 = vmatpush1.msra.mxu0 0.0
  %130 = vmatprep.subr.mxu0 0.0
  %131 = vmatpush1.msra.mxu0 0.0
  %132 = vmatprep.subr.mxu0 0.0
  %133 = vmatpush1.msra.mxu0 0.0
  %134 = vmatprep.subr.mxu0 0.0
  %135 = vmatpush1.msra.mxu0 0.0
  %136 = vmatprep.subr.mxu0 0.0
  %137 = vmatpush1.msra.mxu0 0.0
  %138 = vmatprep.subr.mxu0 0.0
  %139 = vmatpush1.msra.mxu0 0.0
  %140 = vmatprep.subr.mxu0 0.0
  %141 = vmatpush1.msra.mxu0 0.0
  %142 = vmatprep.subr.mxu0 0.0
  %143 = vmatpush1.msra.mxu0 0.0
  %144 = vmatprep.subr.mxu0 0.0
  %145 = vmatpush1.msra.mxu0 0.0
  %146 = vmatprep.subr.mxu0 0.0
  %147 = vmatpush1.msra.mxu0 0.0
  %148 = vmatprep.subr.mxu0 0.0
  %149 = vmatpush1.msra.mxu0 0.0
  %150 = vmatprep.mubr.f32.mxu0 0.0
  %151 = vmatmul.mubr.f32.gmra.mrb[0].mxu0 %v75
  %v152 = vpop.f32.mrb[0].mxu0
  %v153 = vadd.f32 %v71, %v152
  %v154 = vpop.f32.mrb[0].mxu0
  %155 = vmatprep.mubr.f32.mxu0 0.0
  %156 = vmatmul.mubr.f32.gmra.mrb[0].mxu0 %v78
  %v157 = vpop.f32.mrb[0].mxu0
  %v158 = vadd.f32 %v71, %v157
  %v159 = vpop.f32.mrb[0].mxu0
  %160 = vmatprep.mubr.f32.mxu0 0.0
  %161 = vmatmul.mubr.f32.gmra.mrb[0].mxu0 %v81
  %v162 = vpop.f32.mrb[0].mxu0
  %v163 = vadd.f32 %v71, %v162
  %v164 = vpop.f32.mrb[0].mxu0
  %165 = vmatprep.mubr.f32.mxu0 0.0
  %166 = vmatmul.mubr.f32.gmra.mrb[0].mxu0 %v84
  %v167 = vpop.f32.mrb[0].mxu0
  %v168 = vadd.f32 %v71, %v167
  %v169 = vpop.f32.mrb[0].mxu0
  %170 = vdwg.mxu0
  %vm171 = vcmask 261120
  %172 = vst.msk [vmem:[#allocation2] sm:$0xff] %vm171, 0.0
  %173 = vst.msk [vmem:[#allocation2 + $0x8] sm:$0xff] %vm171, 0.0
  %174 = vst.msk [vmem:[#allocation2 + $0x10] sm:$0xff] %vm171, 0.0
  %175 = vst.msk [vmem:[#allocation2 + $0x18] sm:$0xff] %vm171, 0.0
  %176 = vst.msk [vmem:[#allocation2 + $0x20] sm:$0xff] %vm171, 0.0
  %177 = vst.msk [vmem:[#allocation2 + $0x28] sm:$0xff] %vm171, 0.0
  %178 = vst.msk [vmem:[#allocation2 + $0x30] sm:$0xff] %vm171, 0.0
  %179 = vst.msk [vmem:[#allocation2 + $0x38] sm:$0xff] %vm171, 0.0
  %v180 = vld [vmem:[%s3] sm:$0x1]
  %vm181 = vcmask 253952
  %182 = vst.msk [vmem:[#allocation2] sm:$0x1] %vm181, %v180
  %v183 = vld [vmem:[%s4] sm:$0xff]
  %v184 = vld [vmem:[%s4 + $0x8] sm:$0xff]
  %v185 = vadd.f32 %v153, %v183
  %v186 = vadd.f32 %v158, %v184
  %187 = vst.msk [vmem:[#allocation2 + $0x1] sm:$0xff] %vm171, %v185
  %188 = vst.msk [vmem:[#allocation2 + $0x9] sm:$0xff] %vm171, %v186
  %v189 = vld [vmem:[%s3] sm:$0x1]
  %190 = vst.msk [vmem:[#allocation2 + $0x20] sm:$0x1] %vm181, %v189
  %v191 = vld [vmem:[%s4] sm:$0xff]
  %v192 = vld [vmem:[%s4 + $0x8] sm:$0xff]
  %v193 = vadd.f32 %v163, %v191
  %v194 = vadd.f32 %v168, %v192
  %195 = vst.msk [vmem:[#allocation2 + $0x21] sm:$0xff] %vm171, %v193
  %196 = vst.msk [vmem:[#allocation2 + $0x29] sm:$0xff] %vm171, %v194
  %v197 = vld [vmem:[#allocation2] sm:$0xff]
  %v198 = vld [vmem:[#allocation2 + $0x8] sm:$0xff]
  %v199 = vld [vmem:[#allocation2 + $0x10] sm:$0xff]
  %v200 = vld [vmem:[#allocation2 + $0x18] sm:$0xff]
  %v201 = vld [vmem:[#allocation2 + $0x20] sm:$0xff]
  %v202 = vld [vmem:[#allocation2 + $0x28] sm:$0xff]
  %v203 = vld [vmem:[#allocation2 + $0x30] sm:$0xff]
  %v204 = vld [vmem:[#allocation2 + $0x38] sm:$0xff]
  %v205 = vld [vmem:[%s5] sm:$0x1]
  %v206 = vld [vmem:[%s6] sm:$0x3]
  %v207 = vsel %vm171, %v197, 0.0
  %208 = vadd.xlane.f32.xlu0 %v207
  %v209 = vpop.xlane.xlu0 %208
  %v210 = vsel %vm171, %v198, 0.0
  %211 = vadd.xlane.f32.xlu0 %v210
  %v212 = vpop.xlane.xlu0 %211
  %v213 = vsel %vm171, %v199, 0.0
  %214 = vadd.xlane.f32.xlu0 %v213
  %v215 = vpop.xlane.xlu0 %214
  %v216 = vsel %vm171, %v200, 0.0
  %217 = vadd.xlane.f32.xlu0 %v216
  %v218 = vpop.xlane.xlu0 %217
  %v219 = vsel %vm171, %v201, 0.0
  %220 = vadd.xlane.f32.xlu0 %v219
  %v221 = vpop.xlane.xlu0 %220
  %v222 = vsel %vm171, %v202, 0.0
  %223 = vadd.xlane.f32.xlu0 %v222
  %v224 = vpop.xlane.xlu0 %223
  %v225 = vsel %vm171, %v203, 0.0
  %226 = vadd.xlane.f32.xlu0 %v225
  %v227 = vpop.xlane.xlu0 %226
  %v228 = vsel %vm171, %v204, 0.0
  %229 = vadd.xlane.f32.xlu0 %v228
  %v230 = vpop.xlane.xlu0 %229
  %v231 = vrcp.pop 32.0
  %v232 = vmul.f32 %v209, %v231
  %v233 = vmul.f32 %v212, %v231
  %v234 = vmul.f32 %v215, %v231
  %v235 = vmul.f32 %v218, %v231
  %v236 = vmul.f32 %v221, %v231
  %v237 = vmul.f32 %v224, %v231
  %v238 = vmul.f32 %v227, %v231
  %v239 = vmul.f32 %v230, %v231
  %v240 = vsub.f32 %v197, %v232
  %v241 = vsub.f32 %v198, %v233
  %v242 = vsub.f32 %v199, %v234
  %v243 = vsub.f32 %v200, %v235
  %v244 = vsub.f32 %v201, %v236
  %v245 = vsub.f32 %v202, %v237
  %v246 = vsub.f32 %v203, %v238
  %v247 = vsub.f32 %v204, %v239
  %v248 = vmul.f32 %v240, %v240
  %v249 = vmul.f32 %v241, %v241
  %v250 = vmul.f32 %v242, %v242
  %v251 = vmul.f32 %v243, %v243
  %v252 = vmul.f32 %v244, %v244
  %v253 = vmul.f32 %v245, %v245
  %v254 = vmul.f32 %v246, %v246
  %v255 = vmul.f32 %v247, %v247
  %v256 = vsel %vm171, %v248, 0.0
  %257 = vadd.xlane.f32.xlu0 %v256
  %v258 = vpop.xlane.xlu0 %257
  %v259 = vsel %vm171, %v249, 0.0
  %260 = vadd.xlane.f32.xlu0 %v259
  %v261 = vpop.xlane.xlu0 %260
  %v262 = vsel %vm171, %v250, 0.0
  %263 = vadd.xlane.f32.xlu0 %v262
  %v264 = vpop.xlane.xlu0 %263
  %v265 = vsel %vm171, %v251, 0.0
  %266 = vadd.xlane.f32.xlu0 %v265
  %v267 = vpop.xlane.xlu0 %266
  %v268 = vsel %vm171, %v252, 0.0
  %269 = vadd.xlane.f32.xlu0 %v268
  %v270 = vpop.xlane.xlu0 %269
  %v271 = vsel %vm171, %v253, 0.0
  %272 = vadd.xlane.f32.xlu0 %v271
  %v273 = vpop.xlane.xlu0 %272
  %v274 = vsel %vm171, %v254, 0.0
  %275 = vadd.xlane.f32.xlu0 %v274
  %v276 = vpop.xlane.xlu0 %275
  %v277 = vsel %vm171, %v255, 0.0
  %278 = vadd.xlane.f32.xlu0 %v277
  %v279 = vpop.xlane.xlu0 %278
  %v280 = vmul.f32 %v258, %v231
  %v281 = vmul.f32 %v261, %v231
  %v282 = vmul.f32 %v264, %v231
  %v283 = vmul.f32 %v267, %v231
  %v284 = vmul.f32 %v270, %v231
  %v285 = vmul.f32 %v273, %v231
  %v286 = vmul.f32 %v276, %v231
  %v287 = vmul.f32 %v279, %v231
  %v288 = vadd.f32 %v280, 1e-06
  %v289 = vadd.f32 %v281, 1e-06
  %v290 = vadd.f32 %v282, 1e-06
  %v291 = vadd.f32 %v283, 1e-06
  %v292 = vadd.f32 %v284, 1e-06
  %v293 = vadd.f32 %v285, 1e-06
  %v294 = vadd.f32 %v286, 1e-06
  %v295 = vadd.f32 %v287, 1e-06
  %v296 = vrsqrt.pop %v288
  %v297 = vrsqrt.pop %v289
  %v298 = vrsqrt.pop %v290
  %v299 = vrsqrt.pop %v291
  %v300 = vrsqrt.pop %v292
  %v301 = vrsqrt.pop %v293
  %v302 = vrsqrt.pop %v294
  %v303 = vrsqrt.pop %v295
  %v304 = vmul.f32 %v240, %v296
  %v305 = vmul.f32 %v241, %v297
  %v306 = vmul.f32 %v242, %v298
  %v307 = vmul.f32 %v243, %v299
  %v308 = vmul.f32 %v244, %v300
  %v309 = vmul.f32 %v245, %v301
  %v310 = vmul.f32 %v246, %v302
  %v311 = vmul.f32 %v247, %v303
  %v312 = vlaneseq
  %v313 = vshrl.u32 %v312, 7
  %v314 = vsub.s32 0, %v313
  %v315 = vrot.slane %v206, %v314
  %v316 = vmul.f32 %v304, %v315
  %v317 = vmul.f32 %v305, %v315
  %v318 = vmul.f32 %v306, %v315
  %v319 = vmul.f32 %v307, %v315
  %v320 = vmul.f32 %v308, %v315
  %v321 = vmul.f32 %v309, %v315
  %v322 = vmul.f32 %v310, %v315
  %v323 = vmul.f32 %v311, %v315
  %v324 = vlaneseq
  %v325 = vshrl.u32 %v324, 7
  %v326 = vsub.s32 1, %v325
  %v327 = vrot.slane %v206, %v326
  %v328 = vadd.f32 %v316, %v327
  %v329 = vadd.f32 %v317, %v327
  %v330 = vadd.f32 %v318, %v327
  %v331 = vadd.f32 %v319, %v327
  %v332 = vadd.f32 %v320, %v327
  %v333 = vadd.f32 %v321, %v327
  %v334 = vadd.f32 %v322, %v327
  %v335 = vadd.f32 %v323, %v327
  %v336 = vld [vmem:[%s7] sm:$0xff]
  %v337 = vld [vmem:[%s7 + $0x8] sm:$0xff]
  %v338 = vld [vmem:[%s7 + $0x10] sm:$0xff]
  %v339 = vld [vmem:[%s7 + $0x18] sm:$0xff]
  %v340 = vld [vmem:[%s8] sm:$0x1]
  %v342 = vlaneseq
  %v343 = vshrl.u32 %v342, 7
  %v344 = vsub.s32 0, %v343
  %v345 = vrot.slane %v340, %v344
  %v348 = vsel %vm171, %v328, 0
  %v351 = vsel %vm171, %v329, 0
  %v354 = vsel %vm171, %v330, 0
  %v357 = vsel %vm171, %v331, 0
  %v360 = vsel %vm171, %v332, 0
  %v363 = vsel %vm171, %v333, 0
  %v366 = vsel %vm171, %v334, 0
  %v369 = vsel %vm171, %v335, 0
  %371 = vmatprep.subr.mxu0 0.0
  %372 = vmatpush1.msra.mxu0 %v336
  %373 = vmatprep.subr.mxu0 0.0
  %374 = vmatpush1.msra.mxu0 %v337
  %375 = vmatprep.subr.mxu0 0.0
  %376 = vmatpush1.msra.mxu0 %v338
  %377 = vmatprep.subr.mxu0 0.0
  %378 = vmatpush1.msra.mxu0 %v339
  %379 = vmatprep.subr.mxu0 0.0
  %380 = vmatpush1.msra.mxu0 0.0
  %381 = vmatprep.subr.mxu0 0.0
  %382 = vmatpush1.msra.mxu0 0.0
  %383 = vmatprep.subr.mxu0 0.0
  %384 = vmatpush1.msra.mxu0 0.0
  %385 = vmatprep.subr.mxu0 0.0
  %386 = vmatpush1.msra.mxu0 0.0
  %387 = vmatprep.subr.mxu0 0.0
  %388 = vmatpush1.msra.mxu0 0.0
  %389 = vmatprep.subr.mxu0 0.0
  %390 = vmatpush1.msra.mxu0 0.0
  %391 = vmatprep.subr.mxu0 0.0
  %392 = vmatpush1.msra.mxu0 0.0
  %393 = vmatprep.subr.mxu0 0.0
  %394 = vmatpush1.msra.mxu0 0.0
  %395 = vmatprep.subr.mxu0 0.0
  %396 = vmatpush1.msra.mxu0 0.0
  %397 = vmatprep.subr.mxu0 0.0
  %398 = vmatpush1.msra.mxu0 0.0
  %399 = vmatprep.subr.mxu0 0.0
  %400 = vmatpush1.msra.mxu0 0.0
  %401 = vmatprep.subr.mxu0 0.0
  %402 = vmatpush1.msra.mxu0 0.0
  %403 = vmatprep.subr.mxu0 0.0
  %404 = vmatpush1.msra.mxu0 0.0
  %405 = vmatprep.subr.mxu0 0.0
  %406 = vmatpush1.msra.mxu0 0.0
  %407 = vmatprep.subr.mxu0 0.0
  %408 = vmatpush1.msra.mxu0 0.0
  %409 = vmatprep.subr.mxu0 0.0
  %410 = vmatpush1.msra.mxu0 0.0
  %411 = vmatprep.subr.mxu0 0.0
  %412 = vmatpush1.msra.mxu0 0.0
  %413 = vmatprep.subr.mxu0 0.0
  %414 = vmatpush1.msra.mxu0 0.0
  %415 = vmatprep.subr.mxu0 0.0
  %416 = vmatpush1.msra.mxu0 0.0
  %417 = vmatprep.subr.mxu0 0.0
  %418 = vmatpush1.msra.mxu0 0.0
  %419 = vmatprep.subr.mxu0 0.0
  %420 = vmatpush1.msra.mxu0 0.0
  %421 = vmatprep.subr.mxu0 0.0
  %422 = vmatpush1.msra.mxu0 0.0
  %423 = vmatprep.subr.mxu0 0.0
  %424 = vmatpush1.msra.mxu0 0.0
  %425 = vmatprep.subr.mxu0 0.0
  %426 = vmatpush1.msra.mxu0 0.0
  %427 = vmatprep.subr.mxu0 0.0
  %428 = vmatpush1.msra.mxu0 0.0
  %429 = vmatprep.subr.mxu0 0.0
  %430 = vmatpush1.msra.mxu0 0.0
  %431 = vmatprep.subr.mxu0 0.0
  %432 = vmatpush1.msra.mxu0 0.0
  %433 = vmatprep.subr.mxu0 0.0
  %434 = vmatpush1.msra.mxu0 0.0
  %435 = vmatprep.mubr.f32.mxu0 0.0
  %436 = vmatmul.mubr.f32.gmra.mrb[0].mxu0 %v348
  %v437 = vpop.f32.mrb[0].mxu0
  %v438 = vadd.f32 %v345, %v437
  %v439 = vpop.f32.mrb[0].mxu0
  %440 = vmatprep.mubr.f32.mxu0 0.0
  %441 = vmatmul.mubr.f32.gmra.mrb[0].mxu0 %v351
  %v442 = vpop.f32.mrb[0].mxu0
  %v443 = vadd.f32 %v345, %v442
  %v444 = vpop.f32.mrb[0].mxu0
  %445 = vmatprep.mubr.f32.mxu0 0.0
  %446 = vmatmul.mubr.f32.gmra.mrb[0].mxu0 %v354
  %v447 = vpop.f32.mrb[0].mxu0
  %v448 = vadd.f32 %v345, %v447
  %v449 = vpop.f32.mrb[0].mxu0
  %450 = vmatprep.mubr.f32.mxu0 0.0
  %451 = vmatmul.mubr.f32.gmra.mrb[0].mxu0 %v357
  %v452 = vpop.f32.mrb[0].mxu0
  %v453 = vadd.f32 %v345, %v452
  %v454 = vpop.f32.mrb[0].mxu0
  %455 = vmatprep.mubr.f32.mxu0 0.0
  %456 = vmatmul.mubr.f32.gmra.mrb[0].mxu0 %v360
  %v457 = vpop.f32.mrb[0].mxu0
  %v458 = vadd.f32 %v345, %v457
  %v459 = vpop.f32.mrb[0].mxu0
  %460 = vmatprep.mubr.f32.mxu0 0.0
  %461 = vmatmul.mubr.f32.gmra.mrb[0].mxu0 %v363
  %v462 = vpop.f32.mrb[0].mxu0
  %v463 = vadd.f32 %v345, %v462
  %v464 = vpop.f32.mrb[0].mxu0
  %465 = vmatprep.mubr.f32.mxu0 0.0
  %466 = vmatmul.mubr.f32.gmra.mrb[0].mxu0 %v366
  %v467 = vpop.f32.mrb[0].mxu0
  %v468 = vadd.f32 %v345, %v467
  %v469 = vpop.f32.mrb[0].mxu0
  %470 = vmatprep.mubr.f32.mxu0 0.0
  %471 = vmatmul.mubr.f32.gmra.mrb[0].mxu0 %v369
  %v472 = vpop.f32.mrb[0].mxu0
  %v473 = vadd.f32 %v345, %v472
  %v474 = vpop.f32.mrb[0].mxu0
  %475 = vdwg.mxu0
  %480 = vrot.lane.b32.xlu0 %v438, 96
  %v481 = vpop.permute.xlu0 %480
  %482 = vrot.lane.b32.xlu0 %v443, 96
  %v483 = vpop.permute.xlu0 %482
  %484 = vrot.lane.b32.xlu0 %v448, 96
  %v485 = vpop.permute.xlu0 %484
  %486 = vrot.lane.b32.xlu0 %v453, 96
  %v487 = vpop.permute.xlu0 %486
  %vm488 = vcmask 64512
  %v489 = vsel %vm488, %v438, 0
  %v491 = vsel %vm488, %v443, 0
  %v493 = vsel %vm488, %v448, 0
  %v495 = vsel %vm488, %v453, 0
  %v497 = vsel %vm488, %v481, 0
  %v499 = vsel %vm488, %v483, 0
  %v501 = vsel %vm488, %v485, 0
  %v503 = vsel %vm488, %v487, 0
  %505 = vmatprep.subr.mxu0 0.0
  %506 = vmatpush1.xpose.msra.mxu0 %v497
  %507 = vmatprep.subr.mxu0 0.0
  %508 = vmatpush1.xpose.msra.mxu0 %v499
  %509 = vmatprep.subr.mxu0 0.0
  %510 = vmatpush1.xpose.msra.mxu0 %v501
  %511 = vmatprep.subr.mxu0 0.0
  %512 = vmatpush1.xpose.msra.mxu0 %v503
  %513 = vmatprep.subr.mxu0 0.0
  %514 = vmatpush1.xpose.msra.mxu0 0.0
  %515 = vmatprep.subr.mxu0 0.0
  %516 = vmatpush1.xpose.msra.mxu0 0.0
  %517 = vmatprep.subr.mxu0 0.0
  %518 = vmatpush1.xpose.msra.mxu0 0.0
  %519 = vmatprep.subr.mxu0 0.0
  %520 = vmatpush1.xpose.msra.mxu0 0.0
  %521 = vmatprep.subr.mxu0 0.0
  %522 = vmatpush1.xpose.msra.mxu0 0.0
  %523 = vmatprep.subr.mxu0 0.0
  %524 = vmatpush1.xpose.msra.mxu0 0.0
  %525 = vmatprep.subr.mxu0 0.0
  %526 = vmatpush1.xpose.msra.mxu0 0.0
  %527 = vmatprep.subr.mxu0 0.0
  %528 = vmatpush1.xpose.msra.mxu0 0.0
  %529 = vmatprep.subr.mxu0 0.0
  %530 = vmatpush1.xpose.msra.mxu0 0.0
  %531 = vmatprep.subr.mxu0 0.0
  %532 = vmatpush1.xpose.msra.mxu0 0.0
  %533 = vmatprep.subr.mxu0 0.0
  %534 = vmatpush1.xpose.msra.mxu0 0.0
  %535 = vmatprep.subr.mxu0 0.0
  %536 = vmatpush1.xpose.msra.mxu0 0.0
  %537 = vmatprep.subr.mxu0 0.0
  %538 = vmatpush1.xpose.msra.mxu0 0.0
  %539 = vmatprep.subr.mxu0 0.0
  %540 = vmatpush1.xpose.msra.mxu0 0.0
  %541 = vmatprep.subr.mxu0 0.0
  %542 = vmatpush1.xpose.msra.mxu0 0.0
  %543 = vmatprep.subr.mxu0 0.0
  %544 = vmatpush1.xpose.msra.mxu0 0.0
  %545 = vmatprep.subr.mxu0 0.0
  %546 = vmatpush1.xpose.msra.mxu0 0.0
  %547 = vmatprep.subr.mxu0 0.0
  %548 = vmatpush1.xpose.msra.mxu0 0.0
  %549 = vmatprep.subr.mxu0 0.0
  %550 = vmatpush1.xpose.msra.mxu0 0.0
  %551 = vmatprep.subr.mxu0 0.0
  %552 = vmatpush1.xpose.msra.mxu0 0.0
  %553 = vmatprep.subr.mxu0 0.0
  %554 = vmatpush1.xpose.msra.mxu0 0.0
  %555 = vmatprep.subr.mxu0 0.0
  %556 = vmatpush1.xpose.msra.mxu0 0.0
  %557 = vmatprep.subr.mxu0 0.0
  %558 = vmatpush1.xpose.msra.mxu0 0.0
  %559 = vmatprep.subr.mxu0 0.0
  %560 = vmatpush1.xpose.msra.mxu0 0.0
  %561 = vmatprep.subr.mxu0 0.0
  %562 = vmatpush1.xpose.msra.mxu0 0.0
  %563 = vmatprep.subr.mxu0 0.0
  %564 = vmatpush1.xpose.msra.mxu0 0.0
  %565 = vmatprep.subr.mxu0 0.0
  %566 = vmatpush1.xpose.msra.mxu0 0.0
  %567 = vmatprep.subr.mxu0 0.0
  %568 = vmatpush1.xpose.msra.mxu0 0.0
  %569 = vmatprep.mubr.f32.mxu0 0.0
  %570 = vmatmul.mubr.f32.gmra.mrb[0].mxu0 %v489
  %v571 = vpop.f32.mrb[0].mxu0
  %v572 = vadd.f32 0.0, %v571
  %v573 = vpop.f32.mrb[0].mxu0
  %574 = vmatprep.mubr.f32.mxu0 0.0
  %575 = vmatmul.mubr.f32.gmra.mrb[0].mxu0 %v491
  %v576 = vpop.f32.mrb[0].mxu0
  %v577 = vadd.f32 0.0, %v576
  %v578 = vpop.f32.mrb[0].mxu0
  %579 = vmatprep.mubr.f32.mxu0 0.0
  %580 = vmatmul.mubr.f32.gmra.mrb[0].mxu0 %v493
  %v581 = vpop.f32.mrb[0].mxu0
  %v582 = vadd.f32 0.0, %v581
  %v583 = vpop.f32.mrb[0].mxu0
  %584 = vmatprep.mubr.f32.mxu0 0.0
  %585 = vmatmul.mubr.f32.gmra.mrb[0].mxu0 %v495
  %v586 = vpop.f32.mrb[0].mxu0
  %v587 = vadd.f32 0.0, %v586
  %v588 = vpop.f32.mrb[0].mxu0
  %589 = vdwg.mxu0
  %594 = vrot.lane.b32.xlu0 %v458, 96
  %v595 = vpop.permute.xlu0 %594
  %596 = vrot.lane.b32.xlu0 %v463, 96
  %v597 = vpop.permute.xlu0 %596
  %598 = vrot.lane.b32.xlu0 %v468, 96
  %v599 = vpop.permute.xlu0 %598
  %600 = vrot.lane.b32.xlu0 %v473, 96
  %v601 = vpop.permute.xlu0 %600
  %v602 = vsel %vm488, %v458, 0
  %v604 = vsel %vm488, %v463, 0
  %v606 = vsel %vm488, %v468, 0
  %v608 = vsel %vm488, %v473, 0
  %v610 = vsel %vm488, %v595, 0
  %v612 = vsel %vm488, %v597, 0
  %v614 = vsel %vm488, %v599, 0
  %v616 = vsel %vm488, %v601, 0
  %618 = vmatprep.subr.mxu0 0.0
  %619 = vmatpush1.xpose.msra.mxu0 %v610
  %620 = vmatprep.subr.mxu0 0.0
  %621 = vmatpush1.xpose.msra.mxu0 %v612
  %622 = vmatprep.subr.mxu0 0.0
  %623 = vmatpush1.xpose.msra.mxu0 %v614
  %624 = vmatprep.subr.mxu0 0.0
  %625 = vmatpush1.xpose.msra.mxu0 %v616
  %626 = vmatprep.subr.mxu0 0.0
  %627 = vmatpush1.xpose.msra.mxu0 0.0
  %628 = vmatprep.subr.mxu0 0.0
  %629 = vmatpush1.xpose.msra.mxu0 0.0
  %630 = vmatprep.subr.mxu0 0.0
  %631 = vmatpush1.xpose.msra.mxu0 0.0
  %632 = vmatprep.subr.mxu0 0.0
  %633 = vmatpush1.xpose.msra.mxu0 0.0
  %634 = vmatprep.subr.mxu0 0.0
  %635 = vmatpush1.xpose.msra.mxu0 0.0
  %636 = vmatprep.subr.mxu0 0.0
  %637 = vmatpush1.xpose.msra.mxu0 0.0
  %638 = vmatprep.subr.mxu0 0.0
  %639 = vmatpush1.xpose.msra.mxu0 0.0
  %640 = vmatprep.subr.mxu0 0.0
  %641 = vmatpush1.xpose.msra.mxu0 0.0
  %642 = vmatprep.subr.mxu0 0.0
  %643 = vmatpush1.xpose.msra.mxu0 0.0
  %644 = vmatprep.subr.mxu0 0.0
  %645 = vmatpush1.xpose.msra.mxu0 0.0
  %646 = vmatprep.subr.mxu0 0.0
  %647 = vmatpush1.xpose.msra.mxu0 0.0
  %648 = vmatprep.subr.mxu0 0.0
  %649 = vmatpush1.xpose.msra.mxu0 0.0
  %650 = vmatprep.subr.mxu0 0.0
  %651 = vmatpush1.xpose.msra.mxu0 0.0
  %652 = vmatprep.subr.mxu0 0.0
  %653 = vmatpush1.xpose.msra.mxu0 0.0
  %654 = vmatprep.subr.mxu0 0.0
  %655 = vmatpush1.xpose.msra.mxu0 0.0
  %656 = vmatprep.subr.mxu0 0.0
  %657 = vmatpush1.xpose.msra.mxu0 0.0
  %658 = vmatprep.subr.mxu0 0.0
  %659 = vmatpush1.xpose.msra.mxu0 0.0
  %660 = vmatprep.subr.mxu0 0.0
  %661 = vmatpush1.xpose.msra.mxu0 0.0
  %662 = vmatprep.subr.mxu0 0.0
  %663 = vmatpush1.xpose.msra.mxu0 0.0
  %664 = vmatprep.subr.mxu0 0.0
  %665 = vmatpush1.xpose.msra.mxu0 0.0
  %666 = vmatprep.subr.mxu0 0.0
  %667 = vmatpush1.xpose.msra.mxu0 0.0
  %668 = vmatprep.subr.mxu0 0.0
  %669 = vmatpush1.xpose.msra.mxu0 0.0
  %670 = vmatprep.subr.mxu0 0.0
  %671 = vmatpush1.xpose.msra.mxu0 0.0
  %672 = vmatprep.subr.mxu0 0.0
  %673 = vmatpush1.xpose.msra.mxu0 0.0
  %674 = vmatprep.subr.mxu0 0.0
  %675 = vmatpush1.xpose.msra.mxu0 0.0
  %676 = vmatprep.subr.mxu0 0.0
  %677 = vmatpush1.xpose.msra.mxu0 0.0
  %678 = vmatprep.subr.mxu0 0.0
  %679 = vmatpush1.xpose.msra.mxu0 0.0
  %680 = vmatprep.subr.mxu0 0.0
  %681 = vmatpush1.xpose.msra.mxu0 0.0
  %682 = vmatprep.mubr.f32.mxu0 0.0
  %683 = vmatmul.mubr.f32.gmra.mrb[0].mxu0 %v602
  %v684 = vpop.f32.mrb[0].mxu0
  %v685 = vadd.f32 0.0, %v684
  %v686 = vpop.f32.mrb[0].mxu0
  %687 = vmatprep.mubr.f32.mxu0 0.0
  %688 = vmatmul.mubr.f32.gmra.mrb[0].mxu0 %v604
  %v689 = vpop.f32.mrb[0].mxu0
  %v690 = vadd.f32 0.0, %v689
  %v691 = vpop.f32.mrb[0].mxu0
  %692 = vmatprep.mubr.f32.mxu0 0.0
  %693 = vmatmul.mubr.f32.gmra.mrb[0].mxu0 %v606
  %v694 = vpop.f32.mrb[0].mxu0
  %v695 = vadd.f32 0.0, %v694
  %v696 = vpop.f32.mrb[0].mxu0
  %697 = vmatprep.mubr.f32.mxu0 0.0
  %698 = vmatmul.mubr.f32.gmra.mrb[0].mxu0 %v608
  %v699 = vpop.f32.mrb[0].mxu0
  %v700 = vadd.f32 0.0, %v699
  %v701 = vpop.f32.mrb[0].mxu0
  %702 = vdwg.mxu0
  %v703 = vmul.f32 %v572, 0.35355338
  %v704 = vmul.f32 %v577, 0.35355338
  %v705 = vmul.f32 %v582, 0.35355338
  %v706 = vmul.f32 %v587, 0.35355338
  %v707 = vmul.f32 %v685, 0.35355338
  %v708 = vmul.f32 %v690, 0.35355338
  %v709 = vmul.f32 %v695, 0.35355338
  %v710 = vmul.f32 %v700, 0.35355338
  %v712 = vlaneseq
  %v713 = vshrl.u32 %v712, 7
  %v714 = vsub.s32 0, %v713
  %v715 = vrot.slane %v205, %v714
  %v717 = vadd.f32 %v703, %v715
  %v718 = vadd.f32 %v704, %v715
  %v719 = vadd.f32 %v705, %v715
  %v720 = vadd.f32 %v706, %v715
  %v721 = vadd.f32 %v707, %v715
  %v722 = vadd.f32 %v708, %v715
  %v723 = vadd.f32 %v709, %v715
  %v724 = vadd.f32 %v710, %v715
  %v725 = vsel %vm171, %v717, -inf
  %726 = vmax.xlane.f32.xlu0 %v725
  %v727 = vpop.xlane.xlu0 %726
  %v728 = vsel %vm171, %v718, -inf
  %729 = vmax.xlane.f32.xlu0 %v728
  %v730 = vpop.xlane.xlu0 %729
  %v731 = vsel %vm171, %v719, -inf
  %732 = vmax.xlane.f32.xlu0 %v731
  %v733 = vpop.xlane.xlu0 %732
  %v734 = vsel %vm171, %v720, -inf
  %735 = vmax.xlane.f32.xlu0 %v734
  %v736 = vpop.xlane.xlu0 %735
  %v737 = vsel %vm171, %v721, -inf
  %738 = vmax.xlane.f32.xlu0 %v737
  %v739 = vpop.xlane.xlu0 %738
  %v740 = vsel %vm171, %v722, -inf
  %741 = vmax.xlane.f32.xlu0 %v740
  %v742 = vpop.xlane.xlu0 %741
  %v743 = vsel %vm171, %v723, -inf
  %744 = vmax.xlane.f32.xlu0 %v743
  %v745 = vpop.xlane.xlu0 %744
  %v746 = vsel %vm171, %v724, -inf
  %747 = vmax.xlane.f32.xlu0 %v746
  %v748 = vpop.xlane.xlu0 %747
  %v749 = vsub.f32 %v717, %v727
  %v750 = vsub.f32 %v718, %v730
  %v751 = vsub.f32 %v719, %v733
  %v752 = vsub.f32 %v720, %v736
  %v753 = vsub.f32 %v721, %v739
  %v754 = vsub.f32 %v722, %v742
  %v755 = vsub.f32 %v723, %v745
  %v756 = vsub.f32 %v724, %v748
  %v757 = vmul.f32 %v749, 1.442695
  %v758 = vpow.pop %v757
  %v759 = vmul.f32 %v750, 1.442695
  %v760 = vpow.pop %v759
  %v761 = vmul.f32 %v751, 1.442695
  %v762 = vpow.pop %v761
  %v763 = vmul.f32 %v752, 1.442695
  %v764 = vpow.pop %v763
  %v765 = vmul.f32 %v753, 1.442695
  %v766 = vpow.pop %v765
  %v767 = vmul.f32 %v754, 1.442695
  %v768 = vpow.pop %v767
  %v769 = vmul.f32 %v755, 1.442695
  %v770 = vpow.pop %v769
  %v771 = vmul.f32 %v756, 1.442695
  %v772 = vpow.pop %v771
  %v773 = vsel %vm171, %v758, 0.0
  %774 = vadd.xlane.f32.xlu0 %v773
  %v775 = vpop.xlane.xlu0 %774
  %v776 = vsel %vm171, %v760, 0.0
  %777 = vadd.xlane.f32.xlu0 %v776
  %v778 = vpop.xlane.xlu0 %777
  %v779 = vsel %vm171, %v762, 0.0
  %780 = vadd.xlane.f32.xlu0 %v779
  %v781 = vpop.xlane.xlu0 %780
  %v782 = vsel %vm171, %v764, 0.0
  %783 = vadd.xlane.f32.xlu0 %v782
  %v784 = vpop.xlane.xlu0 %783
  %v785 = vsel %vm171, %v766, 0.0
  %786 = vadd.xlane.f32.xlu0 %v785
  %v787 = vpop.xlane.xlu0 %786
  %v788 = vsel %vm171, %v768, 0.0
  %789 = vadd.xlane.f32.xlu0 %v788
  %v790 = vpop.xlane.xlu0 %789
  %v791 = vsel %vm171, %v770, 0.0
  %792 = vadd.xlane.f32.xlu0 %v791
  %v793 = vpop.xlane.xlu0 %792
  %v794 = vsel %vm171, %v772, 0.0
  %795 = vadd.xlane.f32.xlu0 %v794
  %v796 = vpop.xlane.xlu0 %795
  %v797 = vrcp.pop %v775
  %v798 = vmul.f32 %v758, %v797
  %v799 = vrcp.pop %v778
  %v800 = vmul.f32 %v760, %v799
  %v801 = vrcp.pop %v781
  %v802 = vmul.f32 %v762, %v801
  %v803 = vrcp.pop %v784
  %v804 = vmul.f32 %v764, %v803
  %v805 = vrcp.pop %v787
  %v806 = vmul.f32 %v766, %v805
  %v807 = vrcp.pop %v790
  %v808 = vmul.f32 %v768, %v807
  %v809 = vrcp.pop %v793
  %v810 = vmul.f32 %v770, %v809
  %v811 = vrcp.pop %v796
  %v812 = vmul.f32 %v772, %v811
  %813 = vrot.lane.b32.xlu0 %v438, 64
  %v814 = vpop.permute.xlu0 %813
  %815 = vrot.lane.b32.xlu0 %v443, 64
  %v816 = vpop.permute.xlu0 %815
  %817 = vrot.lane.b32.xlu0 %v448, 64
  %v818 = vpop.permute.xlu0 %817
  %819 = vrot.lane.b32.xlu0 %v453, 64
  %v820 = vpop.permute.xlu0 %819
  %v826 = vsel %vm171, %v798, 0
  %v829 = vsel %vm171, %v800, 0
  %v832 = vsel %vm171, %v802, 0
  %v835 = vsel %vm171, %v804, 0
  %837 = vmatprep.subr.mxu0 0.0
  %838 = vmatpush1.msra.mxu0 %v814
  %839 = vmatprep.subr.mxu0 0.0
  %840 = vmatpush1.msra.mxu0 %v816
  %841 = vmatprep.subr.mxu0 0.0
  %842 = vmatpush1.msra.mxu0 %v818
  %843 = vmatprep.subr.mxu0 0.0
  %844 = vmatpush1.msra.mxu0 %v820
  %845 = vmatprep.subr.mxu0 0.0
  %846 = vmatpush1.msra.mxu0 0.0
  %847 = vmatprep.subr.mxu0 0.0
  %848 = vmatpush1.msra.mxu0 0.0
  %849 = vmatprep.subr.mxu0 0.0
  %850 = vmatpush1.msra.mxu0 0.0
  %851 = vmatprep.subr.mxu0 0.0
  %852 = vmatpush1.msra.mxu0 0.0
  %853 = vmatprep.subr.mxu0 0.0
  %854 = vmatpush1.msra.mxu0 0.0
  %855 = vmatprep.subr.mxu0 0.0
  %856 = vmatpush1.msra.mxu0 0.0
  %857 = vmatprep.subr.mxu0 0.0
  %858 = vmatpush1.msra.mxu0 0.0
  %859 = vmatprep.subr.mxu0 0.0
  %860 = vmatpush1.msra.mxu0 0.0
  %861 = vmatprep.subr.mxu0 0.0
  %862 = vmatpush1.msra.mxu0 0.0
  %863 = vmatprep.subr.mxu0 0.0
  %864 = vmatpush1.msra.mxu0 0.0
  %865 = vmatprep.subr.mxu0 0.0
  %866 = vmatpush1.msra.mxu0 0.0
  %867 = vmatprep.subr.mxu0 0.0
  %868 = vmatpush1.msra.mxu0 0.0
  %869 = vmatprep.subr.mxu0 0.0
  %870 = vmatpush1.msra.mxu0 0.0
  %871 = vmatprep.subr.mxu0 0.0
  %872 = vmatpush1.msra.mxu0 0.0
  %873 = vmatprep.subr.mxu0 0.0
  %874 = vmatpush1.msra.mxu0 0.0
  %875 = vmatprep.subr.mxu0 0.0
  %876 = vmatpush1.msra.mxu0 0.0
  %877 = vmatprep.subr.mxu0 0.0
  %878 = vmatpush1.msra.mxu0 0.0
  %879 = vmatprep.subr.mxu0 0.0
  %880 = vmatpush1.msra.mxu0 0.0
  %881 = vmatprep.subr.mxu0 0.0
  %882 = vmatpush1.msra.mxu0 0.0
  %883 = vmatprep.subr.mxu0 0.0
  %884 = vmatpush1.msra.mxu0 0.0
  %885 = vmatprep.subr.mxu0 0.0
  %886 = vmatpush1.msra.mxu0 0.0
  %887 = vmatprep.subr.mxu0 0.0
  %888 = vmatpush1.msra.mxu0 0.0
  %889 = vmatprep.subr.mxu0 0.0
  %890 = vmatpush1.msra.mxu0 0.0
  %891 = vmatprep.subr.mxu0 0.0
  %892 = vmatpush1.msra.mxu0 0.0
  %893 = vmatprep.subr.mxu0 0.0
  %894 = vmatpush1.msra.mxu0 0.0
  %895 = vmatprep.subr.mxu0 0.0
  %896 = vmatpush1.msra.mxu0 0.0
  %897 = vmatprep.subr.mxu0 0.0
  %898 = vmatpush1.msra.mxu0 0.0
  %899 = vmatprep.subr.mxu0 0.0
  %900 = vmatpush1.msra.mxu0 0.0
  %901 = vmatprep.mubr.f32.mxu0 0.0
  %902 = vmatmul.mubr.f32.gmra.mrb[0].mxu0 %v826
  %v903 = vpop.f32.mrb[0].mxu0
  %v904 = vadd.f32 0.0, %v903
  %v905 = vpop.f32.mrb[0].mxu0
  %906 = vmatprep.mubr.f32.mxu0 0.0
  %907 = vmatmul.mubr.f32.gmra.mrb[0].mxu0 %v829
  %v908 = vpop.f32.mrb[0].mxu0
  %v909 = vadd.f32 0.0, %v908
  %v910 = vpop.f32.mrb[0].mxu0
  %911 = vmatprep.mubr.f32.mxu0 0.0
  %912 = vmatmul.mubr.f32.gmra.mrb[0].mxu0 %v832
  %v913 = vpop.f32.mrb[0].mxu0
  %v914 = vadd.f32 0.0, %v913
  %v915 = vpop.f32.mrb[0].mxu0
  %916 = vmatprep.mubr.f32.mxu0 0.0
  %917 = vmatmul.mubr.f32.gmra.mrb[0].mxu0 %v835
  %v918 = vpop.f32.mrb[0].mxu0
  %v919 = vadd.f32 0.0, %v918
  %v920 = vpop.f32.mrb[0].mxu0
  %921 = vdwg.mxu0
  %922 = vrot.lane.b32.xlu0 %v458, 64
  %v923 = vpop.permute.xlu0 %922
  %924 = vrot.lane.b32.xlu0 %v463, 64
  %v925 = vpop.permute.xlu0 %924
  %926 = vrot.lane.b32.xlu0 %v468, 64
  %v927 = vpop.permute.xlu0 %926
  %928 = vrot.lane.b32.xlu0 %v473, 64
  %v929 = vpop.permute.xlu0 %928
  %v935 = vsel %vm171, %v806, 0
  %v938 = vsel %vm171, %v808, 0
  %v941 = vsel %vm171, %v810, 0
  %v944 = vsel %vm171, %v812, 0
  %946 = vmatprep.subr.mxu0 0.0
  %947 = vmatpush1.msra.mxu0 %v923
  %948 = vmatprep.subr.mxu0 0.0
  %949 = vmatpush1.msra.mxu0 %v925
  %950 = vmatprep.subr.mxu0 0.0
  %951 = vmatpush1.msra.mxu0 %v927
  %952 = vmatprep.subr.mxu0 0.0
  %953 = vmatpush1.msra.mxu0 %v929
  %954 = vmatprep.subr.mxu0 0.0
  %955 = vmatpush1.msra.mxu0 0.0
  %956 = vmatprep.subr.mxu0 0.0
  %957 = vmatpush1.msra.mxu0 0.0
  %958 = vmatprep.subr.mxu0 0.0
  %959 = vmatpush1.msra.mxu0 0.0
  %960 = vmatprep.subr.mxu0 0.0
  %961 = vmatpush1.msra.mxu0 0.0
  %962 = vmatprep.subr.mxu0 0.0
  %963 = vmatpush1.msra.mxu0 0.0
  %964 = vmatprep.subr.mxu0 0.0
  %965 = vmatpush1.msra.mxu0 0.0
  %966 = vmatprep.subr.mxu0 0.0
  %967 = vmatpush1.msra.mxu0 0.0
  %968 = vmatprep.subr.mxu0 0.0
  %969 = vmatpush1.msra.mxu0 0.0
  %970 = vmatprep.subr.mxu0 0.0
  %971 = vmatpush1.msra.mxu0 0.0
  %972 = vmatprep.subr.mxu0 0.0
  %973 = vmatpush1.msra.mxu0 0.0
  %974 = vmatprep.subr.mxu0 0.0
  %975 = vmatpush1.msra.mxu0 0.0
  %976 = vmatprep.subr.mxu0 0.0
  %977 = vmatpush1.msra.mxu0 0.0
  %978 = vmatprep.subr.mxu0 0.0
  %979 = vmatpush1.msra.mxu0 0.0
  %980 = vmatprep.subr.mxu0 0.0
  %981 = vmatpush1.msra.mxu0 0.0
  %982 = vmatprep.subr.mxu0 0.0
  %983 = vmatpush1.msra.mxu0 0.0
  %984 = vmatprep.subr.mxu0 0.0
  %985 = vmatpush1.msra.mxu0 0.0
  %986 = vmatprep.subr.mxu0 0.0
  %987 = vmatpush1.msra.mxu0 0.0
  %988 = vmatprep.subr.mxu0 0.0
  %989 = vmatpush1.msra.mxu0 0.0
  %990 = vmatprep.subr.mxu0 0.0
  %991 = vmatpush1.msra.mxu0 0.0
  %992 = vmatprep.subr.mxu0 0.0
  %993 = vmatpush1.msra.mxu0 0.0
  %994 = vmatprep.subr.mxu0 0.0
  %995 = vmatpush1.msra.mxu0 0.0
  %996 = vmatprep.subr.mxu0 0.0
  %997 = vmatpush1.msra.mxu0 0.0
  %998 = vmatprep.subr.mxu0 0.0
  %999 = vmatpush1.msra.mxu0 0.0
  %1000 = vmatprep.subr.mxu0 0.0
  %1001 = vmatpush1.msra.mxu0 0.0
  %1002 = vmatprep.subr.mxu0 0.0
  %1003 = vmatpush1.msra.mxu0 0.0
  %1004 = vmatprep.subr.mxu0 0.0
  %1005 = vmatpush1.msra.mxu0 0.0
  %1006 = vmatprep.subr.mxu0 0.0
  %1007 = vmatpush1.msra.mxu0 0.0
  %1008 = vmatprep.subr.mxu0 0.0
  %1009 = vmatpush1.msra.mxu0 0.0
  %1010 = vmatprep.mubr.f32.mxu0 0.0
  %1011 = vmatmul.mubr.f32.gmra.mrb[0].mxu0 %v935
  %v1012 = vpop.f32.mrb[0].mxu0
  %v1013 = vadd.f32 0.0, %v1012
  %v1014 = vpop.f32.mrb[0].mxu0
  %1015 = vmatprep.mubr.f32.mxu0 0.0
  %1016 = vmatmul.mubr.f32.gmra.mrb[0].mxu0 %v938
  %v1017 = vpop.f32.mrb[0].mxu0
  %v1018 = vadd.f32 0.0, %v1017
  %v1019 = vpop.f32.mrb[0].mxu0
  %1020 = vmatprep.mubr.f32.mxu0 0.0
  %1021 = vmatmul.mubr.f32.gmra.mrb[0].mxu0 %v941
  %v1022 = vpop.f32.mrb[0].mxu0
  %v1023 = vadd.f32 0.0, %v1022
  %v1024 = vpop.f32.mrb[0].mxu0
  %1025 = vmatprep.mubr.f32.mxu0 0.0
  %1026 = vmatmul.mubr.f32.gmra.mrb[0].mxu0 %v944
  %v1027 = vpop.f32.mrb[0].mxu0
  %v1028 = vadd.f32 0.0, %v1027
  %v1029 = vpop.f32.mrb[0].mxu0
  %1030 = vdwg.mxu0
  %1031 = vst.msk [vmem:[#allocation3] sm:$0xff] %vm488, %v904
  %1032 = vst.msk [vmem:[#allocation3 + $0x8] sm:$0xff] %vm488, %v909
  %1033 = vst.msk [vmem:[#allocation3 + $0x10] sm:$0xff] %vm488, %v914
  %1034 = vst.msk [vmem:[#allocation3 + $0x18] sm:$0xff] %vm488, %v919
  %1035 = vst.msk [vmem:[#allocation3 + $0x20] sm:$0xff] %vm488, %v1013
  %1036 = vst.msk [vmem:[#allocation3 + $0x28] sm:$0xff] %vm488, %v1018
  %1037 = vst.msk [vmem:[#allocation3 + $0x30] sm:$0xff] %vm488, %v1023
  %1038 = vst.msk [vmem:[#allocation3 + $0x38] sm:$0xff] %vm488, %v1028
  %1039 = vrot.lane.b32.xlu0 %v438, 120
  %v1040 = vpop.permute.xlu0 %1039
  %1041 = vrot.lane.b32.xlu0 %v443, 120
  %v1042 = vpop.permute.xlu0 %1041
  %1043 = vrot.lane.b32.xlu0 %v448, 120
  %v1044 = vpop.permute.xlu0 %1043
  %1045 = vrot.lane.b32.xlu0 %v453, 120
  %v1046 = vpop.permute.xlu0 %1045
  %1047 = vrot.lane.b32.xlu0 %v438, 88
  %v1048 = vpop.permute.xlu0 %1047
  %1049 = vrot.lane.b32.xlu0 %v443, 88
  %v1050 = vpop.permute.xlu0 %1049
  %1051 = vrot.lane.b32.xlu0 %v448, 88
  %v1052 = vpop.permute.xlu0 %1051
  %1053 = vrot.lane.b32.xlu0 %v453, 88
  %v1054 = vpop.permute.xlu0 %1053
  %v1055 = vsel %vm488, %v1040, 0
  %v1057 = vsel %vm488, %v1042, 0
  %v1059 = vsel %vm488, %v1044, 0
  %v1061 = vsel %vm488, %v1046, 0
  %v1063 = vsel %vm488, %v1048, 0
  %v1065 = vsel %vm488, %v1050, 0
  %v1067 = vsel %vm488, %v1052, 0
  %v1069 = vsel %vm488, %v1054, 0
  %1071 = vmatprep.subr.mxu0 0.0
  %1072 = vmatpush1.xpose.msra.mxu0 %v1063
  %1073 = vmatprep.subr.mxu0 0.0
  %1074 = vmatpush1.xpose.msra.mxu0 %v1065
  %1075 = vmatprep.subr.mxu0 0.0
  %1076 = vmatpush1.xpose.msra.mxu0 %v1067
  %1077 = vmatprep.subr.mxu0 0.0
  %1078 = vmatpush1.xpose.msra.mxu0 %v1069
  %1079 = vmatprep.subr.mxu0 0.0
  %1080 = vmatpush1.xpose.msra.mxu0 0.0
  %1081 = vmatprep.subr.mxu0 0.0
  %1082 = vmatpush1.xpose.msra.mxu0 0.0
  %1083 = vmatprep.subr.mxu0 0.0
  %1084 = vmatpush1.xpose.msra.mxu0 0.0
  %1085 = vmatprep.subr.mxu0 0.0
  %1086 = vmatpush1.xpose.msra.mxu0 0.0
  %1087 = vmatprep.subr.mxu0 0.0
  %1088 = vmatpush1.xpose.msra.mxu0 0.0
  %1089 = vmatprep.subr.mxu0 0.0
  %1090 = vmatpush1.xpose.msra.mxu0 0.0
  %1091 = vmatprep.subr.mxu0 0.0
  %1092 = vmatpush1.xpose.msra.mxu0 0.0
  %1093 = vmatprep.subr.mxu0 0.0
  %1094 = vmatpush1.xpose.msra.mxu0 0.0
  %1095 = vmatprep.subr.mxu0 0.0
  %1096 = vmatpush1.xpose.msra.mxu0 0.0
  %1097 = vmatprep.subr.mxu0 0.0
  %1098 = vmatpush1.xpose.msra.mxu0 0.0
  %1099 = vmatprep.subr.mxu0 0.0
  %1100 = vmatpush1.xpose.msra.mxu0 0.0
  %1101 = vmatprep.subr.mxu0 0.0
  %1102 = vmatpush1.xpose.msra.mxu0 0.0
  %1103 = vmatprep.subr.mxu0 0.0
  %1104 = vmatpush1.xpose.msra.mxu0 0.0
  %1105 = vmatprep.subr.mxu0 0.0
  %1106 = vmatpush1.xpose.msra.mxu0 0.0
  %1107 = vmatprep.subr.mxu0 0.0
  %1108 = vmatpush1.xpose.msra.mxu0 0.0
  %1109 = vmatprep.subr.mxu0 0.0
  %1110 = vmatpush1.xpose.msra.mxu0 0.0
  %1111 = vmatprep.subr.mxu0 0.0
  %1112 = vmatpush1.xpose.msra.mxu0 0.0
  %1113 = vmatprep.subr.mxu0 0.0
  %1114 = vmatpush1.xpose.msra.mxu0 0.0
  %1115 = vmatprep.subr.mxu0 0.0
  %1116 = vmatpush1.xpose.msra.mxu0 0.0
  %1117 = vmatprep.subr.mxu0 0.0
  %1118 = vmatpush1.xpose.msra.mxu0 0.0
  %1119 = vmatprep.subr.mxu0 0.0
  %1120 = vmatpush1.xpose.msra.mxu0 0.0
  %1121 = vmatprep.subr.mxu0 0.0
  %1122 = vmatpush1.xpose.msra.mxu0 0.0
  %1123 = vmatprep.subr.mxu0 0.0
  %1124 = vmatpush1.xpose.msra.mxu0 0.0
  %1125 = vmatprep.subr.mxu0 0.0
  %1126 = vmatpush1.xpose.msra.mxu0 0.0
  %1127 = vmatprep.subr.mxu0 0.0
  %1128 = vmatpush1.xpose.msra.mxu0 0.0
  %1129 = vmatprep.subr.mxu0 0.0
  %1130 = vmatpush1.xpose.msra.mxu0 0.0
  %1131 = vmatprep.subr.mxu0 0.0
  %1132 = vmatpush1.xpose.msra.mxu0 0.0
  %1133 = vmatprep.subr.mxu0 0.0
  %1134 = vmatpush1.xpose.msra.mxu0 0.0
  %1135 = vmatprep.mubr.f32.mxu0 0.0
  %1136 = vmatmul.mubr.f32.gmra.mrb[0].mxu0 %v1055
  %v1137 = vpop.f32.mrb[0].mxu0
  %v1138 = vadd.f32 0.0, %v1137
  %v1139 = vpop.f32.mrb[0].mxu0
  %1140 = vmatprep.mubr.f32.mxu0 0.0
  %1141 = vmatmul.mubr.f32.gmra.mrb[0].mxu0 %v1057
  %v1142 = vpop.f32.mrb[0].mxu0
  %v1143 = vadd.f32 0.0, %v1142
  %v1144 = vpop.f32.mrb[0].mxu0
  %1145 = vmatprep.mubr.f32.mxu0 0.0
  %1146 = vmatmul.mubr.f32.gmra.mrb[0].mxu0 %v1059
  %v1147 = vpop.f32.mrb[0].mxu0
  %v1148 = vadd.f32 0.0, %v1147
  %v1149 = vpop.f32.mrb[0].mxu0
  %1150 = vmatprep.mubr.f32.mxu0 0.0
  %1151 = vmatmul.mubr.f32.gmra.mrb[0].mxu0 %v1061
  %v1152 = vpop.f32.mrb[0].mxu0
  %v1153 = vadd.f32 0.0, %v1152
  %v1154 = vpop.f32.mrb[0].mxu0
  %1155 = vdwg.mxu0
  %1156 = vrot.lane.b32.xlu0 %v458, 120
  %v1157 = vpop.permute.xlu0 %1156
  %1158 = vrot.lane.b32.xlu0 %v463, 120
  %v1159 = vpop.permute.xlu0 %1158
  %1160 = vrot.lane.b32.xlu0 %v468, 120
  %v1161 = vpop.permute.xlu0 %1160
  %1162 = vrot.lane.b32.xlu0 %v473, 120
  %v1163 = vpop.permute.xlu0 %1162
  %1164 = vrot.lane.b32.xlu0 %v458, 88
  %v1165 = vpop.permute.xlu0 %1164
  %1166 = vrot.lane.b32.xlu0 %v463, 88
  %v1167 = vpop.permute.xlu0 %1166
  %1168 = vrot.lane.b32.xlu0 %v468, 88
  %v1169 = vpop.permute.xlu0 %1168
  %1170 = vrot.lane.b32.xlu0 %v473, 88
  %v1171 = vpop.permute.xlu0 %1170
  %v1172 = vsel %vm488, %v1157, 0
  %v1174 = vsel %vm488, %v1159, 0
  %v1176 = vsel %vm488, %v1161, 0
  %v1178 = vsel %vm488, %v1163, 0
  %v1180 = vsel %vm488, %v1165, 0
  %v1182 = vsel %vm488, %v1167, 0
  %v1184 = vsel %vm488, %v1169, 0
  %v1186 = vsel %vm488, %v1171, 0
  %1188 = vmatprep.subr.mxu0 0.0
  %1189 = vmatpush1.xpose.msra.mxu0 %v1180
  %1190 = vmatprep.subr.mxu0 0.0
  %1191 = vmatpush1.xpose.msra.mxu0 %v1182
  %1192 = vmatprep.subr.mxu0 0.0
  %1193 = vmatpush1.xpose.msra.mxu0 %v1184
  %1194 = vmatprep.subr.mxu0 0.0
  %1195 = vmatpush1.xpose.msra.mxu0 %v1186
  %1196 = vmatprep.subr.mxu0 0.0
  %1197 = vmatpush1.xpose.msra.mxu0 0.0
  %1198 = vmatprep.subr.mxu0 0.0
  %1199 = vmatpush1.xpose.msra.mxu0 0.0
  %1200 = vmatprep.subr.mxu0 0.0
  %1201 = vmatpush1.xpose.msra.mxu0 0.0
  %1202 = vmatprep.subr.mxu0 0.0
  %1203 = vmatpush1.xpose.msra.mxu0 0.0
  %1204 = vmatprep.subr.mxu0 0.0
  %1205 = vmatpush1.xpose.msra.mxu0 0.0
  %1206 = vmatprep.subr.mxu0 0.0
  %1207 = vmatpush1.xpose.msra.mxu0 0.0
  %1208 = vmatprep.subr.mxu0 0.0
  %1209 = vmatpush1.xpose.msra.mxu0 0.0
  %1210 = vmatprep.subr.mxu0 0.0
  %1211 = vmatpush1.xpose.msra.mxu0 0.0
  %1212 = vmatprep.subr.mxu0 0.0
  %1213 = vmatpush1.xpose.msra.mxu0 0.0
  %1214 = vmatprep.subr.mxu0 0.0
  %1215 = vmatpush1.xpose.msra.mxu0 0.0
  %1216 = vmatprep.subr.mxu0 0.0
  %1217 = vmatpush1.xpose.msra.mxu0 0.0
  %1218 = vmatprep.subr.mxu0 0.0
  %1219 = vmatpush1.xpose.msra.mxu0 0.0
  %1220 = vmatprep.subr.mxu0 0.0
  %1221 = vmatpush1.xpose.msra.mxu0 0.0
  %1222 = vmatprep.subr.mxu0 0.0
  %1223 = vmatpush1.xpose.msra.mxu0 0.0
  %1224 = vmatprep.subr.mxu0 0.0
  %1225 = vmatpush1.xpose.msra.mxu0 0.0
  %1226 = vmatprep.subr.mxu0 0.0
  %1227 = vmatpush1.xpose.msra.mxu0 0.0
  %1228 = vmatprep.subr.mxu0 0.0
  %1229 = vmatpush1.xpose.msra.mxu0 0.0
  %1230 = vmatprep.subr.mxu0 0.0
  %1231 = vmatpush1.xpose.msra.mxu0 0.0
  %1232 = vmatprep.subr.mxu0 0.0
  %1233 = vmatpush1.xpose.msra.mxu0 0.0
  %1234 = vmatprep.subr.mxu0 0.0
  %1235 = vmatpush1.xpose.msra.mxu0 0.0
  %1236 = vmatprep.subr.mxu0 0.0
  %1237 = vmatpush1.xpose.msra.mxu0 0.0
  %1238 = vmatprep.subr.mxu0 0.0
  %1239 = vmatpush1.xpose.msra.mxu0 0.0
  %1240 = vmatprep.subr.mxu0 0.0
  %1241 = vmatpush1.xpose.msra.mxu0 0.0
  %1242 = vmatprep.subr.mxu0 0.0
  %1243 = vmatpush1.xpose.msra.mxu0 0.0
  %1244 = vmatprep.subr.mxu0 0.0
  %1245 = vmatpush1.xpose.msra.mxu0 0.0
  %1246 = vmatprep.subr.mxu0 0.0
  %1247 = vmatpush1.xpose.msra.mxu0 0.0
  %1248 = vmatprep.subr.mxu0 0.0
  %1249 = vmatpush1.xpose.msra.mxu0 0.0
  %1250 = vmatprep.subr.mxu0 0.0
  %1251 = vmatpush1.xpose.msra.mxu0 0.0
  %1252 = vmatprep.mubr.f32.mxu0 0.0
  %1253 = vmatmul.mubr.f32.gmra.mrb[0].mxu0 %v1172
  %v1254 = vpop.f32.mrb[0].mxu0
  %v1255 = vadd.f32 0.0, %v1254
  %v1256 = vpop.f32.mrb[0].mxu0
  %1257 = vmatprep.mubr.f32.mxu0 0.0
  %1258 = vmatmul.mubr.f32.gmra.mrb[0].mxu0 %v1174
  %v1259 = vpop.f32.mrb[0].mxu0
  %v1260 = vadd.f32 0.0, %v1259
  %v1261 = vpop.f32.mrb[0].mxu0
  %1262 = vmatprep.mubr.f32.mxu0 0.0
  %1263 = vmatmul.mubr.f32.gmra.mrb[0].mxu0 %v1176
  %v1264 = vpop.f32.mrb[0].mxu0
  %v1265 = vadd.f32 0.0, %v1264
  %v1266 = vpop.f32.mrb[0].mxu0
  %1267 = vmatprep.mubr.f32.mxu0 0.0
  %1268 = vmatmul.mubr.f32.gmra.mrb[0].mxu0 %v1178
  %v1269 = vpop.f32.mrb[0].mxu0
  %v1270 = vadd.f32 0.0, %v1269
  %v1271 = vpop.f32.mrb[0].mxu0
  %1272 = vdwg.mxu0
  %v1273 = vmul.f32 %v1138, 0.35355338
  %v1274 = vmul.f32 %v1143, 0.35355338
  %v1275 = vmul.f32 %v1148, 0.35355338
  %v1276 = vmul.f32 %v1153, 0.35355338
  %v1277 = vmul.f32 %v1255, 0.35355338
  %v1278 = vmul.f32 %v1260, 0.35355338
  %v1279 = vmul.f32 %v1265, 0.35355338
  %v1280 = vmul.f32 %v1270, 0.35355338
  %v1281 = vadd.f32 %v1273, %v715
  %v1282 = vadd.f32 %v1274, %v715
  %v1283 = vadd.f32 %v1275, %v715
  %v1284 = vadd.f32 %v1276, %v715
  %v1285 = vadd.f32 %v1277, %v715
  %v1286 = vadd.f32 %v1278, %v715
  %v1287 = vadd.f32 %v1279, %v715
  %v1288 = vadd.f32 %v1280, %v715
  %v1289 = vsel %vm171, %v1281, -inf
  %1290 = vmax.xlane.f32.xlu0 %v1289
  %v1291 = vpop.xlane.xlu0 %1290
  %v1292 = vsel %vm171, %v1282, -inf
  %1293 = vmax.xlane.f32.xlu0 %v1292
  %v1294 = vpop.xlane.xlu0 %1293
  %v1295 = vsel %vm171, %v1283, -inf
  %1296 = vmax.xlane.f32.xlu0 %v1295
  %v1297 = vpop.xlane.xlu0 %1296
  %v1298 = vsel %vm171, %v1284, -inf
  %1299 = vmax.xlane.f32.xlu0 %v1298
  %v1300 = vpop.xlane.xlu0 %1299
  %v1301 = vsel %vm171, %v1285, -inf
  %1302 = vmax.xlane.f32.xlu0 %v1301
  %v1303 = vpop.xlane.xlu0 %1302
  %v1304 = vsel %vm171, %v1286, -inf
  %1305 = vmax.xlane.f32.xlu0 %v1304
  %v1306 = vpop.xlane.xlu0 %1305
  %v1307 = vsel %vm171, %v1287, -inf
  %1308 = vmax.xlane.f32.xlu0 %v1307
  %v1309 = vpop.xlane.xlu0 %1308
  %v1310 = vsel %vm171, %v1288, -inf
  %1311 = vmax.xlane.f32.xlu0 %v1310
  %v1312 = vpop.xlane.xlu0 %1311
  %v1313 = vsub.f32 %v1281, %v1291
  %v1314 = vsub.f32 %v1282, %v1294
  %v1315 = vsub.f32 %v1283, %v1297
  %v1316 = vsub.f32 %v1284, %v1300
  %v1317 = vsub.f32 %v1285, %v1303
  %v1318 = vsub.f32 %v1286, %v1306
  %v1319 = vsub.f32 %v1287, %v1309
  %v1320 = vsub.f32 %v1288, %v1312
  %v1321 = vmul.f32 %v1313, 1.442695
  %v1322 = vpow.pop %v1321
  %v1323 = vmul.f32 %v1314, 1.442695
  %v1324 = vpow.pop %v1323
  %v1325 = vmul.f32 %v1315, 1.442695
  %v1326 = vpow.pop %v1325
  %v1327 = vmul.f32 %v1316, 1.442695
  %v1328 = vpow.pop %v1327
  %v1329 = vmul.f32 %v1317, 1.442695
  %v1330 = vpow.pop %v1329
  %v1331 = vmul.f32 %v1318, 1.442695
  %v1332 = vpow.pop %v1331
  %v1333 = vmul.f32 %v1319, 1.442695
  %v1334 = vpow.pop %v1333
  %v1335 = vmul.f32 %v1320, 1.442695
  %v1336 = vpow.pop %v1335
  %v1337 = vsel %vm171, %v1322, 0.0
  %1338 = vadd.xlane.f32.xlu0 %v1337
  %v1339 = vpop.xlane.xlu0 %1338
  %v1340 = vsel %vm171, %v1324, 0.0
  %1341 = vadd.xlane.f32.xlu0 %v1340
  %v1342 = vpop.xlane.xlu0 %1341
  %v1343 = vsel %vm171, %v1326, 0.0
  %1344 = vadd.xlane.f32.xlu0 %v1343
  %v1345 = vpop.xlane.xlu0 %1344
  %v1346 = vsel %vm171, %v1328, 0.0
  %1347 = vadd.xlane.f32.xlu0 %v1346
  %v1348 = vpop.xlane.xlu0 %1347
  %v1349 = vsel %vm171, %v1330, 0.0
  %1350 = vadd.xlane.f32.xlu0 %v1349
  %v1351 = vpop.xlane.xlu0 %1350
  %v1352 = vsel %vm171, %v1332, 0.0
  %1353 = vadd.xlane.f32.xlu0 %v1352
  %v1354 = vpop.xlane.xlu0 %1353
  %v1355 = vsel %vm171, %v1334, 0.0
  %1356 = vadd.xlane.f32.xlu0 %v1355
  %v1357 = vpop.xlane.xlu0 %1356
  %v1358 = vsel %vm171, %v1336, 0.0
  %1359 = vadd.xlane.f32.xlu0 %v1358
  %v1360 = vpop.xlane.xlu0 %1359
  %v1361 = vrcp.pop %v1339
  %v1362 = vmul.f32 %v1322, %v1361
  %v1363 = vrcp.pop %v1342
  %v1364 = vmul.f32 %v1324, %v1363
  %v1365 = vrcp.pop %v1345
  %v1366 = vmul.f32 %v1326, %v1365
  %v1367 = vrcp.pop %v1348
  %v1368 = vmul.f32 %v1328, %v1367
  %v1369 = vrcp.pop %v1351
  %v1370 = vmul.f32 %v1330, %v1369
  %v1371 = vrcp.pop %v1354
  %v1372 = vmul.f32 %v1332, %v1371
  %v1373 = vrcp.pop %v1357
  %v1374 = vmul.f32 %v1334, %v1373
  %v1375 = vrcp.pop %v1360
  %v1376 = vmul.f32 %v1336, %v1375
  %1377 = vrot.lane.b32.xlu0 %v438, 56
  %v1378 = vpop.permute.xlu0 %1377
  %1379 = vrot.lane.b32.xlu0 %v443, 56
  %v1380 = vpop.permute.xlu0 %1379
  %1381 = vrot.lane.b32.xlu0 %v448, 56
  %v1382 = vpop.permute.xlu0 %1381
  %1383 = vrot.lane.b32.xlu0 %v453, 56
  %v1384 = vpop.permute.xlu0 %1383
  %v1390 = vsel %vm171, %v1362, 0
  %v1393 = vsel %vm171, %v1364, 0
  %v1396 = vsel %vm171, %v1366, 0
  %v1399 = vsel %vm171, %v1368, 0
  %1401 = vmatprep.subr.mxu0 0.0
  %1402 = vmatpush1.msra.mxu0 %v1378
  %1403 = vmatprep.subr.mxu0 0.0
  %1404 = vmatpush1.msra.mxu0 %v1380
  %1405 = vmatprep.subr.mxu0 0.0
  %1406 = vmatpush1.msra.mxu0 %v1382
  %1407 = vmatprep.subr.mxu0 0.0
  %1408 = vmatpush1.msra.mxu0 %v1384
  %1409 = vmatprep.subr.mxu0 0.0
  %1410 = vmatpush1.msra.mxu0 0.0
  %1411 = vmatprep.subr.mxu0 0.0
  %1412 = vmatpush1.msra.mxu0 0.0
  %1413 = vmatprep.subr.mxu0 0.0
  %1414 = vmatpush1.msra.mxu0 0.0
  %1415 = vmatprep.subr.mxu0 0.0
  %1416 = vmatpush1.msra.mxu0 0.0
  %1417 = vmatprep.subr.mxu0 0.0
  %1418 = vmatpush1.msra.mxu0 0.0
  %1419 = vmatprep.subr.mxu0 0.0
  %1420 = vmatpush1.msra.mxu0 0.0
  %1421 = vmatprep.subr.mxu0 0.0
  %1422 = vmatpush1.msra.mxu0 0.0
  %1423 = vmatprep.subr.mxu0 0.0
  %1424 = vmatpush1.msra.mxu0 0.0
  %1425 = vmatprep.subr.mxu0 0.0
  %1426 = vmatpush1.msra.mxu0 0.0
  %1427 = vmatprep.subr.mxu0 0.0
  %1428 = vmatpush1.msra.mxu0 0.0
  %1429 = vmatprep.subr.mxu0 0.0
  %1430 = vmatpush1.msra.mxu0 0.0
  %1431 = vmatprep.subr.mxu0 0.0
  %1432 = vmatpush1.msra.mxu0 0.0
  %1433 = vmatprep.subr.mxu0 0.0
  %1434 = vmatpush1.msra.mxu0 0.0
  %1435 = vmatprep.subr.mxu0 0.0
  %1436 = vmatpush1.msra.mxu0 0.0
  %1437 = vmatprep.subr.mxu0 0.0
  %1438 = vmatpush1.msra.mxu0 0.0
  %1439 = vmatprep.subr.mxu0 0.0
  %1440 = vmatpush1.msra.mxu0 0.0
  %1441 = vmatprep.subr.mxu0 0.0
  %1442 = vmatpush1.msra.mxu0 0.0
  %1443 = vmatprep.subr.mxu0 0.0
  %1444 = vmatpush1.msra.mxu0 0.0
  %1445 = vmatprep.subr.mxu0 0.0
  %1446 = vmatpush1.msra.mxu0 0.0
  %1447 = vmatprep.subr.mxu0 0.0
  %1448 = vmatpush1.msra.mxu0 0.0
  %1449 = vmatprep.subr.mxu0 0.0
  %1450 = vmatpush1.msra.mxu0 0.0
  %1451 = vmatprep.subr.mxu0 0.0
  %1452 = vmatpush1.msra.mxu0 0.0
  %1453 = vmatprep.subr.mxu0 0.0
  %1454 = vmatpush1.msra.mxu0 0.0
  %1455 = vmatprep.subr.mxu0 0.0
  %1456 = vmatpush1.msra.mxu0 0.0
  %1457 = vmatprep.subr.mxu0 0.0
  %1458 = vmatpush1.msra.mxu0 0.0
  %1459 = vmatprep.subr.mxu0 0.0
  %1460 = vmatpush1.msra.mxu0 0.0
  %1461 = vmatprep.subr.mxu0 0.0
  %1462 = vmatpush1.msra.mxu0 0.0
  %1463 = vmatprep.subr.mxu0 0.0
  %1464 = vmatpush1.msra.mxu0 0.0
  %1465 = vmatprep.mubr.f32.mxu0 0.0
  %1466 = vmatmul.mubr.f32.gmra.mrb[0].mxu0 %v1390
  %v1467 = vpop.f32.mrb[0].mxu0
  %v1468 = vadd.f32 0.0, %v1467
  %v1469 = vpop.f32.mrb[0].mxu0
  %1470 = vmatprep.mubr.f32.mxu0 0.0
  %1471 = vmatmul.mubr.f32.gmra.mrb[0].mxu0 %v1393
  %v1472 = vpop.f32.mrb[0].mxu0
  %v1473 = vadd.f32 0.0, %v1472
  %v1474 = vpop.f32.mrb[0].mxu0
  %1475 = vmatprep.mubr.f32.mxu0 0.0
  %1476 = vmatmul.mubr.f32.gmra.mrb[0].mxu0 %v1396
  %v1477 = vpop.f32.mrb[0].mxu0
  %v1478 = vadd.f32 0.0, %v1477
  %v1479 = vpop.f32.mrb[0].mxu0
  %1480 = vmatprep.mubr.f32.mxu0 0.0
  %1481 = vmatmul.mubr.f32.gmra.mrb[0].mxu0 %v1399
  %v1482 = vpop.f32.mrb[0].mxu0
  %v1483 = vadd.f32 0.0, %v1482
  %v1484 = vpop.f32.mrb[0].mxu0
  %1485 = vdwg.mxu0
  %1486 = vrot.lane.b32.xlu0 %v458, 56
  %v1487 = vpop.permute.xlu0 %1486
  %1488 = vrot.lane.b32.xlu0 %v463, 56
  %v1489 = vpop.permute.xlu0 %1488
  %1490 = vrot.lane.b32.xlu0 %v468, 56
  %v1491 = vpop.permute.xlu0 %1490
  %1492 = vrot.lane.b32.xlu0 %v473, 56
  %v1493 = vpop.permute.xlu0 %1492
  %v1499 = vsel %vm171, %v1370, 0
  %v1502 = vsel %vm171, %v1372, 0
  %v1505 = vsel %vm171, %v1374, 0
  %v1508 = vsel %vm171, %v1376, 0
  %1510 = vmatprep.subr.mxu0 0.0
  %1511 = vmatpush1.msra.mxu0 %v1487
  %1512 = vmatprep.subr.mxu0 0.0
  %1513 = vmatpush1.msra.mxu0 %v1489
  %1514 = vmatprep.subr.mxu0 0.0
  %1515 = vmatpush1.msra.mxu0 %v1491
  %1516 = vmatprep.subr.mxu0 0.0
  %1517 = vmatpush1.msra.mxu0 %v1493
  %1518 = vmatprep.subr.mxu0 0.0
  %1519 = vmatpush1.msra.mxu0 0.0
  %1520 = vmatprep.subr.mxu0 0.0
  %1521 = vmatpush1.msra.mxu0 0.0
  %1522 = vmatprep.subr.mxu0 0.0
  %1523 = vmatpush1.msra.mxu0 0.0
  %1524 = vmatprep.subr.mxu0 0.0
  %1525 = vmatpush1.msra.mxu0 0.0
  %1526 = vmatprep.subr.mxu0 0.0
  %1527 = vmatpush1.msra.mxu0 0.0
  %1528 = vmatprep.subr.mxu0 0.0
  %1529 = vmatpush1.msra.mxu0 0.0
  %1530 = vmatprep.subr.mxu0 0.0
  %1531 = vmatpush1.msra.mxu0 0.0
  %1532 = vmatprep.subr.mxu0 0.0
  %1533 = vmatpush1.msra.mxu0 0.0
  %1534 = vmatprep.subr.mxu0 0.0
  %1535 = vmatpush1.msra.mxu0 0.0
  %1536 = vmatprep.subr.mxu0 0.0
  %1537 = vmatpush1.msra.mxu0 0.0
  %1538 = vmatprep.subr.mxu0 0.0
  %1539 = vmatpush1.msra.mxu0 0.0
  %1540 = vmatprep.subr.mxu0 0.0
  %1541 = vmatpush1.msra.mxu0 0.0
  %1542 = vmatprep.subr.mxu0 0.0
  %1543 = vmatpush1.msra.mxu0 0.0
  %1544 = vmatprep.subr.mxu0 0.0
  %1545 = vmatpush1.msra.mxu0 0.0
  %1546 = vmatprep.subr.mxu0 0.0
  %1547 = vmatpush1.msra.mxu0 0.0
  %1548 = vmatprep.subr.mxu0 0.0
  %1549 = vmatpush1.msra.mxu0 0.0
  %1550 = vmatprep.subr.mxu0 0.0
  %1551 = vmatpush1.msra.mxu0 0.0
  %1552 = vmatprep.subr.mxu0 0.0
  %1553 = vmatpush1.msra.mxu0 0.0
  %1554 = vmatprep.subr.mxu0 0.0
  %1555 = vmatpush1.msra.mxu0 0.0
  %1556 = vmatprep.subr.mxu0 0.0
  %1557 = vmatpush1.msra.mxu0 0.0
  %1558 = vmatprep.subr.mxu0 0.0
  %1559 = vmatpush1.msra.mxu0 0.0
  %1560 = vmatprep.subr.mxu0 0.0
  %1561 = vmatpush1.msra.mxu0 0.0
  %1562 = vmatprep.subr.mxu0 0.0
  %1563 = vmatpush1.msra.mxu0 0.0
  %1564 = vmatprep.subr.mxu0 0.0
  %1565 = vmatpush1.msra.mxu0 0.0
  %1566 = vmatprep.subr.mxu0 0.0
  %1567 = vmatpush1.msra.mxu0 0.0
  %1568 = vmatprep.subr.mxu0 0.0
  %1569 = vmatpush1.msra.mxu0 0.0
  %1570 = vmatprep.subr.mxu0 0.0
  %1571 = vmatpush1.msra.mxu0 0.0
  %1572 = vmatprep.subr.mxu0 0.0
  %1573 = vmatpush1.msra.mxu0 0.0
  %1574 = vmatprep.mubr.f32.mxu0 0.0
  %1575 = vmatmul.mubr.f32.gmra.mrb[0].mxu0 %v1499
  %v1576 = vpop.f32.mrb[0].mxu0
  %v1577 = vadd.f32 0.0, %v1576
  %v1578 = vpop.f32.mrb[0].mxu0
  %1579 = vmatprep.mubr.f32.mxu0 0.0
  %1580 = vmatmul.mubr.f32.gmra.mrb[0].mxu0 %v1502
  %v1581 = vpop.f32.mrb[0].mxu0
  %v1582 = vadd.f32 0.0, %v1581
  %v1583 = vpop.f32.mrb[0].mxu0
  %1584 = vmatprep.mubr.f32.mxu0 0.0
  %1585 = vmatmul.mubr.f32.gmra.mrb[0].mxu0 %v1505
  %v1586 = vpop.f32.mrb[0].mxu0
  %v1587 = vadd.f32 0.0, %v1586
  %v1588 = vpop.f32.mrb[0].mxu0
  %1589 = vmatprep.mubr.f32.mxu0 0.0
  %1590 = vmatmul.mubr.f32.gmra.mrb[0].mxu0 %v1508
  %v1591 = vpop.f32.mrb[0].mxu0
  %v1592 = vadd.f32 0.0, %v1591
  %v1593 = vpop.f32.mrb[0].mxu0
  %1594 = vdwg.mxu0
  %1603 = vrot.lane.b32.xlu0 %v1468, 8
  %v1604 = vpop.permute.xlu0 %1603
  %1605 = vrot.lane.b32.xlu0 %v1473, 8
  %v1606 = vpop.permute.xlu0 %1605
  %1607 = vrot.lane.b32.xlu0 %v1478, 8
  %v1608 = vpop.permute.xlu0 %1607
  %1609 = vrot.lane.b32.xlu0 %v1483, 8
  %v1610 = vpop.permute.xlu0 %1609
  %1611 = vrot.lane.b32.xlu0 %v1577, 8
  %v1612 = vpop.permute.xlu0 %1611
  %1613 = vrot.lane.b32.xlu0 %v1582, 8
  %v1614 = vpop.permute.xlu0 %1613
  %1615 = vrot.lane.b32.xlu0 %v1587, 8
  %v1616 = vpop.permute.xlu0 %1615
  %1617 = vrot.lane.b32.xlu0 %v1592, 8
  %v1618 = vpop.permute.xlu0 %1617
  %vm1627 = vcmask 130112
  %1628 = vst.msk [vmem:[#allocation3] sm:$0xff] %vm1627, %v1604
  %1629 = vst.msk [vmem:[#allocation3 + $0x8] sm:$0xff] %vm1627, %v1606
  %1630 = vst.msk [vmem:[#allocation3 + $0x10] sm:$0xff] %vm1627, %v1608
  %1631 = vst.msk [vmem:[#allocation3 + $0x18] sm:$0xff] %vm1627, %v1610
  %1632 = vst.msk [vmem:[#allocation3 + $0x20] sm:$0xff] %vm1627, %v1612
  %1633 = vst.msk [vmem:[#allocation3 + $0x28] sm:$0xff] %vm1627, %v1614
  %1634 = vst.msk [vmem:[#allocation3 + $0x30] sm:$0xff] %vm1627, %v1616
  %1635 = vst.msk [vmem:[#allocation3 + $0x38] sm:$0xff] %vm1627, %v1618
  %1636 = vrot.lane.b32.xlu0 %v438, 112
  %v1637 = vpop.permute.xlu0 %1636
  %1638 = vrot.lane.b32.xlu0 %v443, 112
  %v1639 = vpop.permute.xlu0 %1638
  %1640 = vrot.lane.b32.xlu0 %v448, 112
  %v1641 = vpop.permute.xlu0 %1640
  %1642 = vrot.lane.b32.xlu0 %v453, 112
  %v1643 = vpop.permute.xlu0 %1642
  %1644 = vrot.lane.b32.xlu0 %v438, 80
  %v1645 = vpop.permute.xlu0 %1644
  %1646 = vrot.lane.b32.xlu0 %v443, 80
  %v1647 = vpop.permute.xlu0 %1646
  %1648 = vrot.lane.b32.xlu0 %v448, 80
  %v1649 = vpop.permute.xlu0 %1648
  %1650 = vrot.lane.b32.xlu0 %v453, 80
  %v1651 = vpop.permute.xlu0 %1650
  %v1652 = vsel %vm488, %v1637, 0
  %v1654 = vsel %vm488, %v1639, 0
  %v1656 = vsel %vm488, %v1641, 0
  %v1658 = vsel %vm488, %v1643, 0
  %v1660 = vsel %vm488, %v1645, 0
  %v1662 = vsel %vm488, %v1647, 0
  %v1664 = vsel %vm488, %v1649, 0
  %v1666 = vsel %vm488, %v1651, 0
  %1668 = vmatprep.subr.mxu0 0.0
  %1669 = vmatpush1.xpose.msra.mxu0 %v1660
  %1670 = vmatprep.subr.mxu0 0.0
  %1671 = vmatpush1.xpose.msra.mxu0 %v1662
  %1672 = vmatprep.subr.mxu0 0.0
  %1673 = vmatpush1.xpose.msra.mxu0 %v1664
  %1674 = vmatprep.subr.mxu0 0.0
  %1675 = vmatpush1.xpose.msra.mxu0 %v1666
  %1676 = vmatprep.subr.mxu0 0.0
  %1677 = vmatpush1.xpose.msra.mxu0 0.0
  %1678 = vmatprep.subr.mxu0 0.0
  %1679 = vmatpush1.xpose.msra.mxu0 0.0
  %1680 = vmatprep.subr.mxu0 0.0
  %1681 = vmatpush1.xpose.msra.mxu0 0.0
  %1682 = vmatprep.subr.mxu0 0.0
  %1683 = vmatpush1.xpose.msra.mxu0 0.0
  %1684 = vmatprep.subr.mxu0 0.0
  %1685 = vmatpush1.xpose.msra.mxu0 0.0
  %1686 = vmatprep.subr.mxu0 0.0
  %1687 = vmatpush1.xpose.msra.mxu0 0.0
  %1688 = vmatprep.subr.mxu0 0.0
  %1689 = vmatpush1.xpose.msra.mxu0 0.0
  %1690 = vmatprep.subr.mxu0 0.0
  %1691 = vmatpush1.xpose.msra.mxu0 0.0
  %1692 = vmatprep.subr.mxu0 0.0
  %1693 = vmatpush1.xpose.msra.mxu0 0.0
  %1694 = vmatprep.subr.mxu0 0.0
  %1695 = vmatpush1.xpose.msra.mxu0 0.0
  %1696 = vmatprep.subr.mxu0 0.0
  %1697 = vmatpush1.xpose.msra.mxu0 0.0
  %1698 = vmatprep.subr.mxu0 0.0
  %1699 = vmatpush1.xpose.msra.mxu0 0.0
  %1700 = vmatprep.subr.mxu0 0.0
  %1701 = vmatpush1.xpose.msra.mxu0 0.0
  %1702 = vmatprep.subr.mxu0 0.0
  %1703 = vmatpush1.xpose.msra.mxu0 0.0
  %1704 = vmatprep.subr.mxu0 0.0
  %1705 = vmatpush1.xpose.msra.mxu0 0.0
  %1706 = vmatprep.subr.mxu0 0.0
  %1707 = vmatpush1.xpose.msra.mxu0 0.0
  %1708 = vmatprep.subr.mxu0 0.0
  %1709 = vmatpush1.xpose.msra.mxu0 0.0
  %1710 = vmatprep.subr.mxu0 0.0
  %1711 = vmatpush1.xpose.msra.mxu0 0.0
  %1712 = vmatprep.subr.mxu0 0.0
  %1713 = vmatpush1.xpose.msra.mxu0 0.0
  %1714 = vmatprep.subr.mxu0 0.0
  %1715 = vmatpush1.xpose.msra.mxu0 0.0
  %1716 = vmatprep.subr.mxu0 0.0
  %1717 = vmatpush1.xpose.msra.mxu0 0.0
  %1718 = vmatprep.subr.mxu0 0.0
  %1719 = vmatpush1.xpose.msra.mxu0 0.0
  %1720 = vmatprep.subr.mxu0 0.0
  %1721 = vmatpush1.xpose.msra.mxu0 0.0
  %1722 = vmatprep.subr.mxu0 0.0
  %1723 = vmatpush1.xpose.msra.mxu0 0.0
  %1724 = vmatprep.subr.mxu0 0.0
  %1725 = vmatpush1.xpose.msra.mxu0 0.0
  %1726 = vmatprep.subr.mxu0 0.0
  %1727 = vmatpush1.xpose.msra.mxu0 0.0
  %1728 = vmatprep.subr.mxu0 0.0
  %1729 = vmatpush1.xpose.msra.mxu0 0.0
  %1730 = vmatprep.subr.mxu0 0.0
  %1731 = vmatpush1.xpose.msra.mxu0 0.0
  %1732 = vmatprep.mubr.f32.mxu0 0.0
  %1733 = vmatmul.mubr.f32.gmra.mrb[0].mxu0 %v1652
  %v1734 = vpop.f32.mrb[0].mxu0
  %v1735 = vadd.f32 0.0, %v1734
  %v1736 = vpop.f32.mrb[0].mxu0
  %1737 = vmatprep.mubr.f32.mxu0 0.0
  %1738 = vmatmul.mubr.f32.gmra.mrb[0].mxu0 %v1654
  %v1739 = vpop.f32.mrb[0].mxu0
  %v1740 = vadd.f32 0.0, %v1739
  %v1741 = vpop.f32.mrb[0].mxu0
  %1742 = vmatprep.mubr.f32.mxu0 0.0
  %1743 = vmatmul.mubr.f32.gmra.mrb[0].mxu0 %v1656
  %v1744 = vpop.f32.mrb[0].mxu0
  %v1745 = vadd.f32 0.0, %v1744
  %v1746 = vpop.f32.mrb[0].mxu0
  %1747 = vmatprep.mubr.f32.mxu0 0.0
  %1748 = vmatmul.mubr.f32.gmra.mrb[0].mxu0 %v1658
  %v1749 = vpop.f32.mrb[0].mxu0
  %v1750 = vadd.f32 0.0, %v1749
  %v1751 = vpop.f32.mrb[0].mxu0
  %1752 = vdwg.mxu0
  %1753 = vrot.lane.b32.xlu0 %v458, 112
  %v1754 = vpop.permute.xlu0 %1753
  %1755 = vrot.lane.b32.xlu0 %v463, 112
  %v1756 = vpop.permute.xlu0 %1755
  %1757 = vrot.lane.b32.xlu0 %v468, 112
  %v1758 = vpop.permute.xlu0 %1757
  %1759 = vrot.lane.b32.xlu0 %v473, 112
  %v1760 = vpop.permute.xlu0 %1759
  %1761 = vrot.lane.b32.xlu0 %v458, 80
  %v1762 = vpop.permute.xlu0 %1761
  %1763 = vrot.lane.b32.xlu0 %v463, 80
  %v1764 = vpop.permute.xlu0 %1763
  %1765 = vrot.lane.b32.xlu0 %v468, 80
  %v1766 = vpop.permute.xlu0 %1765
  %1767 = vrot.lane.b32.xlu0 %v473, 80
  %v1768 = vpop.permute.xlu0 %1767
  %v1769 = vsel %vm488, %v1754, 0
  %v1771 = vsel %vm488, %v1756, 0
  %v1773 = vsel %vm488, %v1758, 0
  %v1775 = vsel %vm488, %v1760, 0
  %v1777 = vsel %vm488, %v1762, 0
  %v1779 = vsel %vm488, %v1764, 0
  %v1781 = vsel %vm488, %v1766, 0
  %v1783 = vsel %vm488, %v1768, 0
  %1785 = vmatprep.subr.mxu0 0.0
  %1786 = vmatpush1.xpose.msra.mxu0 %v1777
  %1787 = vmatprep.subr.mxu0 0.0
  %1788 = vmatpush1.xpose.msra.mxu0 %v1779
  %1789 = vmatprep.subr.mxu0 0.0
  %1790 = vmatpush1.xpose.msra.mxu0 %v1781
  %1791 = vmatprep.subr.mxu0 0.0
  %1792 = vmatpush1.xpose.msra.mxu0 %v1783
  %1793 = vmatprep.subr.mxu0 0.0
  %1794 = vmatpush1.xpose.msra.mxu0 0.0
  %1795 = vmatprep.subr.mxu0 0.0
  %1796 = vmatpush1.xpose.msra.mxu0 0.0
  %1797 = vmatprep.subr.mxu0 0.0
  %1798 = vmatpush1.xpose.msra.mxu0 0.0
  %1799 = vmatprep.subr.mxu0 0.0
  %1800 = vmatpush1.xpose.msra.mxu0 0.0
  %1801 = vmatprep.subr.mxu0 0.0
  %1802 = vmatpush1.xpose.msra.mxu0 0.0
  %1803 = vmatprep.subr.mxu0 0.0
  %1804 = vmatpush1.xpose.msra.mxu0 0.0
  %1805 = vmatprep.subr.mxu0 0.0
  %1806 = vmatpush1.xpose.msra.mxu0 0.0
  %1807 = vmatprep.subr.mxu0 0.0
  %1808 = vmatpush1.xpose.msra.mxu0 0.0
  %1809 = vmatprep.subr.mxu0 0.0
  %1810 = vmatpush1.xpose.msra.mxu0 0.0
  %1811 = vmatprep.subr.mxu0 0.0
  %1812 = vmatpush1.xpose.msra.mxu0 0.0
  %1813 = vmatprep.subr.mxu0 0.0
  %1814 = vmatpush1.xpose.msra.mxu0 0.0
  %1815 = vmatprep.subr.mxu0 0.0
  %1816 = vmatpush1.xpose.msra.mxu0 0.0
  %1817 = vmatprep.subr.mxu0 0.0
  %1818 = vmatpush1.xpose.msra.mxu0 0.0
  %1819 = vmatprep.subr.mxu0 0.0
  %1820 = vmatpush1.xpose.msra.mxu0 0.0
  %1821 = vmatprep.subr.mxu0 0.0
  %1822 = vmatpush1.xpose.msra.mxu0 0.0
  %1823 = vmatprep.subr.mxu0 0.0
  %1824 = vmatpush1.xpose.msra.mxu0 0.0
  %1825 = vmatprep.subr.mxu0 0.0
  %1826 = vmatpush1.xpose.msra.mxu0 0.0
  %1827 = vmatprep.subr.mxu0 0.0
  %1828 = vmatpush1.xpose.msra.mxu0 0.0
  %1829 = vmatprep.subr.mxu0 0.0
  %1830 = vmatpush1.xpose.msra.mxu0 0.0
  %1831 = vmatprep.subr.mxu0 0.0
  %1832 = vmatpush1.xpose.msra.mxu0 0.0
  %1833 = vmatprep.subr.mxu0 0.0
  %1834 = vmatpush1.xpose.msra.mxu0 0.0
  %1835 = vmatprep.subr.mxu0 0.0
  %1836 = vmatpush1.xpose.msra.mxu0 0.0
  %1837 = vmatprep.subr.mxu0 0.0
  %1838 = vmatpush1.xpose.msra.mxu0 0.0
  %1839 = vmatprep.subr.mxu0 0.0
  %1840 = vmatpush1.xpose.msra.mxu0 0.0
  %1841 = vmatprep.subr.mxu0 0.0
  %1842 = vmatpush1.xpose.msra.mxu0 0.0
  %1843 = vmatprep.subr.mxu0 0.0
  %1844 = vmatpush1.xpose.msra.mxu0 0.0
  %1845 = vmatprep.subr.mxu0 0.0
  %1846 = vmatpush1.xpose.msra.mxu0 0.0
  %1847 = vmatprep.subr.mxu0 0.0
  %1848 = vmatpush1.xpose.msra.mxu0 0.0
  %1849 = vmatprep.mubr.f32.mxu0 0.0
  %1850 = vmatmul.mubr.f32.gmra.mrb[0].mxu0 %v1769
  %v1851 = vpop.f32.mrb[0].mxu0
  %v1852 = vadd.f32 0.0, %v1851
  %v1853 = vpop.f32.mrb[0].mxu0
  %1854 = vmatprep.mubr.f32.mxu0 0.0
  %1855 = vmatmul.mubr.f32.gmra.mrb[0].mxu0 %v1771
  %v1856 = vpop.f32.mrb[0].mxu0
  %v1857 = vadd.f32 0.0, %v1856
  %v1858 = vpop.f32.mrb[0].mxu0
  %1859 = vmatprep.mubr.f32.mxu0 0.0
  %1860 = vmatmul.mubr.f32.gmra.mrb[0].mxu0 %v1773
  %v1861 = vpop.f32.mrb[0].mxu0
  %v1862 = vadd.f32 0.0, %v1861
  %v1863 = vpop.f32.mrb[0].mxu0
  %1864 = vmatprep.mubr.f32.mxu0 0.0
  %1865 = vmatmul.mubr.f32.gmra.mrb[0].mxu0 %v1775
  %v1866 = vpop.f32.mrb[0].mxu0
  %v1867 = vadd.f32 0.0, %v1866
  %v1868 = vpop.f32.mrb[0].mxu0
  %1869 = vdwg.mxu0
  %v1870 = vmul.f32 %v1735, 0.35355338
  %v1871 = vmul.f32 %v1740, 0.35355338
  %v1872 = vmul.f32 %v1745, 0.35355338
  %v1873 = vmul.f32 %v1750, 0.35355338
  %v1874 = vmul.f32 %v1852, 0.35355338
  %v1875 = vmul.f32 %v1857, 0.35355338
  %v1876 = vmul.f32 %v1862, 0.35355338
  %v1877 = vmul.f32 %v1867, 0.35355338
  %v1878 = vadd.f32 %v1870, %v715
  %v1879 = vadd.f32 %v1871, %v715
  %v1880 = vadd.f32 %v1872, %v715
  %v1881 = vadd.f32 %v1873, %v715
  %v1882 = vadd.f32 %v1874, %v715
  %v1883 = vadd.f32 %v1875, %v715
  %v1884 = vadd.f32 %v1876, %v715
  %v1885 = vadd.f32 %v1877, %v715
  %v1886 = vsel %vm171, %v1878, -inf
  %1887 = vmax.xlane.f32.xlu0 %v1886
  %v1888 = vpop.xlane.xlu0 %1887
  %v1889 = vsel %vm171, %v1879, -inf
  %1890 = vmax.xlane.f32.xlu0 %v1889
  %v1891 = vpop.xlane.xlu0 %1890
  %v1892 = vsel %vm171, %v1880, -inf
  %1893 = vmax.xlane.f32.xlu0 %v1892
  %v1894 = vpop.xlane.xlu0 %1893
  %v1895 = vsel %vm171, %v1881, -inf
  %1896 = vmax.xlane.f32.xlu0 %v1895
  %v1897 = vpop.xlane.xlu0 %1896
  %v1898 = vsel %vm171, %v1882, -inf
  %1899 = vmax.xlane.f32.xlu0 %v1898
  %v1900 = vpop.xlane.xlu0 %1899
  %v1901 = vsel %vm171, %v1883, -inf
  %1902 = vmax.xlane.f32.xlu0 %v1901
  %v1903 = vpop.xlane.xlu0 %1902
  %v1904 = vsel %vm171, %v1884, -inf
  %1905 = vmax.xlane.f32.xlu0 %v1904
  %v1906 = vpop.xlane.xlu0 %1905
  %v1907 = vsel %vm171, %v1885, -inf
  %1908 = vmax.xlane.f32.xlu0 %v1907
  %v1909 = vpop.xlane.xlu0 %1908
  %v1910 = vsub.f32 %v1878, %v1888
  %v1911 = vsub.f32 %v1879, %v1891
  %v1912 = vsub.f32 %v1880, %v1894
  %v1913 = vsub.f32 %v1881, %v1897
  %v1914 = vsub.f32 %v1882, %v1900
  %v1915 = vsub.f32 %v1883, %v1903
  %v1916 = vsub.f32 %v1884, %v1906
  %v1917 = vsub.f32 %v1885, %v1909
  %v1918 = vmul.f32 %v1910, 1.442695
  %v1919 = vpow.pop %v1918
  %v1920 = vmul.f32 %v1911, 1.442695
  %v1921 = vpow.pop %v1920
  %v1922 = vmul.f32 %v1912, 1.442695
  %v1923 = vpow.pop %v1922
  %v1924 = vmul.f32 %v1913, 1.442695
  %v1925 = vpow.pop %v1924
  %v1926 = vmul.f32 %v1914, 1.442695
  %v1927 = vpow.pop %v1926
  %v1928 = vmul.f32 %v1915, 1.442695
  %v1929 = vpow.pop %v1928
  %v1930 = vmul.f32 %v1916, 1.442695
  %v1931 = vpow.pop %v1930
  %v1932 = vmul.f32 %v1917, 1.442695
  %v1933 = vpow.pop %v1932
  %v1934 = vsel %vm171, %v1919, 0.0
  %1935 = vadd.xlane.f32.xlu0 %v1934
  %v1936 = vpop.xlane.xlu0 %1935
  %v1937 = vsel %vm171, %v1921, 0.0
  %1938 = vadd.xlane.f32.xlu0 %v1937
  %v1939 = vpop.xlane.xlu0 %1938
  %v1940 = vsel %vm171, %v1923, 0.0
  %1941 = vadd.xlane.f32.xlu0 %v1940
  %v1942 = vpop.xlane.xlu0 %1941
  %v1943 = vsel %vm171, %v1925, 0.0
  %1944 = vadd.xlane.f32.xlu0 %v1943
  %v1945 = vpop.xlane.xlu0 %1944
  %v1946 = vsel %vm171, %v1927, 0.0
  %1947 = vadd.xlane.f32.xlu0 %v1946
  %v1948 = vpop.xlane.xlu0 %1947
  %v1949 = vsel %vm171, %v1929, 0.0
  %1950 = vadd.xlane.f32.xlu0 %v1949
  %v1951 = vpop.xlane.xlu0 %1950
  %v1952 = vsel %vm171, %v1931, 0.0
  %1953 = vadd.xlane.f32.xlu0 %v1952
  %v1954 = vpop.xlane.xlu0 %1953
  %v1955 = vsel %vm171, %v1933, 0.0
  %1956 = vadd.xlane.f32.xlu0 %v1955
  %v1957 = vpop.xlane.xlu0 %1956
  %v1958 = vrcp.pop %v1936
  %v1959 = vmul.f32 %v1919, %v1958
  %v1960 = vrcp.pop %v1939
  %v1961 = vmul.f32 %v1921, %v1960
  %v1962 = vrcp.pop %v1942
  %v1963 = vmul.f32 %v1923, %v1962
  %v1964 = vrcp.pop %v1945
  %v1965 = vmul.f32 %v1925, %v1964
  %v1966 = vrcp.pop %v1948
  %v1967 = vmul.f32 %v1927, %v1966
  %v1968 = vrcp.pop %v1951
  %v1969 = vmul.f32 %v1929, %v1968
  %v1970 = vrcp.pop %v1954
  %v1971 = vmul.f32 %v1931, %v1970
  %v1972 = vrcp.pop %v1957
  %v1973 = vmul.f32 %v1933, %v1972
  %1974 = vrot.lane.b32.xlu0 %v438, 48
  %v1975 = vpop.permute.xlu0 %1974
  %1976 = vrot.lane.b32.xlu0 %v443, 48
  %v1977 = vpop.permute.xlu0 %1976
  %1978 = vrot.lane.b32.xlu0 %v448, 48
  %v1979 = vpop.permute.xlu0 %1978
  %1980 = vrot.lane.b32.xlu0 %v453, 48
  %v1981 = vpop.permute.xlu0 %1980
  %v1987 = vsel %vm171, %v1959, 0
  %v1990 = vsel %vm171, %v1961, 0
  %v1993 = vsel %vm171, %v1963, 0
  %v1996 = vsel %vm171, %v1965, 0
  %1998 = vmatprep.subr.mxu0 0.0
  %1999 = vmatpush1.msra.mxu0 %v1975
  %2000 = vmatprep.subr.mxu0 0.0
  %2001 = vmatpush1.msra.mxu0 %v1977
  %2002 = vmatprep.subr.mxu0 0.0
  %2003 = vmatpush1.msra.mxu0 %v1979
  %2004 = vmatprep.subr.mxu0 0.0
  %2005 = vmatpush1.msra.mxu0 %v1981
  %2006 = vmatprep.subr.mxu0 0.0
  %2007 = vmatpush1.msra.mxu0 0.0
  %2008 = vmatprep.subr.mxu0 0.0
  %2009 = vmatpush1.msra.mxu0 0.0
  %2010 = vmatprep.subr.mxu0 0.0
  %2011 = vmatpush1.msra.mxu0 0.0
  %2012 = vmatprep.subr.mxu0 0.0
  %2013 = vmatpush1.msra.mxu0 0.0
  %2014 = vmatprep.subr.mxu0 0.0
  %2015 = vmatpush1.msra.mxu0 0.0
  %2016 = vmatprep.subr.mxu0 0.0
  %2017 = vmatpush1.msra.mxu0 0.0
  %2018 = vmatprep.subr.mxu0 0.0
  %2019 = vmatpush1.msra.mxu0 0.0
  %2020 = vmatprep.subr.mxu0 0.0
  %2021 = vmatpush1.msra.mxu0 0.0
  %2022 = vmatprep.subr.mxu0 0.0
  %2023 = vmatpush1.msra.mxu0 0.0
  %2024 = vmatprep.subr.mxu0 0.0
  %2025 = vmatpush1.msra.mxu0 0.0
  %2026 = vmatprep.subr.mxu0 0.0
  %2027 = vmatpush1.msra.mxu0 0.0
  %2028 = vmatprep.subr.mxu0 0.0
  %2029 = vmatpush1.msra.mxu0 0.0
  %2030 = vmatprep.subr.mxu0 0.0
  %2031 = vmatpush1.msra.mxu0 0.0
  %2032 = vmatprep.subr.mxu0 0.0
  %2033 = vmatpush1.msra.mxu0 0.0
  %2034 = vmatprep.subr.mxu0 0.0
  %2035 = vmatpush1.msra.mxu0 0.0
  %2036 = vmatprep.subr.mxu0 0.0
  %2037 = vmatpush1.msra.mxu0 0.0
  %2038 = vmatprep.subr.mxu0 0.0
  %2039 = vmatpush1.msra.mxu0 0.0
  %2040 = vmatprep.subr.mxu0 0.0
  %2041 = vmatpush1.msra.mxu0 0.0
  %2042 = vmatprep.subr.mxu0 0.0
  %2043 = vmatpush1.msra.mxu0 0.0
  %2044 = vmatprep.subr.mxu0 0.0
  %2045 = vmatpush1.msra.mxu0 0.0
  %2046 = vmatprep.subr.mxu0 0.0
  %2047 = vmatpush1.msra.mxu0 0.0
  %2048 = vmatprep.subr.mxu0 0.0
  %2049 = vmatpush1.msra.mxu0 0.0
  %2050 = vmatprep.subr.mxu0 0.0
  %2051 = vmatpush1.msra.mxu0 0.0
  %2052 = vmatprep.subr.mxu0 0.0
  %2053 = vmatpush1.msra.mxu0 0.0
  %2054 = vmatprep.subr.mxu0 0.0
  %2055 = vmatpush1.msra.mxu0 0.0
  %2056 = vmatprep.subr.mxu0 0.0
  %2057 = vmatpush1.msra.mxu0 0.0
  %2058 = vmatprep.subr.mxu0 0.0
  %2059 = vmatpush1.msra.mxu0 0.0
  %2060 = vmatprep.subr.mxu0 0.0
  %2061 = vmatpush1.msra.mxu0 0.0
  %2062 = vmatprep.mubr.f32.mxu0 0.0
  %2063 = vmatmul.mubr.f32.gmra.mrb[0].mxu0 %v1987
  %v2064 = vpop.f32.mrb[0].mxu0
  %v2065 = vadd.f32 0.0, %v2064
  %v2066 = vpop.f32.mrb[0].mxu0
  %2067 = vmatprep.mubr.f32.mxu0 0.0
  %2068 = vmatmul.mubr.f32.gmra.mrb[0].mxu0 %v1990
  %v2069 = vpop.f32.mrb[0].mxu0
  %v2070 = vadd.f32 0.0, %v2069
  %v2071 = vpop.f32.mrb[0].mxu0
  %2072 = vmatprep.mubr.f32.mxu0 0.0
  %2073 = vmatmul.mubr.f32.gmra.mrb[0].mxu0 %v1993
  %v2074 = vpop.f32.mrb[0].mxu0
  %v2075 = vadd.f32 0.0, %v2074
  %v2076 = vpop.f32.mrb[0].mxu0
  %2077 = vmatprep.mubr.f32.mxu0 0.0
  %2078 = vmatmul.mubr.f32.gmra.mrb[0].mxu0 %v1996
  %v2079 = vpop.f32.mrb[0].mxu0
  %v2080 = vadd.f32 0.0, %v2079
  %v2081 = vpop.f32.mrb[0].mxu0
  %2082 = vdwg.mxu0
  %2083 = vrot.lane.b32.xlu0 %v458, 48
  %v2084 = vpop.permute.xlu0 %2083
  %2085 = vrot.lane.b32.xlu0 %v463, 48
  %v2086 = vpop.permute.xlu0 %2085
  %2087 = vrot.lane.b32.xlu0 %v468, 48
  %v2088 = vpop.permute.xlu0 %2087
  %2089 = vrot.lane.b32.xlu0 %v473, 48
  %v2090 = vpop.permute.xlu0 %2089
  %v2096 = vsel %vm171, %v1967, 0
  %v2099 = vsel %vm171, %v1969, 0
  %v2102 = vsel %vm171, %v1971, 0
  %v2105 = vsel %vm171, %v1973, 0
  %2107 = vmatprep.subr.mxu0 0.0
  %2108 = vmatpush1.msra.mxu0 %v2084
  %2109 = vmatprep.subr.mxu0 0.0
  %2110 = vmatpush1.msra.mxu0 %v2086
  %2111 = vmatprep.subr.mxu0 0.0
  %2112 = vmatpush1.msra.mxu0 %v2088
  %2113 = vmatprep.subr.mxu0 0.0
  %2114 = vmatpush1.msra.mxu0 %v2090
  %2115 = vmatprep.subr.mxu0 0.0
  %2116 = vmatpush1.msra.mxu0 0.0
  %2117 = vmatprep.subr.mxu0 0.0
  %2118 = vmatpush1.msra.mxu0 0.0
  %2119 = vmatprep.subr.mxu0 0.0
  %2120 = vmatpush1.msra.mxu0 0.0
  %2121 = vmatprep.subr.mxu0 0.0
  %2122 = vmatpush1.msra.mxu0 0.0
  %2123 = vmatprep.subr.mxu0 0.0
  %2124 = vmatpush1.msra.mxu0 0.0
  %2125 = vmatprep.subr.mxu0 0.0
  %2126 = vmatpush1.msra.mxu0 0.0
  %2127 = vmatprep.subr.mxu0 0.0
  %2128 = vmatpush1.msra.mxu0 0.0
  %2129 = vmatprep.subr.mxu0 0.0
  %2130 = vmatpush1.msra.mxu0 0.0
  %2131 = vmatprep.subr.mxu0 0.0
  %2132 = vmatpush1.msra.mxu0 0.0
  %2133 = vmatprep.subr.mxu0 0.0
  %2134 = vmatpush1.msra.mxu0 0.0
  %2135 = vmatprep.subr.mxu0 0.0
  %2136 = vmatpush1.msra.mxu0 0.0
  %2137 = vmatprep.subr.mxu0 0.0
  %2138 = vmatpush1.msra.mxu0 0.0
  %2139 = vmatprep.subr.mxu0 0.0
  %2140 = vmatpush1.msra.mxu0 0.0
  %2141 = vmatprep.subr.mxu0 0.0
  %2142 = vmatpush1.msra.mxu0 0.0
  %2143 = vmatprep.subr.mxu0 0.0
  %2144 = vmatpush1.msra.mxu0 0.0
  %2145 = vmatprep.subr.mxu0 0.0
  %2146 = vmatpush1.msra.mxu0 0.0
  %2147 = vmatprep.subr.mxu0 0.0
  %2148 = vmatpush1.msra.mxu0 0.0
  %2149 = vmatprep.subr.mxu0 0.0
  %2150 = vmatpush1.msra.mxu0 0.0
  %2151 = vmatprep.subr.mxu0 0.0
  %2152 = vmatpush1.msra.mxu0 0.0
  %2153 = vmatprep.subr.mxu0 0.0
  %2154 = vmatpush1.msra.mxu0 0.0
  %2155 = vmatprep.subr.mxu0 0.0
  %2156 = vmatpush1.msra.mxu0 0.0
  %2157 = vmatprep.subr.mxu0 0.0
  %2158 = vmatpush1.msra.mxu0 0.0
  %2159 = vmatprep.subr.mxu0 0.0
  %2160 = vmatpush1.msra.mxu0 0.0
  %2161 = vmatprep.subr.mxu0 0.0
  %2162 = vmatpush1.msra.mxu0 0.0
  %2163 = vmatprep.subr.mxu0 0.0
  %2164 = vmatpush1.msra.mxu0 0.0
  %2165 = vmatprep.subr.mxu0 0.0
  %2166 = vmatpush1.msra.mxu0 0.0
  %2167 = vmatprep.subr.mxu0 0.0
  %2168 = vmatpush1.msra.mxu0 0.0
  %2169 = vmatprep.subr.mxu0 0.0
  %2170 = vmatpush1.msra.mxu0 0.0
  %2171 = vmatprep.mubr.f32.mxu0 0.0
  %2172 = vmatmul.mubr.f32.gmra.mrb[0].mxu0 %v2096
  %v2173 = vpop.f32.mrb[0].mxu0
  %v2174 = vadd.f32 0.0, %v2173
  %v2175 = vpop.f32.mrb[0].mxu0
  %2176 = vmatprep.mubr.f32.mxu0 0.0
  %2177 = vmatmul.mubr.f32.gmra.mrb[0].mxu0 %v2099
  %v2178 = vpop.f32.mrb[0].mxu0
  %v2179 = vadd.f32 0.0, %v2178
  %v2180 = vpop.f32.mrb[0].mxu0
  %2181 = vmatprep.mubr.f32.mxu0 0.0
  %2182 = vmatmul.mubr.f32.gmra.mrb[0].mxu0 %v2102
  %v2183 = vpop.f32.mrb[0].mxu0
  %v2184 = vadd.f32 0.0, %v2183
  %v2185 = vpop.f32.mrb[0].mxu0
  %2186 = vmatprep.mubr.f32.mxu0 0.0
  %2187 = vmatmul.mubr.f32.gmra.mrb[0].mxu0 %v2105
  %v2188 = vpop.f32.mrb[0].mxu0
  %v2189 = vadd.f32 0.0, %v2188
  %v2190 = vpop.f32.mrb[0].mxu0
  %2191 = vdwg.mxu0
  %2200 = vrot.lane.b32.xlu0 %v2065, 16
  %v2201 = vpop.permute.xlu0 %2200
  %2202 = vrot.lane.b32.xlu0 %v2070, 16
  %v2203 = vpop.permute.xlu0 %2202
  %2204 = vrot.lane.b32.xlu0 %v2075, 16
  %v2205 = vpop.permute.xlu0 %2204
  %2206 = vrot.lane.b32.xlu0 %v2080, 16
  %v2207 = vpop.permute.xlu0 %2206
  %2208 = vrot.lane.b32.xlu0 %v2174, 16
  %v2209 = vpop.permute.xlu0 %2208
  %2210 = vrot.lane.b32.xlu0 %v2179, 16
  %v2211 = vpop.permute.xlu0 %2210
  %2212 = vrot.lane.b32.xlu0 %v2184, 16
  %v2213 = vpop.permute.xlu0 %2212
  %2214 = vrot.lane.b32.xlu0 %v2189, 16
  %v2215 = vpop.permute.xlu0 %2214
  %vm2224 = vcmask 195712
  %2225 = vst.msk [vmem:[#allocation3] sm:$0xff] %vm2224, %v2201
  %2226 = vst.msk [vmem:[#allocation3 + $0x8] sm:$0xff] %vm2224, %v2203
  %2227 = vst.msk [vmem:[#allocation3 + $0x10] sm:$0xff] %vm2224, %v2205
  %2228 = vst.msk [vmem:[#allocation3 + $0x18] sm:$0xff] %vm2224, %v2207
  %2229 = vst.msk [vmem:[#allocation3 + $0x20] sm:$0xff] %vm2224, %v2209
  %2230 = vst.msk [vmem:[#allocation3 + $0x28] sm:$0xff] %vm2224, %v2211
  %2231 = vst.msk [vmem:[#allocation3 + $0x30] sm:$0xff] %vm2224, %v2213
  %2232 = vst.msk [vmem:[#allocation3 + $0x38] sm:$0xff] %vm2224, %v2215
  %2233 = vrot.lane.b32.xlu0 %v438, 104
  %v2234 = vpop.permute.xlu0 %2233
  %2235 = vrot.lane.b32.xlu0 %v443, 104
  %v2236 = vpop.permute.xlu0 %2235
  %2237 = vrot.lane.b32.xlu0 %v448, 104
  %v2238 = vpop.permute.xlu0 %2237
  %2239 = vrot.lane.b32.xlu0 %v453, 104
  %v2240 = vpop.permute.xlu0 %2239
  %2241 = vrot.lane.b32.xlu0 %v438, 72
  %v2242 = vpop.permute.xlu0 %2241
  %2243 = vrot.lane.b32.xlu0 %v443, 72
  %v2244 = vpop.permute.xlu0 %2243
  %2245 = vrot.lane.b32.xlu0 %v448, 72
  %v2246 = vpop.permute.xlu0 %2245
  %2247 = vrot.lane.b32.xlu0 %v453, 72
  %v2248 = vpop.permute.xlu0 %2247
  %v2249 = vsel %vm488, %v2234, 0
  %v2251 = vsel %vm488, %v2236, 0
  %v2253 = vsel %vm488, %v2238, 0
  %v2255 = vsel %vm488, %v2240, 0
  %v2257 = vsel %vm488, %v2242, 0
  %v2259 = vsel %vm488, %v2244, 0
  %v2261 = vsel %vm488, %v2246, 0
  %v2263 = vsel %vm488, %v2248, 0
  %2265 = vmatprep.subr.mxu0 0.0
  %2266 = vmatpush1.xpose.msra.mxu0 %v2257
  %2267 = vmatprep.subr.mxu0 0.0
  %2268 = vmatpush1.xpose.msra.mxu0 %v2259
  %2269 = vmatprep.subr.mxu0 0.0
  %2270 = vmatpush1.xpose.msra.mxu0 %v2261
  %2271 = vmatprep.subr.mxu0 0.0
  %2272 = vmatpush1.xpose.msra.mxu0 %v2263
  %2273 = vmatprep.subr.mxu0 0.0
  %2274 = vmatpush1.xpose.msra.mxu0 0.0
  %2275 = vmatprep.subr.mxu0 0.0
  %2276 = vmatpush1.xpose.msra.mxu0 0.0
  %2277 = vmatprep.subr.mxu0 0.0
  %2278 = vmatpush1.xpose.msra.mxu0 0.0
  %2279 = vmatprep.subr.mxu0 0.0
  %2280 = vmatpush1.xpose.msra.mxu0 0.0
  %2281 = vmatprep.subr.mxu0 0.0
  %2282 = vmatpush1.xpose.msra.mxu0 0.0
  %2283 = vmatprep.subr.mxu0 0.0
  %2284 = vmatpush1.xpose.msra.mxu0 0.0
  %2285 = vmatprep.subr.mxu0 0.0
  %2286 = vmatpush1.xpose.msra.mxu0 0.0
  %2287 = vmatprep.subr.mxu0 0.0
  %2288 = vmatpush1.xpose.msra.mxu0 0.0
  %2289 = vmatprep.subr.mxu0 0.0
  %2290 = vmatpush1.xpose.msra.mxu0 0.0
  %2291 = vmatprep.subr.mxu0 0.0
  %2292 = vmatpush1.xpose.msra.mxu0 0.0
  %2293 = vmatprep.subr.mxu0 0.0
  %2294 = vmatpush1.xpose.msra.mxu0 0.0
  %2295 = vmatprep.subr.mxu0 0.0
  %2296 = vmatpush1.xpose.msra.mxu0 0.0
  %2297 = vmatprep.subr.mxu0 0.0
  %2298 = vmatpush1.xpose.msra.mxu0 0.0
  %2299 = vmatprep.subr.mxu0 0.0
  %2300 = vmatpush1.xpose.msra.mxu0 0.0
  %2301 = vmatprep.subr.mxu0 0.0
  %2302 = vmatpush1.xpose.msra.mxu0 0.0
  %2303 = vmatprep.subr.mxu0 0.0
  %2304 = vmatpush1.xpose.msra.mxu0 0.0
  %2305 = vmatprep.subr.mxu0 0.0
  %2306 = vmatpush1.xpose.msra.mxu0 0.0
  %2307 = vmatprep.subr.mxu0 0.0
  %2308 = vmatpush1.xpose.msra.mxu0 0.0
  %2309 = vmatprep.subr.mxu0 0.0
  %2310 = vmatpush1.xpose.msra.mxu0 0.0
  %2311 = vmatprep.subr.mxu0 0.0
  %2312 = vmatpush1.xpose.msra.mxu0 0.0
  %2313 = vmatprep.subr.mxu0 0.0
  %2314 = vmatpush1.xpose.msra.mxu0 0.0
  %2315 = vmatprep.subr.mxu0 0.0
  %2316 = vmatpush1.xpose.msra.mxu0 0.0
  %2317 = vmatprep.subr.mxu0 0.0
  %2318 = vmatpush1.xpose.msra.mxu0 0.0
  %2319 = vmatprep.subr.mxu0 0.0
  %2320 = vmatpush1.xpose.msra.mxu0 0.0
  %2321 = vmatprep.subr.mxu0 0.0
  %2322 = vmatpush1.xpose.msra.mxu0 0.0
  %2323 = vmatprep.subr.mxu0 0.0
  %2324 = vmatpush1.xpose.msra.mxu0 0.0
  %2325 = vmatprep.subr.mxu0 0.0
  %2326 = vmatpush1.xpose.msra.mxu0 0.0
  %2327 = vmatprep.subr.mxu0 0.0
  %2328 = vmatpush1.xpose.msra.mxu0 0.0
  %2329 = vmatprep.mubr.f32.mxu0 0.0
  %2330 = vmatmul.mubr.f32.gmra.mrb[0].mxu0 %v2249
  %v2331 = vpop.f32.mrb[0].mxu0
  %v2332 = vadd.f32 0.0, %v2331
  %v2333 = vpop.f32.mrb[0].mxu0
  %2334 = vmatprep.mubr.f32.mxu0 0.0
  %2335 = vmatmul.mubr.f32.gmra.mrb[0].mxu0 %v2251
  %v2336 = vpop.f32.mrb[0].mxu0
  %v2337 = vadd.f32 0.0, %v2336
  %v2338 = vpop.f32.mrb[0].mxu0
  %2339 = vmatprep.mubr.f32.mxu0 0.0
  %2340 = vmatmul.mubr.f32.gmra.mrb[0].mxu0 %v2253
  %v2341 = vpop.f32.mrb[0].mxu0
  %v2342 = vadd.f32 0.0, %v2341
  %v2343 = vpop.f32.mrb[0].mxu0
  %2344 = vmatprep.mubr.f32.mxu0 0.0
  %2345 = vmatmul.mubr.f32.gmra.mrb[0].mxu0 %v2255
  %v2346 = vpop.f32.mrb[0].mxu0
  %v2347 = vadd.f32 0.0, %v2346
  %v2348 = vpop.f32.mrb[0].mxu0
  %2349 = vdwg.mxu0
  %2350 = vrot.lane.b32.xlu0 %v458, 104
  %v2351 = vpop.permute.xlu0 %2350
  %2352 = vrot.lane.b32.xlu0 %v463, 104
  %v2353 = vpop.permute.xlu0 %2352
  %2354 = vrot.lane.b32.xlu0 %v468, 104
  %v2355 = vpop.permute.xlu0 %2354
  %2356 = vrot.lane.b32.xlu0 %v473, 104
  %v2357 = vpop.permute.xlu0 %2356
  %2358 = vrot.lane.b32.xlu0 %v458, 72
  %v2359 = vpop.permute.xlu0 %2358
  %2360 = vrot.lane.b32.xlu0 %v463, 72
  %v2361 = vpop.permute.xlu0 %2360
  %2362 = vrot.lane.b32.xlu0 %v468, 72
  %v2363 = vpop.permute.xlu0 %2362
  %2364 = vrot.lane.b32.xlu0 %v473, 72
  %v2365 = vpop.permute.xlu0 %2364
  %v2366 = vsel %vm488, %v2351, 0
  %v2368 = vsel %vm488, %v2353, 0
  %v2370 = vsel %vm488, %v2355, 0
  %v2372 = vsel %vm488, %v2357, 0
  %v2374 = vsel %vm488, %v2359, 0
  %v2376 = vsel %vm488, %v2361, 0
  %v2378 = vsel %vm488, %v2363, 0
  %v2380 = vsel %vm488, %v2365, 0
  %2382 = vmatprep.subr.mxu0 0.0
  %2383 = vmatpush1.xpose.msra.mxu0 %v2374
  %2384 = vmatprep.subr.mxu0 0.0
  %2385 = vmatpush1.xpose.msra.mxu0 %v2376
  %2386 = vmatprep.subr.mxu0 0.0
  %2387 = vmatpush1.xpose.msra.mxu0 %v2378
  %2388 = vmatprep.subr.mxu0 0.0
  %2389 = vmatpush1.xpose.msra.mxu0 %v2380
  %2390 = vmatprep.subr.mxu0 0.0
  %2391 = vmatpush1.xpose.msra.mxu0 0.0
  %2392 = vmatprep.subr.mxu0 0.0
  %2393 = vmatpush1.xpose.msra.mxu0 0.0
  %2394 = vmatprep.subr.mxu0 0.0
  %2395 = vmatpush1.xpose.msra.mxu0 0.0
  %2396 = vmatprep.subr.mxu0 0.0
  %2397 = vmatpush1.xpose.msra.mxu0 0.0
  %2398 = vmatprep.subr.mxu0 0.0
  %2399 = vmatpush1.xpose.msra.mxu0 0.0
  %2400 = vmatprep.subr.mxu0 0.0
  %2401 = vmatpush1.xpose.msra.mxu0 0.0
  %2402 = vmatprep.subr.mxu0 0.0
  %2403 = vmatpush1.xpose.msra.mxu0 0.0
  %2404 = vmatprep.subr.mxu0 0.0
  %2405 = vmatpush1.xpose.msra.mxu0 0.0
  %2406 = vmatprep.subr.mxu0 0.0
  %2407 = vmatpush1.xpose.msra.mxu0 0.0
  %2408 = vmatprep.subr.mxu0 0.0
  %2409 = vmatpush1.xpose.msra.mxu0 0.0
  %2410 = vmatprep.subr.mxu0 0.0
  %2411 = vmatpush1.xpose.msra.mxu0 0.0
  %2412 = vmatprep.subr.mxu0 0.0
  %2413 = vmatpush1.xpose.msra.mxu0 0.0
  %2414 = vmatprep.subr.mxu0 0.0
  %2415 = vmatpush1.xpose.msra.mxu0 0.0
  %2416 = vmatprep.subr.mxu0 0.0
  %2417 = vmatpush1.xpose.msra.mxu0 0.0
  %2418 = vmatprep.subr.mxu0 0.0
  %2419 = vmatpush1.xpose.msra.mxu0 0.0
  %2420 = vmatprep.subr.mxu0 0.0
  %2421 = vmatpush1.xpose.msra.mxu0 0.0
  %2422 = vmatprep.subr.mxu0 0.0
  %2423 = vmatpush1.xpose.msra.mxu0 0.0
  %2424 = vmatprep.subr.mxu0 0.0
  %2425 = vmatpush1.xpose.msra.mxu0 0.0
  %2426 = vmatprep.subr.mxu0 0.0
  %2427 = vmatpush1.xpose.msra.mxu0 0.0
  %2428 = vmatprep.subr.mxu0 0.0
  %2429 = vmatpush1.xpose.msra.mxu0 0.0
  %2430 = vmatprep.subr.mxu0 0.0
  %2431 = vmatpush1.xpose.msra.mxu0 0.0
  %2432 = vmatprep.subr.mxu0 0.0
  %2433 = vmatpush1.xpose.msra.mxu0 0.0
  %2434 = vmatprep.subr.mxu0 0.0
  %2435 = vmatpush1.xpose.msra.mxu0 0.0
  %2436 = vmatprep.subr.mxu0 0.0
  %2437 = vmatpush1.xpose.msra.mxu0 0.0
  %2438 = vmatprep.subr.mxu0 0.0
  %2439 = vmatpush1.xpose.msra.mxu0 0.0
  %2440 = vmatprep.subr.mxu0 0.0
  %2441 = vmatpush1.xpose.msra.mxu0 0.0
  %2442 = vmatprep.subr.mxu0 0.0
  %2443 = vmatpush1.xpose.msra.mxu0 0.0
  %2444 = vmatprep.subr.mxu0 0.0
  %2445 = vmatpush1.xpose.msra.mxu0 0.0
  %2446 = vmatprep.mubr.f32.mxu0 0.0
  %2447 = vmatmul.mubr.f32.gmra.mrb[0].mxu0 %v2366
  %v2448 = vpop.f32.mrb[0].mxu0
  %v2449 = vadd.f32 0.0, %v2448
  %v2450 = vpop.f32.mrb[0].mxu0
  %2451 = vmatprep.mubr.f32.mxu0 0.0
  %2452 = vmatmul.mubr.f32.gmra.mrb[0].mxu0 %v2368
  %v2453 = vpop.f32.mrb[0].mxu0
  %v2454 = vadd.f32 0.0, %v2453
  %v2455 = vpop.f32.mrb[0].mxu0
  %2456 = vmatprep.mubr.f32.mxu0 0.0
  %2457 = vmatmul.mubr.f32.gmra.mrb[0].mxu0 %v2370
  %v2458 = vpop.f32.mrb[0].mxu0
  %v2459 = vadd.f32 0.0, %v2458
  %v2460 = vpop.f32.mrb[0].mxu0
  %2461 = vmatprep.mubr.f32.mxu0 0.0
  %2462 = vmatmul.mubr.f32.gmra.mrb[0].mxu0 %v2372
  %v2463 = vpop.f32.mrb[0].mxu0
  %v2464 = vadd.f32 0.0, %v2463
  %v2465 = vpop.f32.mrb[0].mxu0
  %2466 = vdwg.mxu0
  %v2467 = vmul.f32 %v2332, 0.35355338
  %v2468 = vmul.f32 %v2337, 0.35355338
  %v2469 = vmul.f32 %v2342, 0.35355338
  %v2470 = vmul.f32 %v2347, 0.35355338
  %v2471 = vmul.f32 %v2449, 0.35355338
  %v2472 = vmul.f32 %v2454, 0.35355338
  %v2473 = vmul.f32 %v2459, 0.35355338
  %v2474 = vmul.f32 %v2464, 0.35355338
  %v2475 = vadd.f32 %v2467, %v715
  %v2476 = vadd.f32 %v2468, %v715
  %v2477 = vadd.f32 %v2469, %v715
  %v2478 = vadd.f32 %v2470, %v715
  %v2479 = vadd.f32 %v2471, %v715
  %v2480 = vadd.f32 %v2472, %v715
  %v2481 = vadd.f32 %v2473, %v715
  %v2482 = vadd.f32 %v2474, %v715
  %v2483 = vsel %vm171, %v2475, -inf
  %2484 = vmax.xlane.f32.xlu0 %v2483
  %v2485 = vpop.xlane.xlu0 %2484
  %v2486 = vsel %vm171, %v2476, -inf
  %2487 = vmax.xlane.f32.xlu0 %v2486
  %v2488 = vpop.xlane.xlu0 %2487
  %v2489 = vsel %vm171, %v2477, -inf
  %2490 = vmax.xlane.f32.xlu0 %v2489
  %v2491 = vpop.xlane.xlu0 %2490
  %v2492 = vsel %vm171, %v2478, -inf
  %2493 = vmax.xlane.f32.xlu0 %v2492
  %v2494 = vpop.xlane.xlu0 %2493
  %v2495 = vsel %vm171, %v2479, -inf
  %2496 = vmax.xlane.f32.xlu0 %v2495
  %v2497 = vpop.xlane.xlu0 %2496
  %v2498 = vsel %vm171, %v2480, -inf
  %2499 = vmax.xlane.f32.xlu0 %v2498
  %v2500 = vpop.xlane.xlu0 %2499
  %v2501 = vsel %vm171, %v2481, -inf
  %2502 = vmax.xlane.f32.xlu0 %v2501
  %v2503 = vpop.xlane.xlu0 %2502
  %v2504 = vsel %vm171, %v2482, -inf
  %2505 = vmax.xlane.f32.xlu0 %v2504
  %v2506 = vpop.xlane.xlu0 %2505
  %v2507 = vsub.f32 %v2475, %v2485
  %v2508 = vsub.f32 %v2476, %v2488
  %v2509 = vsub.f32 %v2477, %v2491
  %v2510 = vsub.f32 %v2478, %v2494
  %v2511 = vsub.f32 %v2479, %v2497
  %v2512 = vsub.f32 %v2480, %v2500
  %v2513 = vsub.f32 %v2481, %v2503
  %v2514 = vsub.f32 %v2482, %v2506
  %v2515 = vmul.f32 %v2507, 1.442695
  %v2516 = vpow.pop %v2515
  %v2517 = vmul.f32 %v2508, 1.442695
  %v2518 = vpow.pop %v2517
  %v2519 = vmul.f32 %v2509, 1.442695
  %v2520 = vpow.pop %v2519
  %v2521 = vmul.f32 %v2510, 1.442695
  %v2522 = vpow.pop %v2521
  %v2523 = vmul.f32 %v2511, 1.442695
  %v2524 = vpow.pop %v2523
  %v2525 = vmul.f32 %v2512, 1.442695
  %v2526 = vpow.pop %v2525
  %v2527 = vmul.f32 %v2513, 1.442695
  %v2528 = vpow.pop %v2527
  %v2529 = vmul.f32 %v2514, 1.442695
  %v2530 = vpow.pop %v2529
  %v2531 = vsel %vm171, %v2516, 0.0
  %2532 = vadd.xlane.f32.xlu0 %v2531
  %v2533 = vpop.xlane.xlu0 %2532
  %v2534 = vsel %vm171, %v2518, 0.0
  %2535 = vadd.xlane.f32.xlu0 %v2534
  %v2536 = vpop.xlane.xlu0 %2535
  %v2537 = vsel %vm171, %v2520, 0.0
  %2538 = vadd.xlane.f32.xlu0 %v2537
  %v2539 = vpop.xlane.xlu0 %2538
  %v2540 = vsel %vm171, %v2522, 0.0
  %2541 = vadd.xlane.f32.xlu0 %v2540
  %v2542 = vpop.xlane.xlu0 %2541
  %v2543 = vsel %vm171, %v2524, 0.0
  %2544 = vadd.xlane.f32.xlu0 %v2543
  %v2545 = vpop.xlane.xlu0 %2544
  %v2546 = vsel %vm171, %v2526, 0.0
  %2547 = vadd.xlane.f32.xlu0 %v2546
  %v2548 = vpop.xlane.xlu0 %2547
  %v2549 = vsel %vm171, %v2528, 0.0
  %2550 = vadd.xlane.f32.xlu0 %v2549
  %v2551 = vpop.xlane.xlu0 %2550
  %v2552 = vsel %vm171, %v2530, 0.0
  %2553 = vadd.xlane.f32.xlu0 %v2552
  %v2554 = vpop.xlane.xlu0 %2553
  %v2555 = vrcp.pop %v2533
  %v2556 = vmul.f32 %v2516, %v2555
  %v2557 = vrcp.pop %v2536
  %v2558 = vmul.f32 %v2518, %v2557
  %v2559 = vrcp.pop %v2539
  %v2560 = vmul.f32 %v2520, %v2559
  %v2561 = vrcp.pop %v2542
  %v2562 = vmul.f32 %v2522, %v2561
  %v2563 = vrcp.pop %v2545
  %v2564 = vmul.f32 %v2524, %v2563
  %v2565 = vrcp.pop %v2548
  %v2566 = vmul.f32 %v2526, %v2565
  %v2567 = vrcp.pop %v2551
  %v2568 = vmul.f32 %v2528, %v2567
  %v2569 = vrcp.pop %v2554
  %v2570 = vmul.f32 %v2530, %v2569
  %2571 = vrot.lane.b32.xlu0 %v438, 40
  %v2572 = vpop.permute.xlu0 %2571
  %2573 = vrot.lane.b32.xlu0 %v443, 40
  %v2574 = vpop.permute.xlu0 %2573
  %2575 = vrot.lane.b32.xlu0 %v448, 40
  %v2576 = vpop.permute.xlu0 %2575
  %2577 = vrot.lane.b32.xlu0 %v453, 40
  %v2578 = vpop.permute.xlu0 %2577
  %v2584 = vsel %vm171, %v2556, 0
  %v2587 = vsel %vm171, %v2558, 0
  %v2590 = vsel %vm171, %v2560, 0
  %v2593 = vsel %vm171, %v2562, 0
  %2595 = vmatprep.subr.mxu0 0.0
  %2596 = vmatpush1.msra.mxu0 %v2572
  %2597 = vmatprep.subr.mxu0 0.0
  %2598 = vmatpush1.msra.mxu0 %v2574
  %2599 = vmatprep.subr.mxu0 0.0
  %2600 = vmatpush1.msra.mxu0 %v2576
  %2601 = vmatprep.subr.mxu0 0.0
  %2602 = vmatpush1.msra.mxu0 %v2578
  %2603 = vmatprep.subr.mxu0 0.0
  %2604 = vmatpush1.msra.mxu0 0.0
  %2605 = vmatprep.subr.mxu0 0.0
  %2606 = vmatpush1.msra.mxu0 0.0
  %2607 = vmatprep.subr.mxu0 0.0
  %2608 = vmatpush1.msra.mxu0 0.0
  %2609 = vmatprep.subr.mxu0 0.0
  %2610 = vmatpush1.msra.mxu0 0.0
  %2611 = vmatprep.subr.mxu0 0.0
  %2612 = vmatpush1.msra.mxu0 0.0
  %2613 = vmatprep.subr.mxu0 0.0
  %2614 = vmatpush1.msra.mxu0 0.0
  %2615 = vmatprep.subr.mxu0 0.0
  %2616 = vmatpush1.msra.mxu0 0.0
  %2617 = vmatprep.subr.mxu0 0.0
  %2618 = vmatpush1.msra.mxu0 0.0
  %2619 = vmatprep.subr.mxu0 0.0
  %2620 = vmatpush1.msra.mxu0 0.0
  %2621 = vmatprep.subr.mxu0 0.0
  %2622 = vmatpush1.msra.mxu0 0.0
  %2623 = vmatprep.subr.mxu0 0.0
  %2624 = vmatpush1.msra.mxu0 0.0
  %2625 = vmatprep.subr.mxu0 0.0
  %2626 = vmatpush1.msra.mxu0 0.0
  %2627 = vmatprep.subr.mxu0 0.0
  %2628 = vmatpush1.msra.mxu0 0.0
  %2629 = vmatprep.subr.mxu0 0.0
  %2630 = vmatpush1.msra.mxu0 0.0
  %2631 = vmatprep.subr.mxu0 0.0
  %2632 = vmatpush1.msra.mxu0 0.0
  %2633 = vmatprep.subr.mxu0 0.0
  %2634 = vmatpush1.msra.mxu0 0.0
  %2635 = vmatprep.subr.mxu0 0.0
  %2636 = vmatpush1.msra.mxu0 0.0
  %2637 = vmatprep.subr.mxu0 0.0
  %2638 = vmatpush1.msra.mxu0 0.0
  %2639 = vmatprep.subr.mxu0 0.0
  %2640 = vmatpush1.msra.mxu0 0.0
  %2641 = vmatprep.subr.mxu0 0.0
  %2642 = vmatpush1.msra.mxu0 0.0
  %2643 = vmatprep.subr.mxu0 0.0
  %2644 = vmatpush1.msra.mxu0 0.0
  %2645 = vmatprep.subr.mxu0 0.0
  %2646 = vmatpush1.msra.mxu0 0.0
  %2647 = vmatprep.subr.mxu0 0.0
  %2648 = vmatpush1.msra.mxu0 0.0
  %2649 = vmatprep.subr.mxu0 0.0
  %2650 = vmatpush1.msra.mxu0 0.0
  %2651 = vmatprep.subr.mxu0 0.0
  %2652 = vmatpush1.msra.mxu0 0.0
  %2653 = vmatprep.subr.mxu0 0.0
  %2654 = vmatpush1.msra.mxu0 0.0
  %2655 = vmatprep.subr.mxu0 0.0
  %2656 = vmatpush1.msra.mxu0 0.0
  %2657 = vmatprep.subr.mxu0 0.0
  %2658 = vmatpush1.msra.mxu0 0.0
  %2659 = vmatprep.mubr.f32.mxu0 0.0
  %2660 = vmatmul.mubr.f32.gmra.mrb[0].mxu0 %v2584
  %v2661 = vpop.f32.mrb[0].mxu0
  %v2662 = vadd.f32 0.0, %v2661
  %v2663 = vpop.f32.mrb[0].mxu0
  %2664 = vmatprep.mubr.f32.mxu0 0.0
  %2665 = vmatmul.mubr.f32.gmra.mrb[0].mxu0 %v2587
  %v2666 = vpop.f32.mrb[0].mxu0
  %v2667 = vadd.f32 0.0, %v2666
  %v2668 = vpop.f32.mrb[0].mxu0
  %2669 = vmatprep.mubr.f32.mxu0 0.0
  %2670 = vmatmul.mubr.f32.gmra.mrb[0].mxu0 %v2590
  %v2671 = vpop.f32.mrb[0].mxu0
  %v2672 = vadd.f32 0.0, %v2671
  %v2673 = vpop.f32.mrb[0].mxu0
  %2674 = vmatprep.mubr.f32.mxu0 0.0
  %2675 = vmatmul.mubr.f32.gmra.mrb[0].mxu0 %v2593
  %v2676 = vpop.f32.mrb[0].mxu0
  %v2677 = vadd.f32 0.0, %v2676
  %v2678 = vpop.f32.mrb[0].mxu0
  %2679 = vdwg.mxu0
  %2680 = vrot.lane.b32.xlu0 %v458, 40
  %v2681 = vpop.permute.xlu0 %2680
  %2682 = vrot.lane.b32.xlu0 %v463, 40
  %v2683 = vpop.permute.xlu0 %2682
  %2684 = vrot.lane.b32.xlu0 %v468, 40
  %v2685 = vpop.permute.xlu0 %2684
  %2686 = vrot.lane.b32.xlu0 %v473, 40
  %v2687 = vpop.permute.xlu0 %2686
  %v2693 = vsel %vm171, %v2564, 0
  %v2696 = vsel %vm171, %v2566, 0
  %v2699 = vsel %vm171, %v2568, 0
  %v2702 = vsel %vm171, %v2570, 0
  %2704 = vmatprep.subr.mxu0 0.0
  %2705 = vmatpush1.msra.mxu0 %v2681
  %2706 = vmatprep.subr.mxu0 0.0
  %2707 = vmatpush1.msra.mxu0 %v2683
  %2708 = vmatprep.subr.mxu0 0.0
  %2709 = vmatpush1.msra.mxu0 %v2685
  %2710 = vmatprep.subr.mxu0 0.0
  %2711 = vmatpush1.msra.mxu0 %v2687
  %2712 = vmatprep.subr.mxu0 0.0
  %2713 = vmatpush1.msra.mxu0 0.0
  %2714 = vmatprep.subr.mxu0 0.0
  %2715 = vmatpush1.msra.mxu0 0.0
  %2716 = vmatprep.subr.mxu0 0.0
  %2717 = vmatpush1.msra.mxu0 0.0
  %2718 = vmatprep.subr.mxu0 0.0
  %2719 = vmatpush1.msra.mxu0 0.0
  %2720 = vmatprep.subr.mxu0 0.0
  %2721 = vmatpush1.msra.mxu0 0.0
  %2722 = vmatprep.subr.mxu0 0.0
  %2723 = vmatpush1.msra.mxu0 0.0
  %2724 = vmatprep.subr.mxu0 0.0
  %2725 = vmatpush1.msra.mxu0 0.0
  %2726 = vmatprep.subr.mxu0 0.0
  %2727 = vmatpush1.msra.mxu0 0.0
  %2728 = vmatprep.subr.mxu0 0.0
  %2729 = vmatpush1.msra.mxu0 0.0
  %2730 = vmatprep.subr.mxu0 0.0
  %2731 = vmatpush1.msra.mxu0 0.0
  %2732 = vmatprep.subr.mxu0 0.0
  %2733 = vmatpush1.msra.mxu0 0.0
  %2734 = vmatprep.subr.mxu0 0.0
  %2735 = vmatpush1.msra.mxu0 0.0
  %2736 = vmatprep.subr.mxu0 0.0
  %2737 = vmatpush1.msra.mxu0 0.0
  %2738 = vmatprep.subr.mxu0 0.0
  %2739 = vmatpush1.msra.mxu0 0.0
  %2740 = vmatprep.subr.mxu0 0.0
  %2741 = vmatpush1.msra.mxu0 0.0
  %2742 = vmatprep.subr.mxu0 0.0
  %2743 = vmatpush1.msra.mxu0 0.0
  %2744 = vmatprep.subr.mxu0 0.0
  %2745 = vmatpush1.msra.mxu0 0.0
  %2746 = vmatprep.subr.mxu0 0.0
  %2747 = vmatpush1.msra.mxu0 0.0
  %2748 = vmatprep.subr.mxu0 0.0
  %2749 = vmatpush1.msra.mxu0 0.0
  %2750 = vmatprep.subr.mxu0 0.0
  %2751 = vmatpush1.msra.mxu0 0.0
  %2752 = vmatprep.subr.mxu0 0.0
  %2753 = vmatpush1.msra.mxu0 0.0
  %2754 = vmatprep.subr.mxu0 0.0
  %2755 = vmatpush1.msra.mxu0 0.0
  %2756 = vmatprep.subr.mxu0 0.0
  %2757 = vmatpush1.msra.mxu0 0.0
  %2758 = vmatprep.subr.mxu0 0.0
  %2759 = vmatpush1.msra.mxu0 0.0
  %2760 = vmatprep.subr.mxu0 0.0
  %2761 = vmatpush1.msra.mxu0 0.0
  %2762 = vmatprep.subr.mxu0 0.0
  %2763 = vmatpush1.msra.mxu0 0.0
  %2764 = vmatprep.subr.mxu0 0.0
  %2765 = vmatpush1.msra.mxu0 0.0
  %2766 = vmatprep.subr.mxu0 0.0
  %2767 = vmatpush1.msra.mxu0 0.0
  %2768 = vmatprep.mubr.f32.mxu0 0.0
  %2769 = vmatmul.mubr.f32.gmra.mrb[0].mxu0 %v2693
  %v2770 = vpop.f32.mrb[0].mxu0
  %v2771 = vadd.f32 0.0, %v2770
  %v2772 = vpop.f32.mrb[0].mxu0
  %2773 = vmatprep.mubr.f32.mxu0 0.0
  %2774 = vmatmul.mubr.f32.gmra.mrb[0].mxu0 %v2696
  %v2775 = vpop.f32.mrb[0].mxu0
  %v2776 = vadd.f32 0.0, %v2775
  %v2777 = vpop.f32.mrb[0].mxu0
  %2778 = vmatprep.mubr.f32.mxu0 0.0
  %2779 = vmatmul.mubr.f32.gmra.mrb[0].mxu0 %v2699
  %v2780 = vpop.f32.mrb[0].mxu0
  %v2781 = vadd.f32 0.0, %v2780
  %v2782 = vpop.f32.mrb[0].mxu0
  %2783 = vmatprep.mubr.f32.mxu0 0.0
  %2784 = vmatmul.mubr.f32.gmra.mrb[0].mxu0 %v2702
  %v2785 = vpop.f32.mrb[0].mxu0
  %v2786 = vadd.f32 0.0, %v2785
  %v2787 = vpop.f32.mrb[0].mxu0
  %2788 = vdwg.mxu0
  %2797 = vrot.lane.b32.xlu0 %v2662, 24
  %v2798 = vpop.permute.xlu0 %2797
  %2799 = vrot.lane.b32.xlu0 %v2667, 24
  %v2800 = vpop.permute.xlu0 %2799
  %2801 = vrot.lane.b32.xlu0 %v2672, 24
  %v2802 = vpop.permute.xlu0 %2801
  %2803 = vrot.lane.b32.xlu0 %v2677, 24
  %v2804 = vpop.permute.xlu0 %2803
  %2805 = vrot.lane.b32.xlu0 %v2771, 24
  %v2806 = vpop.permute.xlu0 %2805
  %2807 = vrot.lane.b32.xlu0 %v2776, 24
  %v2808 = vpop.permute.xlu0 %2807
  %2809 = vrot.lane.b32.xlu0 %v2781, 24
  %v2810 = vpop.permute.xlu0 %2809
  %2811 = vrot.lane.b32.xlu0 %v2786, 24
  %v2812 = vpop.permute.xlu0 %2811
  %vm2821 = vcmask 261312
  %2822 = vst.msk [vmem:[#allocation3] sm:$0xff] %vm2821, %v2798
  %2823 = vst.msk [vmem:[#allocation3 + $0x8] sm:$0xff] %vm2821, %v2800
  %2824 = vst.msk [vmem:[#allocation3 + $0x10] sm:$0xff] %vm2821, %v2802
  %2825 = vst.msk [vmem:[#allocation3 + $0x18] sm:$0xff] %vm2821, %v2804
  %2826 = vst.msk [vmem:[#allocation3 + $0x20] sm:$0xff] %vm2821, %v2806
  %2827 = vst.msk [vmem:[#allocation3 + $0x28] sm:$0xff] %vm2821, %v2808
  %2828 = vst.msk [vmem:[#allocation3 + $0x30] sm:$0xff] %vm2821, %v2810
  %2829 = vst.msk [vmem:[#allocation3 + $0x38] sm:$0xff] %vm2821, %v2812
  %v2830 = vld [vmem:[#allocation3] sm:$0xff]
  %v2831 = vld [vmem:[#allocation3 + $0x8] sm:$0xff]
  %v2832 = vld [vmem:[#allocation3 + $0x10] sm:$0xff]
  %v2833 = vld [vmem:[#allocation3 + $0x18] sm:$0xff]
  %v2834 = vld [vmem:[#allocation3 + $0x20] sm:$0xff]
  %v2835 = vld [vmem:[#allocation3 + $0x28] sm:$0xff]
  %v2836 = vld [vmem:[#allocation3 + $0x30] sm:$0xff]
  %v2837 = vld [vmem:[#allocation3 + $0x38] sm:$0xff]
  %v2838 = vld [vmem:[%s9] sm:$0xff]
  %v2839 = vld [vmem:[%s9 + $0x8] sm:$0xff]
  %v2840 = vld [vmem:[%s9 + $0x10] sm:$0xff]
  %v2841 = vld [vmem:[%s9 + $0x18] sm:$0xff]
  %v2842 = vld [vmem:[%s10] sm:$0x1]
  %v2844 = vlaneseq
  %v2845 = vshrl.u32 %v2844, 7
  %v2846 = vsub.s32 0, %v2845
  %v2847 = vrot.slane %v2842, %v2846
  %v2850 = vsel %vm171, %v2830, 0
  %v2853 = vsel %vm171, %v2831, 0
  %v2856 = vsel %vm171, %v2832, 0
  %v2859 = vsel %vm171, %v2833, 0
  %v2862 = vsel %vm171, %v2834, 0
  %v2865 = vsel %vm171, %v2835, 0
  %v2868 = vsel %vm171, %v2836, 0
  %v2871 = vsel %vm171, %v2837, 0
  %2873 = vmatprep.subr.mxu0 0.0
  %2874 = vmatpush1.msra.mxu0 %v2838
  %2875 = vmatprep.subr.mxu0 0.0
  %2876 = vmatpush1.msra.mxu0 %v2839
  %2877 = vmatprep.subr.mxu0 0.0
  %2878 = vmatpush1.msra.mxu0 %v2840
  %2879 = vmatprep.subr.mxu0 0.0
  %2880 = vmatpush1.msra.mxu0 %v2841
  %2881 = vmatprep.subr.mxu0 0.0
  %2882 = vmatpush1.msra.mxu0 0.0
  %2883 = vmatprep.subr.mxu0 0.0
  %2884 = vmatpush1.msra.mxu0 0.0
  %2885 = vmatprep.subr.mxu0 0.0
  %2886 = vmatpush1.msra.mxu0 0.0
  %2887 = vmatprep.subr.mxu0 0.0
  %2888 = vmatpush1.msra.mxu0 0.0
  %2889 = vmatprep.subr.mxu0 0.0
  %2890 = vmatpush1.msra.mxu0 0.0
  %2891 = vmatprep.subr.mxu0 0.0
  %2892 = vmatpush1.msra.mxu0 0.0
  %2893 = vmatprep.subr.mxu0 0.0
  %2894 = vmatpush1.msra.mxu0 0.0
  %2895 = vmatprep.subr.mxu0 0.0
  %2896 = vmatpush1.msra.mxu0 0.0
  %2897 = vmatprep.subr.mxu0 0.0
  %2898 = vmatpush1.msra.mxu0 0.0
  %2899 = vmatprep.subr.mxu0 0.0
  %2900 = vmatpush1.msra.mxu0 0.0
  %2901 = vmatprep.subr.mxu0 0.0
  %2902 = vmatpush1.msra.mxu0 0.0
  %2903 = vmatprep.subr.mxu0 0.0
  %2904 = vmatpush1.msra.mxu0 0.0
  %2905 = vmatprep.subr.mxu0 0.0
  %2906 = vmatpush1.msra.mxu0 0.0
  %2907 = vmatprep.subr.mxu0 0.0
  %2908 = vmatpush1.msra.mxu0 0.0
  %2909 = vmatprep.subr.mxu0 0.0
  %2910 = vmatpush1.msra.mxu0 0.0
  %2911 = vmatprep.subr.mxu0 0.0
  %2912 = vmatpush1.msra.mxu0 0.0
  %2913 = vmatprep.subr.mxu0 0.0
  %2914 = vmatpush1.msra.mxu0 0.0
  %2915 = vmatprep.subr.mxu0 0.0
  %2916 = vmatpush1.msra.mxu0 0.0
  %2917 = vmatprep.subr.mxu0 0.0
  %2918 = vmatpush1.msra.mxu0 0.0
  %2919 = vmatprep.subr.mxu0 0.0
  %2920 = vmatpush1.msra.mxu0 0.0
  %2921 = vmatprep.subr.mxu0 0.0
  %2922 = vmatpush1.msra.mxu0 0.0
  %2923 = vmatprep.subr.mxu0 0.0
  %2924 = vmatpush1.msra.mxu0 0.0
  %2925 = vmatprep.subr.mxu0 0.0
  %2926 = vmatpush1.msra.mxu0 0.0
  %2927 = vmatprep.subr.mxu0 0.0
  %2928 = vmatpush1.msra.mxu0 0.0
  %2929 = vmatprep.subr.mxu0 0.0
  %2930 = vmatpush1.msra.mxu0 0.0
  %2931 = vmatprep.subr.mxu0 0.0
  %2932 = vmatpush1.msra.mxu0 0.0
  %2933 = vmatprep.subr.mxu0 0.0
  %2934 = vmatpush1.msra.mxu0 0.0
  %2935 = vmatprep.subr.mxu0 0.0
  %2936 = vmatpush1.msra.mxu0 0.0
  %2937 = vmatprep.mubr.f32.mxu0 0.0
  %2938 = vmatmul.mubr.f32.gmra.mrb[0].mxu0 %v2850
  %v2939 = vpop.f32.mrb[0].mxu0
  %v2940 = vadd.f32 %v2847, %v2939
  %v2941 = vpop.f32.mrb[0].mxu0
  %2942 = vmatprep.mubr.f32.mxu0 0.0
  %2943 = vmatmul.mubr.f32.gmra.mrb[0].mxu0 %v2853
  %v2944 = vpop.f32.mrb[0].mxu0
  %v2945 = vadd.f32 %v2847, %v2944
  %v2946 = vpop.f32.mrb[0].mxu0
  %2947 = vmatprep.mubr.f32.mxu0 0.0
  %2948 = vmatmul.mubr.f32.gmra.mrb[0].mxu0 %v2856
  %v2949 = vpop.f32.mrb[0].mxu0
  %v2950 = vadd.f32 %v2847, %v2949
  %v2951 = vpop.f32.mrb[0].mxu0
  %2952 = vmatprep.mubr.f32.mxu0 0.0
  %2953 = vmatmul.mubr.f32.gmra.mrb[0].mxu0 %v2859
  %v2954 = vpop.f32.mrb[0].mxu0
  %v2955 = vadd.f32 %v2847, %v2954
  %v2956 = vpop.f32.mrb[0].mxu0
  %2957 = vmatprep.mubr.f32.mxu0 0.0
  %2958 = vmatmul.mubr.f32.gmra.mrb[0].mxu0 %v2862
  %v2959 = vpop.f32.mrb[0].mxu0
  %v2960 = vadd.f32 %v2847, %v2959
  %v2961 = vpop.f32.mrb[0].mxu0
  %2962 = vmatprep.mubr.f32.mxu0 0.0
  %2963 = vmatmul.mubr.f32.gmra.mrb[0].mxu0 %v2865
  %v2964 = vpop.f32.mrb[0].mxu0
  %v2965 = vadd.f32 %v2847, %v2964
  %v2966 = vpop.f32.mrb[0].mxu0
  %2967 = vmatprep.mubr.f32.mxu0 0.0
  %2968 = vmatmul.mubr.f32.gmra.mrb[0].mxu0 %v2868
  %v2969 = vpop.f32.mrb[0].mxu0
  %v2970 = vadd.f32 %v2847, %v2969
  %v2971 = vpop.f32.mrb[0].mxu0
  %2972 = vmatprep.mubr.f32.mxu0 0.0
  %2973 = vmatmul.mubr.f32.gmra.mrb[0].mxu0 %v2871
  %v2974 = vpop.f32.mrb[0].mxu0
  %v2975 = vadd.f32 %v2847, %v2974
  %v2976 = vpop.f32.mrb[0].mxu0
  %2977 = vdwg.mxu0
  %v2978 = vadd.f32 %v2940, %v197
  %v2979 = vadd.f32 %v2945, %v198
  %v2980 = vadd.f32 %v2950, %v199
  %v2981 = vadd.f32 %v2955, %v200
  %v2982 = vadd.f32 %v2960, %v201
  %v2983 = vadd.f32 %v2965, %v202
  %v2984 = vadd.f32 %v2970, %v203
  %v2985 = vadd.f32 %v2975, %v204
  %v2986 = vld [vmem:[%s11] sm:$0x3]
  %v2987 = vsel %vm171, %v2978, 0.0
  %2988 = vadd.xlane.f32.xlu0 %v2987
  %v2989 = vpop.xlane.xlu0 %2988
  %v2990 = vsel %vm171, %v2979, 0.0
  %2991 = vadd.xlane.f32.xlu0 %v2990
  %v2992 = vpop.xlane.xlu0 %2991
  %v2993 = vsel %vm171, %v2980, 0.0
  %2994 = vadd.xlane.f32.xlu0 %v2993
  %v2995 = vpop.xlane.xlu0 %2994
  %v2996 = vsel %vm171, %v2981, 0.0
  %2997 = vadd.xlane.f32.xlu0 %v2996
  %v2998 = vpop.xlane.xlu0 %2997
  %v2999 = vsel %vm171, %v2982, 0.0
  %3000 = vadd.xlane.f32.xlu0 %v2999
  %v3001 = vpop.xlane.xlu0 %3000
  %v3002 = vsel %vm171, %v2983, 0.0
  %3003 = vadd.xlane.f32.xlu0 %v3002
  %v3004 = vpop.xlane.xlu0 %3003
  %v3005 = vsel %vm171, %v2984, 0.0
  %3006 = vadd.xlane.f32.xlu0 %v3005
  %v3007 = vpop.xlane.xlu0 %3006
  %v3008 = vsel %vm171, %v2985, 0.0
  %3009 = vadd.xlane.f32.xlu0 %v3008
  %v3010 = vpop.xlane.xlu0 %3009
  %v3011 = vmul.f32 %v2989, %v231
  %v3012 = vmul.f32 %v2992, %v231
  %v3013 = vmul.f32 %v2995, %v231
  %v3014 = vmul.f32 %v2998, %v231
  %v3015 = vmul.f32 %v3001, %v231
  %v3016 = vmul.f32 %v3004, %v231
  %v3017 = vmul.f32 %v3007, %v231
  %v3018 = vmul.f32 %v3010, %v231
  %v3019 = vsub.f32 %v2978, %v3011
  %v3020 = vsub.f32 %v2979, %v3012
  %v3021 = vsub.f32 %v2980, %v3013
  %v3022 = vsub.f32 %v2981, %v3014
  %v3023 = vsub.f32 %v2982, %v3015
  %v3024 = vsub.f32 %v2983, %v3016
  %v3025 = vsub.f32 %v2984, %v3017
  %v3026 = vsub.f32 %v2985, %v3018
  %v3027 = vmul.f32 %v3019, %v3019
  %v3028 = vmul.f32 %v3020, %v3020
  %v3029 = vmul.f32 %v3021, %v3021
  %v3030 = vmul.f32 %v3022, %v3022
  %v3031 = vmul.f32 %v3023, %v3023
  %v3032 = vmul.f32 %v3024, %v3024
  %v3033 = vmul.f32 %v3025, %v3025
  %v3034 = vmul.f32 %v3026, %v3026
  %v3035 = vsel %vm171, %v3027, 0.0
  %3036 = vadd.xlane.f32.xlu0 %v3035
  %v3037 = vpop.xlane.xlu0 %3036
  %v3038 = vsel %vm171, %v3028, 0.0
  %3039 = vadd.xlane.f32.xlu0 %v3038
  %v3040 = vpop.xlane.xlu0 %3039
  %v3041 = vsel %vm171, %v3029, 0.0
  %3042 = vadd.xlane.f32.xlu0 %v3041
  %v3043 = vpop.xlane.xlu0 %3042
  %v3044 = vsel %vm171, %v3030, 0.0
  %3045 = vadd.xlane.f32.xlu0 %v3044
  %v3046 = vpop.xlane.xlu0 %3045
  %v3047 = vsel %vm171, %v3031, 0.0
  %3048 = vadd.xlane.f32.xlu0 %v3047
  %v3049 = vpop.xlane.xlu0 %3048
  %v3050 = vsel %vm171, %v3032, 0.0
  %3051 = vadd.xlane.f32.xlu0 %v3050
  %v3052 = vpop.xlane.xlu0 %3051
  %v3053 = vsel %vm171, %v3033, 0.0
  %3054 = vadd.xlane.f32.xlu0 %v3053
  %v3055 = vpop.xlane.xlu0 %3054
  %v3056 = vsel %vm171, %v3034, 0.0
  %3057 = vadd.xlane.f32.xlu0 %v3056
  %v3058 = vpop.xlane.xlu0 %3057
  %v3059 = vmul.f32 %v3037, %v231
  %v3060 = vmul.f32 %v3040, %v231
  %v3061 = vmul.f32 %v3043, %v231
  %v3062 = vmul.f32 %v3046, %v231
  %v3063 = vmul.f32 %v3049, %v231
  %v3064 = vmul.f32 %v3052, %v231
  %v3065 = vmul.f32 %v3055, %v231
  %v3066 = vmul.f32 %v3058, %v231
  %v3067 = vadd.f32 %v3059, 1e-06
  %v3068 = vadd.f32 %v3060, 1e-06
  %v3069 = vadd.f32 %v3061, 1e-06
  %v3070 = vadd.f32 %v3062, 1e-06
  %v3071 = vadd.f32 %v3063, 1e-06
  %v3072 = vadd.f32 %v3064, 1e-06
  %v3073 = vadd.f32 %v3065, 1e-06
  %v3074 = vadd.f32 %v3066, 1e-06
  %v3075 = vrsqrt.pop %v3067
  %v3076 = vrsqrt.pop %v3068
  %v3077 = vrsqrt.pop %v3069
  %v3078 = vrsqrt.pop %v3070
  %v3079 = vrsqrt.pop %v3071
  %v3080 = vrsqrt.pop %v3072
  %v3081 = vrsqrt.pop %v3073
  %v3082 = vrsqrt.pop %v3074
  %v3083 = vmul.f32 %v3019, %v3075
  %v3084 = vmul.f32 %v3020, %v3076
  %v3085 = vmul.f32 %v3021, %v3077
  %v3086 = vmul.f32 %v3022, %v3078
  %v3087 = vmul.f32 %v3023, %v3079
  %v3088 = vmul.f32 %v3024, %v3080
  %v3089 = vmul.f32 %v3025, %v3081
  %v3090 = vmul.f32 %v3026, %v3082
  %v3091 = vlaneseq
  %v3092 = vshrl.u32 %v3091, 7
  %v3093 = vsub.s32 0, %v3092
  %v3094 = vrot.slane %v2986, %v3093
  %v3095 = vmul.f32 %v3083, %v3094
  %v3096 = vmul.f32 %v3084, %v3094
  %v3097 = vmul.f32 %v3085, %v3094
  %v3098 = vmul.f32 %v3086, %v3094
  %v3099 = vmul.f32 %v3087, %v3094
  %v3100 = vmul.f32 %v3088, %v3094
  %v3101 = vmul.f32 %v3089, %v3094
  %v3102 = vmul.f32 %v3090, %v3094
  %v3103 = vlaneseq
  %v3104 = vshrl.u32 %v3103, 7
  %v3105 = vsub.s32 1, %v3104
  %v3106 = vrot.slane %v2986, %v3105
  %v3107 = vadd.f32 %v3095, %v3106
  %v3108 = vadd.f32 %v3096, %v3106
  %v3109 = vadd.f32 %v3097, %v3106
  %v3110 = vadd.f32 %v3098, %v3106
  %v3111 = vadd.f32 %v3099, %v3106
  %v3112 = vadd.f32 %v3100, %v3106
  %v3113 = vadd.f32 %v3101, %v3106
  %v3114 = vadd.f32 %v3102, %v3106
  %v3115 = vld [vmem:[%s12] sm:$0xff]
  %v3116 = vld [vmem:[%s12 + $0x8] sm:$0xff]
  %v3117 = vld [vmem:[%s12 + $0x10] sm:$0xff]
  %v3118 = vld [vmem:[%s12 + $0x18] sm:$0xff]
  %v3119 = vld [vmem:[%s13] sm:$0x1]
  %v3121 = vlaneseq
  %v3122 = vshrl.u32 %v3121, 7
  %v3123 = vsub.s32 0, %v3122
  %v3124 = vrot.slane %v3119, %v3123
  %v3127 = vsel %vm171, %v3107, 0
  %v3130 = vsel %vm171, %v3108, 0
  %v3133 = vsel %vm171, %v3109, 0
  %v3136 = vsel %vm171, %v3110, 0
  %v3139 = vsel %vm171, %v3111, 0
  %v3142 = vsel %vm171, %v3112, 0
  %v3145 = vsel %vm171, %v3113, 0
  %v3148 = vsel %vm171, %v3114, 0
  %3150 = vmatprep.subr.mxu0 0.0
  %3151 = vmatpush1.msra.mxu0 %v3115
  %3152 = vmatprep.subr.mxu0 0.0
  %3153 = vmatpush1.msra.mxu0 %v3116
  %3154 = vmatprep.subr.mxu0 0.0
  %3155 = vmatpush1.msra.mxu0 %v3117
  %3156 = vmatprep.subr.mxu0 0.0
  %3157 = vmatpush1.msra.mxu0 %v3118
  %3158 = vmatprep.subr.mxu0 0.0
  %3159 = vmatpush1.msra.mxu0 0.0
  %3160 = vmatprep.subr.mxu0 0.0
  %3161 = vmatpush1.msra.mxu0 0.0
  %3162 = vmatprep.subr.mxu0 0.0
  %3163 = vmatpush1.msra.mxu0 0.0
  %3164 = vmatprep.subr.mxu0 0.0
  %3165 = vmatpush1.msra.mxu0 0.0
  %3166 = vmatprep.subr.mxu0 0.0
  %3167 = vmatpush1.msra.mxu0 0.0
  %3168 = vmatprep.subr.mxu0 0.0
  %3169 = vmatpush1.msra.mxu0 0.0
  %3170 = vmatprep.subr.mxu0 0.0
  %3171 = vmatpush1.msra.mxu0 0.0
  %3172 = vmatprep.subr.mxu0 0.0
  %3173 = vmatpush1.msra.mxu0 0.0
  %3174 = vmatprep.subr.mxu0 0.0
  %3175 = vmatpush1.msra.mxu0 0.0
  %3176 = vmatprep.subr.mxu0 0.0
  %3177 = vmatpush1.msra.mxu0 0.0
  %3178 = vmatprep.subr.mxu0 0.0
  %3179 = vmatpush1.msra.mxu0 0.0
  %3180 = vmatprep.subr.mxu0 0.0
  %3181 = vmatpush1.msra.mxu0 0.0
  %3182 = vmatprep.subr.mxu0 0.0
  %3183 = vmatpush1.msra.mxu0 0.0
  %3184 = vmatprep.subr.mxu0 0.0
  %3185 = vmatpush1.msra.mxu0 0.0
  %3186 = vmatprep.subr.mxu0 0.0
  %3187 = vmatpush1.msra.mxu0 0.0
  %3188 = vmatprep.subr.mxu0 0.0
  %3189 = vmatpush1.msra.mxu0 0.0
  %3190 = vmatprep.subr.mxu0 0.0
  %3191 = vmatpush1.msra.mxu0 0.0
  %3192 = vmatprep.subr.mxu0 0.0
  %3193 = vmatpush1.msra.mxu0 0.0
  %3194 = vmatprep.subr.mxu0 0.0
  %3195 = vmatpush1.msra.mxu0 0.0
  %3196 = vmatprep.subr.mxu0 0.0
  %3197 = vmatpush1.msra.mxu0 0.0
  %3198 = vmatprep.subr.mxu0 0.0
  %3199 = vmatpush1.msra.mxu0 0.0
  %3200 = vmatprep.subr.mxu0 0.0
  %3201 = vmatpush1.msra.mxu0 0.0
  %3202 = vmatprep.subr.mxu0 0.0
  %3203 = vmatpush1.msra.mxu0 0.0
  %3204 = vmatprep.subr.mxu0 0.0
  %3205 = vmatpush1.msra.mxu0 0.0
  %3206 = vmatprep.subr.mxu0 0.0
  %3207 = vmatpush1.msra.mxu0 0.0
  %3208 = vmatprep.subr.mxu0 0.0
  %3209 = vmatpush1.msra.mxu0 0.0
  %3210 = vmatprep.subr.mxu0 0.0
  %3211 = vmatpush1.msra.mxu0 0.0
  %3212 = vmatprep.subr.mxu0 0.0
  %3213 = vmatpush1.msra.mxu0 0.0
  %3214 = vmatprep.mubr.f32.mxu0 0.0
  %3215 = vmatmul.mubr.f32.gmra.mrb[0].mxu0 %v3127
  %v3216 = vpop.f32.mrb[0].mxu0
  %v3217 = vadd.f32 %v3124, %v3216
  %v3218 = vpop.f32.mrb[0].mxu0
  %3219 = vmatprep.mubr.f32.mxu0 0.0
  %3220 = vmatmul.mubr.f32.gmra.mrb[0].mxu0 %v3130
  %v3221 = vpop.f32.mrb[0].mxu0
  %v3222 = vadd.f32 %v3124, %v3221
  %v3223 = vpop.f32.mrb[0].mxu0
  %3224 = vmatprep.mubr.f32.mxu0 0.0
  %3225 = vmatmul.mubr.f32.gmra.mrb[0].mxu0 %v3133
  %v3226 = vpop.f32.mrb[0].mxu0
  %v3227 = vadd.f32 %v3124, %v3226
  %v3228 = vpop.f32.mrb[0].mxu0
  %3229 = vmatprep.mubr.f32.mxu0 0.0
  %3230 = vmatmul.mubr.f32.gmra.mrb[0].mxu0 %v3136
  %v3231 = vpop.f32.mrb[0].mxu0
  %v3232 = vadd.f32 %v3124, %v3231
  %v3233 = vpop.f32.mrb[0].mxu0
  %3234 = vmatprep.mubr.f32.mxu0 0.0
  %3235 = vmatmul.mubr.f32.gmra.mrb[0].mxu0 %v3139
  %v3236 = vpop.f32.mrb[0].mxu0
  %v3237 = vadd.f32 %v3124, %v3236
  %v3238 = vpop.f32.mrb[0].mxu0
  %3239 = vmatprep.mubr.f32.mxu0 0.0
  %3240 = vmatmul.mubr.f32.gmra.mrb[0].mxu0 %v3142
  %v3241 = vpop.f32.mrb[0].mxu0
  %v3242 = vadd.f32 %v3124, %v3241
  %v3243 = vpop.f32.mrb[0].mxu0
  %3244 = vmatprep.mubr.f32.mxu0 0.0
  %3245 = vmatmul.mubr.f32.gmra.mrb[0].mxu0 %v3145
  %v3246 = vpop.f32.mrb[0].mxu0
  %v3247 = vadd.f32 %v3124, %v3246
  %v3248 = vpop.f32.mrb[0].mxu0
  %3249 = vmatprep.mubr.f32.mxu0 0.0
  %3250 = vmatmul.mubr.f32.gmra.mrb[0].mxu0 %v3148
  %v3251 = vpop.f32.mrb[0].mxu0
  %v3252 = vadd.f32 %v3124, %v3251
  %v3253 = vpop.f32.mrb[0].mxu0
  %3254 = vdwg.mxu0
  %v3255 = vmul.f32 %v3217, 0.5
  %v3256 = vmul.f32 %v3222, 0.5
  %v3257 = vmul.f32 %v3227, 0.5
  %v3258 = vmul.f32 %v3232, 0.5
  %v3259 = vmul.f32 %v3237, 0.5
  %v3260 = vmul.f32 %v3242, 0.5
  %v3261 = vmul.f32 %v3247, 0.5
  %v3262 = vmul.f32 %v3252, 0.5
  %v3263 = vmul.f32 %v3217, 0.70710677
  %v3264 = vmul.f32 %v3222, 0.70710677
  %v3265 = vmul.f32 %v3227, 0.70710677
  %v3266 = vmul.f32 %v3232, 0.70710677
  %v3267 = vmul.f32 %v3237, 0.70710677
  %v3268 = vmul.f32 %v3242, 0.70710677
  %v3269 = vmul.f32 %v3247, 0.70710677
  %v3270 = vmul.f32 %v3252, 0.70710677
  %v3271 = verf.f32.pop %v3263
  %v3272 = verf.f32.pop %v3264
  %v3273 = verf.f32.pop %v3265
  %v3274 = verf.f32.pop %v3266
  %v3275 = verf.f32.pop %v3267
  %v3276 = verf.f32.pop %v3268
  %v3277 = verf.f32.pop %v3269
  %v3278 = verf.f32.pop %v3270
  %v3279 = vadd.f32 %v3271, 1.0
  %v3280 = vadd.f32 %v3272, 1.0
  %v3281 = vadd.f32 %v3273, 1.0
  %v3282 = vadd.f32 %v3274, 1.0
  %v3283 = vadd.f32 %v3275, 1.0
  %v3284 = vadd.f32 %v3276, 1.0
  %v3285 = vadd.f32 %v3277, 1.0
  %v3286 = vadd.f32 %v3278, 1.0
  %v3287 = vmul.f32 %v3255, %v3279
  %v3288 = vmul.f32 %v3256, %v3280
  %v3289 = vmul.f32 %v3257, %v3281
  %v3290 = vmul.f32 %v3258, %v3282
  %v3291 = vmul.f32 %v3259, %v3283
  %v3292 = vmul.f32 %v3260, %v3284
  %v3293 = vmul.f32 %v3261, %v3285
  %v3294 = vmul.f32 %v3262, %v3286
  %v3295 = vld [vmem:[%s14] sm:$0xff]
  %v3296 = vld [vmem:[%s14 + $0x8] sm:$0xff]
  %v3297 = vld [vmem:[%s14 + $0x10] sm:$0xff]
  %v3298 = vld [vmem:[%s14 + $0x18] sm:$0xff]
  %v3299 = vld [vmem:[%s14 + $0x20] sm:$0xff]
  %v3300 = vld [vmem:[%s14 + $0x28] sm:$0xff]
  %v3301 = vld [vmem:[%s14 + $0x30] sm:$0xff]
  %v3302 = vld [vmem:[%s14 + $0x38] sm:$0xff]
  %v3303 = vld [vmem:[%s15] sm:$0x1]
  %v3305 = vlaneseq
  %v3306 = vshrl.u32 %v3305, 7
  %v3307 = vsub.s32 0, %v3306
  %v3308 = vrot.slane %v3303, %v3307
  %vm3310 = vcmask 523264
  %v3312 = vsel %vm3310, %v3287, 0
  %v3315 = vsel %vm3310, %v3288, 0
  %v3318 = vsel %vm3310, %v3289, 0
  %v3321 = vsel %vm3310, %v3290, 0
  %v3324 = vsel %vm3310, %v3291, 0
  %v3327 = vsel %vm3310, %v3292, 0
  %v3330 = vsel %vm3310, %v3293, 0
  %v3333 = vsel %vm3310, %v3294, 0
  %3335 = vmatprep.subr.mxu0 0.0
  %3336 = vmatpush1.msra.mxu0 %v3295
  %3337 = vmatprep.subr.mxu0 0.0
  %3338 = vmatpush1.msra.mxu0 %v3296
  %3339 = vmatprep.subr.mxu0 0.0
  %3340 = vmatpush1.msra.mxu0 %v3297
  %3341 = vmatprep.subr.mxu0 0.0
  %3342 = vmatpush1.msra.mxu0 %v3298
  %3343 = vmatprep.subr.mxu0 0.0
  %3344 = vmatpush1.msra.mxu0 %v3299
  %3345 = vmatprep.subr.mxu0 0.0
  %3346 = vmatpush1.msra.mxu0 %v3300
  %3347 = vmatprep.subr.mxu0 0.0
  %3348 = vmatpush1.msra.mxu0 %v3301
  %3349 = vmatprep.subr.mxu0 0.0
  %3350 = vmatpush1.msra.mxu0 %v3302
  %3351 = vmatprep.subr.mxu0 0.0
  %3352 = vmatpush1.msra.mxu0 0.0
  %3353 = vmatprep.subr.mxu0 0.0
  %3354 = vmatpush1.msra.mxu0 0.0
  %3355 = vmatprep.subr.mxu0 0.0
  %3356 = vmatpush1.msra.mxu0 0.0
  %3357 = vmatprep.subr.mxu0 0.0
  %3358 = vmatpush1.msra.mxu0 0.0
  %3359 = vmatprep.subr.mxu0 0.0
  %3360 = vmatpush1.msra.mxu0 0.0
  %3361 = vmatprep.subr.mxu0 0.0
  %3362 = vmatpush1.msra.mxu0 0.0
  %3363 = vmatprep.subr.mxu0 0.0
  %3364 = vmatpush1.msra.mxu0 0.0
  %3365 = vmatprep.subr.mxu0 0.0
  %3366 = vmatpush1.msra.mxu0 0.0
  %3367 = vmatprep.subr.mxu0 0.0
  %3368 = vmatpush1.msra.mxu0 0.0
  %3369 = vmatprep.subr.mxu0 0.0
  %3370 = vmatpush1.msra.mxu0 0.0
  %3371 = vmatprep.subr.mxu0 0.0
  %3372 = vmatpush1.msra.mxu0 0.0
  %3373 = vmatprep.subr.mxu0 0.0
  %3374 = vmatpush1.msra.mxu0 0.0
  %3375 = vmatprep.subr.mxu0 0.0
  %3376 = vmatpush1.msra.mxu0 0.0
  %3377 = vmatprep.subr.mxu0 0.0
  %3378 = vmatpush1.msra.mxu0 0.0
  %3379 = vmatprep.subr.mxu0 0.0
  %3380 = vmatpush1.msra.mxu0 0.0
  %3381 = vmatprep.subr.mxu0 0.0
  %3382 = vmatpush1.msra.mxu0 0.0
  %3383 = vmatprep.subr.mxu0 0.0
  %3384 = vmatpush1.msra.mxu0 0.0
  %3385 = vmatprep.subr.mxu0 0.0
  %3386 = vmatpush1.msra.mxu0 0.0
  %3387 = vmatprep.subr.mxu0 0.0
  %3388 = vmatpush1.msra.mxu0 0.0
  %3389 = vmatprep.subr.mxu0 0.0
  %3390 = vmatpush1.msra.mxu0 0.0
  %3391 = vmatprep.subr.mxu0 0.0
  %3392 = vmatpush1.msra.mxu0 0.0
  %3393 = vmatprep.subr.mxu0 0.0
  %3394 = vmatpush1.msra.mxu0 0.0
  %3395 = vmatprep.subr.mxu0 0.0
  %3396 = vmatpush1.msra.mxu0 0.0
  %3397 = vmatprep.subr.mxu0 0.0
  %3398 = vmatpush1.msra.mxu0 0.0
  %3399 = vmatprep.mubr.f32.mxu0 0.0
  %3400 = vmatmul.mubr.f32.gmra.mrb[0].mxu0 %v3312
  %v3401 = vpop.f32.mrb[0].mxu0
  %v3402 = vadd.f32 %v3308, %v3401
  %v3403 = vpop.f32.mrb[0].mxu0
  %3404 = vmatprep.mubr.f32.mxu0 0.0
  %3405 = vmatmul.mubr.f32.gmra.mrb[0].mxu0 %v3315
  %v3406 = vpop.f32.mrb[0].mxu0
  %v3407 = vadd.f32 %v3308, %v3406
  %v3408 = vpop.f32.mrb[0].mxu0
  %3409 = vmatprep.mubr.f32.mxu0 0.0
  %3410 = vmatmul.mubr.f32.gmra.mrb[0].mxu0 %v3318
  %v3411 = vpop.f32.mrb[0].mxu0
  %v3412 = vadd.f32 %v3308, %v3411
  %v3413 = vpop.f32.mrb[0].mxu0
  %3414 = vmatprep.mubr.f32.mxu0 0.0
  %3415 = vmatmul.mubr.f32.gmra.mrb[0].mxu0 %v3321
  %v3416 = vpop.f32.mrb[0].mxu0
  %v3417 = vadd.f32 %v3308, %v3416
  %v3418 = vpop.f32.mrb[0].mxu0
  %3419 = vmatprep.mubr.f32.mxu0 0.0
  %3420 = vmatmul.mubr.f32.gmra.mrb[0].mxu0 %v3324
  %v3421 = vpop.f32.mrb[0].mxu0
  %v3422 = vadd.f32 %v3308, %v3421
  %v3423 = vpop.f32.mrb[0].mxu0
  %3424 = vmatprep.mubr.f32.mxu0 0.0
  %3425 = vmatmul.mubr.f32.gmra.mrb[0].mxu0 %v3327
  %v3426 = vpop.f32.mrb[0].mxu0
  %v3427 = vadd.f32 %v3308, %v3426
  %v3428 = vpop.f32.mrb[0].mxu0
  %3429 = vmatprep.mubr.f32.mxu0 0.0
  %3430 = vmatmul.mubr.f32.gmra.mrb[0].mxu0 %v3330
  %v3431 = vpop.f32.mrb[0].mxu0
  %v3432 = vadd.f32 %v3308, %v3431
  %v3433 = vpop.f32.mrb[0].mxu0
  %3434 = vmatprep.mubr.f32.mxu0 0.0
  %3435 = vmatmul.mubr.f32.gmra.mrb[0].mxu0 %v3333
  %v3436 = vpop.f32.mrb[0].mxu0
  %v3437 = vadd.f32 %v3308, %v3436
  %v3438 = vpop.f32.mrb[0].mxu0
  %3439 = vdwg.mxu0
  %v3440 = vadd.f32 %v3402, %v2978
  %v3441 = vadd.f32 %v3407, %v2979
  %v3442 = vadd.f32 %v3412, %v2980
  %v3443 = vadd.f32 %v3417, %v2981
  %v3444 = vadd.f32 %v3422, %v2982
  %v3445 = vadd.f32 %v3427, %v2983
  %v3446 = vadd.f32 %v3432, %v2984
  %v3447 = vadd.f32 %v3437, %v2985
  %s3448 = scalar_lea.vmem %s6, 2
  %v3449 = vld [vmem:[%s3448] sm:$0x3]
  %v3450 = vsel %vm171, %v3440, 0.0
  %3451 = vadd.xlane.f32.xlu0 %v3450
  %v3452 = vpop.xlane.xlu0 %3451
  %v3453 = vsel %vm171, %v3441, 0.0
  %3454 = vadd.xlane.f32.xlu0 %v3453
  %v3455 = vpop.xlane.xlu0 %3454
  %v3456 = vsel %vm171, %v3442, 0.0
  %3457 = vadd.xlane.f32.xlu0 %v3456
  %v3458 = vpop.xlane.xlu0 %3457
  %v3459 = vsel %vm171, %v3443, 0.0
  %3460 = vadd.xlane.f32.xlu0 %v3459
  %v3461 = vpop.xlane.xlu0 %3460
  %v3462 = vsel %vm171, %v3444, 0.0
  %3463 = vadd.xlane.f32.xlu0 %v3462
  %v3464 = vpop.xlane.xlu0 %3463
  %v3465 = vsel %vm171, %v3445, 0.0
  %3466 = vadd.xlane.f32.xlu0 %v3465
  %v3467 = vpop.xlane.xlu0 %3466
  %v3468 = vsel %vm171, %v3446, 0.0
  %3469 = vadd.xlane.f32.xlu0 %v3468
  %v3470 = vpop.xlane.xlu0 %3469
  %v3471 = vsel %vm171, %v3447, 0.0
  %3472 = vadd.xlane.f32.xlu0 %v3471
  %v3473 = vpop.xlane.xlu0 %3472
  %v3474 = vmul.f32 %v3452, %v231
  %v3475 = vmul.f32 %v3455, %v231
  %v3476 = vmul.f32 %v3458, %v231
  %v3477 = vmul.f32 %v3461, %v231
  %v3478 = vmul.f32 %v3464, %v231
  %v3479 = vmul.f32 %v3467, %v231
  %v3480 = vmul.f32 %v3470, %v231
  %v3481 = vmul.f32 %v3473, %v231
  %v3482 = vsub.f32 %v3440, %v3474
  %v3483 = vsub.f32 %v3441, %v3475
  %v3484 = vsub.f32 %v3442, %v3476
  %v3485 = vsub.f32 %v3443, %v3477
  %v3486 = vsub.f32 %v3444, %v3478
  %v3487 = vsub.f32 %v3445, %v3479
  %v3488 = vsub.f32 %v3446, %v3480
  %v3489 = vsub.f32 %v3447, %v3481
  %v3490 = vmul.f32 %v3482, %v3482
  %v3491 = vmul.f32 %v3483, %v3483
  %v3492 = vmul.f32 %v3484, %v3484
  %v3493 = vmul.f32 %v3485, %v3485
  %v3494 = vmul.f32 %v3486, %v3486
  %v3495 = vmul.f32 %v3487, %v3487
  %v3496 = vmul.f32 %v3488, %v3488
  %v3497 = vmul.f32 %v3489, %v3489
  %v3498 = vsel %vm171, %v3490, 0.0
  %3499 = vadd.xlane.f32.xlu0 %v3498
  %v3500 = vpop.xlane.xlu0 %3499
  %v3501 = vsel %vm171, %v3491, 0.0
  %3502 = vadd.xlane.f32.xlu0 %v3501
  %v3503 = vpop.xlane.xlu0 %3502
  %v3504 = vsel %vm171, %v3492, 0.0
  %3505 = vadd.xlane.f32.xlu0 %v3504
  %v3506 = vpop.xlane.xlu0 %3505
  %v3507 = vsel %vm171, %v3493, 0.0
  %3508 = vadd.xlane.f32.xlu0 %v3507
  %v3509 = vpop.xlane.xlu0 %3508
  %v3510 = vsel %vm171, %v3494, 0.0
  %3511 = vadd.xlane.f32.xlu0 %v3510
  %v3512 = vpop.xlane.xlu0 %3511
  %v3513 = vsel %vm171, %v3495, 0.0
  %3514 = vadd.xlane.f32.xlu0 %v3513
  %v3515 = vpop.xlane.xlu0 %3514
  %v3516 = vsel %vm171, %v3496, 0.0
  %3517 = vadd.xlane.f32.xlu0 %v3516
  %v3518 = vpop.xlane.xlu0 %3517
  %v3519 = vsel %vm171, %v3497, 0.0
  %3520 = vadd.xlane.f32.xlu0 %v3519
  %v3521 = vpop.xlane.xlu0 %3520
  %v3522 = vmul.f32 %v3500, %v231
  %v3523 = vmul.f32 %v3503, %v231
  %v3524 = vmul.f32 %v3506, %v231
  %v3525 = vmul.f32 %v3509, %v231
  %v3526 = vmul.f32 %v3512, %v231
  %v3527 = vmul.f32 %v3515, %v231
  %v3528 = vmul.f32 %v3518, %v231
  %v3529 = vmul.f32 %v3521, %v231
  %v3530 = vadd.f32 %v3522, 1e-06
  %v3531 = vadd.f32 %v3523, 1e-06
  %v3532 = vadd.f32 %v3524, 1e-06
  %v3533 = vadd.f32 %v3525, 1e-06
  %v3534 = vadd.f32 %v3526, 1e-06
  %v3535 = vadd.f32 %v3527, 1e-06
  %v3536 = vadd.f32 %v3528, 1e-06
  %v3537 = vadd.f32 %v3529, 1e-06
  %v3538 = vrsqrt.pop %v3530
  %v3539 = vrsqrt.pop %v3531
  %v3540 = vrsqrt.pop %v3532
  %v3541 = vrsqrt.pop %v3533
  %v3542 = vrsqrt.pop %v3534
  %v3543 = vrsqrt.pop %v3535
  %v3544 = vrsqrt.pop %v3536
  %v3545 = vrsqrt.pop %v3537
  %v3546 = vmul.f32 %v3482, %v3538
  %v3547 = vmul.f32 %v3483, %v3539
  %v3548 = vmul.f32 %v3484, %v3540
  %v3549 = vmul.f32 %v3485, %v3541
  %v3550 = vmul.f32 %v3486, %v3542
  %v3551 = vmul.f32 %v3487, %v3543
  %v3552 = vmul.f32 %v3488, %v3544
  %v3553 = vmul.f32 %v3489, %v3545
  %v3554 = vlaneseq
  %v3555 = vshrl.u32 %v3554, 7
  %v3556 = vsub.s32 0, %v3555
  %v3557 = vrot.slane %v3449, %v3556
  %v3558 = vmul.f32 %v3546, %v3557
  %v3559 = vmul.f32 %v3547, %v3557
  %v3560 = vmul.f32 %v3548, %v3557
  %v3561 = vmul.f32 %v3549, %v3557
  %v3562 = vmul.f32 %v3550, %v3557
  %v3563 = vmul.f32 %v3551, %v3557
  %v3564 = vmul.f32 %v3552, %v3557
  %v3565 = vmul.f32 %v3553, %v3557
  %v3566 = vlaneseq
  %v3567 = vshrl.u32 %v3566, 7
  %v3568 = vsub.s32 1, %v3567
  %v3569 = vrot.slane %v3449, %v3568
  %v3570 = vadd.f32 %v3558, %v3569
  %v3571 = vadd.f32 %v3559, %v3569
  %v3572 = vadd.f32 %v3560, %v3569
  %v3573 = vadd.f32 %v3561, %v3569
  %v3574 = vadd.f32 %v3562, %v3569
  %v3575 = vadd.f32 %v3563, %v3569
  %v3576 = vadd.f32 %v3564, %v3569
  %v3577 = vadd.f32 %v3565, %v3569
  %s3578 = scalar_lea.vmem %s7, 32
  %v3579 = vld [vmem:[%s3578] sm:$0xff]
  %v3580 = vld [vmem:[%s3578 + $0x8] sm:$0xff]
  %v3581 = vld [vmem:[%s3578 + $0x10] sm:$0xff]
  %v3582 = vld [vmem:[%s3578 + $0x18] sm:$0xff]
  %s3583 = scalar_lea.vmem %s8, 1
  %v3584 = vld [vmem:[%s3583] sm:$0x1]
  %v3586 = vlaneseq
  %v3587 = vshrl.u32 %v3586, 7
  %v3588 = vsub.s32 0, %v3587
  %v3589 = vrot.slane %v3584, %v3588
  %v3592 = vsel %vm171, %v3570, 0
  %v3595 = vsel %vm171, %v3571, 0
  %v3598 = vsel %vm171, %v3572, 0
  %v3601 = vsel %vm171, %v3573, 0
  %v3604 = vsel %vm171, %v3574, 0
  %v3607 = vsel %vm171, %v3575, 0
  %v3610 = vsel %vm171, %v3576, 0
  %v3613 = vsel %vm171, %v3577, 0
  %3615 = vmatprep.subr.mxu0 0.0
  %3616 = vmatpush1.msra.mxu0 %v3579
  %3617 = vmatprep.subr.mxu0 0.0
  %3618 = vmatpush1.msra.mxu0 %v3580
  %3619 = vmatprep.subr.mxu0 0.0
  %3620 = vmatpush1.msra.mxu0 %v3581
  %3621 = vmatprep.subr.mxu0 0.0
  %3622 = vmatpush1.msra.mxu0 %v3582
  %3623 = vmatprep.subr.mxu0 0.0
  %3624 = vmatpush1.msra.mxu0 0.0
  %3625 = vmatprep.subr.mxu0 0.0
  %3626 = vmatpush1.msra.mxu0 0.0
  %3627 = vmatprep.subr.mxu0 0.0
  %3628 = vmatpush1.msra.mxu0 0.0
  %3629 = vmatprep.subr.mxu0 0.0
  %3630 = vmatpush1.msra.mxu0 0.0
  %3631 = vmatprep.subr.mxu0 0.0
  %3632 = vmatpush1.msra.mxu0 0.0
  %3633 = vmatprep.subr.mxu0 0.0
  %3634 = vmatpush1.msra.mxu0 0.0
  %3635 = vmatprep.subr.mxu0 0.0
  %3636 = vmatpush1.msra.mxu0 0.0
  %3637 = vmatprep.subr.mxu0 0.0
  %3638 = vmatpush1.msra.mxu0 0.0
  %3639 = vmatprep.subr.mxu0 0.0
  %3640 = vmatpush1.msra.mxu0 0.0
  %3641 = vmatprep.subr.mxu0 0.0
  %3642 = vmatpush1.msra.mxu0 0.0
  %3643 = vmatprep.subr.mxu0 0.0
  %3644 = vmatpush1.msra.mxu0 0.0
  %3645 = vmatprep.subr.mxu0 0.0
  %3646 = vmatpush1.msra.mxu0 0.0
  %3647 = vmatprep.subr.mxu0 0.0
  %3648 = vmatpush1.msra.mxu0 0.0
  %3649 = vmatprep.subr.mxu0 0.0
  %3650 = vmatpush1.msra.mxu0 0.0
  %3651 = vmatprep.subr.mxu0 0.0
  %3652 = vmatpush1.msra.mxu0 0.0
  %3653 = vmatprep.subr.mxu0 0.0
  %3654 = vmatpush1.msra.mxu0 0.0
  %3655 = vmatprep.subr.mxu0 0.0
  %3656 = vmatpush1.msra.mxu0 0.0
  %3657 = vmatprep.subr.mxu0 0.0
  %3658 = vmatpush1.msra.mxu0 0.0
  %3659 = vmatprep.subr.mxu0 0.0
  %3660 = vmatpush1.msra.mxu0 0.0
  %3661 = vmatprep.subr.mxu0 0.0
  %3662 = vmatpush1.msra.mxu0 0.0
  %3663 = vmatprep.subr.mxu0 0.0
  %3664 = vmatpush1.msra.mxu0 0.0
  %3665 = vmatprep.subr.mxu0 0.0
  %3666 = vmatpush1.msra.mxu0 0.0
  %3667 = vmatprep.subr.mxu0 0.0
  %3668 = vmatpush1.msra.mxu0 0.0
  %3669 = vmatprep.subr.mxu0 0.0
  %3670 = vmatpush1.msra.mxu0 0.0
  %3671 = vmatprep.subr.mxu0 0.0
  %3672 = vmatpush1.msra.mxu0 0.0
  %3673 = vmatprep.subr.mxu0 0.0
  %3674 = vmatpush1.msra.mxu0 0.0
  %3675 = vmatprep.subr.mxu0 0.0
  %3676 = vmatpush1.msra.mxu0 0.0
  %3677 = vmatprep.subr.mxu0 0.0
  %3678 = vmatpush1.msra.mxu0 0.0
  %3679 = vmatprep.mubr.f32.mxu0 0.0
  %3680 = vmatmul.mubr.f32.gmra.mrb[0].mxu0 %v3592
  %v3681 = vpop.f32.mrb[0].mxu0
  %v3682 = vadd.f32 %v3589, %v3681
  %v3683 = vpop.f32.mrb[0].mxu0
  %3684 = vmatprep.mubr.f32.mxu0 0.0
  %3685 = vmatmul.mubr.f32.gmra.mrb[0].mxu0 %v3595
  %v3686 = vpop.f32.mrb[0].mxu0
  %v3687 = vadd.f32 %v3589, %v3686
  %v3688 = vpop.f32.mrb[0].mxu0
  %3689 = vmatprep.mubr.f32.mxu0 0.0
  %3690 = vmatmul.mubr.f32.gmra.mrb[0].mxu0 %v3598
  %v3691 = vpop.f32.mrb[0].mxu0
  %v3692 = vadd.f32 %v3589, %v3691
  %v3693 = vpop.f32.mrb[0].mxu0
  %3694 = vmatprep.mubr.f32.mxu0 0.0
  %3695 = vmatmul.mubr.f32.gmra.mrb[0].mxu0 %v3601
  %v3696 = vpop.f32.mrb[0].mxu0
  %v3697 = vadd.f32 %v3589, %v3696
  %v3698 = vpop.f32.mrb[0].mxu0
  %3699 = vmatprep.mubr.f32.mxu0 0.0
  %3700 = vmatmul.mubr.f32.gmra.mrb[0].mxu0 %v3604
  %v3701 = vpop.f32.mrb[0].mxu0
  %v3702 = vadd.f32 %v3589, %v3701
  %v3703 = vpop.f32.mrb[0].mxu0
  %3704 = vmatprep.mubr.f32.mxu0 0.0
  %3705 = vmatmul.mubr.f32.gmra.mrb[0].mxu0 %v3607
  %v3706 = vpop.f32.mrb[0].mxu0
  %v3707 = vadd.f32 %v3589, %v3706
  %v3708 = vpop.f32.mrb[0].mxu0
  %3709 = vmatprep.mubr.f32.mxu0 0.0
  %3710 = vmatmul.mubr.f32.gmra.mrb[0].mxu0 %v3610
  %v3711 = vpop.f32.mrb[0].mxu0
  %v3712 = vadd.f32 %v3589, %v3711
  %v3713 = vpop.f32.mrb[0].mxu0
  %3714 = vmatprep.mubr.f32.mxu0 0.0
  %3715 = vmatmul.mubr.f32.gmra.mrb[0].mxu0 %v3613
  %v3716 = vpop.f32.mrb[0].mxu0
  %v3717 = vadd.f32 %v3589, %v3716
  %v3718 = vpop.f32.mrb[0].mxu0
  %3719 = vdwg.mxu0
  %3724 = vrot.lane.b32.xlu0 %v3682, 96
  %v3725 = vpop.permute.xlu0 %3724
  %3726 = vrot.lane.b32.xlu0 %v3687, 96
  %v3727 = vpop.permute.xlu0 %3726
  %3728 = vrot.lane.b32.xlu0 %v3692, 96
  %v3729 = vpop.permute.xlu0 %3728
  %3730 = vrot.lane.b32.xlu0 %v3697, 96
  %v3731 = vpop.permute.xlu0 %3730
  %v3732 = vsel %vm488, %v3682, 0
  %v3734 = vsel %vm488, %v3687, 0
  %v3736 = vsel %vm488, %v3692, 0
  %v3738 = vsel %vm488, %v3697, 0
  %v3740 = vsel %vm488, %v3725, 0
  %v3742 = vsel %vm488, %v3727, 0
  %v3744 = vsel %vm488, %v3729, 0
  %v3746 = vsel %vm488, %v3731, 0
  %3748 = vmatprep.subr.mxu0 0.0
  %3749 = vmatpush1.xpose.msra.mxu0 %v3740
  %3750 = vmatprep.subr.mxu0 0.0
  %3751 = vmatpush1.xpose.msra.mxu0 %v3742
  %3752 = vmatprep.subr.mxu0 0.0
  %3753 = vmatpush1.xpose.msra.mxu0 %v3744
  %3754 = vmatprep.subr.mxu0 0.0
  %3755 = vmatpush1.xpose.msra.mxu0 %v3746
  %3756 = vmatprep.subr.mxu0 0.0
  %3757 = vmatpush1.xpose.msra.mxu0 0.0
  %3758 = vmatprep.subr.mxu0 0.0
  %3759 = vmatpush1.xpose.msra.mxu0 0.0
  %3760 = vmatprep.subr.mxu0 0.0
  %3761 = vmatpush1.xpose.msra.mxu0 0.0
  %3762 = vmatprep.subr.mxu0 0.0
  %3763 = vmatpush1.xpose.msra.mxu0 0.0
  %3764 = vmatprep.subr.mxu0 0.0
  %3765 = vmatpush1.xpose.msra.mxu0 0.0
  %3766 = vmatprep.subr.mxu0 0.0
  %3767 = vmatpush1.xpose.msra.mxu0 0.0
  %3768 = vmatprep.subr.mxu0 0.0
  %3769 = vmatpush1.xpose.msra.mxu0 0.0
  %3770 = vmatprep.subr.mxu0 0.0
  %3771 = vmatpush1.xpose.msra.mxu0 0.0
  %3772 = vmatprep.subr.mxu0 0.0
  %3773 = vmatpush1.xpose.msra.mxu0 0.0
  %3774 = vmatprep.subr.mxu0 0.0
  %3775 = vmatpush1.xpose.msra.mxu0 0.0
  %3776 = vmatprep.subr.mxu0 0.0
  %3777 = vmatpush1.xpose.msra.mxu0 0.0
  %3778 = vmatprep.subr.mxu0 0.0
  %3779 = vmatpush1.xpose.msra.mxu0 0.0
  %3780 = vmatprep.subr.mxu0 0.0
  %3781 = vmatpush1.xpose.msra.mxu0 0.0
  %3782 = vmatprep.subr.mxu0 0.0
  %3783 = vmatpush1.xpose.msra.mxu0 0.0
  %3784 = vmatprep.subr.mxu0 0.0
  %3785 = vmatpush1.xpose.msra.mxu0 0.0
  %3786 = vmatprep.subr.mxu0 0.0
  %3787 = vmatpush1.xpose.msra.mxu0 0.0
  %3788 = vmatprep.subr.mxu0 0.0
  %3789 = vmatpush1.xpose.msra.mxu0 0.0
  %3790 = vmatprep.subr.mxu0 0.0
  %3791 = vmatpush1.xpose.msra.mxu0 0.0
  %3792 = vmatprep.subr.mxu0 0.0
  %3793 = vmatpush1.xpose.msra.mxu0 0.0
  %3794 = vmatprep.subr.mxu0 0.0
  %3795 = vmatpush1.xpose.msra.mxu0 0.0
  %3796 = vmatprep.subr.mxu0 0.0
  %3797 = vmatpush1.xpose.msra.mxu0 0.0
  %3798 = vmatprep.subr.mxu0 0.0
  %3799 = vmatpush1.xpose.msra.mxu0 0.0
  %3800 = vmatprep.subr.mxu0 0.0
  %3801 = vmatpush1.xpose.msra.mxu0 0.0
  %3802 = vmatprep.subr.mxu0 0.0
  %3803 = vmatpush1.xpose.msra.mxu0 0.0
  %3804 = vmatprep.subr.mxu0 0.0
  %3805 = vmatpush1.xpose.msra.mxu0 0.0
  %3806 = vmatprep.subr.mxu0 0.0
  %3807 = vmatpush1.xpose.msra.mxu0 0.0
  %3808 = vmatprep.subr.mxu0 0.0
  %3809 = vmatpush1.xpose.msra.mxu0 0.0
  %3810 = vmatprep.subr.mxu0 0.0
  %3811 = vmatpush1.xpose.msra.mxu0 0.0
  %3812 = vmatprep.mubr.f32.mxu0 0.0
  %3813 = vmatmul.mubr.f32.gmra.mrb[0].mxu0 %v3732
  %v3814 = vpop.f32.mrb[0].mxu0
  %v3815 = vadd.f32 0.0, %v3814
  %v3816 = vpop.f32.mrb[0].mxu0
  %3817 = vmatprep.mubr.f32.mxu0 0.0
  %3818 = vmatmul.mubr.f32.gmra.mrb[0].mxu0 %v3734
  %v3819 = vpop.f32.mrb[0].mxu0
  %v3820 = vadd.f32 0.0, %v3819
  %v3821 = vpop.f32.mrb[0].mxu0
  %3822 = vmatprep.mubr.f32.mxu0 0.0
  %3823 = vmatmul.mubr.f32.gmra.mrb[0].mxu0 %v3736
  %v3824 = vpop.f32.mrb[0].mxu0
  %v3825 = vadd.f32 0.0, %v3824
  %v3826 = vpop.f32.mrb[0].mxu0
  %3827 = vmatprep.mubr.f32.mxu0 0.0
  %3828 = vmatmul.mubr.f32.gmra.mrb[0].mxu0 %v3738
  %v3829 = vpop.f32.mrb[0].mxu0
  %v3830 = vadd.f32 0.0, %v3829
  %v3831 = vpop.f32.mrb[0].mxu0
  %3832 = vdwg.mxu0
  %3837 = vrot.lane.b32.xlu0 %v3702, 96
  %v3838 = vpop.permute.xlu0 %3837
  %3839 = vrot.lane.b32.xlu0 %v3707, 96
  %v3840 = vpop.permute.xlu0 %3839
  %3841 = vrot.lane.b32.xlu0 %v3712, 96
  %v3842 = vpop.permute.xlu0 %3841
  %3843 = vrot.lane.b32.xlu0 %v3717, 96
  %v3844 = vpop.permute.xlu0 %3843
  %v3845 = vsel %vm488, %v3702, 0
  %v3847 = vsel %vm488, %v3707, 0
  %v3849 = vsel %vm488, %v3712, 0
  %v3851 = vsel %vm488, %v3717, 0
  %v3853 = vsel %vm488, %v3838, 0
  %v3855 = vsel %vm488, %v3840, 0
  %v3857 = vsel %vm488, %v3842, 0
  %v3859 = vsel %vm488, %v3844, 0
  %3861 = vmatprep.subr.mxu0 0.0
  %3862 = vmatpush1.xpose.msra.mxu0 %v3853
  %3863 = vmatprep.subr.mxu0 0.0
  %3864 = vmatpush1.xpose.msra.mxu0 %v3855
  %3865 = vmatprep.subr.mxu0 0.0
  %3866 = vmatpush1.xpose.msra.mxu0 %v3857
  %3867 = vmatprep.subr.mxu0 0.0
  %3868 = vmatpush1.xpose.msra.mxu0 %v3859
  %3869 = vmatprep.subr.mxu0 0.0
  %3870 = vmatpush1.xpose.msra.mxu0 0.0
  %3871 = vmatprep.subr.mxu0 0.0
  %3872 = vmatpush1.xpose.msra.mxu0 0.0
  %3873 = vmatprep.subr.mxu0 0.0
  %3874 = vmatpush1.xpose.msra.mxu0 0.0
  %3875 = vmatprep.subr.mxu0 0.0
  %3876 = vmatpush1.xpose.msra.mxu0 0.0
  %3877 = vmatprep.subr.mxu0 0.0
  %3878 = vmatpush1.xpose.msra.mxu0 0.0
  %3879 = vmatprep.subr.mxu0 0.0
  %3880 = vmatpush1.xpose.msra.mxu0 0.0
  %3881 = vmatprep.subr.mxu0 0.0
  %3882 = vmatpush1.xpose.msra.mxu0 0.0
  %3883 = vmatprep.subr.mxu0 0.0
  %3884 = vmatpush1.xpose.msra.mxu0 0.0
  %3885 = vmatprep.subr.mxu0 0.0
  %3886 = vmatpush1.xpose.msra.mxu0 0.0
  %3887 = vmatprep.subr.mxu0 0.0
  %3888 = vmatpush1.xpose.msra.mxu0 0.0
  %3889 = vmatprep.subr.mxu0 0.0
  %3890 = vmatpush1.xpose.msra.mxu0 0.0
  %3891 = vmatprep.subr.mxu0 0.0
  %3892 = vmatpush1.xpose.msra.mxu0 0.0
  %3893 = vmatprep.subr.mxu0 0.0
  %3894 = vmatpush1.xpose.msra.mxu0 0.0
  %3895 = vmatprep.subr.mxu0 0.0
  %3896 = vmatpush1.xpose.msra.mxu0 0.0
  %3897 = vmatprep.subr.mxu0 0.0
  %3898 = vmatpush1.xpose.msra.mxu0 0.0
  %3899 = vmatprep.subr.mxu0 0.0
  %3900 = vmatpush1.xpose.msra.mxu0 0.0
  %3901 = vmatprep.subr.mxu0 0.0
  %3902 = vmatpush1.xpose.msra.mxu0 0.0
  %3903 = vmatprep.subr.mxu0 0.0
  %3904 = vmatpush1.xpose.msra.mxu0 0.0
  %3905 = vmatprep.subr.mxu0 0.0
  %3906 = vmatpush1.xpose.msra.mxu0 0.0
  %3907 = vmatprep.subr.mxu0 0.0
  %3908 = vmatpush1.xpose.msra.mxu0 0.0
  %3909 = vmatprep.subr.mxu0 0.0
  %3910 = vmatpush1.xpose.msra.mxu0 0.0
  %3911 = vmatprep.subr.mxu0 0.0
  %3912 = vmatpush1.xpose.msra.mxu0 0.0
  %3913 = vmatprep.subr.mxu0 0.0
  %3914 = vmatpush1.xpose.msra.mxu0 0.0
  %3915 = vmatprep.subr.mxu0 0.0
  %3916 = vmatpush1.xpose.msra.mxu0 0.0
  %3917 = vmatprep.subr.mxu0 0.0
  %3918 = vmatpush1.xpose.msra.mxu0 0.0
  %3919 = vmatprep.subr.mxu0 0.0
  %3920 = vmatpush1.xpose.msra.mxu0 0.0
  %3921 = vmatprep.subr.mxu0 0.0
  %3922 = vmatpush1.xpose.msra.mxu0 0.0
  %3923 = vmatprep.subr.mxu0 0.0
  %3924 = vmatpush1.xpose.msra.mxu0 0.0
  %3925 = vmatprep.mubr.f32.mxu0 0.0
  %3926 = vmatmul.mubr.f32.gmra.mrb[0].mxu0 %v3845
  %v3927 = vpop.f32.mrb[0].mxu0
  %v3928 = vadd.f32 0.0, %v3927
  %v3929 = vpop.f32.mrb[0].mxu0
  %3930 = vmatprep.mubr.f32.mxu0 0.0
  %3931 = vmatmul.mubr.f32.gmra.mrb[0].mxu0 %v3847
  %v3932 = vpop.f32.mrb[0].mxu0
  %v3933 = vadd.f32 0.0, %v3932
  %v3934 = vpop.f32.mrb[0].mxu0
  %3935 = vmatprep.mubr.f32.mxu0 0.0
  %3936 = vmatmul.mubr.f32.gmra.mrb[0].mxu0 %v3849
  %v3937 = vpop.f32.mrb[0].mxu0
  %v3938 = vadd.f32 0.0, %v3937
  %v3939 = vpop.f32.mrb[0].mxu0
  %3940 = vmatprep.mubr.f32.mxu0 0.0
  %3941 = vmatmul.mubr.f32.gmra.mrb[0].mxu0 %v3851
  %v3942 = vpop.f32.mrb[0].mxu0
  %v3943 = vadd.f32 0.0, %v3942
  %v3944 = vpop.f32.mrb[0].mxu0
  %3945 = vdwg.mxu0
  %v3946 = vmul.f32 %v3815, 0.35355338
  %v3947 = vmul.f32 %v3820, 0.35355338
  %v3948 = vmul.f32 %v3825, 0.35355338
  %v3949 = vmul.f32 %v3830, 0.35355338
  %v3950 = vmul.f32 %v3928, 0.35355338
  %v3951 = vmul.f32 %v3933, 0.35355338
  %v3952 = vmul.f32 %v3938, 0.35355338
  %v3953 = vmul.f32 %v3943, 0.35355338
  %v3954 = vadd.f32 %v3946, %v715
  %v3955 = vadd.f32 %v3947, %v715
  %v3956 = vadd.f32 %v3948, %v715
  %v3957 = vadd.f32 %v3949, %v715
  %v3958 = vadd.f32 %v3950, %v715
  %v3959 = vadd.f32 %v3951, %v715
  %v3960 = vadd.f32 %v3952, %v715
  %v3961 = vadd.f32 %v3953, %v715
  %v3962 = vsel %vm171, %v3954, -inf
  %3963 = vmax.xlane.f32.xlu0 %v3962
  %v3964 = vpop.xlane.xlu0 %3963
  %v3965 = vsel %vm171, %v3955, -inf
  %3966 = vmax.xlane.f32.xlu0 %v3965
  %v3967 = vpop.xlane.xlu0 %3966
  %v3968 = vsel %vm171, %v3956, -inf
  %3969 = vmax.xlane.f32.xlu0 %v3968
  %v3970 = vpop.xlane.xlu0 %3969
  %v3971 = vsel %vm171, %v3957, -inf
  %3972 = vmax.xlane.f32.xlu0 %v3971
  %v3973 = vpop.xlane.xlu0 %3972
  %v3974 = vsel %vm171, %v3958, -inf
  %3975 = vmax.xlane.f32.xlu0 %v3974
  %v3976 = vpop.xlane.xlu0 %3975
  %v3977 = vsel %vm171, %v3959, -inf
  %3978 = vmax.xlane.f32.xlu0 %v3977
  %v3979 = vpop.xlane.xlu0 %3978
  %v3980 = vsel %vm171, %v3960, -inf
  %3981 = vmax.xlane.f32.xlu0 %v3980
  %v3982 = vpop.xlane.xlu0 %3981
  %v3983 = vsel %vm171, %v3961, -inf
  %3984 = vmax.xlane.f32.xlu0 %v3983
  %v3985 = vpop.xlane.xlu0 %3984
  %v3986 = vsub.f32 %v3954, %v3964
  %v3987 = vsub.f32 %v3955, %v3967
  %v3988 = vsub.f32 %v3956, %v3970
  %v3989 = vsub.f32 %v3957, %v3973
  %v3990 = vsub.f32 %v3958, %v3976
  %v3991 = vsub.f32 %v3959, %v3979
  %v3992 = vsub.f32 %v3960, %v3982
  %v3993 = vsub.f32 %v3961, %v3985
  %v3994 = vmul.f32 %v3986, 1.442695
  %v3995 = vpow.pop %v3994
  %v3996 = vmul.f32 %v3987, 1.442695
  %v3997 = vpow.pop %v3996
  %v3998 = vmul.f32 %v3988, 1.442695
  %v3999 = vpow.pop %v3998
  %v4000 = vmul.f32 %v3989, 1.442695
  %v4001 = vpow.pop %v4000
  %v4002 = vmul.f32 %v3990, 1.442695
  %v4003 = vpow.pop %v4002
  %v4004 = vmul.f32 %v3991, 1.442695
  %v4005 = vpow.pop %v4004
  %v4006 = vmul.f32 %v3992, 1.442695
  %v4007 = vpow.pop %v4006
  %v4008 = vmul.f32 %v3993, 1.442695
  %v4009 = vpow.pop %v4008
  %v4010 = vsel %vm171, %v3995, 0.0
  %4011 = vadd.xlane.f32.xlu0 %v4010
  %v4012 = vpop.xlane.xlu0 %4011
  %v4013 = vsel %vm171, %v3997, 0.0
  %4014 = vadd.xlane.f32.xlu0 %v4013
  %v4015 = vpop.xlane.xlu0 %4014
  %v4016 = vsel %vm171, %v3999, 0.0
  %4017 = vadd.xlane.f32.xlu0 %v4016
  %v4018 = vpop.xlane.xlu0 %4017
  %v4019 = vsel %vm171, %v4001, 0.0
  %4020 = vadd.xlane.f32.xlu0 %v4019
  %v4021 = vpop.xlane.xlu0 %4020
  %v4022 = vsel %vm171, %v4003, 0.0
  %4023 = vadd.xlane.f32.xlu0 %v4022
  %v4024 = vpop.xlane.xlu0 %4023
  %v4025 = vsel %vm171, %v4005, 0.0
  %4026 = vadd.xlane.f32.xlu0 %v4025
  %v4027 = vpop.xlane.xlu0 %4026
  %v4028 = vsel %vm171, %v4007, 0.0
  %4029 = vadd.xlane.f32.xlu0 %v4028
  %v4030 = vpop.xlane.xlu0 %4029
  %v4031 = vsel %vm171, %v4009, 0.0
  %4032 = vadd.xlane.f32.xlu0 %v4031
  %v4033 = vpop.xlane.xlu0 %4032
  %v4034 = vrcp.pop %v4012
  %v4035 = vmul.f32 %v3995, %v4034
  %v4036 = vrcp.pop %v4015
  %v4037 = vmul.f32 %v3997, %v4036
  %v4038 = vrcp.pop %v4018
  %v4039 = vmul.f32 %v3999, %v4038
  %v4040 = vrcp.pop %v4021
  %v4041 = vmul.f32 %v4001, %v4040
  %v4042 = vrcp.pop %v4024
  %v4043 = vmul.f32 %v4003, %v4042
  %v4044 = vrcp.pop %v4027
  %v4045 = vmul.f32 %v4005, %v4044
  %v4046 = vrcp.pop %v4030
  %v4047 = vmul.f32 %v4007, %v4046
  %v4048 = vrcp.pop %v4033
  %v4049 = vmul.f32 %v4009, %v4048
  %4050 = vrot.lane.b32.xlu0 %v3682, 64
  %v4051 = vpop.permute.xlu0 %4050
  %4052 = vrot.lane.b32.xlu0 %v3687, 64
  %v4053 = vpop.permute.xlu0 %4052
  %4054 = vrot.lane.b32.xlu0 %v3692, 64
  %v4055 = vpop.permute.xlu0 %4054
  %4056 = vrot.lane.b32.xlu0 %v3697, 64
  %v4057 = vpop.permute.xlu0 %4056
  %v4063 = vsel %vm171, %v4035, 0
  %v4066 = vsel %vm171, %v4037, 0
  %v4069 = vsel %vm171, %v4039, 0
  %v4072 = vsel %vm171, %v4041, 0
  %4074 = vmatprep.subr.mxu0 0.0
  %4075 = vmatpush1.msra.mxu0 %v4051
  %4076 = vmatprep.subr.mxu0 0.0
  %4077 = vmatpush1.msra.mxu0 %v4053
  %4078 = vmatprep.subr.mxu0 0.0
  %4079 = vmatpush1.msra.mxu0 %v4055
  %4080 = vmatprep.subr.mxu0 0.0
  %4081 = vmatpush1.msra.mxu0 %v4057
  %4082 = vmatprep.subr.mxu0 0.0
  %4083 = vmatpush1.msra.mxu0 0.0
  %4084 = vmatprep.subr.mxu0 0.0
  %4085 = vmatpush1.msra.mxu0 0.0
  %4086 = vmatprep.subr.mxu0 0.0
  %4087 = vmatpush1.msra.mxu0 0.0
  %4088 = vmatprep.subr.mxu0 0.0
  %4089 = vmatpush1.msra.mxu0 0.0
  %4090 = vmatprep.subr.mxu0 0.0
  %4091 = vmatpush1.msra.mxu0 0.0
  %4092 = vmatprep.subr.mxu0 0.0
  %4093 = vmatpush1.msra.mxu0 0.0
  %4094 = vmatprep.subr.mxu0 0.0
  %4095 = vmatpush1.msra.mxu0 0.0
  %4096 = vmatprep.subr.mxu0 0.0
  %4097 = vmatpush1.msra.mxu0 0.0
  %4098 = vmatprep.subr.mxu0 0.0
  %4099 = vmatpush1.msra.mxu0 0.0
  %4100 = vmatprep.subr.mxu0 0.0
  %4101 = vmatpush1.msra.mxu0 0.0
  %4102 = vmatprep.subr.mxu0 0.0
  %4103 = vmatpush1.msra.mxu0 0.0
  %4104 = vmatprep.subr.mxu0 0.0
  %4105 = vmatpush1.msra.mxu0 0.0
  %4106 = vmatprep.subr.mxu0 0.0
  %4107 = vmatpush1.msra.mxu0 0.0
  %4108 = vmatprep.subr.mxu0 0.0
  %4109 = vmatpush1.msra.mxu0 0.0
  %4110 = vmatprep.subr.mxu0 0.0
  %4111 = vmatpush1.msra.mxu0 0.0
  %4112 = vmatprep.subr.mxu0 0.0
  %4113 = vmatpush1.msra.mxu0 0.0
  %4114 = vmatprep.subr.mxu0 0.0
  %4115 = vmatpush1.msra.mxu0 0.0
  %4116 = vmatprep.subr.mxu0 0.0
  %4117 = vmatpush1.msra.mxu0 0.0
  %4118 = vmatprep.subr.mxu0 0.0
  %4119 = vmatpush1.msra.mxu0 0.0
  %4120 = vmatprep.subr.mxu0 0.0
  %4121 = vmatpush1.msra.mxu0 0.0
  %4122 = vmatprep.subr.mxu0 0.0
  %4123 = vmatpush1.msra.mxu0 0.0
  %4124 = vmatprep.subr.mxu0 0.0
  %4125 = vmatpush1.msra.mxu0 0.0
  %4126 = vmatprep.subr.mxu0 0.0
  %4127 = vmatpush1.msra.mxu0 0.0
  %4128 = vmatprep.subr.mxu0 0.0
  %4129 = vmatpush1.msra.mxu0 0.0
  %4130 = vmatprep.subr.mxu0 0.0
  %4131 = vmatpush1.msra.mxu0 0.0
  %4132 = vmatprep.subr.mxu0 0.0
  %4133 = vmatpush1.msra.mxu0 0.0
  %4134 = vmatprep.subr.mxu0 0.0
  %4135 = vmatpush1.msra.mxu0 0.0
  %4136 = vmatprep.subr.mxu0 0.0
  %4137 = vmatpush1.msra.mxu0 0.0
  %4138 = vmatprep.mubr.f32.mxu0 0.0
  %4139 = vmatmul.mubr.f32.gmra.mrb[0].mxu0 %v4063
  %v4140 = vpop.f32.mrb[0].mxu0
  %v4141 = vadd.f32 0.0, %v4140
  %v4142 = vpop.f32.mrb[0].mxu0
  %4143 = vmatprep.mubr.f32.mxu0 0.0
  %4144 = vmatmul.mubr.f32.gmra.mrb[0].mxu0 %v4066
  %v4145 = vpop.f32.mrb[0].mxu0
  %v4146 = vadd.f32 0.0, %v4145
  %v4147 = vpop.f32.mrb[0].mxu0
  %4148 = vmatprep.mubr.f32.mxu0 0.0
  %4149 = vmatmul.mubr.f32.gmra.mrb[0].mxu0 %v4069
  %v4150 = vpop.f32.mrb[0].mxu0
  %v4151 = vadd.f32 0.0, %v4150
  %v4152 = vpop.f32.mrb[0].mxu0
  %4153 = vmatprep.mubr.f32.mxu0 0.0
  %4154 = vmatmul.mubr.f32.gmra.mrb[0].mxu0 %v4072
  %v4155 = vpop.f32.mrb[0].mxu0
  %v4156 = vadd.f32 0.0, %v4155
  %v4157 = vpop.f32.mrb[0].mxu0
  %4158 = vdwg.mxu0
  %4159 = vrot.lane.b32.xlu0 %v3702, 64
  %v4160 = vpop.permute.xlu0 %4159
  %4161 = vrot.lane.b32.xlu0 %v3707, 64
  %v4162 = vpop.permute.xlu0 %4161
  %4163 = vrot.lane.b32.xlu0 %v3712, 64
  %v4164 = vpop.permute.xlu0 %4163
  %4165 = vrot.lane.b32.xlu0 %v3717, 64
  %v4166 = vpop.permute.xlu0 %4165
  %v4172 = vsel %vm171, %v4043, 0
  %v4175 = vsel %vm171, %v4045, 0
  %v4178 = vsel %vm171, %v4047, 0
  %v4181 = vsel %vm171, %v4049, 0
  %4183 = vmatprep.subr.mxu0 0.0
  %4184 = vmatpush1.msra.mxu0 %v4160
  %4185 = vmatprep.subr.mxu0 0.0
  %4186 = vmatpush1.msra.mxu0 %v4162
  %4187 = vmatprep.subr.mxu0 0.0
  %4188 = vmatpush1.msra.mxu0 %v4164
  %4189 = vmatprep.subr.mxu0 0.0
  %4190 = vmatpush1.msra.mxu0 %v4166
  %4191 = vmatprep.subr.mxu0 0.0
  %4192 = vmatpush1.msra.mxu0 0.0
  %4193 = vmatprep.subr.mxu0 0.0
  %4194 = vmatpush1.msra.mxu0 0.0
  %4195 = vmatprep.subr.mxu0 0.0
  %4196 = vmatpush1.msra.mxu0 0.0
  %4197 = vmatprep.subr.mxu0 0.0
  %4198 = vmatpush1.msra.mxu0 0.0
  %4199 = vmatprep.subr.mxu0 0.0
  %4200 = vmatpush1.msra.mxu0 0.0
  %4201 = vmatprep.subr.mxu0 0.0
  %4202 = vmatpush1.msra.mxu0 0.0
  %4203 = vmatprep.subr.mxu0 0.0
  %4204 = vmatpush1.msra.mxu0 0.0
  %4205 = vmatprep.subr.mxu0 0.0
  %4206 = vmatpush1.msra.mxu0 0.0
  %4207 = vmatprep.subr.mxu0 0.0
  %4208 = vmatpush1.msra.mxu0 0.0
  %4209 = vmatprep.subr.mxu0 0.0
  %4210 = vmatpush1.msra.mxu0 0.0
  %4211 = vmatprep.subr.mxu0 0.0
  %4212 = vmatpush1.msra.mxu0 0.0
  %4213 = vmatprep.subr.mxu0 0.0
  %4214 = vmatpush1.msra.mxu0 0.0
  %4215 = vmatprep.subr.mxu0 0.0
  %4216 = vmatpush1.msra.mxu0 0.0
  %4217 = vmatprep.subr.mxu0 0.0
  %4218 = vmatpush1.msra.mxu0 0.0
  %4219 = vmatprep.subr.mxu0 0.0
  %4220 = vmatpush1.msra.mxu0 0.0
  %4221 = vmatprep.subr.mxu0 0.0
  %4222 = vmatpush1.msra.mxu0 0.0
  %4223 = vmatprep.subr.mxu0 0.0
  %4224 = vmatpush1.msra.mxu0 0.0
  %4225 = vmatprep.subr.mxu0 0.0
  %4226 = vmatpush1.msra.mxu0 0.0
  %4227 = vmatprep.subr.mxu0 0.0
  %4228 = vmatpush1.msra.mxu0 0.0
  %4229 = vmatprep.subr.mxu0 0.0
  %4230 = vmatpush1.msra.mxu0 0.0
  %4231 = vmatprep.subr.mxu0 0.0
  %4232 = vmatpush1.msra.mxu0 0.0
  %4233 = vmatprep.subr.mxu0 0.0
  %4234 = vmatpush1.msra.mxu0 0.0
  %4235 = vmatprep.subr.mxu0 0.0
  %4236 = vmatpush1.msra.mxu0 0.0
  %4237 = vmatprep.subr.mxu0 0.0
  %4238 = vmatpush1.msra.mxu0 0.0
  %4239 = vmatprep.subr.mxu0 0.0
  %4240 = vmatpush1.msra.mxu0 0.0
  %4241 = vmatprep.subr.mxu0 0.0
  %4242 = vmatpush1.msra.mxu0 0.0
  %4243 = vmatprep.subr.mxu0 0.0
  %4244 = vmatpush1.msra.mxu0 0.0
  %4245 = vmatprep.subr.mxu0 0.0
  %4246 = vmatpush1.msra.mxu0 0.0
  %4247 = vmatprep.mubr.f32.mxu0 0.0
  %4248 = vmatmul.mubr.f32.gmra.mrb[0].mxu0 %v4172
  %v4249 = vpop.f32.mrb[0].mxu0
  %v4250 = vadd.f32 0.0, %v4249
  %v4251 = vpop.f32.mrb[0].mxu0
  %4252 = vmatprep.mubr.f32.mxu0 0.0
  %4253 = vmatmul.mubr.f32.gmra.mrb[0].mxu0 %v4175
  %v4254 = vpop.f32.mrb[0].mxu0
  %v4255 = vadd.f32 0.0, %v4254
  %v4256 = vpop.f32.mrb[0].mxu0
  %4257 = vmatprep.mubr.f32.mxu0 0.0
  %4258 = vmatmul.mubr.f32.gmra.mrb[0].mxu0 %v4178
  %v4259 = vpop.f32.mrb[0].mxu0
  %v4260 = vadd.f32 0.0, %v4259
  %v4261 = vpop.f32.mrb[0].mxu0
  %4262 = vmatprep.mubr.f32.mxu0 0.0
  %4263 = vmatmul.mubr.f32.gmra.mrb[0].mxu0 %v4181
  %v4264 = vpop.f32.mrb[0].mxu0
  %v4265 = vadd.f32 0.0, %v4264
  %v4266 = vpop.f32.mrb[0].mxu0
  %4267 = vdwg.mxu0
  %4268 = vst.msk [vmem:[#allocation3] sm:$0xff] %vm488, %v4141
  %4269 = vst.msk [vmem:[#allocation3 + $0x8] sm:$0xff] %vm488, %v4146
  %4270 = vst.msk [vmem:[#allocation3 + $0x10] sm:$0xff] %vm488, %v4151
  %4271 = vst.msk [vmem:[#allocation3 + $0x18] sm:$0xff] %vm488, %v4156
  %4272 = vst.msk [vmem:[#allocation3 + $0x20] sm:$0xff] %vm488, %v4250
  %4273 = vst.msk [vmem:[#allocation3 + $0x28] sm:$0xff] %vm488, %v4255
  %4274 = vst.msk [vmem:[#allocation3 + $0x30] sm:$0xff] %vm488, %v4260
  %4275 = vst.msk [vmem:[#allocation3 + $0x38] sm:$0xff] %vm488, %v4265
  %4276 = vrot.lane.b32.xlu0 %v3682, 120
  %v4277 = vpop.permute.xlu0 %4276
  %4278 = vrot.lane.b32.xlu0 %v3687, 120
  %v4279 = vpop.permute.xlu0 %4278
  %4280 = vrot.lane.b32.xlu0 %v3692, 120
  %v4281 = vpop.permute.xlu0 %4280
  %4282 = vrot.lane.b32.xlu0 %v3697, 120
  %v4283 = vpop.permute.xlu0 %4282
  %4284 = vrot.lane.b32.xlu0 %v3682, 88
  %v4285 = vpop.permute.xlu0 %4284
  %4286 = vrot.lane.b32.xlu0 %v3687, 88
  %v4287 = vpop.permute.xlu0 %4286
  %4288 = vrot.lane.b32.xlu0 %v3692, 88
  %v4289 = vpop.permute.xlu0 %4288
  %4290 = vrot.lane.b32.xlu0 %v3697, 88
  %v4291 = vpop.permute.xlu0 %4290
  %v4292 = vsel %vm488, %v4277, 0
  %v4294 = vsel %vm488, %v4279, 0
  %v4296 = vsel %vm488, %v4281, 0
  %v4298 = vsel %vm488, %v4283, 0
  %v4300 = vsel %vm488, %v4285, 0
  %v4302 = vsel %vm488, %v4287, 0
  %v4304 = vsel %vm488, %v4289, 0
  %v4306 = vsel %vm488, %v4291, 0
  %4308 = vmatprep.subr.mxu0 0.0
  %4309 = vmatpush1.xpose.msra.mxu0 %v4300
  %4310 = vmatprep.subr.mxu0 0.0
  %4311 = vmatpush1.xpose.msra.mxu0 %v4302
  %4312 = vmatprep.subr.mxu0 0.0
  %4313 = vmatpush1.xpose.msra.mxu0 %v4304
  %4314 = vmatprep.subr.mxu0 0.0
  %4315 = vmatpush1.xpose.msra.mxu0 %v4306
  %4316 = vmatprep.subr.mxu0 0.0
  %4317 = vmatpush1.xpose.msra.mxu0 0.0
  %4318 = vmatprep.subr.mxu0 0.0
  %4319 = vmatpush1.xpose.msra.mxu0 0.0
  %4320 = vmatprep.subr.mxu0 0.0
  %4321 = vmatpush1.xpose.msra.mxu0 0.0
  %4322 = vmatprep.subr.mxu0 0.0
  %4323 = vmatpush1.xpose.msra.mxu0 0.0
  %4324 = vmatprep.subr.mxu0 0.0
  %4325 = vmatpush1.xpose.msra.mxu0 0.0
  %4326 = vmatprep.subr.mxu0 0.0
  %4327 = vmatpush1.xpose.msra.mxu0 0.0
  %4328 = vmatprep.subr.mxu0 0.0
  %4329 = vmatpush1.xpose.msra.mxu0 0.0
  %4330 = vmatprep.subr.mxu0 0.0
  %4331 = vmatpush1.xpose.msra.mxu0 0.0
  %4332 = vmatprep.subr.mxu0 0.0
  %4333 = vmatpush1.xpose.msra.mxu0 0.0
  %4334 = vmatprep.subr.mxu0 0.0
  %4335 = vmatpush1.xpose.msra.mxu0 0.0
  %4336 = vmatprep.subr.mxu0 0.0
  %4337 = vmatpush1.xpose.msra.mxu0 0.0
  %4338 = vmatprep.subr.mxu0 0.0
  %4339 = vmatpush1.xpose.msra.mxu0 0.0
  %4340 = vmatprep.subr.mxu0 0.0
  %4341 = vmatpush1.xpose.msra.mxu0 0.0
  %4342 = vmatprep.subr.mxu0 0.0
  %4343 = vmatpush1.xpose.msra.mxu0 0.0
  %4344 = vmatprep.subr.mxu0 0.0
  %4345 = vmatpush1.xpose.msra.mxu0 0.0
  %4346 = vmatprep.subr.mxu0 0.0
  %4347 = vmatpush1.xpose.msra.mxu0 0.0
  %4348 = vmatprep.subr.mxu0 0.0
  %4349 = vmatpush1.xpose.msra.mxu0 0.0
  %4350 = vmatprep.subr.mxu0 0.0
  %4351 = vmatpush1.xpose.msra.mxu0 0.0
  %4352 = vmatprep.subr.mxu0 0.0
  %4353 = vmatpush1.xpose.msra.mxu0 0.0
  %4354 = vmatprep.subr.mxu0 0.0
  %4355 = vmatpush1.xpose.msra.mxu0 0.0
  %4356 = vmatprep.subr.mxu0 0.0
  %4357 = vmatpush1.xpose.msra.mxu0 0.0
  %4358 = vmatprep.subr.mxu0 0.0
  %4359 = vmatpush1.xpose.msra.mxu0 0.0
  %4360 = vmatprep.subr.mxu0 0.0
  %4361 = vmatpush1.xpose.msra.mxu0 0.0
  %4362 = vmatprep.subr.mxu0 0.0
  %4363 = vmatpush1.xpose.msra.mxu0 0.0
  %4364 = vmatprep.subr.mxu0 0.0
  %4365 = vmatpush1.xpose.msra.mxu0 0.0
  %4366 = vmatprep.subr.mxu0 0.0
  %4367 = vmatpush1.xpose.msra.mxu0 0.0
  %4368 = vmatprep.subr.mxu0 0.0
  %4369 = vmatpush1.xpose.msra.mxu0 0.0
  %4370 = vmatprep.subr.mxu0 0.0
  %4371 = vmatpush1.xpose.msra.mxu0 0.0
  %4372 = vmatprep.mubr.f32.mxu0 0.0
  %4373 = vmatmul.mubr.f32.gmra.mrb[0].mxu0 %v4292
  %v4374 = vpop.f32.mrb[0].mxu0
  %v4375 = vadd.f32 0.0, %v4374
  %v4376 = vpop.f32.mrb[0].mxu0
  %4377 = vmatprep.mubr.f32.mxu0 0.0
  %4378 = vmatmul.mubr.f32.gmra.mrb[0].mxu0 %v4294
  %v4379 = vpop.f32.mrb[0].mxu0
  %v4380 = vadd.f32 0.0, %v4379
  %v4381 = vpop.f32.mrb[0].mxu0
  %4382 = vmatprep.mubr.f32.mxu0 0.0
  %4383 = vmatmul.mubr.f32.gmra.mrb[0].mxu0 %v4296
  %v4384 = vpop.f32.mrb[0].mxu0
  %v4385 = vadd.f32 0.0, %v4384
  %v4386 = vpop.f32.mrb[0].mxu0
  %4387 = vmatprep.mubr.f32.mxu0 0.0
  %4388 = vmatmul.mubr.f32.gmra.mrb[0].mxu0 %v4298
  %v4389 = vpop.f32.mrb[0].mxu0
  %v4390 = vadd.f32 0.0, %v4389
  %v4391 = vpop.f32.mrb[0].mxu0
  %4392 = vdwg.mxu0
  %4393 = vrot.lane.b32.xlu0 %v3702, 120
  %v4394 = vpop.permute.xlu0 %4393
  %4395 = vrot.lane.b32.xlu0 %v3707, 120
  %v4396 = vpop.permute.xlu0 %4395
  %4397 = vrot.lane.b32.xlu0 %v3712, 120
  %v4398 = vpop.permute.xlu0 %4397
  %4399 = vrot.lane.b32.xlu0 %v3717, 120
  %v4400 = vpop.permute.xlu0 %4399
  %4401 = vrot.lane.b32.xlu0 %v3702, 88
  %v4402 = vpop.permute.xlu0 %4401
  %4403 = vrot.lane.b32.xlu0 %v3707, 88
  %v4404 = vpop.permute.xlu0 %4403
  %4405 = vrot.lane.b32.xlu0 %v3712, 88
  %v4406 = vpop.permute.xlu0 %4405
  %4407 = vrot.lane.b32.xlu0 %v3717, 88
  %v4408 = vpop.permute.xlu0 %4407
  %v4409 = vsel %vm488, %v4394, 0
  %v4411 = vsel %vm488, %v4396, 0
  %v4413 = vsel %vm488, %v4398, 0
  %v4415 = vsel %vm488, %v4400, 0
  %v4417 = vsel %vm488, %v4402, 0
  %v4419 = vsel %vm488, %v4404, 0
  %v4421 = vsel %vm488, %v4406, 0
  %v4423 = vsel %vm488, %v4408, 0
  %4425 = vmatprep.subr.mxu0 0.0
  %4426 = vmatpush1.xpose.msra.mxu0 %v4417
  %4427 = vmatprep.subr.mxu0 0.0
  %4428 = vmatpush1.xpose.msra.mxu0 %v4419
  %4429 = vmatprep.subr.mxu0 0.0
  %4430 = vmatpush1.xpose.msra.mxu0 %v4421
  %4431 = vmatprep.subr.mxu0 0.0
  %4432 = vmatpush1.xpose.msra.mxu0 %v4423
  %4433 = vmatprep.subr.mxu0 0.0
  %4434 = vmatpush1.xpose.msra.mxu0 0.0
  %4435 = vmatprep.subr.mxu0 0.0
  %4436 = vmatpush1.xpose.msra.mxu0 0.0
  %4437 = vmatprep.subr.mxu0 0.0
  %4438 = vmatpush1.xpose.msra.mxu0 0.0
  %4439 = vmatprep.subr.mxu0 0.0
  %4440 = vmatpush1.xpose.msra.mxu0 0.0
  %4441 = vmatprep.subr.mxu0 0.0
  %4442 = vmatpush1.xpose.msra.mxu0 0.0
  %4443 = vmatprep.subr.mxu0 0.0
  %4444 = vmatpush1.xpose.msra.mxu0 0.0
  %4445 = vmatprep.subr.mxu0 0.0
  %4446 = vmatpush1.xpose.msra.mxu0 0.0
  %4447 = vmatprep.subr.mxu0 0.0
  %4448 = vmatpush1.xpose.msra.mxu0 0.0
  %4449 = vmatprep.subr.mxu0 0.0
  %4450 = vmatpush1.xpose.msra.mxu0 0.0
  %4451 = vmatprep.subr.mxu0 0.0
  %4452 = vmatpush1.xpose.msra.mxu0 0.0
  %4453 = vmatprep.subr.mxu0 0.0
  %4454 = vmatpush1.xpose.msra.mxu0 0.0
  %4455 = vmatprep.subr.mxu0 0.0
  %4456 = vmatpush1.xpose.msra.mxu0 0.0
  %4457 = vmatprep.subr.mxu0 0.0
  %4458 = vmatpush1.xpose.msra.mxu0 0.0
  %4459 = vmatprep.subr.mxu0 0.0
  %4460 = vmatpush1.xpose.msra.mxu0 0.0
  %4461 = vmatprep.subr.mxu0 0.0
  %4462 = vmatpush1.xpose.msra.mxu0 0.0
  %4463 = vmatprep.subr.mxu0 0.0
  %4464 = vmatpush1.xpose.msra.mxu0 0.0
  %4465 = vmatprep.subr.mxu0 0.0
  %4466 = vmatpush1.xpose.msra.mxu0 0.0
  %4467 = vmatprep.subr.mxu0 0.0
  %4468 = vmatpush1.xpose.msra.mxu0 0.0
  %4469 = vmatprep.subr.mxu0 0.0
  %4470 = vmatpush1.xpose.msra.mxu0 0.0
  %4471 = vmatprep.subr.mxu0 0.0
  %4472 = vmatpush1.xpose.msra.mxu0 0.0
  %4473 = vmatprep.subr.mxu0 0.0
  %4474 = vmatpush1.xpose.msra.mxu0 0.0
  %4475 = vmatprep.subr.mxu0 0.0
  %4476 = vmatpush1.xpose.msra.mxu0 0.0
  %4477 = vmatprep.subr.mxu0 0.0
  %4478 = vmatpush1.xpose.msra.mxu0 0.0
  %4479 = vmatprep.subr.mxu0 0.0
  %4480 = vmatpush1.xpose.msra.mxu0 0.0
  %4481 = vmatprep.subr.mxu0 0.0
  %4482 = vmatpush1.xpose.msra.mxu0 0.0
  %4483 = vmatprep.subr.mxu0 0.0
  %4484 = vmatpush1.xpose.msra.mxu0 0.0
  %4485 = vmatprep.subr.mxu0 0.0
  %4486 = vmatpush1.xpose.msra.mxu0 0.0
  %4487 = vmatprep.subr.mxu0 0.0
  %4488 = vmatpush1.xpose.msra.mxu0 0.0
  %4489 = vmatprep.mubr.f32.mxu0 0.0
  %4490 = vmatmul.mubr.f32.gmra.mrb[0].mxu0 %v4409
  %v4491 = vpop.f32.mrb[0].mxu0
  %v4492 = vadd.f32 0.0, %v4491
  %v4493 = vpop.f32.mrb[0].mxu0
  %4494 = vmatprep.mubr.f32.mxu0 0.0
  %4495 = vmatmul.mubr.f32.gmra.mrb[0].mxu0 %v4411
  %v4496 = vpop.f32.mrb[0].mxu0
  %v4497 = vadd.f32 0.0, %v4496
  %v4498 = vpop.f32.mrb[0].mxu0
  %4499 = vmatprep.mubr.f32.mxu0 0.0
  %4500 = vmatmul.mubr.f32.gmra.mrb[0].mxu0 %v4413
  %v4501 = vpop.f32.mrb[0].mxu0
  %v4502 = vadd.f32 0.0, %v4501
  %v4503 = vpop.f32.mrb[0].mxu0
  %4504 = vmatprep.mubr.f32.mxu0 0.0
  %4505 = vmatmul.mubr.f32.gmra.mrb[0].mxu0 %v4415
  %v4506 = vpop.f32.mrb[0].mxu0
  %v4507 = vadd.f32 0.0, %v4506
  %v4508 = vpop.f32.mrb[0].mxu0
  %4509 = vdwg.mxu0
  %v4510 = vmul.f32 %v4375, 0.35355338
  %v4511 = vmul.f32 %v4380, 0.35355338
  %v4512 = vmul.f32 %v4385, 0.35355338
  %v4513 = vmul.f32 %v4390, 0.35355338
  %v4514 = vmul.f32 %v4492, 0.35355338
  %v4515 = vmul.f32 %v4497, 0.35355338
  %v4516 = vmul.f32 %v4502, 0.35355338
  %v4517 = vmul.f32 %v4507, 0.35355338
  %v4518 = vadd.f32 %v4510, %v715
  %v4519 = vadd.f32 %v4511, %v715
  %v4520 = vadd.f32 %v4512, %v715
  %v4521 = vadd.f32 %v4513, %v715
  %v4522 = vadd.f32 %v4514, %v715
  %v4523 = vadd.f32 %v4515, %v715
  %v4524 = vadd.f32 %v4516, %v715
  %v4525 = vadd.f32 %v4517, %v715
  %v4526 = vsel %vm171, %v4518, -inf
  %4527 = vmax.xlane.f32.xlu0 %v4526
  %v4528 = vpop.xlane.xlu0 %4527
  %v4529 = vsel %vm171, %v4519, -inf
  %4530 = vmax.xlane.f32.xlu0 %v4529
  %v4531 = vpop.xlane.xlu0 %4530
  %v4532 = vsel %vm171, %v4520, -inf
  %4533 = vmax.xlane.f32.xlu0 %v4532
  %v4534 = vpop.xlane.xlu0 %4533
  %v4535 = vsel %vm171, %v4521, -inf
  %4536 = vmax.xlane.f32.xlu0 %v4535
  %v4537 = vpop.xlane.xlu0 %4536
  %v4538 = vsel %vm171, %v4522, -inf
  %4539 = vmax.xlane.f32.xlu0 %v4538
  %v4540 = vpop.xlane.xlu0 %4539
  %v4541 = vsel %vm171, %v4523, -inf
  %4542 = vmax.xlane.f32.xlu0 %v4541
  %v4543 = vpop.xlane.xlu0 %4542
  %v4544 = vsel %vm171, %v4524, -inf
  %4545 = vmax.xlane.f32.xlu0 %v4544
  %v4546 = vpop.xlane.xlu0 %4545
  %v4547 = vsel %vm171, %v4525, -inf
  %4548 = vmax.xlane.f32.xlu0 %v4547
  %v4549 = vpop.xlane.xlu0 %4548
  %v4550 = vsub.f32 %v4518, %v4528
  %v4551 = vsub.f32 %v4519, %v4531
  %v4552 = vsub.f32 %v4520, %v4534
  %v4553 = vsub.f32 %v4521, %v4537
  %v4554 = vsub.f32 %v4522, %v4540
  %v4555 = vsub.f32 %v4523, %v4543
  %v4556 = vsub.f32 %v4524, %v4546
  %v4557 = vsub.f32 %v4525, %v4549
  %v4558 = vmul.f32 %v4550, 1.442695
  %v4559 = vpow.pop %v4558
  %v4560 = vmul.f32 %v4551, 1.442695
  %v4561 = vpow.pop %v4560
  %v4562 = vmul.f32 %v4552, 1.442695
  %v4563 = vpow.pop %v4562
  %v4564 = vmul.f32 %v4553, 1.442695
  %v4565 = vpow.pop %v4564
  %v4566 = vmul.f32 %v4554, 1.442695
  %v4567 = vpow.pop %v4566
  %v4568 = vmul.f32 %v4555, 1.442695
  %v4569 = vpow.pop %v4568
  %v4570 = vmul.f32 %v4556, 1.442695
  %v4571 = vpow.pop %v4570
  %v4572 = vmul.f32 %v4557, 1.442695
  %v4573 = vpow.pop %v4572
  %v4574 = vsel %vm171, %v4559, 0.0
  %4575 = vadd.xlane.f32.xlu0 %v4574
  %v4576 = vpop.xlane.xlu0 %4575
  %v4577 = vsel %vm171, %v4561, 0.0
  %4578 = vadd.xlane.f32.xlu0 %v4577
  %v4579 = vpop.xlane.xlu0 %4578
  %v4580 = vsel %vm171, %v4563, 0.0
  %4581 = vadd.xlane.f32.xlu0 %v4580
  %v4582 = vpop.xlane.xlu0 %4581
  %v4583 = vsel %vm171, %v4565, 0.0
  %4584 = vadd.xlane.f32.xlu0 %v4583
  %v4585 = vpop.xlane.xlu0 %4584
  %v4586 = vsel %vm171, %v4567, 0.0
  %4587 = vadd.xlane.f32.xlu0 %v4586
  %v4588 = vpop.xlane.xlu0 %4587
  %v4589 = vsel %vm171, %v4569, 0.0
  %4590 = vadd.xlane.f32.xlu0 %v4589
  %v4591 = vpop.xlane.xlu0 %4590
  %v4592 = vsel %vm171, %v4571, 0.0
  %4593 = vadd.xlane.f32.xlu0 %v4592
  %v4594 = vpop.xlane.xlu0 %4593
  %v4595 = vsel %vm171, %v4573, 0.0
  %4596 = vadd.xlane.f32.xlu0 %v4595
  %v4597 = vpop.xlane.xlu0 %4596
  %v4598 = vrcp.pop %v4576
  %v4599 = vmul.f32 %v4559, %v4598
  %v4600 = vrcp.pop %v4579
  %v4601 = vmul.f32 %v4561, %v4600
  %v4602 = vrcp.pop %v4582
  %v4603 = vmul.f32 %v4563, %v4602
  %v4604 = vrcp.pop %v4585
  %v4605 = vmul.f32 %v4565, %v4604
  %v4606 = vrcp.pop %v4588
  %v4607 = vmul.f32 %v4567, %v4606
  %v4608 = vrcp.pop %v4591
  %v4609 = vmul.f32 %v4569, %v4608
  %v4610 = vrcp.pop %v4594
  %v4611 = vmul.f32 %v4571, %v4610
  %v4612 = vrcp.pop %v4597
  %v4613 = vmul.f32 %v4573, %v4612
  %4614 = vrot.lane.b32.xlu0 %v3682, 56
  %v4615 = vpop.permute.xlu0 %4614
  %4616 = vrot.lane.b32.xlu0 %v3687, 56
  %v4617 = vpop.permute.xlu0 %4616
  %4618 = vrot.lane.b32.xlu0 %v3692, 56
  %v4619 = vpop.permute.xlu0 %4618
  %4620 = vrot.lane.b32.xlu0 %v3697, 56
  %v4621 = vpop.permute.xlu0 %4620
  %v4627 = vsel %vm171, %v4599, 0
  %v4630 = vsel %vm171, %v4601, 0
  %v4633 = vsel %vm171, %v4603, 0
  %v4636 = vsel %vm171, %v4605, 0
  %4638 = vmatprep.subr.mxu0 0.0
  %4639 = vmatpush1.msra.mxu0 %v4615
  %4640 = vmatprep.subr.mxu0 0.0
  %4641 = vmatpush1.msra.mxu0 %v4617
  %4642 = vmatprep.subr.mxu0 0.0
  %4643 = vmatpush1.msra.mxu0 %v4619
  %4644 = vmatprep.subr.mxu0 0.0
  %4645 = vmatpush1.msra.mxu0 %v4621
  %4646 = vmatprep.subr.mxu0 0.0
  %4647 = vmatpush1.msra.mxu0 0.0
  %4648 = vmatprep.subr.mxu0 0.0
  %4649 = vmatpush1.msra.mxu0 0.0
  %4650 = vmatprep.subr.mxu0 0.0
  %4651 = vmatpush1.msra.mxu0 0.0
  %4652 = vmatprep.subr.mxu0 0.0
  %4653 = vmatpush1.msra.mxu0 0.0
  %4654 = vmatprep.subr.mxu0 0.0
  %4655 = vmatpush1.msra.mxu0 0.0
  %4656 = vmatprep.subr.mxu0 0.0
  %4657 = vmatpush1.msra.mxu0 0.0
  %4658 = vmatprep.subr.mxu0 0.0
  %4659 = vmatpush1.msra.mxu0 0.0
  %4660 = vmatprep.subr.mxu0 0.0
  %4661 = vmatpush1.msra.mxu0 0.0
  %4662 = vmatprep.subr.mxu0 0.0
  %4663 = vmatpush1.msra.mxu0 0.0
  %4664 = vmatprep.subr.mxu0 0.0
  %4665 = vmatpush1.msra.mxu0 0.0
  %4666 = vmatprep.subr.mxu0 0.0
  %4667 = vmatpush1.msra.mxu0 0.0
  %4668 = vmatprep.subr.mxu0 0.0
  %4669 = vmatpush1.msra.mxu0 0.0
  %4670 = vmatprep.subr.mxu0 0.0
  %4671 = vmatpush1.msra.mxu0 0.0
  %4672 = vmatprep.subr.mxu0 0.0
  %4673 = vmatpush1.msra.mxu0 0.0
  %4674 = vmatprep.subr.mxu0 0.0
  %4675 = vmatpush1.msra.mxu0 0.0
  %4676 = vmatprep.subr.mxu0 0.0
  %4677 = vmatpush1.msra.mxu0 0.0
  %4678 = vmatprep.subr.mxu0 0.0
  %4679 = vmatpush1.msra.mxu0 0.0
  %4680 = vmatprep.subr.mxu0 0.0
  %4681 = vmatpush1.msra.mxu0 0.0
  %4682 = vmatprep.subr.mxu0 0.0
  %4683 = vmatpush1.msra.mxu0 0.0
  %4684 = vmatprep.subr.mxu0 0.0
  %4685 = vmatpush1.msra.mxu0 0.0
  %4686 = vmatprep.subr.mxu0 0.0
  %4687 = vmatpush1.msra.mxu0 0.0
  %4688 = vmatprep.subr.mxu0 0.0
  %4689 = vmatpush1.msra.mxu0 0.0
  %4690 = vmatprep.subr.mxu0 0.0
  %4691 = vmatpush1.msra.mxu0 0.0
  %4692 = vmatprep.subr.mxu0 0.0
  %4693 = vmatpush1.msra.mxu0 0.0
  %4694 = vmatprep.subr.mxu0 0.0
  %4695 = vmatpush1.msra.mxu0 0.0
  %4696 = vmatprep.subr.mxu0 0.0
  %4697 = vmatpush1.msra.mxu0 0.0
  %4698 = vmatprep.subr.mxu0 0.0
  %4699 = vmatpush1.msra.mxu0 0.0
  %4700 = vmatprep.subr.mxu0 0.0
  %4701 = vmatpush1.msra.mxu0 0.0
  %4702 = vmatprep.mubr.f32.mxu0 0.0
  %4703 = vmatmul.mubr.f32.gmra.mrb[0].mxu0 %v4627
  %v4704 = vpop.f32.mrb[0].mxu0
  %v4705 = vadd.f32 0.0, %v4704
  %v4706 = vpop.f32.mrb[0].mxu0
  %4707 = vmatprep.mubr.f32.mxu0 0.0
  %4708 = vmatmul.mubr.f32.gmra.mrb[0].mxu0 %v4630
  %v4709 = vpop.f32.mrb[0].mxu0
  %v4710 = vadd.f32 0.0, %v4709
  %v4711 = vpop.f32.mrb[0].mxu0
  %4712 = vmatprep.mubr.f32.mxu0 0.0
  %4713 = vmatmul.mubr.f32.gmra.mrb[0].mxu0 %v4633
  %v4714 = vpop.f32.mrb[0].mxu0
  %v4715 = vadd.f32 0.0, %v4714
  %v4716 = vpop.f32.mrb[0].mxu0
  %4717 = vmatprep.mubr.f32.mxu0 0.0
  %4718 = vmatmul.mubr.f32.gmra.mrb[0].mxu0 %v4636
  %v4719 = vpop.f32.mrb[0].mxu0
  %v4720 = vadd.f32 0.0, %v4719
  %v4721 = vpop.f32.mrb[0].mxu0
  %4722 = vdwg.mxu0
  %4723 = vrot.lane.b32.xlu0 %v3702, 56
  %v4724 = vpop.permute.xlu0 %4723
  %4725 = vrot.lane.b32.xlu0 %v3707, 56
  %v4726 = vpop.permute.xlu0 %4725
  %4727 = vrot.lane.b32.xlu0 %v3712, 56
  %v4728 = vpop.permute.xlu0 %4727
  %4729 = vrot.lane.b32.xlu0 %v3717, 56
  %v4730 = vpop.permute.xlu0 %4729
  %v4736 = vsel %vm171, %v4607, 0
  %v4739 = vsel %vm171, %v4609, 0
  %v4742 = vsel %vm171, %v4611, 0
  %v4745 = vsel %vm171, %v4613, 0
  %4747 = vmatprep.subr.mxu0 0.0
  %4748 = vmatpush1.msra.mxu0 %v4724
  %4749 = vmatprep.subr.mxu0 0.0
  %4750 = vmatpush1.msra.mxu0 %v4726
  %4751 = vmatprep.subr.mxu0 0.0
  %4752 = vmatpush1.msra.mxu0 %v4728
  %4753 = vmatprep.subr.mxu0 0.0
  %4754 = vmatpush1.msra.mxu0 %v4730
  %4755 = vmatprep.subr.mxu0 0.0
  %4756 = vmatpush1.msra.mxu0 0.0
  %4757 = vmatprep.subr.mxu0 0.0
  %4758 = vmatpush1.msra.mxu0 0.0
  %4759 = vmatprep.subr.mxu0 0.0
  %4760 = vmatpush1.msra.mxu0 0.0
  %4761 = vmatprep.subr.mxu0 0.0
  %4762 = vmatpush1.msra.mxu0 0.0
  %4763 = vmatprep.subr.mxu0 0.0
  %4764 = vmatpush1.msra.mxu0 0.0
  %4765 = vmatprep.subr.mxu0 0.0
  %4766 = vmatpush1.msra.mxu0 0.0
  %4767 = vmatprep.subr.mxu0 0.0
  %4768 = vmatpush1.msra.mxu0 0.0
  %4769 = vmatprep.subr.mxu0 0.0
  %4770 = vmatpush1.msra.mxu0 0.0
  %4771 = vmatprep.subr.mxu0 0.0
  %4772 = vmatpush1.msra.mxu0 0.0
  %4773 = vmatprep.subr.mxu0 0.0
  %4774 = vmatpush1.msra.mxu0 0.0
  %4775 = vmatprep.subr.mxu0 0.0
  %4776 = vmatpush1.msra.mxu0 0.0
  %4777 = vmatprep.subr.mxu0 0.0
  %4778 = vmatpush1.msra.mxu0 0.0
  %4779 = vmatprep.subr.mxu0 0.0
  %4780 = vmatpush1.msra.mxu0 0.0
  %4781 = vmatprep.subr.mxu0 0.0
  %4782 = vmatpush1.msra.mxu0 0.0
  %4783 = vmatprep.subr.mxu0 0.0
  %4784 = vmatpush1.msra.mxu0 0.0
  %4785 = vmatprep.subr.mxu0 0.0
  %4786 = vmatpush1.msra.mxu0 0.0
  %4787 = vmatprep.subr.mxu0 0.0
  %4788 = vmatpush1.msra.mxu0 0.0
  %4789 = vmatprep.subr.mxu0 0.0
  %4790 = vmatpush1.msra.mxu0 0.0
  %4791 = vmatprep.subr.mxu0 0.0
  %4792 = vmatpush1.msra.mxu0 0.0
  %4793 = vmatprep.subr.mxu0 0.0
  %4794 = vmatpush1.msra.mxu0 0.0
  %4795 = vmatprep.subr.mxu0 0.0
  %4796 = vmatpush1.msra.mxu0 0.0
  %4797 = vmatprep.subr.mxu0 0.0
  %4798 = vmatpush1.msra.mxu0 0.0
  %4799 = vmatprep.subr.mxu0 0.0
  %4800 = vmatpush1.msra.mxu0 0.0
  %4801 = vmatprep.subr.mxu0 0.0
  %4802 = vmatpush1.msra.mxu0 0.0
  %4803 = vmatprep.subr.mxu0 0.0
  %4804 = vmatpush1.msra.mxu0 0.0
  %4805 = vmatprep.subr.mxu0 0.0
  %4806 = vmatpush1.msra.mxu0 0.0
  %4807 = vmatprep.subr.mxu0 0.0
  %4808 = vmatpush1.msra.mxu0 0.0
  %4809 = vmatprep.subr.mxu0 0.0
  %4810 = vmatpush1.msra.mxu0 0.0
  %4811 = vmatprep.mubr.f32.mxu0 0.0
  %4812 = vmatmul.mubr.f32.gmra.mrb[0].mxu0 %v4736
  %v4813 = vpop.f32.mrb[0].mxu0
  %v4814 = vadd.f32 0.0, %v4813
  %v4815 = vpop.f32.mrb[0].mxu0
  %4816 = vmatprep.mubr.f32.mxu0 0.0
  %4817 = vmatmul.mubr.f32.gmra.mrb[0].mxu0 %v4739
  %v4818 = vpop.f32.mrb[0].mxu0
  %v4819 = vadd.f32 0.0, %v4818
  %v4820 = vpop.f32.mrb[0].mxu0
  %4821 = vmatprep.mubr.f32.mxu0 0.0
  %4822 = vmatmul.mubr.f32.gmra.mrb[0].mxu0 %v4742
  %v4823 = vpop.f32.mrb[0].mxu0
  %v4824 = vadd.f32 0.0, %v4823
  %v4825 = vpop.f32.mrb[0].mxu0
  %4826 = vmatprep.mubr.f32.mxu0 0.0
  %4827 = vmatmul.mubr.f32.gmra.mrb[0].mxu0 %v4745
  %v4828 = vpop.f32.mrb[0].mxu0
  %v4829 = vadd.f32 0.0, %v4828
  %v4830 = vpop.f32.mrb[0].mxu0
  %4831 = vdwg.mxu0
  %4840 = vrot.lane.b32.xlu0 %v4705, 8
  %v4841 = vpop.permute.xlu0 %4840
  %4842 = vrot.lane.b32.xlu0 %v4710, 8
  %v4843 = vpop.permute.xlu0 %4842
  %4844 = vrot.lane.b32.xlu0 %v4715, 8
  %v4845 = vpop.permute.xlu0 %4844
  %4846 = vrot.lane.b32.xlu0 %v4720, 8
  %v4847 = vpop.permute.xlu0 %4846
  %4848 = vrot.lane.b32.xlu0 %v4814, 8
  %v4849 = vpop.permute.xlu0 %4848
  %4850 = vrot.lane.b32.xlu0 %v4819, 8
  %v4851 = vpop.permute.xlu0 %4850
  %4852 = vrot.lane.b32.xlu0 %v4824, 8
  %v4853 = vpop.permute.xlu0 %4852
  %4854 = vrot.lane.b32.xlu0 %v4829, 8
  %v4855 = vpop.permute.xlu0 %4854
  %4864 = vst.msk [vmem:[#allocation3] sm:$0xff] %vm1627, %v4841
  %4865 = vst.msk [vmem:[#allocation3 + $0x8] sm:$0xff] %vm1627, %v4843
  %4866 = vst.msk [vmem:[#allocation3 + $0x10] sm:$0xff] %vm1627, %v4845
  %4867 = vst.msk [vmem:[#allocation3 + $0x18] sm:$0xff] %vm1627, %v4847
  %4868 = vst.msk [vmem:[#allocation3 + $0x20] sm:$0xff] %vm1627, %v4849
  %4869 = vst.msk [vmem:[#allocation3 + $0x28] sm:$0xff] %vm1627, %v4851
  %4870 = vst.msk [vmem:[#allocation3 + $0x30] sm:$0xff] %vm1627, %v4853
  %4871 = vst.msk [vmem:[#allocation3 + $0x38] sm:$0xff] %vm1627, %v4855
  %4872 = vrot.lane.b32.xlu0 %v3682, 112
  %v4873 = vpop.permute.xlu0 %4872
  %4874 = vrot.lane.b32.xlu0 %v3687, 112
  %v4875 = vpop.permute.xlu0 %4874
  %4876 = vrot.lane.b32.xlu0 %v3692, 112
  %v4877 = vpop.permute.xlu0 %4876
  %4878 = vrot.lane.b32.xlu0 %v3697, 112
  %v4879 = vpop.permute.xlu0 %4878
  %4880 = vrot.lane.b32.xlu0 %v3682, 80
  %v4881 = vpop.permute.xlu0 %4880
  %4882 = vrot.lane.b32.xlu0 %v3687, 80
  %v4883 = vpop.permute.xlu0 %4882
  %4884 = vrot.lane.b32.xlu0 %v3692, 80
  %v4885 = vpop.permute.xlu0 %4884
  %4886 = vrot.lane.b32.xlu0 %v3697, 80
  %v4887 = vpop.permute.xlu0 %4886
  %v4888 = vsel %vm488, %v4873, 0
  %v4890 = vsel %vm488, %v4875, 0
  %v4892 = vsel %vm488, %v4877, 0
  %v4894 = vsel %vm488, %v4879, 0
  %v4896 = vsel %vm488, %v4881, 0
  %v4898 = vsel %vm488, %v4883, 0
  %v4900 = vsel %vm488, %v4885, 0
  %v4902 = vsel %vm488, %v4887, 0
  %4904 = vmatprep.subr.mxu0 0.0
  %4905 = vmatpush1.xpose.msra.mxu0 %v4896
  %4906 = vmatprep.subr.mxu0 0.0
  %4907 = vmatpush1.xpose.msra.mxu0 %v4898
  %4908 = vmatprep.subr.mxu0 0.0
  %4909 = vmatpush1.xpose.msra.mxu0 %v4900
  %4910 = vmatprep.subr.mxu0 0.0
  %4911 = vmatpush1.xpose.msra.mxu0 %v4902
  %4912 = vmatprep.subr.mxu0 0.0
  %4913 = vmatpush1.xpose.msra.mxu0 0.0
  %4914 = vmatprep.subr.mxu0 0.0
  %4915 = vmatpush1.xpose.msra.mxu0 0.0
  %4916 = vmatprep.subr.mxu0 0.0
  %4917 = vmatpush1.xpose.msra.mxu0 0.0
  %4918 = vmatprep.subr.mxu0 0.0
  %4919 = vmatpush1.xpose.msra.mxu0 0.0
  %4920 = vmatprep.subr.mxu0 0.0
  %4921 = vmatpush1.xpose.msra.mxu0 0.0
  %4922 = vmatprep.subr.mxu0 0.0
  %4923 = vmatpush1.xpose.msra.mxu0 0.0
  %4924 = vmatprep.subr.mxu0 0.0
  %4925 = vmatpush1.xpose.msra.mxu0 0.0
  %4926 = vmatprep.subr.mxu0 0.0
  %4927 = vmatpush1.xpose.msra.mxu0 0.0
  %4928 = vmatprep.subr.mxu0 0.0
  %4929 = vmatpush1.xpose.msra.mxu0 0.0
  %4930 = vmatprep.subr.mxu0 0.0
  %4931 = vmatpush1.xpose.msra.mxu0 0.0
  %4932 = vmatprep.subr.mxu0 0.0
  %4933 = vmatpush1.xpose.msra.mxu0 0.0
  %4934 = vmatprep.subr.mxu0 0.0
  %4935 = vmatpush1.xpose.msra.mxu0 0.0
  %4936 = vmatprep.subr.mxu0 0.0
  %4937 = vmatpush1.xpose.msra.mxu0 0.0
  %4938 = vmatprep.subr.mxu0 0.0
  %4939 = vmatpush1.xpose.msra.mxu0 0.0
  %4940 = vmatprep.subr.mxu0 0.0
  %4941 = vmatpush1.xpose.msra.mxu0 0.0
  %4942 = vmatprep.subr.mxu0 0.0
  %4943 = vmatpush1.xpose.msra.mxu0 0.0
  %4944 = vmatprep.subr.mxu0 0.0
  %4945 = vmatpush1.xpose.msra.mxu0 0.0
  %4946 = vmatprep.subr.mxu0 0.0
  %4947 = vmatpush1.xpose.msra.mxu0 0.0
  %4948 = vmatprep.subr.mxu0 0.0
  %4949 = vmatpush1.xpose.msra.mxu0 0.0
  %4950 = vmatprep.subr.mxu0 0.0
  %4951 = vmatpush1.xpose.msra.mxu0 0.0
  %4952 = vmatprep.subr.mxu0 0.0
  %4953 = vmatpush1.xpose.msra.mxu0 0.0
  %4954 = vmatprep.subr.mxu0 0.0
  %4955 = vmatpush1.xpose.msra.mxu0 0.0
  %4956 = vmatprep.subr.mxu0 0.0
  %4957 = vmatpush1.xpose.msra.mxu0 0.0
  %4958 = vmatprep.subr.mxu0 0.0
  %4959 = vmatpush1.xpose.msra.mxu0 0.0
  %4960 = vmatprep.subr.mxu0 0.0
  %4961 = vmatpush1.xpose.msra.mxu0 0.0
  %4962 = vmatprep.subr.mxu0 0.0
  %4963 = vmatpush1.xpose.msra.mxu0 0.0
  %4964 = vmatprep.subr.mxu0 0.0
  %4965 = vmatpush1.xpose.msra.mxu0 0.0
  %4966 = vmatprep.subr.mxu0 0.0
  %4967 = vmatpush1.xpose.msra.mxu0 0.0
  %4968 = vmatprep.mubr.f32.mxu0 0.0
  %4969 = vmatmul.mubr.f32.gmra.mrb[0].mxu0 %v4888
  %v4970 = vpop.f32.mrb[0].mxu0
  %v4971 = vadd.f32 0.0, %v4970
  %v4972 = vpop.f32.mrb[0].mxu0
  %4973 = vmatprep.mubr.f32.mxu0 0.0
  %4974 = vmatmul.mubr.f32.gmra.mrb[0].mxu0 %v4890
  %v4975 = vpop.f32.mrb[0].mxu0
  %v4976 = vadd.f32 0.0, %v4975
  %v4977 = vpop.f32.mrb[0].mxu0
  %4978 = vmatprep.mubr.f32.mxu0 0.0
  %4979 = vmatmul.mubr.f32.gmra.mrb[0].mxu0 %v4892
  %v4980 = vpop.f32.mrb[0].mxu0
  %v4981 = vadd.f32 0.0, %v4980
  %v4982 = vpop.f32.mrb[0].mxu0
  %4983 = vmatprep.mubr.f32.mxu0 0.0
  %4984 = vmatmul.mubr.f32.gmra.mrb[0].mxu0 %v4894
  %v4985 = vpop.f32.mrb[0].mxu0
  %v4986 = vadd.f32 0.0, %v4985
  %v4987 = vpop.f32.mrb[0].mxu0
  %4988 = vdwg.mxu0
  %4989 = vrot.lane.b32.xlu0 %v3702, 112
  %v4990 = vpop.permute.xlu0 %4989
  %4991 = vrot.lane.b32.xlu0 %v3707, 112
  %v4992 = vpop.permute.xlu0 %4991
  %4993 = vrot.lane.b32.xlu0 %v3712, 112
  %v4994 = vpop.permute.xlu0 %4993
  %4995 = vrot.lane.b32.xlu0 %v3717, 112
  %v4996 = vpop.permute.xlu0 %4995
  %4997 = vrot.lane.b32.xlu0 %v3702, 80
  %v4998 = vpop.permute.xlu0 %4997
  %4999 = vrot.lane.b32.xlu0 %v3707, 80
  %v5000 = vpop.permute.xlu0 %4999
  %5001 = vrot.lane.b32.xlu0 %v3712, 80
  %v5002 = vpop.permute.xlu0 %5001
  %5003 = vrot.lane.b32.xlu0 %v3717, 80
  %v5004 = vpop.permute.xlu0 %5003
  %v5005 = vsel %vm488, %v4990, 0
  %v5007 = vsel %vm488, %v4992, 0
  %v5009 = vsel %vm488, %v4994, 0
  %v5011 = vsel %vm488, %v4996, 0
  %v5013 = vsel %vm488, %v4998, 0
  %v5015 = vsel %vm488, %v5000, 0
  %v5017 = vsel %vm488, %v5002, 0
  %v5019 = vsel %vm488, %v5004, 0
  %5021 = vmatprep.subr.mxu0 0.0
  %5022 = vmatpush1.xpose.msra.mxu0 %v5013
  %5023 = vmatprep.subr.mxu0 0.0
  %5024 = vmatpush1.xpose.msra.mxu0 %v5015
  %5025 = vmatprep.subr.mxu0 0.0
  %5026 = vmatpush1.xpose.msra.mxu0 %v5017
  %5027 = vmatprep.subr.mxu0 0.0
  %5028 = vmatpush1.xpose.msra.mxu0 %v5019
  %5029 = vmatprep.subr.mxu0 0.0
  %5030 = vmatpush1.xpose.msra.mxu0 0.0
  %5031 = vmatprep.subr.mxu0 0.0
  %5032 = vmatpush1.xpose.msra.mxu0 0.0
  %5033 = vmatprep.subr.mxu0 0.0
  %5034 = vmatpush1.xpose.msra.mxu0 0.0
  %5035 = vmatprep.subr.mxu0 0.0
  %5036 = vmatpush1.xpose.msra.mxu0 0.0
  %5037 = vmatprep.subr.mxu0 0.0
  %5038 = vmatpush1.xpose.msra.mxu0 0.0
  %5039 = vmatprep.subr.mxu0 0.0
  %5040 = vmatpush1.xpose.msra.mxu0 0.0
  %5041 = vmatprep.subr.mxu0 0.0
  %5042 = vmatpush1.xpose.msra.mxu0 0.0
  %5043 = vmatprep.subr.mxu0 0.0
  %5044 = vmatpush1.xpose.msra.mxu0 0.0
  %5045 = vmatprep.subr.mxu0 0.0
  %5046 = vmatpush1.xpose.msra.mxu0 0.0
  %5047 = vmatprep.subr.mxu0 0.0
  %5048 = vmatpush1.xpose.msra.mxu0 0.0
  %5049 = vmatprep.subr.mxu0 0.0
  %5050 = vmatpush1.xpose.msra.mxu0 0.0
  %5051 = vmatprep.subr.mxu0 0.0
  %5052 = vmatpush1.xpose.msra.mxu0 0.0
  %5053 = vmatprep.subr.mxu0 0.0
  %5054 = vmatpush1.xpose.msra.mxu0 0.0
  %5055 = vmatprep.subr.mxu0 0.0
  %5056 = vmatpush1.xpose.msra.mxu0 0.0
  %5057 = vmatprep.subr.mxu0 0.0
  %5058 = vmatpush1.xpose.msra.mxu0 0.0
  %5059 = vmatprep.subr.mxu0 0.0
  %5060 = vmatpush1.xpose.msra.mxu0 0.0
  %5061 = vmatprep.subr.mxu0 0.0
  %5062 = vmatpush1.xpose.msra.mxu0 0.0
  %5063 = vmatprep.subr.mxu0 0.0
  %5064 = vmatpush1.xpose.msra.mxu0 0.0
  %5065 = vmatprep.subr.mxu0 0.0
  %5066 = vmatpush1.xpose.msra.mxu0 0.0
  %5067 = vmatprep.subr.mxu0 0.0
  %5068 = vmatpush1.xpose.msra.mxu0 0.0
  %5069 = vmatprep.subr.mxu0 0.0
  %5070 = vmatpush1.xpose.msra.mxu0 0.0
  %5071 = vmatprep.subr.mxu0 0.0
  %5072 = vmatpush1.xpose.msra.mxu0 0.0
  %5073 = vmatprep.subr.mxu0 0.0
  %5074 = vmatpush1.xpose.msra.mxu0 0.0
  %5075 = vmatprep.subr.mxu0 0.0
  %5076 = vmatpush1.xpose.msra.mxu0 0.0
  %5077 = vmatprep.subr.mxu0 0.0
  %5078 = vmatpush1.xpose.msra.mxu0 0.0
  %5079 = vmatprep.subr.mxu0 0.0
  %5080 = vmatpush1.xpose.msra.mxu0 0.0
  %5081 = vmatprep.subr.mxu0 0.0
  %5082 = vmatpush1.xpose.msra.mxu0 0.0
  %5083 = vmatprep.subr.mxu0 0.0
  %5084 = vmatpush1.xpose.msra.mxu0 0.0
  %5085 = vmatprep.mubr.f32.mxu0 0.0
  %5086 = vmatmul.mubr.f32.gmra.mrb[0].mxu0 %v5005
  %v5087 = vpop.f32.mrb[0].mxu0
  %v5088 = vadd.f32 0.0, %v5087
  %v5089 = vpop.f32.mrb[0].mxu0
  %5090 = vmatprep.mubr.f32.mxu0 0.0
  %5091 = vmatmul.mubr.f32.gmra.mrb[0].mxu0 %v5007
  %v5092 = vpop.f32.mrb[0].mxu0
  %v5093 = vadd.f32 0.0, %v5092
  %v5094 = vpop.f32.mrb[0].mxu0
  %5095 = vmatprep.mubr.f32.mxu0 0.0
  %5096 = vmatmul.mubr.f32.gmra.mrb[0].mxu0 %v5009
  %v5097 = vpop.f32.mrb[0].mxu0
  %v5098 = vadd.f32 0.0, %v5097
  %v5099 = vpop.f32.mrb[0].mxu0
  %5100 = vmatprep.mubr.f32.mxu0 0.0
  %5101 = vmatmul.mubr.f32.gmra.mrb[0].mxu0 %v5011
  %v5102 = vpop.f32.mrb[0].mxu0
  %v5103 = vadd.f32 0.0, %v5102
  %v5104 = vpop.f32.mrb[0].mxu0
  %5105 = vdwg.mxu0
  %v5106 = vmul.f32 %v4971, 0.35355338
  %v5107 = vmul.f32 %v4976, 0.35355338
  %v5108 = vmul.f32 %v4981, 0.35355338
  %v5109 = vmul.f32 %v4986, 0.35355338
  %v5110 = vmul.f32 %v5088, 0.35355338
  %v5111 = vmul.f32 %v5093, 0.35355338
  %v5112 = vmul.f32 %v5098, 0.35355338
  %v5113 = vmul.f32 %v5103, 0.35355338
  %v5114 = vadd.f32 %v5106, %v715
  %v5115 = vadd.f32 %v5107, %v715
  %v5116 = vadd.f32 %v5108, %v715
  %v5117 = vadd.f32 %v5109, %v715
  %v5118 = vadd.f32 %v5110, %v715
  %v5119 = vadd.f32 %v5111, %v715
  %v5120 = vadd.f32 %v5112, %v715
  %v5121 = vadd.f32 %v5113, %v715
  %v5122 = vsel %vm171, %v5114, -inf
  %5123 = vmax.xlane.f32.xlu0 %v5122
  %v5124 = vpop.xlane.xlu0 %5123
  %v5125 = vsel %vm171, %v5115, -inf
  %5126 = vmax.xlane.f32.xlu0 %v5125
  %v5127 = vpop.xlane.xlu0 %5126
  %v5128 = vsel %vm171, %v5116, -inf
  %5129 = vmax.xlane.f32.xlu0 %v5128
  %v5130 = vpop.xlane.xlu0 %5129
  %v5131 = vsel %vm171, %v5117, -inf
  %5132 = vmax.xlane.f32.xlu0 %v5131
  %v5133 = vpop.xlane.xlu0 %5132
  %v5134 = vsel %vm171, %v5118, -inf
  %5135 = vmax.xlane.f32.xlu0 %v5134
  %v5136 = vpop.xlane.xlu0 %5135
  %v5137 = vsel %vm171, %v5119, -inf
  %5138 = vmax.xlane.f32.xlu0 %v5137
  %v5139 = vpop.xlane.xlu0 %5138
  %v5140 = vsel %vm171, %v5120, -inf
  %5141 = vmax.xlane.f32.xlu0 %v5140
  %v5142 = vpop.xlane.xlu0 %5141
  %v5143 = vsel %vm171, %v5121, -inf
  %5144 = vmax.xlane.f32.xlu0 %v5143
  %v5145 = vpop.xlane.xlu0 %5144
  %v5146 = vsub.f32 %v5114, %v5124
  %v5147 = vsub.f32 %v5115, %v5127
  %v5148 = vsub.f32 %v5116, %v5130
  %v5149 = vsub.f32 %v5117, %v5133
  %v5150 = vsub.f32 %v5118, %v5136
  %v5151 = vsub.f32 %v5119, %v5139
  %v5152 = vsub.f32 %v5120, %v5142
  %v5153 = vsub.f32 %v5121, %v5145
  %v5154 = vmul.f32 %v5146, 1.442695
  %v5155 = vpow.pop %v5154
  %v5156 = vmul.f32 %v5147, 1.442695
  %v5157 = vpow.pop %v5156
  %v5158 = vmul.f32 %v5148, 1.442695
  %v5159 = vpow.pop %v5158
  %v5160 = vmul.f32 %v5149, 1.442695
  %v5161 = vpow.pop %v5160
  %v5162 = vmul.f32 %v5150, 1.442695
  %v5163 = vpow.pop %v5162
  %v5164 = vmul.f32 %v5151, 1.442695
  %v5165 = vpow.pop %v5164
  %v5166 = vmul.f32 %v5152, 1.442695
  %v5167 = vpow.pop %v5166
  %v5168 = vmul.f32 %v5153, 1.442695
  %v5169 = vpow.pop %v5168
  %v5170 = vsel %vm171, %v5155, 0.0
  %5171 = vadd.xlane.f32.xlu0 %v5170
  %v5172 = vpop.xlane.xlu0 %5171
  %v5173 = vsel %vm171, %v5157, 0.0
  %5174 = vadd.xlane.f32.xlu0 %v5173
  %v5175 = vpop.xlane.xlu0 %5174
  %v5176 = vsel %vm171, %v5159, 0.0
  %5177 = vadd.xlane.f32.xlu0 %v5176
  %v5178 = vpop.xlane.xlu0 %5177
  %v5179 = vsel %vm171, %v5161, 0.0
  %5180 = vadd.xlane.f32.xlu0 %v5179
  %v5181 = vpop.xlane.xlu0 %5180
  %v5182 = vsel %vm171, %v5163, 0.0
  %5183 = vadd.xlane.f32.xlu0 %v5182
  %v5184 = vpop.xlane.xlu0 %5183
  %v5185 = vsel %vm171, %v5165, 0.0
  %5186 = vadd.xlane.f32.xlu0 %v5185
  %v5187 = vpop.xlane.xlu0 %5186
  %v5188 = vsel %vm171, %v5167, 0.0
  %5189 = vadd.xlane.f32.xlu0 %v5188
  %v5190 = vpop.xlane.xlu0 %5189
  %v5191 = vsel %vm171, %v5169, 0.0
  %5192 = vadd.xlane.f32.xlu0 %v5191
  %v5193 = vpop.xlane.xlu0 %5192
  %v5194 = vrcp.pop %v5172
  %v5195 = vmul.f32 %v5155, %v5194
  %v5196 = vrcp.pop %v5175
  %v5197 = vmul.f32 %v5157, %v5196
  %v5198 = vrcp.pop %v5178
  %v5199 = vmul.f32 %v5159, %v5198
  %v5200 = vrcp.pop %v5181
  %v5201 = vmul.f32 %v5161, %v5200
  %v5202 = vrcp.pop %v5184
  %v5203 = vmul.f32 %v5163, %v5202
  %v5204 = vrcp.pop %v5187
  %v5205 = vmul.f32 %v5165, %v5204
  %v5206 = vrcp.pop %v5190
  %v5207 = vmul.f32 %v5167, %v5206
  %v5208 = vrcp.pop %v5193
  %v5209 = vmul.f32 %v5169, %v5208
  %5210 = vrot.lane.b32.xlu0 %v3682, 48
  %v5211 = vpop.permute.xlu0 %5210
  %5212 = vrot.lane.b32.xlu0 %v3687, 48
  %v5213 = vpop.permute.xlu0 %5212
  %5214 = vrot.lane.b32.xlu0 %v3692, 48
  %v5215 = vpop.permute.xlu0 %5214
  %5216 = vrot.lane.b32.xlu0 %v3697, 48
  %v5217 = vpop.permute.xlu0 %5216
  %v5223 = vsel %vm171, %v5195, 0
  %v5226 = vsel %vm171, %v5197, 0
  %v5229 = vsel %vm171, %v5199, 0
  %v5232 = vsel %vm171, %v5201, 0
  %5234 = vmatprep.subr.mxu0 0.0
  %5235 = vmatpush1.msra.mxu0 %v5211
  %5236 = vmatprep.subr.mxu0 0.0
  %5237 = vmatpush1.msra.mxu0 %v5213
  %5238 = vmatprep.subr.mxu0 0.0
  %5239 = vmatpush1.msra.mxu0 %v5215
  %5240 = vmatprep.subr.mxu0 0.0
  %5241 = vmatpush1.msra.mxu0 %v5217
  %5242 = vmatprep.subr.mxu0 0.0
  %5243 = vmatpush1.msra.mxu0 0.0
  %5244 = vmatprep.subr.mxu0 0.0
  %5245 = vmatpush1.msra.mxu0 0.0
  %5246 = vmatprep.subr.mxu0 0.0
  %5247 = vmatpush1.msra.mxu0 0.0
  %5248 = vmatprep.subr.mxu0 0.0
  %5249 = vmatpush1.msra.mxu0 0.0
  %5250 = vmatprep.subr.mxu0 0.0
  %5251 = vmatpush1.msra.mxu0 0.0
  %5252 = vmatprep.subr.mxu0 0.0
  %5253 = vmatpush1.msra.mxu0 0.0
  %5254 = vmatprep.subr.mxu0 0.0
  %5255 = vmatpush1.msra.mxu0 0.0
  %5256 = vmatprep.subr.mxu0 0.0
  %5257 = vmatpush1.msra.mxu0 0.0
  %5258 = vmatprep.subr.mxu0 0.0
  %5259 = vmatpush1.msra.mxu0 0.0
  %5260 = vmatprep.subr.mxu0 0.0
  %5261 = vmatpush1.msra.mxu0 0.0
  %5262 = vmatprep.subr.mxu0 0.0
  %5263 = vmatpush1.msra.mxu0 0.0
  %5264 = vmatprep.subr.mxu0 0.0
  %5265 = vmatpush1.msra.mxu0 0.0
  %5266 = vmatprep.subr.mxu0 0.0
  %5267 = vmatpush1.msra.mxu0 0.0
  %5268 = vmatprep.subr.mxu0 0.0
  %5269 = vmatpush1.msra.mxu0 0.0
  %5270 = vmatprep.subr.mxu0 0.0
  %5271 = vmatpush1.msra.mxu0 0.0
  %5272 = vmatprep.subr.mxu0 0.0
  %5273 = vmatpush1.msra.mxu0 0.0
  %5274 = vmatprep.subr.mxu0 0.0
  %5275 = vmatpush1.msra.mxu0 0.0
  %5276 = vmatprep.subr.mxu0 0.0
  %5277 = vmatpush1.msra.mxu0 0.0
  %5278 = vmatprep.subr.mxu0 0.0
  %5279 = vmatpush1.msra.mxu0 0.0
  %5280 = vmatprep.subr.mxu0 0.0
  %5281 = vmatpush1.msra.mxu0 0.0
  %5282 = vmatprep.subr.mxu0 0.0
  %5283 = vmatpush1.msra.mxu0 0.0
  %5284 = vmatprep.subr.mxu0 0.0
  %5285 = vmatpush1.msra.mxu0 0.0
  %5286 = vmatprep.subr.mxu0 0.0
  %5287 = vmatpush1.msra.mxu0 0.0
  %5288 = vmatprep.subr.mxu0 0.0
  %5289 = vmatpush1.msra.mxu0 0.0
  %5290 = vmatprep.subr.mxu0 0.0
  %5291 = vmatpush1.msra.mxu0 0.0
  %5292 = vmatprep.subr.mxu0 0.0
  %5293 = vmatpush1.msra.mxu0 0.0
  %5294 = vmatprep.subr.mxu0 0.0
  %5295 = vmatpush1.msra.mxu0 0.0
  %5296 = vmatprep.subr.mxu0 0.0
  %5297 = vmatpush1.msra.mxu0 0.0
  %5298 = vmatprep.mubr.f32.mxu0 0.0
  %5299 = vmatmul.mubr.f32.gmra.mrb[0].mxu0 %v5223
  %v5300 = vpop.f32.mrb[0].mxu0
  %v5301 = vadd.f32 0.0, %v5300
  %v5302 = vpop.f32.mrb[0].mxu0
  %5303 = vmatprep.mubr.f32.mxu0 0.0
  %5304 = vmatmul.mubr.f32.gmra.mrb[0].mxu0 %v5226
  %v5305 = vpop.f32.mrb[0].mxu0
  %v5306 = vadd.f32 0.0, %v5305
  %v5307 = vpop.f32.mrb[0].mxu0
  %5308 = vmatprep.mubr.f32.mxu0 0.0
  %5309 = vmatmul.mubr.f32.gmra.mrb[0].mxu0 %v5229
  %v5310 = vpop.f32.mrb[0].mxu0
  %v5311 = vadd.f32 0.0, %v5310
  %v5312 = vpop.f32.mrb[0].mxu0
  %5313 = vmatprep.mubr.f32.mxu0 0.0
  %5314 = vmatmul.mubr.f32.gmra.mrb[0].mxu0 %v5232
  %v5315 = vpop.f32.mrb[0].mxu0
  %v5316 = vadd.f32 0.0, %v5315
  %v5317 = vpop.f32.mrb[0].mxu0
  %5318 = vdwg.mxu0
  %5319 = vrot.lane.b32.xlu0 %v3702, 48
  %v5320 = vpop.permute.xlu0 %5319
  %5321 = vrot.lane.b32.xlu0 %v3707, 48
  %v5322 = vpop.permute.xlu0 %5321
  %5323 = vrot.lane.b32.xlu0 %v3712, 48
  %v5324 = vpop.permute.xlu0 %5323
  %5325 = vrot.lane.b32.xlu0 %v3717, 48
  %v5326 = vpop.permute.xlu0 %5325
  %v5332 = vsel %vm171, %v5203, 0
  %v5335 = vsel %vm171, %v5205, 0
  %v5338 = vsel %vm171, %v5207, 0
  %v5341 = vsel %vm171, %v5209, 0
  %5343 = vmatprep.subr.mxu0 0.0
  %5344 = vmatpush1.msra.mxu0 %v5320
  %5345 = vmatprep.subr.mxu0 0.0
  %5346 = vmatpush1.msra.mxu0 %v5322
  %5347 = vmatprep.subr.mxu0 0.0
  %5348 = vmatpush1.msra.mxu0 %v5324
  %5349 = vmatprep.subr.mxu0 0.0
  %5350 = vmatpush1.msra.mxu0 %v5326
  %5351 = vmatprep.subr.mxu0 0.0
  %5352 = vmatpush1.msra.mxu0 0.0
  %5353 = vmatprep.subr.mxu0 0.0
  %5354 = vmatpush1.msra.mxu0 0.0
  %5355 = vmatprep.subr.mxu0 0.0
  %5356 = vmatpush1.msra.mxu0 0.0
  %5357 = vmatprep.subr.mxu0 0.0
  %5358 = vmatpush1.msra.mxu0 0.0
  %5359 = vmatprep.subr.mxu0 0.0
  %5360 = vmatpush1.msra.mxu0 0.0
  %5361 = vmatprep.subr.mxu0 0.0
  %5362 = vmatpush1.msra.mxu0 0.0
  %5363 = vmatprep.subr.mxu0 0.0
  %5364 = vmatpush1.msra.mxu0 0.0
  %5365 = vmatprep.subr.mxu0 0.0
  %5366 = vmatpush1.msra.mxu0 0.0
  %5367 = vmatprep.subr.mxu0 0.0
  %5368 = vmatpush1.msra.mxu0 0.0
  %5369 = vmatprep.subr.mxu0 0.0
  %5370 = vmatpush1.msra.mxu0 0.0
  %5371 = vmatprep.subr.mxu0 0.0
  %5372 = vmatpush1.msra.mxu0 0.0
  %5373 = vmatprep.subr.mxu0 0.0
  %5374 = vmatpush1.msra.mxu0 0.0
  %5375 = vmatprep.subr.mxu0 0.0
  %5376 = vmatpush1.msra.mxu0 0.0
  %5377 = vmatprep.subr.mxu0 0.0
  %5378 = vmatpush1.msra.mxu0 0.0
  %5379 = vmatprep.subr.mxu0 0.0
  %5380 = vmatpush1.msra.mxu0 0.0
  %5381 = vmatprep.subr.mxu0 0.0
  %5382 = vmatpush1.msra.mxu0 0.0
  %5383 = vmatprep.subr.mxu0 0.0
  %5384 = vmatpush1.msra.mxu0 0.0
  %5385 = vmatprep.subr.mxu0 0.0
  %5386 = vmatpush1.msra.mxu0 0.0
  %5387 = vmatprep.subr.mxu0 0.0
  %5388 = vmatpush1.msra.mxu0 0.0
  %5389 = vmatprep.subr.mxu0 0.0
  %5390 = vmatpush1.msra.mxu0 0.0
  %5391 = vmatprep.subr.mxu0 0.0
  %5392 = vmatpush1.msra.mxu0 0.0
  %5393 = vmatprep.subr.mxu0 0.0
  %5394 = vmatpush1.msra.mxu0 0.0
  %5395 = vmatprep.subr.mxu0 0.0
  %5396 = vmatpush1.msra.mxu0 0.0
  %5397 = vmatprep.subr.mxu0 0.0
  %5398 = vmatpush1.msra.mxu0 0.0
  %5399 = vmatprep.subr.mxu0 0.0
  %5400 = vmatpush1.msra.mxu0 0.0
  %5401 = vmatprep.subr.mxu0 0.0
  %5402 = vmatpush1.msra.mxu0 0.0
  %5403 = vmatprep.subr.mxu0 0.0
  %5404 = vmatpush1.msra.mxu0 0.0
  %5405 = vmatprep.subr.mxu0 0.0
  %5406 = vmatpush1.msra.mxu0 0.0
  %5407 = vmatprep.mubr.f32.mxu0 0.0
  %5408 = vmatmul.mubr.f32.gmra.mrb[0].mxu0 %v5332
  %v5409 = vpop.f32.mrb[0].mxu0
  %v5410 = vadd.f32 0.0, %v5409
  %v5411 = vpop.f32.mrb[0].mxu0
  %5412 = vmatprep.mubr.f32.mxu0 0.0
  %5413 = vmatmul.mubr.f32.gmra.mrb[0].mxu0 %v5335
  %v5414 = vpop.f32.mrb[0].mxu0
  %v5415 = vadd.f32 0.0, %v5414
  %v5416 = vpop.f32.mrb[0].mxu0
  %5417 = vmatprep.mubr.f32.mxu0 0.0
  %5418 = vmatmul.mubr.f32.gmra.mrb[0].mxu0 %v5338
  %v5419 = vpop.f32.mrb[0].mxu0
  %v5420 = vadd.f32 0.0, %v5419
  %v5421 = vpop.f32.mrb[0].mxu0
  %5422 = vmatprep.mubr.f32.mxu0 0.0
  %5423 = vmatmul.mubr.f32.gmra.mrb[0].mxu0 %v5341
  %v5424 = vpop.f32.mrb[0].mxu0
  %v5425 = vadd.f32 0.0, %v5424
  %v5426 = vpop.f32.mrb[0].mxu0
  %5427 = vdwg.mxu0
  %5436 = vrot.lane.b32.xlu0 %v5301, 16
  %v5437 = vpop.permute.xlu0 %5436
  %5438 = vrot.lane.b32.xlu0 %v5306, 16
  %v5439 = vpop.permute.xlu0 %5438
  %5440 = vrot.lane.b32.xlu0 %v5311, 16
  %v5441 = vpop.permute.xlu0 %5440
  %5442 = vrot.lane.b32.xlu0 %v5316, 16
  %v5443 = vpop.permute.xlu0 %5442
  %5444 = vrot.lane.b32.xlu0 %v5410, 16
  %v5445 = vpop.permute.xlu0 %5444
  %5446 = vrot.lane.b32.xlu0 %v5415, 16
  %v5447 = vpop.permute.xlu0 %5446
  %5448 = vrot.lane.b32.xlu0 %v5420, 16
  %v5449 = vpop.permute.xlu0 %5448
  %5450 = vrot.lane.b32.xlu0 %v5425, 16
  %v5451 = vpop.permute.xlu0 %5450
  %5460 = vst.msk [vmem:[#allocation3] sm:$0xff] %vm2224, %v5437
  %5461 = vst.msk [vmem:[#allocation3 + $0x8] sm:$0xff] %vm2224, %v5439
  %5462 = vst.msk [vmem:[#allocation3 + $0x10] sm:$0xff] %vm2224, %v5441
  %5463 = vst.msk [vmem:[#allocation3 + $0x18] sm:$0xff] %vm2224, %v5443
  %5464 = vst.msk [vmem:[#allocation3 + $0x20] sm:$0xff] %vm2224, %v5445
  %5465 = vst.msk [vmem:[#allocation3 + $0x28] sm:$0xff] %vm2224, %v5447
  %5466 = vst.msk [vmem:[#allocation3 + $0x30] sm:$0xff] %vm2224, %v5449
  %5467 = vst.msk [vmem:[#allocation3 + $0x38] sm:$0xff] %vm2224, %v5451
  %5468 = vrot.lane.b32.xlu0 %v3682, 104
  %v5469 = vpop.permute.xlu0 %5468
  %5470 = vrot.lane.b32.xlu0 %v3687, 104
  %v5471 = vpop.permute.xlu0 %5470
  %5472 = vrot.lane.b32.xlu0 %v3692, 104
  %v5473 = vpop.permute.xlu0 %5472
  %5474 = vrot.lane.b32.xlu0 %v3697, 104
  %v5475 = vpop.permute.xlu0 %5474
  %5476 = vrot.lane.b32.xlu0 %v3682, 72
  %v5477 = vpop.permute.xlu0 %5476
  %5478 = vrot.lane.b32.xlu0 %v3687, 72
  %v5479 = vpop.permute.xlu0 %5478
  %5480 = vrot.lane.b32.xlu0 %v3692, 72
  %v5481 = vpop.permute.xlu0 %5480
  %5482 = vrot.lane.b32.xlu0 %v3697, 72
  %v5483 = vpop.permute.xlu0 %5482
  %v5484 = vsel %vm488, %v5469, 0
  %v5486 = vsel %vm488, %v5471, 0
  %v5488 = vsel %vm488, %v5473, 0
  %v5490 = vsel %vm488, %v5475, 0
  %v5492 = vsel %vm488, %v5477, 0
  %v5494 = vsel %vm488, %v5479, 0
  %v5496 = vsel %vm488, %v5481, 0
  %v5498 = vsel %vm488, %v5483, 0
  %5500 = vmatprep.subr.mxu0 0.0
  %5501 = vmatpush1.xpose.msra.mxu0 %v5492
  %5502 = vmatprep.subr.mxu0 0.0
  %5503 = vmatpush1.xpose.msra.mxu0 %v5494
  %5504 = vmatprep.subr.mxu0 0.0
  %5505 = vmatpush1.xpose.msra.mxu0 %v5496
  %5506 = vmatprep.subr.mxu0 0.0
  %5507 = vmatpush1.xpose.msra.mxu0 %v5498
  %5508 = vmatprep.subr.mxu0 0.0
  %5509 = vmatpush1.xpose.msra.mxu0 0.0
  %5510 = vmatprep.subr.mxu0 0.0
  %5511 = vmatpush1.xpose.msra.mxu0 0.0
  %5512 = vmatprep.subr.mxu0 0.0
  %5513 = vmatpush1.xpose.msra.mxu0 0.0
  %5514 = vmatprep.subr.mxu0 0.0
  %5515 = vmatpush1.xpose.msra.mxu0 0.0
  %5516 = vmatprep.subr.mxu0 0.0
  %5517 = vmatpush1.xpose.msra.mxu0 0.0
  %5518 = vmatprep.subr.mxu0 0.0
  %5519 = vmatpush1.xpose.msra.mxu0 0.0
  %5520 = vmatprep.subr.mxu0 0.0
  %5521 = vmatpush1.xpose.msra.mxu0 0.0
  %5522 = vmatprep.subr.mxu0 0.0
  %5523 = vmatpush1.xpose.msra.mxu0 0.0
  %5524 = vmatprep.subr.mxu0 0.0
  %5525 = vmatpush1.xpose.msra.mxu0 0.0
  %5526 = vmatprep.subr.mxu0 0.0
  %5527 = vmatpush1.xpose.msra.mxu0 0.0
  %5528 = vmatprep.subr.mxu0 0.0
  %5529 = vmatpush1.xpose.msra.mxu0 0.0
  %5530 = vmatprep.subr.mxu0 0.0
  %5531 = vmatpush1.xpose.msra.mxu0 0.0
  %5532 = vmatprep.subr.mxu0 0.0
  %5533 = vmatpush1.xpose.msra.mxu0 0.0
  %5534 = vmatprep.subr.mxu0 0.0
  %5535 = vmatpush1.xpose.msra.mxu0 0.0
  %5536 = vmatprep.subr.mxu0 0.0
  %5537 = vmatpush1.xpose.msra.mxu0 0.0
  %5538 = vmatprep.subr.mxu0 0.0
  %5539 = vmatpush1.xpose.msra.mxu0 0.0
  %5540 = vmatprep.subr.mxu0 0.0
  %5541 = vmatpush1.xpose.msra.mxu0 0.0
  %5542 = vmatprep.subr.mxu0 0.0
  %5543 = vmatpush1.xpose.msra.mxu0 0.0
  %5544 = vmatprep.subr.mxu0 0.0
  %5545 = vmatpush1.xpose.msra.mxu0 0.0
  %5546 = vmatprep.subr.mxu0 0.0
  %5547 = vmatpush1.xpose.msra.mxu0 0.0
  %5548 = vmatprep.subr.mxu0 0.0
  %5549 = vmatpush1.xpose.msra.mxu0 0.0
  %5550 = vmatprep.subr.mxu0 0.0
  %5551 = vmatpush1.xpose.msra.mxu0 0.0
  %5552 = vmatprep.subr.mxu0 0.0
  %5553 = vmatpush1.xpose.msra.mxu0 0.0
  %5554 = vmatprep.subr.mxu0 0.0
  %5555 = vmatpush1.xpose.msra.mxu0 0.0
  %5556 = vmatprep.subr.mxu0 0.0
  %5557 = vmatpush1.xpose.msra.mxu0 0.0
  %5558 = vmatprep.subr.mxu0 0.0
  %5559 = vmatpush1.xpose.msra.mxu0 0.0
  %5560 = vmatprep.subr.mxu0 0.0
  %5561 = vmatpush1.xpose.msra.mxu0 0.0
  %5562 = vmatprep.subr.mxu0 0.0
  %5563 = vmatpush1.xpose.msra.mxu0 0.0
  %5564 = vmatprep.mubr.f32.mxu0 0.0
  %5565 = vmatmul.mubr.f32.gmra.mrb[0].mxu0 %v5484
  %v5566 = vpop.f32.mrb[0].mxu0
  %v5567 = vadd.f32 0.0, %v5566
  %v5568 = vpop.f32.mrb[0].mxu0
  %5569 = vmatprep.mubr.f32.mxu0 0.0
  %5570 = vmatmul.mubr.f32.gmra.mrb[0].mxu0 %v5486
  %v5571 = vpop.f32.mrb[0].mxu0
  %v5572 = vadd.f32 0.0, %v5571
  %v5573 = vpop.f32.mrb[0].mxu0
  %5574 = vmatprep.mubr.f32.mxu0 0.0
  %5575 = vmatmul.mubr.f32.gmra.mrb[0].mxu0 %v5488
  %v5576 = vpop.f32.mrb[0].mxu0
  %v5577 = vadd.f32 0.0, %v5576
  %v5578 = vpop.f32.mrb[0].mxu0
  %5579 = vmatprep.mubr.f32.mxu0 0.0
  %5580 = vmatmul.mubr.f32.gmra.mrb[0].mxu0 %v5490
  %v5581 = vpop.f32.mrb[0].mxu0
  %v5582 = vadd.f32 0.0, %v5581
  %v5583 = vpop.f32.mrb[0].mxu0
  %5584 = vdwg.mxu0
  %5585 = vrot.lane.b32.xlu0 %v3702, 104
  %v5586 = vpop.permute.xlu0 %5585
  %5587 = vrot.lane.b32.xlu0 %v3707, 104
  %v5588 = vpop.permute.xlu0 %5587
  %5589 = vrot.lane.b32.xlu0 %v3712, 104
  %v5590 = vpop.permute.xlu0 %5589
  %5591 = vrot.lane.b32.xlu0 %v3717, 104
  %v5592 = vpop.permute.xlu0 %5591
  %5593 = vrot.lane.b32.xlu0 %v3702, 72
  %v5594 = vpop.permute.xlu0 %5593
  %5595 = vrot.lane.b32.xlu0 %v3707, 72
  %v5596 = vpop.permute.xlu0 %5595
  %5597 = vrot.lane.b32.xlu0 %v3712, 72
  %v5598 = vpop.permute.xlu0 %5597
  %5599 = vrot.lane.b32.xlu0 %v3717, 72
  %v5600 = vpop.permute.xlu0 %5599
  %v5601 = vsel %vm488, %v5586, 0
  %v5603 = vsel %vm488, %v5588, 0
  %v5605 = vsel %vm488, %v5590, 0
  %v5607 = vsel %vm488, %v5592, 0
  %v5609 = vsel %vm488, %v5594, 0
  %v5611 = vsel %vm488, %v5596, 0
  %v5613 = vsel %vm488, %v5598, 0
  %v5615 = vsel %vm488, %v5600, 0
  %5617 = vmatprep.subr.mxu0 0.0
  %5618 = vmatpush1.xpose.msra.mxu0 %v5609
  %5619 = vmatprep.subr.mxu0 0.0
  %5620 = vmatpush1.xpose.msra.mxu0 %v5611
  %5621 = vmatprep.subr.mxu0 0.0
  %5622 = vmatpush1.xpose.msra.mxu0 %v5613
  %5623 = vmatprep.subr.mxu0 0.0
  %5624 = vmatpush1.xpose.msra.mxu0 %v5615
  %5625 = vmatprep.subr.mxu0 0.0
  %5626 = vmatpush1.xpose.msra.mxu0 0.0
  %5627 = vmatprep.subr.mxu0 0.0
  %5628 = vmatpush1.xpose.msra.mxu0 0.0
  %5629 = vmatprep.subr.mxu0 0.0
  %5630 = vmatpush1.xpose.msra.mxu0 0.0
  %5631 = vmatprep.subr.mxu0 0.0
  %5632 = vmatpush1.xpose.msra.mxu0 0.0
  %5633 = vmatprep.subr.mxu0 0.0
  %5634 = vmatpush1.xpose.msra.mxu0 0.0
  %5635 = vmatprep.subr.mxu0 0.0
  %5636 = vmatpush1.xpose.msra.mxu0 0.0
  %5637 = vmatprep.subr.mxu0 0.0
  %5638 = vmatpush1.xpose.msra.mxu0 0.0
  %5639 = vmatprep.subr.mxu0 0.0
  %5640 = vmatpush1.xpose.msra.mxu0 0.0
  %5641 = vmatprep.subr.mxu0 0.0
  %5642 = vmatpush1.xpose.msra.mxu0 0.0
  %5643 = vmatprep.subr.mxu0 0.0
  %5644 = vmatpush1.xpose.msra.mxu0 0.0
  %5645 = vmatprep.subr.mxu0 0.0
  %5646 = vmatpush1.xpose.msra.mxu0 0.0
  %5647 = vmatprep.subr.mxu0 0.0
  %5648 = vmatpush1.xpose.msra.mxu0 0.0
  %5649 = vmatprep.subr.mxu0 0.0
  %5650 = vmatpush1.xpose.msra.mxu0 0.0
  %5651 = vmatprep.subr.mxu0 0.0
  %5652 = vmatpush1.xpose.msra.mxu0 0.0
  %5653 = vmatprep.subr.mxu0 0.0
  %5654 = vmatpush1.xpose.msra.mxu0 0.0
  %5655 = vmatprep.subr.mxu0 0.0
  %5656 = vmatpush1.xpose.msra.mxu0 0.0
  %5657 = vmatprep.subr.mxu0 0.0
  %5658 = vmatpush1.xpose.msra.mxu0 0.0
  %5659 = vmatprep.subr.mxu0 0.0
  %5660 = vmatpush1.xpose.msra.mxu0 0.0
  %5661 = vmatprep.subr.mxu0 0.0
  %5662 = vmatpush1.xpose.msra.mxu0 0.0
  %5663 = vmatprep.subr.mxu0 0.0
  %5664 = vmatpush1.xpose.msra.mxu0 0.0
  %5665 = vmatprep.subr.mxu0 0.0
  %5666 = vmatpush1.xpose.msra.mxu0 0.0
  %5667 = vmatprep.subr.mxu0 0.0
  %5668 = vmatpush1.xpose.msra.mxu0 0.0
  %5669 = vmatprep.subr.mxu0 0.0
  %5670 = vmatpush1.xpose.msra.mxu0 0.0
  %5671 = vmatprep.subr.mxu0 0.0
  %5672 = vmatpush1.xpose.msra.mxu0 0.0
  %5673 = vmatprep.subr.mxu0 0.0
  %5674 = vmatpush1.xpose.msra.mxu0 0.0
  %5675 = vmatprep.subr.mxu0 0.0
  %5676 = vmatpush1.xpose.msra.mxu0 0.0
  %5677 = vmatprep.subr.mxu0 0.0
  %5678 = vmatpush1.xpose.msra.mxu0 0.0
  %5679 = vmatprep.subr.mxu0 0.0
  %5680 = vmatpush1.xpose.msra.mxu0 0.0
  %5681 = vmatprep.mubr.f32.mxu0 0.0
  %5682 = vmatmul.mubr.f32.gmra.mrb[0].mxu0 %v5601
  %v5683 = vpop.f32.mrb[0].mxu0
  %v5684 = vadd.f32 0.0, %v5683
  %v5685 = vpop.f32.mrb[0].mxu0
  %5686 = vmatprep.mubr.f32.mxu0 0.0
  %5687 = vmatmul.mubr.f32.gmra.mrb[0].mxu0 %v5603
  %v5688 = vpop.f32.mrb[0].mxu0
  %v5689 = vadd.f32 0.0, %v5688
  %v5690 = vpop.f32.mrb[0].mxu0
  %5691 = vmatprep.mubr.f32.mxu0 0.0
  %5692 = vmatmul.mubr.f32.gmra.mrb[0].mxu0 %v5605
  %v5693 = vpop.f32.mrb[0].mxu0
  %v5694 = vadd.f32 0.0, %v5693
  %v5695 = vpop.f32.mrb[0].mxu0
  %5696 = vmatprep.mubr.f32.mxu0 0.0
  %5697 = vmatmul.mubr.f32.gmra.mrb[0].mxu0 %v5607
  %v5698 = vpop.f32.mrb[0].mxu0
  %v5699 = vadd.f32 0.0, %v5698
  %v5700 = vpop.f32.mrb[0].mxu0
  %5701 = vdwg.mxu0
  %v5702 = vmul.f32 %v5567, 0.35355338
  %v5703 = vmul.f32 %v5572, 0.35355338
  %v5704 = vmul.f32 %v5577, 0.35355338
  %v5705 = vmul.f32 %v5582, 0.35355338
  %v5706 = vmul.f32 %v5684, 0.35355338
  %v5707 = vmul.f32 %v5689, 0.35355338
  %v5708 = vmul.f32 %v5694, 0.35355338
  %v5709 = vmul.f32 %v5699, 0.35355338
  %v5710 = vadd.f32 %v5702, %v715
  %v5711 = vadd.f32 %v5703, %v715
  %v5712 = vadd.f32 %v5704, %v715
  %v5713 = vadd.f32 %v5705, %v715
  %v5714 = vadd.f32 %v5706, %v715
  %v5715 = vadd.f32 %v5707, %v715
  %v5716 = vadd.f32 %v5708, %v715
  %v5717 = vadd.f32 %v5709, %v715
  %v5718 = vsel %vm171, %v5710, -inf
  %5719 = vmax.xlane.f32.xlu0 %v5718
  %v5720 = vpop.xlane.xlu0 %5719
  %v5721 = vsel %vm171, %v5711, -inf
  %5722 = vmax.xlane.f32.xlu0 %v5721
  %v5723 = vpop.xlane.xlu0 %5722
  %v5724 = vsel %vm171, %v5712, -inf
  %5725 = vmax.xlane.f32.xlu0 %v5724
  %v5726 = vpop.xlane.xlu0 %5725
  %v5727 = vsel %vm171, %v5713, -inf
  %5728 = vmax.xlane.f32.xlu0 %v5727
  %v5729 = vpop.xlane.xlu0 %5728
  %v5730 = vsel %vm171, %v5714, -inf
  %5731 = vmax.xlane.f32.xlu0 %v5730
  %v5732 = vpop.xlane.xlu0 %5731
  %v5733 = vsel %vm171, %v5715, -inf
  %5734 = vmax.xlane.f32.xlu0 %v5733
  %v5735 = vpop.xlane.xlu0 %5734
  %v5736 = vsel %vm171, %v5716, -inf
  %5737 = vmax.xlane.f32.xlu0 %v5736
  %v5738 = vpop.xlane.xlu0 %5737
  %v5739 = vsel %vm171, %v5717, -inf
  %5740 = vmax.xlane.f32.xlu0 %v5739
  %v5741 = vpop.xlane.xlu0 %5740
  %v5742 = vsub.f32 %v5710, %v5720
  %v5743 = vsub.f32 %v5711, %v5723
  %v5744 = vsub.f32 %v5712, %v5726
  %v5745 = vsub.f32 %v5713, %v5729
  %v5746 = vsub.f32 %v5714, %v5732
  %v5747 = vsub.f32 %v5715, %v5735
  %v5748 = vsub.f32 %v5716, %v5738
  %v5749 = vsub.f32 %v5717, %v5741
  %v5750 = vmul.f32 %v5742, 1.442695
  %v5751 = vpow.pop %v5750
  %v5752 = vmul.f32 %v5743, 1.442695
  %v5753 = vpow.pop %v5752
  %v5754 = vmul.f32 %v5744, 1.442695
  %v5755 = vpow.pop %v5754
  %v5756 = vmul.f32 %v5745, 1.442695
  %v5757 = vpow.pop %v5756
  %v5758 = vmul.f32 %v5746, 1.442695
  %v5759 = vpow.pop %v5758
  %v5760 = vmul.f32 %v5747, 1.442695
  %v5761 = vpow.pop %v5760
  %v5762 = vmul.f32 %v5748, 1.442695
  %v5763 = vpow.pop %v5762
  %v5764 = vmul.f32 %v5749, 1.442695
  %v5765 = vpow.pop %v5764
  %v5766 = vsel %vm171, %v5751, 0.0
  %5767 = vadd.xlane.f32.xlu0 %v5766
  %v5768 = vpop.xlane.xlu0 %5767
  %v5769 = vsel %vm171, %v5753, 0.0
  %5770 = vadd.xlane.f32.xlu0 %v5769
  %v5771 = vpop.xlane.xlu0 %5770
  %v5772 = vsel %vm171, %v5755, 0.0
  %5773 = vadd.xlane.f32.xlu0 %v5772
  %v5774 = vpop.xlane.xlu0 %5773
  %v5775 = vsel %vm171, %v5757, 0.0
  %5776 = vadd.xlane.f32.xlu0 %v5775
  %v5777 = vpop.xlane.xlu0 %5776
  %v5778 = vsel %vm171, %v5759, 0.0
  %5779 = vadd.xlane.f32.xlu0 %v5778
  %v5780 = vpop.xlane.xlu0 %5779
  %v5781 = vsel %vm171, %v5761, 0.0
  %5782 = vadd.xlane.f32.xlu0 %v5781
  %v5783 = vpop.xlane.xlu0 %5782
  %v5784 = vsel %vm171, %v5763, 0.0
  %5785 = vadd.xlane.f32.xlu0 %v5784
  %v5786 = vpop.xlane.xlu0 %5785
  %v5787 = vsel %vm171, %v5765, 0.0
  %5788 = vadd.xlane.f32.xlu0 %v5787
  %v5789 = vpop.xlane.xlu0 %5788
  %v5790 = vrcp.pop %v5768
  %v5791 = vmul.f32 %v5751, %v5790
  %v5792 = vrcp.pop %v5771
  %v5793 = vmul.f32 %v5753, %v5792
  %v5794 = vrcp.pop %v5774
  %v5795 = vmul.f32 %v5755, %v5794
  %v5796 = vrcp.pop %v5777
  %v5797 = vmul.f32 %v5757, %v5796
  %v5798 = vrcp.pop %v5780
  %v5799 = vmul.f32 %v5759, %v5798
  %v5800 = vrcp.pop %v5783
  %v5801 = vmul.f32 %v5761, %v5800
  %v5802 = vrcp.pop %v5786
  %v5803 = vmul.f32 %v5763, %v5802
  %v5804 = vrcp.pop %v5789
  %v5805 = vmul.f32 %v5765, %v5804
  %5806 = vrot.lane.b32.xlu0 %v3682, 40
  %v5807 = vpop.permute.xlu0 %5806
  %5808 = vrot.lane.b32.xlu0 %v3687, 40
  %v5809 = vpop.permute.xlu0 %5808
  %5810 = vrot.lane.b32.xlu0 %v3692, 40
  %v5811 = vpop.permute.xlu0 %5810
  %5812 = vrot.lane.b32.xlu0 %v3697, 40
  %v5813 = vpop.permute.xlu0 %5812
  %v5819 = vsel %vm171, %v5791, 0
  %v5822 = vsel %vm171, %v5793, 0
  %v5825 = vsel %vm171, %v5795, 0
  %v5828 = vsel %vm171, %v5797, 0
  %5830 = vmatprep.subr.mxu0 0.0
  %5831 = vmatpush1.msra.mxu0 %v5807
  %5832 = vmatprep.subr.mxu0 0.0
  %5833 = vmatpush1.msra.mxu0 %v5809
  %5834 = vmatprep.subr.mxu0 0.0
  %5835 = vmatpush1.msra.mxu0 %v5811
  %5836 = vmatprep.subr.mxu0 0.0
  %5837 = vmatpush1.msra.mxu0 %v5813
  %5838 = vmatprep.subr.mxu0 0.0
  %5839 = vmatpush1.msra.mxu0 0.0
  %5840 = vmatprep.subr.mxu0 0.0
  %5841 = vmatpush1.msra.mxu0 0.0
  %5842 = vmatprep.subr.mxu0 0.0
  %5843 = vmatpush1.msra.mxu0 0.0
  %5844 = vmatprep.subr.mxu0 0.0
  %5845 = vmatpush1.msra.mxu0 0.0
  %5846 = vmatprep.subr.mxu0 0.0
  %5847 = vmatpush1.msra.mxu0 0.0
  %5848 = vmatprep.subr.mxu0 0.0
  %5849 = vmatpush1.msra.mxu0 0.0
  %5850 = vmatprep.subr.mxu0 0.0
  %5851 = vmatpush1.msra.mxu0 0.0
  %5852 = vmatprep.subr.mxu0 0.0
  %5853 = vmatpush1.msra.mxu0 0.0
  %5854 = vmatprep.subr.mxu0 0.0
  %5855 = vmatpush1.msra.mxu0 0.0
  %5856 = vmatprep.subr.mxu0 0.0
  %5857 = vmatpush1.msra.mxu0 0.0
  %5858 = vmatprep.subr.mxu0 0.0
  %5859 = vmatpush1.msra.mxu0 0.0
  %5860 = vmatprep.subr.mxu0 0.0
  %5861 = vmatpush1.msra.mxu0 0.0
  %5862 = vmatprep.subr.mxu0 0.0
  %5863 = vmatpush1.msra.mxu0 0.0
  %5864 = vmatprep.subr.mxu0 0.0
  %5865 = vmatpush1.msra.mxu0 0.0
  %5866 = vmatprep.subr.mxu0 0.0
  %5867 = vmatpush1.msra.mxu0 0.0
  %5868 = vmatprep.subr.mxu0 0.0
  %5869 = vmatpush1.msra.mxu0 0.0
  %5870 = vmatprep.subr.mxu0 0.0
  %5871 = vmatpush1.msra.mxu0 0.0
  %5872 = vmatprep.subr.mxu0 0.0
  %5873 = vmatpush1.msra.mxu0 0.0
  %5874 = vmatprep.subr.mxu0 0.0
  %5875 = vmatpush1.msra.mxu0 0.0
  %5876 = vmatprep.subr.mxu0 0.0
  %5877 = vmatpush1.msra.mxu0 0.0
  %5878 = vmatprep.subr.mxu0 0.0
  %5879 = vmatpush1.msra.mxu0 0.0
  %5880 = vmatprep.subr.mxu0 0.0
  %5881 = vmatpush1.msra.mxu0 0.0
  %5882 = vmatprep.subr.mxu0 0.0
  %5883 = vmatpush1.msra.mxu0 0.0
  %5884 = vmatprep.subr.mxu0 0.0
  %5885 = vmatpush1.msra.mxu0 0.0
  %5886 = vmatprep.subr.mxu0 0.0
  %5887 = vmatpush1.msra.mxu0 0.0
  %5888 = vmatprep.subr.mxu0 0.0
  %5889 = vmatpush1.msra.mxu0 0.0
  %5890 = vmatprep.subr.mxu0 0.0
  %5891 = vmatpush1.msra.mxu0 0.0
  %5892 = vmatprep.subr.mxu0 0.0
  %5893 = vmatpush1.msra.mxu0 0.0
  %5894 = vmatprep.mubr.f32.mxu0 0.0
  %5895 = vmatmul.mubr.f32.gmra.mrb[0].mxu0 %v5819
  %v5896 = vpop.f32.mrb[0].mxu0
  %v5897 = vadd.f32 0.0, %v5896
  %v5898 = vpop.f32.mrb[0].mxu0
  %5899 = vmatprep.mubr.f32.mxu0 0.0
  %5900 = vmatmul.mubr.f32.gmra.mrb[0].mxu0 %v5822
  %v5901 = vpop.f32.mrb[0].mxu0
  %v5902 = vadd.f32 0.0, %v5901
  %v5903 = vpop.f32.mrb[0].mxu0
  %5904 = vmatprep.mubr.f32.mxu0 0.0
  %5905 = vmatmul.mubr.f32.gmra.mrb[0].mxu0 %v5825
  %v5906 = vpop.f32.mrb[0].mxu0
  %v5907 = vadd.f32 0.0, %v5906
  %v5908 = vpop.f32.mrb[0].mxu0
  %5909 = vmatprep.mubr.f32.mxu0 0.0
  %5910 = vmatmul.mubr.f32.gmra.mrb[0].mxu0 %v5828
  %v5911 = vpop.f32.mrb[0].mxu0
  %v5912 = vadd.f32 0.0, %v5911
  %v5913 = vpop.f32.mrb[0].mxu0
  %5914 = vdwg.mxu0
  %5915 = vrot.lane.b32.xlu0 %v3702, 40
  %v5916 = vpop.permute.xlu0 %5915
  %5917 = vrot.lane.b32.xlu0 %v3707, 40
  %v5918 = vpop.permute.xlu0 %5917
  %5919 = vrot.lane.b32.xlu0 %v3712, 40
  %v5920 = vpop.permute.xlu0 %5919
  %5921 = vrot.lane.b32.xlu0 %v3717, 40
  %v5922 = vpop.permute.xlu0 %5921
  %v5928 = vsel %vm171, %v5799, 0
  %v5931 = vsel %vm171, %v5801, 0
  %v5934 = vsel %vm171, %v5803, 0
  %v5937 = vsel %vm171, %v5805, 0
  %5939 = vmatprep.subr.mxu0 0.0
  %5940 = vmatpush1.msra.mxu0 %v5916
  %5941 = vmatprep.subr.mxu0 0.0
  %5942 = vmatpush1.msra.mxu0 %v5918
  %5943 = vmatprep.subr.mxu0 0.0
  %5944 = vmatpush1.msra.mxu0 %v5920
  %5945 = vmatprep.subr.mxu0 0.0
  %5946 = vmatpush1.msra.mxu0 %v5922
  %5947 = vmatprep.subr.mxu0 0.0
  %5948 = vmatpush1.msra.mxu0 0.0
  %5949 = vmatprep.subr.mxu0 0.0
  %5950 = vmatpush1.msra.mxu0 0.0
  %5951 = vmatprep.subr.mxu0 0.0
  %5952 = vmatpush1.msra.mxu0 0.0
  %5953 = vmatprep.subr.mxu0 0.0
  %5954 = vmatpush1.msra.mxu0 0.0
  %5955 = vmatprep.subr.mxu0 0.0
  %5956 = vmatpush1.msra.mxu0 0.0
  %5957 = vmatprep.subr.mxu0 0.0
  %5958 = vmatpush1.msra.mxu0 0.0
  %5959 = vmatprep.subr.mxu0 0.0
  %5960 = vmatpush1.msra.mxu0 0.0
  %5961 = vmatprep.subr.mxu0 0.0
  %5962 = vmatpush1.msra.mxu0 0.0
  %5963 = vmatprep.subr.mxu0 0.0
  %5964 = vmatpush1.msra.mxu0 0.0
  %5965 = vmatprep.subr.mxu0 0.0
  %5966 = vmatpush1.msra.mxu0 0.0
  %5967 = vmatprep.subr.mxu0 0.0
  %5968 = vmatpush1.msra.mxu0 0.0
  %5969 = vmatprep.subr.mxu0 0.0
  %5970 = vmatpush1.msra.mxu0 0.0
  %5971 = vmatprep.subr.mxu0 0.0
  %5972 = vmatpush1.msra.mxu0 0.0
  %5973 = vmatprep.subr.mxu0 0.0
  %5974 = vmatpush1.msra.mxu0 0.0
  %5975 = vmatprep.subr.mxu0 0.0
  %5976 = vmatpush1.msra.mxu0 0.0
  %5977 = vmatprep.subr.mxu0 0.0
  %5978 = vmatpush1.msra.mxu0 0.0
  %5979 = vmatprep.subr.mxu0 0.0
  %5980 = vmatpush1.msra.mxu0 0.0
  %5981 = vmatprep.subr.mxu0 0.0
  %5982 = vmatpush1.msra.mxu0 0.0
  %5983 = vmatprep.subr.mxu0 0.0
  %5984 = vmatpush1.msra.mxu0 0.0
  %5985 = vmatprep.subr.mxu0 0.0
  %5986 = vmatpush1.msra.mxu0 0.0
  %5987 = vmatprep.subr.mxu0 0.0
  %5988 = vmatpush1.msra.mxu0 0.0
  %5989 = vmatprep.subr.mxu0 0.0
  %5990 = vmatpush1.msra.mxu0 0.0
  %5991 = vmatprep.subr.mxu0 0.0
  %5992 = vmatpush1.msra.mxu0 0.0
  %5993 = vmatprep.subr.mxu0 0.0
  %5994 = vmatpush1.msra.mxu0 0.0
  %5995 = vmatprep.subr.mxu0 0.0
  %5996 = vmatpush1.msra.mxu0 0.0
  %5997 = vmatprep.subr.mxu0 0.0
  %5998 = vmatpush1.msra.mxu0 0.0
  %5999 = vmatprep.subr.mxu0 0.0
  %6000 = vmatpush1.msra.mxu0 0.0
  %6001 = vmatprep.subr.mxu0 0.0
  %6002 = vmatpush1.msra.mxu0 0.0
  %6003 = vmatprep.mubr.f32.mxu0 0.0
  %6004 = vmatmul.mubr.f32.gmra.mrb[0].mxu0 %v5928
  %v6005 = vpop.f32.mrb[0].mxu0
  %v6006 = vadd.f32 0.0, %v6005
  %v6007 = vpop.f32.mrb[0].mxu0
  %6008 = vmatprep.mubr.f32.mxu0 0.0
  %6009 = vmatmul.mubr.f32.gmra.mrb[0].mxu0 %v5931
  %v6010 = vpop.f32.mrb[0].mxu0
  %v6011 = vadd.f32 0.0, %v6010
  %v6012 = vpop.f32.mrb[0].mxu0
  %6013 = vmatprep.mubr.f32.mxu0 0.0
  %6014 = vmatmul.mubr.f32.gmra.mrb[0].mxu0 %v5934
  %v6015 = vpop.f32.mrb[0].mxu0
  %v6016 = vadd.f32 0.0, %v6015
  %v6017 = vpop.f32.mrb[0].mxu0
  %6018 = vmatprep.mubr.f32.mxu0 0.0
  %6019 = vmatmul.mubr.f32.gmra.mrb[0].mxu0 %v5937
  %v6020 = vpop.f32.mrb[0].mxu0
  %v6021 = vadd.f32 0.0, %v6020
  %v6022 = vpop.f32.mrb[0].mxu0
  %6023 = vdwg.mxu0
  %6032 = vrot.lane.b32.xlu0 %v5897, 24
  %v6033 = vpop.permute.xlu0 %6032
  %6034 = vrot.lane.b32.xlu0 %v5902, 24
  %v6035 = vpop.permute.xlu0 %6034
  %6036 = vrot.lane.b32.xlu0 %v5907, 24
  %v6037 = vpop.permute.xlu0 %6036
  %6038 = vrot.lane.b32.xlu0 %v5912, 24
  %v6039 = vpop.permute.xlu0 %6038
  %6040 = vrot.lane.b32.xlu0 %v6006, 24
  %v6041 = vpop.permute.xlu0 %6040
  %6042 = vrot.lane.b32.xlu0 %v6011, 24
  %v6043 = vpop.permute.xlu0 %6042
  %6044 = vrot.lane.b32.xlu0 %v6016, 24
  %v6045 = vpop.permute.xlu0 %6044
  %6046 = vrot.lane.b32.xlu0 %v6021, 24
  %v6047 = vpop.permute.xlu0 %6046
  %6056 = vst.msk [vmem:[#allocation3] sm:$0xff] %vm2821, %v6033
  %6057 = vst.msk [vmem:[#allocation3 + $0x8] sm:$0xff] %vm2821, %v6035
  %6058 = vst.msk [vmem:[#allocation3 + $0x10] sm:$0xff] %vm2821, %v6037
  %6059 = vst.msk [vmem:[#allocation3 + $0x18] sm:$0xff] %vm2821, %v6039
  %6060 = vst.msk [vmem:[#allocation3 + $0x20] sm:$0xff] %vm2821, %v6041
  %6061 = vst.msk [vmem:[#allocation3 + $0x28] sm:$0xff] %vm2821, %v6043
  %6062 = vst.msk [vmem:[#allocation3 + $0x30] sm:$0xff] %vm2821, %v6045
  %6063 = vst.msk [vmem:[#allocation3 + $0x38] sm:$0xff] %vm2821, %v6047
  %v6064 = vld [vmem:[#allocation3] sm:$0xff]
  %v6065 = vld [vmem:[#allocation3 + $0x8] sm:$0xff]
  %v6066 = vld [vmem:[#allocation3 + $0x10] sm:$0xff]
  %v6067 = vld [vmem:[#allocation3 + $0x18] sm:$0xff]
  %v6068 = vld [vmem:[#allocation3 + $0x20] sm:$0xff]
  %v6069 = vld [vmem:[#allocation3 + $0x28] sm:$0xff]
  %v6070 = vld [vmem:[#allocation3 + $0x30] sm:$0xff]
  %v6071 = vld [vmem:[#allocation3 + $0x38] sm:$0xff]
  %s6072 = scalar_lea.vmem %s9, 32
  %v6073 = vld [vmem:[%s6072] sm:$0xff]
  %v6074 = vld [vmem:[%s6072 + $0x8] sm:$0xff]
  %v6075 = vld [vmem:[%s6072 + $0x10] sm:$0xff]
  %v6076 = vld [vmem:[%s6072 + $0x18] sm:$0xff]
  %s6077 = scalar_lea.vmem %s10, 1
  %v6078 = vld [vmem:[%s6077] sm:$0x1]
  %v6080 = vlaneseq
  %v6081 = vshrl.u32 %v6080, 7
  %v6082 = vsub.s32 0, %v6081
  %v6083 = vrot.slane %v6078, %v6082
  %v6086 = vsel %vm171, %v6064, 0
  %v6089 = vsel %vm171, %v6065, 0
  %v6092 = vsel %vm171, %v6066, 0
  %v6095 = vsel %vm171, %v6067, 0
  %v6098 = vsel %vm171, %v6068, 0
  %v6101 = vsel %vm171, %v6069, 0
  %v6104 = vsel %vm171, %v6070, 0
  %v6107 = vsel %vm171, %v6071, 0
  %6109 = vmatprep.subr.mxu0 0.0
  %6110 = vmatpush1.msra.mxu0 %v6073
  %6111 = vmatprep.subr.mxu0 0.0
  %6112 = vmatpush1.msra.mxu0 %v6074
  %6113 = vmatprep.subr.mxu0 0.0
  %6114 = vmatpush1.msra.mxu0 %v6075
  %6115 = vmatprep.subr.mxu0 0.0
  %6116 = vmatpush1.msra.mxu0 %v6076
  %6117 = vmatprep.subr.mxu0 0.0
  %6118 = vmatpush1.msra.mxu0 0.0
  %6119 = vmatprep.subr.mxu0 0.0
  %6120 = vmatpush1.msra.mxu0 0.0
  %6121 = vmatprep.subr.mxu0 0.0
  %6122 = vmatpush1.msra.mxu0 0.0
  %6123 = vmatprep.subr.mxu0 0.0
  %6124 = vmatpush1.msra.mxu0 0.0
  %6125 = vmatprep.subr.mxu0 0.0
  %6126 = vmatpush1.msra.mxu0 0.0
  %6127 = vmatprep.subr.mxu0 0.0
  %6128 = vmatpush1.msra.mxu0 0.0
  %6129 = vmatprep.subr.mxu0 0.0
  %6130 = vmatpush1.msra.mxu0 0.0
  %6131 = vmatprep.subr.mxu0 0.0
  %6132 = vmatpush1.msra.mxu0 0.0
  %6133 = vmatprep.subr.mxu0 0.0
  %6134 = vmatpush1.msra.mxu0 0.0
  %6135 = vmatprep.subr.mxu0 0.0
  %6136 = vmatpush1.msra.mxu0 0.0
  %6137 = vmatprep.subr.mxu0 0.0
  %6138 = vmatpush1.msra.mxu0 0.0
  %6139 = vmatprep.subr.mxu0 0.0
  %6140 = vmatpush1.msra.mxu0 0.0
  %6141 = vmatprep.subr.mxu0 0.0
  %6142 = vmatpush1.msra.mxu0 0.0
  %6143 = vmatprep.subr.mxu0 0.0
  %6144 = vmatpush1.msra.mxu0 0.0
  %6145 = vmatprep.subr.mxu0 0.0
  %6146 = vmatpush1.msra.mxu0 0.0
  %6147 = vmatprep.subr.mxu0 0.0
  %6148 = vmatpush1.msra.mxu0 0.0
  %6149 = vmatprep.subr.mxu0 0.0
  %6150 = vmatpush1.msra.mxu0 0.0
  %6151 = vmatprep.subr.mxu0 0.0
  %6152 = vmatpush1.msra.mxu0 0.0
  %6153 = vmatprep.subr.mxu0 0.0
  %6154 = vmatpush1.msra.mxu0 0.0
  %6155 = vmatprep.subr.mxu0 0.0
  %6156 = vmatpush1.msra.mxu0 0.0
  %6157 = vmatprep.subr.mxu0 0.0
  %6158 = vmatpush1.msra.mxu0 0.0
  %6159 = vmatprep.subr.mxu0 0.0
  %6160 = vmatpush1.msra.mxu0 0.0
  %6161 = vmatprep.subr.mxu0 0.0
  %6162 = vmatpush1.msra.mxu0 0.0
  %6163 = vmatprep.subr.mxu0 0.0
  %6164 = vmatpush1.msra.mxu0 0.0
  %6165 = vmatprep.subr.mxu0 0.0
  %6166 = vmatpush1.msra.mxu0 0.0
  %6167 = vmatprep.subr.mxu0 0.0
  %6168 = vmatpush1.msra.mxu0 0.0
  %6169 = vmatprep.subr.mxu0 0.0
  %6170 = vmatpush1.msra.mxu0 0.0
  %6171 = vmatprep.subr.mxu0 0.0
  %6172 = vmatpush1.msra.mxu0 0.0
  %6173 = vmatprep.mubr.f32.mxu0 0.0
  %6174 = vmatmul.mubr.f32.gmra.mrb[0].mxu0 %v6086
  %v6175 = vpop.f32.mrb[0].mxu0
  %v6176 = vadd.f32 %v6083, %v6175
  %v6177 = vpop.f32.mrb[0].mxu0
  %6178 = vmatprep.mubr.f32.mxu0 0.0
  %6179 = vmatmul.mubr.f32.gmra.mrb[0].mxu0 %v6089
  %v6180 = vpop.f32.mrb[0].mxu0
  %v6181 = vadd.f32 %v6083, %v6180
  %v6182 = vpop.f32.mrb[0].mxu0
  %6183 = vmatprep.mubr.f32.mxu0 0.0
  %6184 = vmatmul.mubr.f32.gmra.mrb[0].mxu0 %v6092
  %v6185 = vpop.f32.mrb[0].mxu0
  %v6186 = vadd.f32 %v6083, %v6185
  %v6187 = vpop.f32.mrb[0].mxu0
  %6188 = vmatprep.mubr.f32.mxu0 0.0
  %6189 = vmatmul.mubr.f32.gmra.mrb[0].mxu0 %v6095
  %v6190 = vpop.f32.mrb[0].mxu0
  %v6191 = vadd.f32 %v6083, %v6190
  %v6192 = vpop.f32.mrb[0].mxu0
  %6193 = vmatprep.mubr.f32.mxu0 0.0
  %6194 = vmatmul.mubr.f32.gmra.mrb[0].mxu0 %v6098
  %v6195 = vpop.f32.mrb[0].mxu0
  %v6196 = vadd.f32 %v6083, %v6195
  %v6197 = vpop.f32.mrb[0].mxu0
  %6198 = vmatprep.mubr.f32.mxu0 0.0
  %6199 = vmatmul.mubr.f32.gmra.mrb[0].mxu0 %v6101
  %v6200 = vpop.f32.mrb[0].mxu0
  %v6201 = vadd.f32 %v6083, %v6200
  %v6202 = vpop.f32.mrb[0].mxu0
  %6203 = vmatprep.mubr.f32.mxu0 0.0
  %6204 = vmatmul.mubr.f32.gmra.mrb[0].mxu0 %v6104
  %v6205 = vpop.f32.mrb[0].mxu0
  %v6206 = vadd.f32 %v6083, %v6205
  %v6207 = vpop.f32.mrb[0].mxu0
  %6208 = vmatprep.mubr.f32.mxu0 0.0
  %6209 = vmatmul.mubr.f32.gmra.mrb[0].mxu0 %v6107
  %v6210 = vpop.f32.mrb[0].mxu0
  %v6211 = vadd.f32 %v6083, %v6210
  %v6212 = vpop.f32.mrb[0].mxu0
  %6213 = vdwg.mxu0
  %v6214 = vadd.f32 %v6176, %v3440
  %v6215 = vadd.f32 %v6181, %v3441
  %v6216 = vadd.f32 %v6186, %v3442
  %v6217 = vadd.f32 %v6191, %v3443
  %v6218 = vadd.f32 %v6196, %v3444
  %v6219 = vadd.f32 %v6201, %v3445
  %v6220 = vadd.f32 %v6206, %v3446
  %v6221 = vadd.f32 %v6211, %v3447
  %s6222 = scalar_lea.vmem %s11, 2
  %v6223 = vld [vmem:[%s6222] sm:$0x3]
  %v6224 = vsel %vm171, %v6214, 0.0
  %6225 = vadd.xlane.f32.xlu0 %v6224
  %v6226 = vpop.xlane.xlu0 %6225
  %v6227 = vsel %vm171, %v6215, 0.0
  %6228 = vadd.xlane.f32.xlu0 %v6227
  %v6229 = vpop.xlane.xlu0 %6228
  %v6230 = vsel %vm171, %v6216, 0.0
  %6231 = vadd.xlane.f32.xlu0 %v6230
  %v6232 = vpop.xlane.xlu0 %6231
  %v6233 = vsel %vm171, %v6217, 0.0
  %6234 = vadd.xlane.f32.xlu0 %v6233
  %v6235 = vpop.xlane.xlu0 %6234
  %v6236 = vsel %vm171, %v6218, 0.0
  %6237 = vadd.xlane.f32.xlu0 %v6236
  %v6238 = vpop.xlane.xlu0 %6237
  %v6239 = vsel %vm171, %v6219, 0.0
  %6240 = vadd.xlane.f32.xlu0 %v6239
  %v6241 = vpop.xlane.xlu0 %6240
  %v6242 = vsel %vm171, %v6220, 0.0
  %6243 = vadd.xlane.f32.xlu0 %v6242
  %v6244 = vpop.xlane.xlu0 %6243
  %v6245 = vsel %vm171, %v6221, 0.0
  %6246 = vadd.xlane.f32.xlu0 %v6245
  %v6247 = vpop.xlane.xlu0 %6246
  %v6248 = vmul.f32 %v6226, %v231
  %v6249 = vmul.f32 %v6229, %v231
  %v6250 = vmul.f32 %v6232, %v231
  %v6251 = vmul.f32 %v6235, %v231
  %v6252 = vmul.f32 %v6238, %v231
  %v6253 = vmul.f32 %v6241, %v231
  %v6254 = vmul.f32 %v6244, %v231
  %v6255 = vmul.f32 %v6247, %v231
  %v6256 = vsub.f32 %v6214, %v6248
  %v6257 = vsub.f32 %v6215, %v6249
  %v6258 = vsub.f32 %v6216, %v6250
  %v6259 = vsub.f32 %v6217, %v6251
  %v6260 = vsub.f32 %v6218, %v6252
  %v6261 = vsub.f32 %v6219, %v6253
  %v6262 = vsub.f32 %v6220, %v6254
  %v6263 = vsub.f32 %v6221, %v6255
  %v6264 = vmul.f32 %v6256, %v6256
  %v6265 = vmul.f32 %v6257, %v6257
  %v6266 = vmul.f32 %v6258, %v6258
  %v6267 = vmul.f32 %v6259, %v6259
  %v6268 = vmul.f32 %v6260, %v6260
  %v6269 = vmul.f32 %v6261, %v6261
  %v6270 = vmul.f32 %v6262, %v6262
  %v6271 = vmul.f32 %v6263, %v6263
  %v6272 = vsel %vm171, %v6264, 0.0
  %6273 = vadd.xlane.f32.xlu0 %v6272
  %v6274 = vpop.xlane.xlu0 %6273
  %v6275 = vsel %vm171, %v6265, 0.0
  %6276 = vadd.xlane.f32.xlu0 %v6275
  %v6277 = vpop.xlane.xlu0 %6276
  %v6278 = vsel %vm171, %v6266, 0.0
  %6279 = vadd.xlane.f32.xlu0 %v6278
  %v6280 = vpop.xlane.xlu0 %6279
  %v6281 = vsel %vm171, %v6267, 0.0
  %6282 = vadd.xlane.f32.xlu0 %v6281
  %v6283 = vpop.xlane.xlu0 %6282
  %v6284 = vsel %vm171, %v6268, 0.0
  %6285 = vadd.xlane.f32.xlu0 %v6284
  %v6286 = vpop.xlane.xlu0 %6285
  %v6287 = vsel %vm171, %v6269, 0.0
  %6288 = vadd.xlane.f32.xlu0 %v6287
  %v6289 = vpop.xlane.xlu0 %6288
  %v6290 = vsel %vm171, %v6270, 0.0
  %6291 = vadd.xlane.f32.xlu0 %v6290
  %v6292 = vpop.xlane.xlu0 %6291
  %v6293 = vsel %vm171, %v6271, 0.0
  %6294 = vadd.xlane.f32.xlu0 %v6293
  %v6295 = vpop.xlane.xlu0 %6294
  %v6296 = vmul.f32 %v6274, %v231
  %v6297 = vmul.f32 %v6277, %v231
  %v6298 = vmul.f32 %v6280, %v231
  %v6299 = vmul.f32 %v6283, %v231
  %v6300 = vmul.f32 %v6286, %v231
  %v6301 = vmul.f32 %v6289, %v231
  %v6302 = vmul.f32 %v6292, %v231
  %v6303 = vmul.f32 %v6295, %v231
  %v6304 = vadd.f32 %v6296, 1e-06
  %v6305 = vadd.f32 %v6297, 1e-06
  %v6306 = vadd.f32 %v6298, 1e-06
  %v6307 = vadd.f32 %v6299, 1e-06
  %v6308 = vadd.f32 %v6300, 1e-06
  %v6309 = vadd.f32 %v6301, 1e-06
  %v6310 = vadd.f32 %v6302, 1e-06
  %v6311 = vadd.f32 %v6303, 1e-06
  %v6312 = vrsqrt.pop %v6304
  %v6313 = vrsqrt.pop %v6305
  %v6314 = vrsqrt.pop %v6306
  %v6315 = vrsqrt.pop %v6307
  %v6316 = vrsqrt.pop %v6308
  %v6317 = vrsqrt.pop %v6309
  %v6318 = vrsqrt.pop %v6310
  %v6319 = vrsqrt.pop %v6311
  %v6320 = vmul.f32 %v6256, %v6312
  %v6321 = vmul.f32 %v6257, %v6313
  %v6322 = vmul.f32 %v6258, %v6314
  %v6323 = vmul.f32 %v6259, %v6315
  %v6324 = vmul.f32 %v6260, %v6316
  %v6325 = vmul.f32 %v6261, %v6317
  %v6326 = vmul.f32 %v6262, %v6318
  %v6327 = vmul.f32 %v6263, %v6319
  %v6328 = vlaneseq
  %v6329 = vshrl.u32 %v6328, 7
  %v6330 = vsub.s32 0, %v6329
  %v6331 = vrot.slane %v6223, %v6330
  %v6332 = vmul.f32 %v6320, %v6331
  %v6333 = vmul.f32 %v6321, %v6331
  %v6334 = vmul.f32 %v6322, %v6331
  %v6335 = vmul.f32 %v6323, %v6331
  %v6336 = vmul.f32 %v6324, %v6331
  %v6337 = vmul.f32 %v6325, %v6331
  %v6338 = vmul.f32 %v6326, %v6331
  %v6339 = vmul.f32 %v6327, %v6331
  %v6340 = vlaneseq
  %v6341 = vshrl.u32 %v6340, 7
  %v6342 = vsub.s32 1, %v6341
  %v6343 = vrot.slane %v6223, %v6342
  %v6344 = vadd.f32 %v6332, %v6343
  %v6345 = vadd.f32 %v6333, %v6343
  %v6346 = vadd.f32 %v6334, %v6343
  %v6347 = vadd.f32 %v6335, %v6343
  %v6348 = vadd.f32 %v6336, %v6343
  %v6349 = vadd.f32 %v6337, %v6343
  %v6350 = vadd.f32 %v6338, %v6343
  %v6351 = vadd.f32 %v6339, %v6343
  %s6352 = scalar_lea.vmem %s12, 32
  %v6353 = vld [vmem:[%s6352] sm:$0xff]
  %v6354 = vld [vmem:[%s6352 + $0x8] sm:$0xff]
  %v6355 = vld [vmem:[%s6352 + $0x10] sm:$0xff]
  %v6356 = vld [vmem:[%s6352 + $0x18] sm:$0xff]
  %s6357 = scalar_lea.vmem %s13, 1
  %v6358 = vld [vmem:[%s6357] sm:$0x1]
  %v6360 = vlaneseq
  %v6361 = vshrl.u32 %v6360, 7
  %v6362 = vsub.s32 0, %v6361
  %v6363 = vrot.slane %v6358, %v6362
  %v6366 = vsel %vm171, %v6344, 0
  %v6369 = vsel %vm171, %v6345, 0
  %v6372 = vsel %vm171, %v6346, 0
  %v6375 = vsel %vm171, %v6347, 0
  %v6378 = vsel %vm171, %v6348, 0
  %v6381 = vsel %vm171, %v6349, 0
  %v6384 = vsel %vm171, %v6350, 0
  %v6387 = vsel %vm171, %v6351, 0
  %6389 = vmatprep.subr.mxu0 0.0
  %6390 = vmatpush1.msra.mxu0 %v6353
  %6391 = vmatprep.subr.mxu0 0.0
  %6392 = vmatpush1.msra.mxu0 %v6354
  %6393 = vmatprep.subr.mxu0 0.0
  %6394 = vmatpush1.msra.mxu0 %v6355
  %6395 = vmatprep.subr.mxu0 0.0
  %6396 = vmatpush1.msra.mxu0 %v6356
  %6397 = vmatprep.subr.mxu0 0.0
  %6398 = vmatpush1.msra.mxu0 0.0
  %6399 = vmatprep.subr.mxu0 0.0
  %6400 = vmatpush1.msra.mxu0 0.0
  %6401 = vmatprep.subr.mxu0 0.0
  %6402 = vmatpush1.msra.mxu0 0.0
  %6403 = vmatprep.subr.mxu0 0.0
  %6404 = vmatpush1.msra.mxu0 0.0
  %6405 = vmatprep.subr.mxu0 0.0
  %6406 = vmatpush1.msra.mxu0 0.0
  %6407 = vmatprep.subr.mxu0 0.0
  %6408 = vmatpush1.msra.mxu0 0.0
  %6409 = vmatprep.subr.mxu0 0.0
  %6410 = vmatpush1.msra.mxu0 0.0
  %6411 = vmatprep.subr.mxu0 0.0
  %6412 = vmatpush1.msra.mxu0 0.0
  %6413 = vmatprep.subr.mxu0 0.0
  %6414 = vmatpush1.msra.mxu0 0.0
  %6415 = vmatprep.subr.mxu0 0.0
  %6416 = vmatpush1.msra.mxu0 0.0
  %6417 = vmatprep.subr.mxu0 0.0
  %6418 = vmatpush1.msra.mxu0 0.0
  %6419 = vmatprep.subr.mxu0 0.0
  %6420 = vmatpush1.msra.mxu0 0.0
  %6421 = vmatprep.subr.mxu0 0.0
  %6422 = vmatpush1.msra.mxu0 0.0
  %6423 = vmatprep.subr.mxu0 0.0
  %6424 = vmatpush1.msra.mxu0 0.0
  %6425 = vmatprep.subr.mxu0 0.0
  %6426 = vmatpush1.msra.mxu0 0.0
  %6427 = vmatprep.subr.mxu0 0.0
  %6428 = vmatpush1.msra.mxu0 0.0
  %6429 = vmatprep.subr.mxu0 0.0
  %6430 = vmatpush1.msra.mxu0 0.0
  %6431 = vmatprep.subr.mxu0 0.0
  %6432 = vmatpush1.msra.mxu0 0.0
  %6433 = vmatprep.subr.mxu0 0.0
  %6434 = vmatpush1.msra.mxu0 0.0
  %6435 = vmatprep.subr.mxu0 0.0
  %6436 = vmatpush1.msra.mxu0 0.0
  %6437 = vmatprep.subr.mxu0 0.0
  %6438 = vmatpush1.msra.mxu0 0.0
  %6439 = vmatprep.subr.mxu0 0.0
  %6440 = vmatpush1.msra.mxu0 0.0
  %6441 = vmatprep.subr.mxu0 0.0
  %6442 = vmatpush1.msra.mxu0 0.0
  %6443 = vmatprep.subr.mxu0 0.0
  %6444 = vmatpush1.msra.mxu0 0.0
  %6445 = vmatprep.subr.mxu0 0.0
  %6446 = vmatpush1.msra.mxu0 0.0
  %6447 = vmatprep.subr.mxu0 0.0
  %6448 = vmatpush1.msra.mxu0 0.0
  %6449 = vmatprep.subr.mxu0 0.0
  %6450 = vmatpush1.msra.mxu0 0.0
  %6451 = vmatprep.subr.mxu0 0.0
  %6452 = vmatpush1.msra.mxu0 0.0
  %6453 = vmatprep.mubr.f32.mxu0 0.0
  %6454 = vmatmul.mubr.f32.gmra.mrb[0].mxu0 %v6366
  %v6455 = vpop.f32.mrb[0].mxu0
  %v6456 = vadd.f32 %v6363, %v6455
  %v6457 = vpop.f32.mrb[0].mxu0
  %6458 = vmatprep.mubr.f32.mxu0 0.0
  %6459 = vmatmul.mubr.f32.gmra.mrb[0].mxu0 %v6369
  %v6460 = vpop.f32.mrb[0].mxu0
  %v6461 = vadd.f32 %v6363, %v6460
  %v6462 = vpop.f32.mrb[0].mxu0
  %6463 = vmatprep.mubr.f32.mxu0 0.0
  %6464 = vmatmul.mubr.f32.gmra.mrb[0].mxu0 %v6372
  %v6465 = vpop.f32.mrb[0].mxu0
  %v6466 = vadd.f32 %v6363, %v6465
  %v6467 = vpop.f32.mrb[0].mxu0
  %6468 = vmatprep.mubr.f32.mxu0 0.0
  %6469 = vmatmul.mubr.f32.gmra.mrb[0].mxu0 %v6375
  %v6470 = vpop.f32.mrb[0].mxu0
  %v6471 = vadd.f32 %v6363, %v6470
  %v6472 = vpop.f32.mrb[0].mxu0
  %6473 = vmatprep.mubr.f32.mxu0 0.0
  %6474 = vmatmul.mubr.f32.gmra.mrb[0].mxu0 %v6378
  %v6475 = vpop.f32.mrb[0].mxu0
  %v6476 = vadd.f32 %v6363, %v6475
  %v6477 = vpop.f32.mrb[0].mxu0
  %6478 = vmatprep.mubr.f32.mxu0 0.0
  %6479 = vmatmul.mubr.f32.gmra.mrb[0].mxu0 %v6381
  %v6480 = vpop.f32.mrb[0].mxu0
  %v6481 = vadd.f32 %v6363, %v6480
  %v6482 = vpop.f32.mrb[0].mxu0
  %6483 = vmatprep.mubr.f32.mxu0 0.0
  %6484 = vmatmul.mubr.f32.gmra.mrb[0].mxu0 %v6384
  %v6485 = vpop.f32.mrb[0].mxu0
  %v6486 = vadd.f32 %v6363, %v6485
  %v6487 = vpop.f32.mrb[0].mxu0
  %6488 = vmatprep.mubr.f32.mxu0 0.0
  %6489 = vmatmul.mubr.f32.gmra.mrb[0].mxu0 %v6387
  %v6490 = vpop.f32.mrb[0].mxu0
  %v6491 = vadd.f32 %v6363, %v6490
  %v6492 = vpop.f32.mrb[0].mxu0
  %6493 = vdwg.mxu0
  %v6494 = vmul.f32 %v6456, 0.5
  %v6495 = vmul.f32 %v6461, 0.5
  %v6496 = vmul.f32 %v6466, 0.5
  %v6497 = vmul.f32 %v6471, 0.5
  %v6498 = vmul.f32 %v6476, 0.5
  %v6499 = vmul.f32 %v6481, 0.5
  %v6500 = vmul.f32 %v6486, 0.5
  %v6501 = vmul.f32 %v6491, 0.5
  %v6502 = vmul.f32 %v6456, 0.70710677
  %v6503 = vmul.f32 %v6461, 0.70710677
  %v6504 = vmul.f32 %v6466, 0.70710677
  %v6505 = vmul.f32 %v6471, 0.70710677
  %v6506 = vmul.f32 %v6476, 0.70710677
  %v6507 = vmul.f32 %v6481, 0.70710677
  %v6508 = vmul.f32 %v6486, 0.70710677
  %v6509 = vmul.f32 %v6491, 0.70710677
  %v6510 = verf.f32.pop %v6502
  %v6511 = verf.f32.pop %v6503
  %v6512 = verf.f32.pop %v6504
  %v6513 = verf.f32.pop %v6505
  %v6514 = verf.f32.pop %v6506
  %v6515 = verf.f32.pop %v6507
  %v6516 = verf.f32.pop %v6508
  %v6517 = verf.f32.pop %v6509
  %v6518 = vadd.f32 %v6510, 1.0
  %v6519 = vadd.f32 %v6511, 1.0
  %v6520 = vadd.f32 %v6512, 1.0
  %v6521 = vadd.f32 %v6513, 1.0
  %v6522 = vadd.f32 %v6514, 1.0
  %v6523 = vadd.f32 %v6515, 1.0
  %v6524 = vadd.f32 %v6516, 1.0
  %v6525 = vadd.f32 %v6517, 1.0
  %v6526 = vmul.f32 %v6494, %v6518
  %v6527 = vmul.f32 %v6495, %v6519
  %v6528 = vmul.f32 %v6496, %v6520
  %v6529 = vmul.f32 %v6497, %v6521
  %v6530 = vmul.f32 %v6498, %v6522
  %v6531 = vmul.f32 %v6499, %v6523
  %v6532 = vmul.f32 %v6500, %v6524
  %v6533 = vmul.f32 %v6501, %v6525
  %s6534 = scalar_lea.vmem %s14, 64
  %v6535 = vld [vmem:[%s6534] sm:$0xff]
  %v6536 = vld [vmem:[%s6534 + $0x8] sm:$0xff]
  %v6537 = vld [vmem:[%s6534 + $0x10] sm:$0xff]
  %v6538 = vld [vmem:[%s6534 + $0x18] sm:$0xff]
  %v6539 = vld [vmem:[%s6534 + $0x20] sm:$0xff]
  %v6540 = vld [vmem:[%s6534 + $0x28] sm:$0xff]
  %v6541 = vld [vmem:[%s6534 + $0x30] sm:$0xff]
  %v6542 = vld [vmem:[%s6534 + $0x38] sm:$0xff]
  %s6543 = scalar_lea.vmem %s15, 1
  %v6544 = vld [vmem:[%s6543] sm:$0x1]
  %v6546 = vlaneseq
  %v6547 = vshrl.u32 %v6546, 7
  %v6548 = vsub.s32 0, %v6547
  %v6549 = vrot.slane %v6544, %v6548
  %v6552 = vsel %vm3310, %v6526, 0
  %v6555 = vsel %vm3310, %v6527, 0
  %v6558 = vsel %vm3310, %v6528, 0
  %v6561 = vsel %vm3310, %v6529, 0
  %v6564 = vsel %vm3310, %v6530, 0
  %v6567 = vsel %vm3310, %v6531, 0
  %v6570 = vsel %vm3310, %v6532, 0
  %v6573 = vsel %vm3310, %v6533, 0
  %6575 = vmatprep.subr.mxu0 0.0
  %6576 = vmatpush1.msra.mxu0 %v6535
  %6577 = vmatprep.subr.mxu0 0.0
  %6578 = vmatpush1.msra.mxu0 %v6536
  %6579 = vmatprep.subr.mxu0 0.0
  %6580 = vmatpush1.msra.mxu0 %v6537
  %6581 = vmatprep.subr.mxu0 0.0
  %6582 = vmatpush1.msra.mxu0 %v6538
  %6583 = vmatprep.subr.mxu0 0.0
  %6584 = vmatpush1.msra.mxu0 %v6539
  %6585 = vmatprep.subr.mxu0 0.0
  %6586 = vmatpush1.msra.mxu0 %v6540
  %6587 = vmatprep.subr.mxu0 0.0
  %6588 = vmatpush1.msra.mxu0 %v6541
  %6589 = vmatprep.subr.mxu0 0.0
  %6590 = vmatpush1.msra.mxu0 %v6542
  %6591 = vmatprep.subr.mxu0 0.0
  %6592 = vmatpush1.msra.mxu0 0.0
  %6593 = vmatprep.subr.mxu0 0.0
  %6594 = vmatpush1.msra.mxu0 0.0
  %6595 = vmatprep.subr.mxu0 0.0
  %6596 = vmatpush1.msra.mxu0 0.0
  %6597 = vmatprep.subr.mxu0 0.0
  %6598 = vmatpush1.msra.mxu0 0.0
  %6599 = vmatprep.subr.mxu0 0.0
  %6600 = vmatpush1.msra.mxu0 0.0
  %6601 = vmatprep.subr.mxu0 0.0
  %6602 = vmatpush1.msra.mxu0 0.0
  %6603 = vmatprep.subr.mxu0 0.0
  %6604 = vmatpush1.msra.mxu0 0.0
  %6605 = vmatprep.subr.mxu0 0.0
  %6606 = vmatpush1.msra.mxu0 0.0
  %6607 = vmatprep.subr.mxu0 0.0
  %6608 = vmatpush1.msra.mxu0 0.0
  %6609 = vmatprep.subr.mxu0 0.0
  %6610 = vmatpush1.msra.mxu0 0.0
  %6611 = vmatprep.subr.mxu0 0.0
  %6612 = vmatpush1.msra.mxu0 0.0
  %6613 = vmatprep.subr.mxu0 0.0
  %6614 = vmatpush1.msra.mxu0 0.0
  %6615 = vmatprep.subr.mxu0 0.0
  %6616 = vmatpush1.msra.mxu0 0.0
  %6617 = vmatprep.subr.mxu0 0.0
  %6618 = vmatpush1.msra.mxu0 0.0
  %6619 = vmatprep.subr.mxu0 0.0
  %6620 = vmatpush1.msra.mxu0 0.0
  %6621 = vmatprep.subr.mxu0 0.0
  %6622 = vmatpush1.msra.mxu0 0.0
  %6623 = vmatprep.subr.mxu0 0.0
  %6624 = vmatpush1.msra.mxu0 0.0
  %6625 = vmatprep.subr.mxu0 0.0
  %6626 = vmatpush1.msra.mxu0 0.0
  %6627 = vmatprep.subr.mxu0 0.0
  %6628 = vmatpush1.msra.mxu0 0.0
  %6629 = vmatprep.subr.mxu0 0.0
  %6630 = vmatpush1.msra.mxu0 0.0
  %6631 = vmatprep.subr.mxu0 0.0
  %6632 = vmatpush1.msra.mxu0 0.0
  %6633 = vmatprep.subr.mxu0 0.0
  %6634 = vmatpush1.msra.mxu0 0.0
  %6635 = vmatprep.subr.mxu0 0.0
  %6636 = vmatpush1.msra.mxu0 0.0
  %6637 = vmatprep.subr.mxu0 0.0
  %6638 = vmatpush1.msra.mxu0 0.0
  %6639 = vmatprep.mubr.f32.mxu0 0.0
  %6640 = vmatmul.mubr.f32.gmra.mrb[0].mxu0 %v6552
  %v6641 = vpop.f32.mrb[0].mxu0
  %v6642 = vadd.f32 %v6549, %v6641
  %v6643 = vpop.f32.mrb[0].mxu0
  %6644 = vmatprep.mubr.f32.mxu0 0.0
  %6645 = vmatmul.mubr.f32.gmra.mrb[0].mxu0 %v6555
  %v6646 = vpop.f32.mrb[0].mxu0
  %v6647 = vadd.f32 %v6549, %v6646
  %v6648 = vpop.f32.mrb[0].mxu0
  %6649 = vmatprep.mubr.f32.mxu0 0.0
  %6650 = vmatmul.mubr.f32.gmra.mrb[0].mxu0 %v6558
  %v6651 = vpop.f32.mrb[0].mxu0
  %v6652 = vadd.f32 %v6549, %v6651
  %v6653 = vpop.f32.mrb[0].mxu0
  %6654 = vmatprep.mubr.f32.mxu0 0.0
  %6655 = vmatmul.mubr.f32.gmra.mrb[0].mxu0 %v6561
  %v6656 = vpop.f32.mrb[0].mxu0
  %v6657 = vadd.f32 %v6549, %v6656
  %v6658 = vpop.f32.mrb[0].mxu0
  %6659 = vmatprep.mubr.f32.mxu0 0.0
  %6660 = vmatmul.mubr.f32.gmra.mrb[0].mxu0 %v6564
  %v6661 = vpop.f32.mrb[0].mxu0
  %v6662 = vadd.f32 %v6549, %v6661
  %v6663 = vpop.f32.mrb[0].mxu0
  %6664 = vmatprep.mubr.f32.mxu0 0.0
  %6665 = vmatmul.mubr.f32.gmra.mrb[0].mxu0 %v6567
  %v6666 = vpop.f32.mrb[0].mxu0
  %v6667 = vadd.f32 %v6549, %v6666
  %v6668 = vpop.f32.mrb[0].mxu0
  %6669 = vmatprep.mubr.f32.mxu0 0.0
  %6670 = vmatmul.mubr.f32.gmra.mrb[0].mxu0 %v6570
  %v6671 = vpop.f32.mrb[0].mxu0
  %v6672 = vadd.f32 %v6549, %v6671
  %v6673 = vpop.f32.mrb[0].mxu0
  %6674 = vmatprep.mubr.f32.mxu0 0.0
  %6675 = vmatmul.mubr.f32.gmra.mrb[0].mxu0 %v6573
  %v6676 = vpop.f32.mrb[0].mxu0
  %v6677 = vadd.f32 %v6549, %v6676
  %v6678 = vpop.f32.mrb[0].mxu0
  %6679 = vdwg.mxu0
  %v6680 = vadd.f32 %v6642, %v6214
  %v6681 = vadd.f32 %v6647, %v6215
  %v6682 = vadd.f32 %v6652, %v6216
  %v6683 = vadd.f32 %v6657, %v6217
  %v6684 = vadd.f32 %v6662, %v6218
  %v6685 = vadd.f32 %v6667, %v6219
  %v6686 = vadd.f32 %v6672, %v6220
  %v6687 = vadd.f32 %v6677, %v6221
  %v6688 = vld [vmem:[%s16] sm:$0x3]
  %v6689 = vsel %vm171, %v6680, 0.0
  %6690 = vadd.xlane.f32.xlu0 %v6689
  %v6691 = vpop.xlane.xlu0 %6690
  %v6692 = vsel %vm171, %v6681, 0.0
  %6693 = vadd.xlane.f32.xlu0 %v6692
  %v6694 = vpop.xlane.xlu0 %6693
  %v6695 = vsel %vm171, %v6682, 0.0
  %6696 = vadd.xlane.f32.xlu0 %v6695
  %v6697 = vpop.xlane.xlu0 %6696
  %v6698 = vsel %vm171, %v6683, 0.0
  %6699 = vadd.xlane.f32.xlu0 %v6698
  %v6700 = vpop.xlane.xlu0 %6699
  %v6701 = vsel %vm171, %v6684, 0.0
  %6702 = vadd.xlane.f32.xlu0 %v6701
  %v6703 = vpop.xlane.xlu0 %6702
  %v6704 = vsel %vm171, %v6685, 0.0
  %6705 = vadd.xlane.f32.xlu0 %v6704
  %v6706 = vpop.xlane.xlu0 %6705
  %v6707 = vsel %vm171, %v6686, 0.0
  %6708 = vadd.xlane.f32.xlu0 %v6707
  %v6709 = vpop.xlane.xlu0 %6708
  %v6710 = vsel %vm171, %v6687, 0.0
  %6711 = vadd.xlane.f32.xlu0 %v6710
  %v6712 = vpop.xlane.xlu0 %6711
  %v6713 = vmul.f32 %v6691, %v231
  %v6714 = vmul.f32 %v6694, %v231
  %v6715 = vmul.f32 %v6697, %v231
  %v6716 = vmul.f32 %v6700, %v231
  %v6717 = vmul.f32 %v6703, %v231
  %v6718 = vmul.f32 %v6706, %v231
  %v6719 = vmul.f32 %v6709, %v231
  %v6720 = vmul.f32 %v6712, %v231
  %v6721 = vsub.f32 %v6680, %v6713
  %v6722 = vsub.f32 %v6681, %v6714
  %v6723 = vsub.f32 %v6682, %v6715
  %v6724 = vsub.f32 %v6683, %v6716
  %v6725 = vsub.f32 %v6684, %v6717
  %v6726 = vsub.f32 %v6685, %v6718
  %v6727 = vsub.f32 %v6686, %v6719
  %v6728 = vsub.f32 %v6687, %v6720
  %v6729 = vmul.f32 %v6721, %v6721
  %v6730 = vmul.f32 %v6722, %v6722
  %v6731 = vmul.f32 %v6723, %v6723
  %v6732 = vmul.f32 %v6724, %v6724
  %v6733 = vmul.f32 %v6725, %v6725
  %v6734 = vmul.f32 %v6726, %v6726
  %v6735 = vmul.f32 %v6727, %v6727
  %v6736 = vmul.f32 %v6728, %v6728
  %v6737 = vsel %vm171, %v6729, 0.0
  %6738 = vadd.xlane.f32.xlu0 %v6737
  %v6739 = vpop.xlane.xlu0 %6738
  %v6740 = vsel %vm171, %v6730, 0.0
  %6741 = vadd.xlane.f32.xlu0 %v6740
  %v6742 = vpop.xlane.xlu0 %6741
  %v6743 = vsel %vm171, %v6731, 0.0
  %6744 = vadd.xlane.f32.xlu0 %v6743
  %v6745 = vpop.xlane.xlu0 %6744
  %v6746 = vsel %vm171, %v6732, 0.0
  %6747 = vadd.xlane.f32.xlu0 %v6746
  %v6748 = vpop.xlane.xlu0 %6747
  %v6749 = vsel %vm171, %v6733, 0.0
  %6750 = vadd.xlane.f32.xlu0 %v6749
  %v6751 = vpop.xlane.xlu0 %6750
  %v6752 = vsel %vm171, %v6734, 0.0
  %6753 = vadd.xlane.f32.xlu0 %v6752
  %v6754 = vpop.xlane.xlu0 %6753
  %v6755 = vsel %vm171, %v6735, 0.0
  %6756 = vadd.xlane.f32.xlu0 %v6755
  %v6757 = vpop.xlane.xlu0 %6756
  %v6758 = vsel %vm171, %v6736, 0.0
  %6759 = vadd.xlane.f32.xlu0 %v6758
  %v6760 = vpop.xlane.xlu0 %6759
  %v6761 = vmul.f32 %v6739, %v231
  %v6762 = vmul.f32 %v6742, %v231
  %v6763 = vmul.f32 %v6745, %v231
  %v6764 = vmul.f32 %v6748, %v231
  %v6765 = vmul.f32 %v6751, %v231
  %v6766 = vmul.f32 %v6754, %v231
  %v6767 = vmul.f32 %v6757, %v231
  %v6768 = vmul.f32 %v6760, %v231
  %v6769 = vadd.f32 %v6761, 1e-06
  %v6770 = vadd.f32 %v6762, 1e-06
  %v6771 = vadd.f32 %v6763, 1e-06
  %v6772 = vadd.f32 %v6764, 1e-06
  %v6773 = vadd.f32 %v6765, 1e-06
  %v6774 = vadd.f32 %v6766, 1e-06
  %v6775 = vadd.f32 %v6767, 1e-06
  %v6776 = vadd.f32 %v6768, 1e-06
  %v6777 = vrsqrt.pop %v6769
  %v6778 = vrsqrt.pop %v6770
  %v6779 = vrsqrt.pop %v6771
  %v6780 = vrsqrt.pop %v6772
  %v6781 = vrsqrt.pop %v6773
  %v6782 = vrsqrt.pop %v6774
  %v6783 = vrsqrt.pop %v6775
  %v6784 = vrsqrt.pop %v6776
  %v6785 = vmul.f32 %v6721, %v6777
  %v6786 = vmul.f32 %v6722, %v6778
  %v6787 = vmul.f32 %v6723, %v6779
  %v6788 = vmul.f32 %v6724, %v6780
  %v6789 = vmul.f32 %v6725, %v6781
  %v6790 = vmul.f32 %v6726, %v6782
  %v6791 = vmul.f32 %v6727, %v6783
  %v6792 = vmul.f32 %v6728, %v6784
  %v6793 = vlaneseq
  %v6794 = vshrl.u32 %v6793, 7
  %v6795 = vsub.s32 0, %v6794
  %v6796 = vrot.slane %v6688, %v6795
  %v6797 = vmul.f32 %v6785, %v6796
  %v6798 = vmul.f32 %v6786, %v6796
  %v6799 = vmul.f32 %v6787, %v6796
  %v6800 = vmul.f32 %v6788, %v6796
  %v6801 = vmul.f32 %v6789, %v6796
  %v6802 = vmul.f32 %v6790, %v6796
  %v6803 = vmul.f32 %v6791, %v6796
  %v6804 = vmul.f32 %v6792, %v6796
  %v6805 = vlaneseq
  %v6806 = vshrl.u32 %v6805, 7
  %v6807 = vsub.s32 1, %v6806
  %v6808 = vrot.slane %v6688, %v6807
  %v6809 = vadd.f32 %v6797, %v6808
  %v6810 = vadd.f32 %v6798, %v6808
  %v6811 = vadd.f32 %v6799, %v6808
  %v6812 = vadd.f32 %v6800, %v6808
  %v6813 = vadd.f32 %v6801, %v6808
  %v6814 = vadd.f32 %v6802, %v6808
  %v6815 = vadd.f32 %v6803, %v6808
  %v6816 = vadd.f32 %v6804, %v6808
  %6817 = vst.msk [vmem:[%s17] sm:$0xff] %vm171, %v6809
  %6818 = vst.msk [vmem:[%s17 + $0x8] sm:$0xff] %vm171, %v6810
  %6819 = vst.msk [vmem:[%s17 + $0x10] sm:$0xff] %vm171, %v6811
  %6820 = vst.msk [vmem:[%s17 + $0x18] sm:$0xff] %vm171, %v6812
  %6821 = vst.msk [vmem:[%s17 + $0x20] sm:$0xff] %vm171, %v6813
  %6822 = vst.msk [vmem:[%s17 + $0x28] sm:$0xff] %vm171, %v6814
  %6823 = vst.msk [vmem:[%s17 + $0x30] sm:$0xff] %vm171, %v6815
  %6824 = vst.msk [vmem:[%s17 + $0x38] sm:$0xff] %vm171, %v6816
  // Predicated region
  $region70: #{vit_transformer_pallas.1} parent=0 // pred_check
    _
  $region71: #{vit_transformer_pallas.1} parent=0 // pred_check_branch
    %6826 = sbr.rel (0) target = $region73
  $region72: #{vit_transformer_pallas.1} parent=0 // pred_region
    _
  $region73: #{vit_transformer_pallas.1} parent=0 // pred_fallthru
    _
  // Predicated region
  $region74: #{vit_transformer_pallas.1} parent=0 // pred_check
    _
  $region75: #{vit_transformer_pallas.1} parent=0 // pred_check_branch
    %6828 = sbr.rel (0) target = $region77
  $region76: #{vit_transformer_pallas.1} parent=0 // pred_region
    _
  $region77: #{vit_transformer_pallas.1} parent=0 // pred_fallthru
    _

</llo_original>
